<compile_context>
chip_gen: v7x
topology: tpu7x:2x2x1
jax: 0.10.0
libtpu: 0.0.40
codegen_flags: <defaults>
</compile_context>

<pallas_src>
import functools

import jax
import jax.numpy as jnp
from jax.experimental import pallas as pl
from jax.experimental.pallas import tpu as pltpu


def _recurrent_block_kernel(xp_ref, w_ref, g_ref, b_ref, m_ref, o_ref,
                            *, t, eps, n_valid, shifts):
    # xp_ref: (C, N)    zero-padded input, channel-major, flat spatial on lanes
    # w_ref:  (9, C, C) per-tap weights: w_ref[k, co, ci] = W[co, ci, ky, kx], k = ky*3+kx
    # g_ref:  (C, 1)    BN gamma            b_ref: (C, 1) BN beta
    # m_ref:  (1, N)    interior mask (1.0 at real pixels, 0.0 on halo ring / tail)
    # o_ref:  (C, N)    output: final x1, padded-flat channel-major
    C, N = xp_ref.shape
    x = xp_ref[...]                      # resident across all recurrent steps
    m = m_ref[...]
    w = w_ref[...]
    gamma = g_ref[...]
    beta = b_ref[...]
    inv_n = 1.0 / float(n_valid)

    state = x                            # conv input for step 0 is x itself
    x1 = x
    for step in range(t + 1):            # fully unrolled recurrence, no grid
        # ---- 3x3 "same" conv: 9 lane-rolled taps (XLU), each a (C,C)x(C,N)
        #      dot accumulated in f32.  The halo ring of `state` is zero, so
        #      rolled taps read correct zeros at image borders (no tap masks).
        y = None
        for k, s in enumerate(shifts):
            tap = state if s == 0 else pltpu.roll(state, shift=s, axis=1)
            contrib = jnp.dot(w[k], tap, preferred_element_type=jnp.float32)
            y = contrib if y is None else y + contrib

        # ---- BatchNorm2d (training-mode batch stats, two-pass variance),
        #      gamma/beta folded into one scale/shift, fused with ReLU.
        #      Conv bias omitted: cancelled exactly by the mean subtraction.
        mu = jnp.sum(y * m, axis=1, keepdims=True) * inv_n           # (C, 1)
        d = (y - mu) * m
        var = jnp.sum(d * d, axis=1, keepdims=True) * inv_n          # (C, 1)
        scale = gamma * jax.lax.rsqrt(var + eps)                     # (C, 1)
        shift = beta - mu * scale
        x1 = jnp.maximum(y * scale + shift, 0.0)                     # (C, N)

        # ---- next conv input is (x + x1); keep halo ring / tail at zero.
        if step < t:
            state = (x + x1) * m

    o_ref[...] = x1 * m                  # single lane-dense store at the end


def recurrent_block(x_nchw, w_oihw, b, gamma, beta, *, t=2, eps=1e-5):
    """NCHW in/out like the PyTorch module; channel-major compute in-kernel."""
    assert t >= 1, "PyTorch forward requires t >= 1"
    B, C, H, W = x_nchw.shape
    Hp, Wp = H + 2, W + 2
    n_pad = B * Hp * Wp
    N = ((n_pad + 127) // 128) * 128           # lane-dense flat length

    # Channel-major, spatially zero-padded, flattened (+ zero tail to 128k lanes).
    x_cbhw = jnp.transpose(x_nchw, (1, 0, 2, 3)).astype(jnp.float32)
    x_sp = jnp.pad(x_cbhw, ((0, 0), (0, 0), (1, 1), (1, 1)))
    xp = jnp.pad(x_sp.reshape(C, n_pad), ((0, 0), (0, N - n_pad)))

    # Per-tap weights: OIHW -> (ky, kx, Cout, Cin) -> (9, Cout, Cin), k = ky*3+kx.
    w9 = jnp.transpose(w_oihw, (2, 3, 0, 1)).astype(jnp.float32).reshape(9, C, C)
    g2 = gamma.reshape(C, 1).astype(jnp.float32)
    be2 = beta.reshape(C, 1).astype(jnp.float32)
    # Conv bias `b` is NOT passed: it is mathematically cancelled by the
    # training-mode BatchNorm mean subtraction (see kernel comment).
    del b
    # TODO(synk): BatchNorm running_mean/running_var buffer updates (training
    # side effect on module state) are not emitted; only the forward output is
    # produced.  If ever emitted, they must include the conv bias.

    # Interior mask: 1.0 at real pixels, 0.0 on the halo ring and the tail.
    m_sp = jnp.zeros((B, Hp, Wp), jnp.float32).at[:, 1:H + 1, 1:W + 1].set(1.0)
    m_flat = jnp.pad(m_sp.reshape(1, n_pad), ((0, 0), (0, N - n_pad)))

    # Roll amount per tap: tap (ky,kx) reads flat index p + (ky-1)*Wp + (kx-1),
    # i.e. roll the state by the negated offset (mod N, static).
    shifts = tuple((-((ky - 1) * Wp + (kx - 1))) % N
                   for ky in range(3) for kx in range(3))

    kernel = functools.partial(_recurrent_block_kernel, t=t, eps=eps,
                               n_valid=B * H * W, shifts=shifts)
    out_flat = pl.pallas_call(
        kernel,
        # Single invocation (no grid): every index map would be constant, so a
        # step grid would add pure dispatch overhead with zero pipelining
        # benefit.  All operands are whole-array resident in VMEM (<100 KiB).
        in_specs=[
            pl.BlockSpec(memory_space=pltpu.MemorySpace.VMEM),  # xp  (C, N)
            pl.BlockSpec(memory_space=pltpu.MemorySpace.VMEM),  # w9  (9, C, C)
            pl.BlockSpec(memory_space=pltpu.MemorySpace.VMEM),  # gamma (C, 1)
            pl.BlockSpec(memory_space=pltpu.MemorySpace.VMEM),  # beta  (C, 1)
            pl.BlockSpec(memory_space=pltpu.MemorySpace.VMEM),  # mask  (1, N)
        ],
        out_specs=pl.BlockSpec(memory_space=pltpu.MemorySpace.VMEM),
        out_shape=jax.ShapeDtypeStruct((C, N), jnp.float32),
        compiler_params=pltpu.CompilerParams(
            # Tiny footprint here; budget fits every generation incl. v7x.
            vmem_limit_bytes=32 * 1024 * 1024,
        ),
    )(xp, w9, g2, be2, m_flat)

    out = out_flat[:, :n_pad].reshape(C, B, Hp, Wp)[:, :, 1:H + 1, 1:W + 1]
    return jnp.transpose(out, (1, 0, 2, 3))            # -> NCHW


def _ref_forward(x_nchw, w_oihw, b, gamma, beta, *, t=2, eps=1e-5):
    """Pure-JAX reference mirroring the PyTorch module (training-mode BN,
    including the conv bias and two-pass variance)."""
    def conv_bn_relu(inp):
        y = jax.lax.conv_general_dilated(
            inp, w_oihw, window_strides=(1, 1), padding="SAME",
            dimension_numbers=("NCHW", "OIHW", "NCHW"))
        y = y + b[None, :, None, None]
        mu = jnp.mean(y, axis=(0, 2, 3), keepdims=True)
        var = jnp.mean((y - mu) ** 2, axis=(0, 2, 3), keepdims=True)
        yn = (y - mu) * jax.lax.rsqrt(var + eps)
        return jnp.maximum(yn * gamma[None, :, None, None]
                           + beta[None, :, None, None], 0.0)

    x1 = conv_bn_relu(x_nchw)
    for _ in range(t):
        x1 = conv_bn_relu(x_nchw + x1)
    return x1


if __name__ == "__main__":
    B, C, H, W, t = 2, 4, 16, 16, 2
    key = jax.random.PRNGKey(0)
    k1, k2, k3, k4, k5 = jax.random.split(key, 5)

    # Deterministic synthetic parameters (shapes from RecurrentBlock.__init__).
    x = jax.random.normal(k1, (B, C, H, W), dtype=jnp.float32)
    w = 0.1 * jax.random.normal(k2, (C, C, 3, 3), dtype=jnp.float32)   # OIHW
    b = 0.1 * jax.random.normal(k3, (C,), dtype=jnp.float32)
    gamma = 1.0 + 0.1 * jax.random.normal(k4, (C,), dtype=jnp.float32)
    beta = 0.1 * jax.random.normal(k5, (C,), dtype=jnp.float32)

    out = jax.block_until_ready(recurrent_block(x, w, b, gamma, beta, t=t))
    ref = _ref_forward(x, w, b, gamma, beta, t=t)

    assert out.shape == (B, C, H, W)
    err = float(jnp.max(jnp.abs(out - ref)))
    assert err < 5e-3, f"max abs err {err}"
    print("KERNEL_OK")
</pallas_src>

<mosaic_0001>
module attributes {stable_mosaic.version = 11 : i64} {
  func.func @_recurrent_block_kernel(%arg0: memref<4x768xf32, #tpu.memory_space<vmem>>, %arg1: memref<9x4x4xf32, #tpu.memory_space<vmem>>, %arg2: memref<4x1xf32, #tpu.memory_space<vmem>>, %arg3: memref<4x1xf32, #tpu.memory_space<vmem>>, %arg4: memref<1x768xf32, #tpu.memory_space<vmem>>, %arg5: memref<4x768xf32, #tpu.memory_space<vmem>>) attributes {dimension_semantics = [], scalar_prefetch = 0 : i64, scratch_operands = 0 : i64, tpu.core_type = #tpu.core_type<tc>} {
    %c0 = arith.constant 0 : index
    %c0_0 = arith.constant 0 : index
    %0 = vector.load %arg0[%c0, %c0_0] : memref<4x768xf32, #tpu.memory_space<vmem>>, vector<4x768xf32>
    %c0_1 = arith.constant 0 : index
    %c0_2 = arith.constant 0 : index
    %1 = vector.load %arg4[%c0_1, %c0_2] : memref<1x768xf32, #tpu.memory_space<vmem>>, vector<1x768xf32>
    %c0_3 = arith.constant 0 : index
    %c0_4 = arith.constant 0 : index
    %c0_5 = arith.constant 0 : index
    %2 = vector.load %arg1[%c0_3, %c0_4, %c0_5] : memref<9x4x4xf32, #tpu.memory_space<vmem>>, vector<9x4x4xf32>
    %c0_6 = arith.constant 0 : index
    %c0_7 = arith.constant 0 : index
    %3 = vector.load %arg2[%c0_6, %c0_7] : memref<4x1xf32, #tpu.memory_space<vmem>>, vector<4x1xf32>
    %c0_8 = arith.constant 0 : index
    %c0_9 = arith.constant 0 : index
    %4 = vector.load %arg3[%c0_8, %c0_9] : memref<4x1xf32, #tpu.memory_space<vmem>>, vector<4x1xf32>
    %c19_i32 = arith.constant 19 : i32
    %5 = tpu.dynamic_rotate %0 by %c19_i32 dim 1 : vector<4x768xf32>, i32 -> vector<4x768xf32>
    %6 = vector.extract_strided_slice %2 {offsets = [0, 0, 0], sizes = [1, 4, 4], strides = [1, 1, 1]} : vector<9x4x4xf32> to vector<1x4x4xf32>
    %7 = vector.shape_cast %6 : vector<1x4x4xf32> to vector<4x4xf32>
    %cst = arith.constant dense<0.000000e+00> : vector<4x768xf32>
    %8 = tpu.matmul %7, %5, %cst {dimension_numbers = #tpu.dot_dimension_numbers<[1], [0], [0], [1], [0, 0, 1, 1], [], []>} : vector<4x4xf32>, vector<4x768xf32>, vector<4x768xf32> -> vector<4x768xf32>
    %c18_i32 = arith.constant 18 : i32
    %9 = tpu.dynamic_rotate %0 by %c18_i32 dim 1 : vector<4x768xf32>, i32 -> vector<4x768xf32>
    %10 = vector.extract_strided_slice %2 {offsets = [1, 0, 0], sizes = [1, 4, 4], strides = [1, 1, 1]} : vector<9x4x4xf32> to vector<1x4x4xf32>
    %11 = vector.shape_cast %10 : vector<1x4x4xf32> to vector<4x4xf32>
    %cst_10 = arith.constant dense<0.000000e+00> : vector<4x768xf32>
    %12 = tpu.matmul %11, %9, %cst_10 {dimension_numbers = #tpu.dot_dimension_numbers<[1], [0], [0], [1], [0, 0, 1, 1], [], []>} : vector<4x4xf32>, vector<4x768xf32>, vector<4x768xf32> -> vector<4x768xf32>
    %13 = arith.addf %8, %12 : vector<4x768xf32>
    %c17_i32 = arith.constant 17 : i32
    %14 = tpu.dynamic_rotate %0 by %c17_i32 dim 1 : vector<4x768xf32>, i32 -> vector<4x768xf32>
    %15 = vector.extract_strided_slice %2 {offsets = [2, 0, 0], sizes = [1, 4, 4], strides = [1, 1, 1]} : vector<9x4x4xf32> to vector<1x4x4xf32>
    %16 = vector.shape_cast %15 : vector<1x4x4xf32> to vector<4x4xf32>
    %cst_11 = arith.constant dense<0.000000e+00> : vector<4x768xf32>
    %17 = tpu.matmul %16, %14, %cst_11 {dimension_numbers = #tpu.dot_dimension_numbers<[1], [0], [0], [1], [0, 0, 1, 1], [], []>} : vector<4x4xf32>, vector<4x768xf32>, vector<4x768xf32> -> vector<4x768xf32>
    %18 = arith.addf %13, %17 : vector<4x768xf32>
    %c1_i32 = arith.constant 1 : i32
    %19 = tpu.dynamic_rotate %0 by %c1_i32 dim 1 : vector<4x768xf32>, i32 -> vector<4x768xf32>
    %20 = vector.extract_strided_slice %2 {offsets = [3, 0, 0], sizes = [1, 4, 4], strides = [1, 1, 1]} : vector<9x4x4xf32> to vector<1x4x4xf32>
    %21 = vector.shape_cast %20 : vector<1x4x4xf32> to vector<4x4xf32>
    %cst_12 = arith.constant dense<0.000000e+00> : vector<4x768xf32>
    %22 = tpu.matmul %21, %19, %cst_12 {dimension_numbers = #tpu.dot_dimension_numbers<[1], [0], [0], [1], [0, 0, 1, 1], [], []>} : vector<4x4xf32>, vector<4x768xf32>, vector<4x768xf32> -> vector<4x768xf32>
    %23 = arith.addf %18, %22 : vector<4x768xf32>
    %24 = vector.extract_strided_slice %2 {offsets = [4, 0, 0], sizes = [1, 4, 4], strides = [1, 1, 1]} : vector<9x4x4xf32> to vector<1x4x4xf32>
    %25 = vector.shape_cast %24 : vector<1x4x4xf32> to vector<4x4xf32>
    %cst_13 = arith.constant dense<0.000000e+00> : vector<4x768xf32>
    %26 = tpu.matmul %25, %0, %cst_13 {dimension_numbers = #tpu.dot_dimension_numbers<[1], [0], [0], [1], [0, 0, 1, 1], [], []>} : vector<4x4xf32>, vector<4x768xf32>, vector<4x768xf32> -> vector<4x768xf32>
    %27 = arith.addf %23, %26 : vector<4x768xf32>
    %c767_i32 = arith.constant 767 : i32
    %28 = tpu.dynamic_rotate %0 by %c767_i32 dim 1 : vector<4x768xf32>, i32 -> vector<4x768xf32>
    %29 = vector.extract_strided_slice %2 {offsets = [5, 0, 0], sizes = [1, 4, 4], strides = [1, 1, 1]} : vector<9x4x4xf32> to vector<1x4x4xf32>
    %30 = vector.shape_cast %29 : vector<1x4x4xf32> to vector<4x4xf32>
    %cst_14 = arith.constant dense<0.000000e+00> : vector<4x768xf32>
    %31 = tpu.matmul %30, %28, %cst_14 {dimension_numbers = #tpu.dot_dimension_numbers<[1], [0], [0], [1], [0, 0, 1, 1], [], []>} : vector<4x4xf32>, vector<4x768xf32>, vector<4x768xf32> -> vector<4x768xf32>
    %32 = arith.addf %27, %31 : vector<4x768xf32>
    %c751_i32 = arith.constant 751 : i32
    %33 = tpu.dynamic_rotate %0 by %c751_i32 dim 1 : vector<4x768xf32>, i32 -> vector<4x768xf32>
    %34 = vector.extract_strided_slice %2 {offsets = [6, 0, 0], sizes = [1, 4, 4], strides = [1, 1, 1]} : vector<9x4x4xf32> to vector<1x4x4xf32>
    %35 = vector.shape_cast %34 : vector<1x4x4xf32> to vector<4x4xf32>
    %cst_15 = arith.constant dense<0.000000e+00> : vector<4x768xf32>
    %36 = tpu.matmul %35, %33, %cst_15 {dimension_numbers = #tpu.dot_dimension_numbers<[1], [0], [0], [1], [0, 0, 1, 1], [], []>} : vector<4x4xf32>, vector<4x768xf32>, vector<4x768xf32> -> vector<4x768xf32>
    %37 = arith.addf %32, %36 : vector<4x768xf32>
    %c750_i32 = arith.constant 750 : i32
    %38 = tpu.dynamic_rotate %0 by %c750_i32 dim 1 : vector<4x768xf32>, i32 -> vector<4x768xf32>
    %39 = vector.extract_strided_slice %2 {offsets = [7, 0, 0], sizes = [1, 4, 4], strides = [1, 1, 1]} : vector<9x4x4xf32> to vector<1x4x4xf32>
    %40 = vector.shape_cast %39 : vector<1x4x4xf32> to vector<4x4xf32>
    %cst_16 = arith.constant dense<0.000000e+00> : vector<4x768xf32>
    %41 = tpu.matmul %40, %38, %cst_16 {dimension_numbers = #tpu.dot_dimension_numbers<[1], [0], [0], [1], [0, 0, 1, 1], [], []>} : vector<4x4xf32>, vector<4x768xf32>, vector<4x768xf32> -> vector<4x768xf32>
    %42 = arith.addf %37, %41 : vector<4x768xf32>
    %c749_i32 = arith.constant 749 : i32
    %43 = tpu.dynamic_rotate %0 by %c749_i32 dim 1 : vector<4x768xf32>, i32 -> vector<4x768xf32>
    %44 = vector.extract_strided_slice %2 {offsets = [8, 0, 0], sizes = [1, 4, 4], strides = [1, 1, 1]} : vector<9x4x4xf32> to vector<1x4x4xf32>
    %45 = vector.shape_cast %44 : vector<1x4x4xf32> to vector<4x4xf32>
    %cst_17 = arith.constant dense<0.000000e+00> : vector<4x768xf32>
    %46 = tpu.matmul %45, %43, %cst_17 {dimension_numbers = #tpu.dot_dimension_numbers<[1], [0], [0], [1], [0, 0, 1, 1], [], []>} : vector<4x4xf32>, vector<4x768xf32>, vector<4x768xf32> -> vector<4x768xf32>
    %47 = arith.addf %42, %46 : vector<4x768xf32>
    %48 = vector.broadcast %1 : vector<1x768xf32> to vector<4x768xf32>
    %49 = arith.mulf %47, %48 : vector<4x768xf32>
    %cst_18 = arith.constant dense<0.000000e+00> : vector<4xf32>
    %50 = vector.multi_reduction <add>, %49, %cst_18 [1] : vector<4x768xf32> to vector<4xf32>
    %51 = vector.shape_cast %50 : vector<4xf32> to vector<4x1xf32>
    %cst_19 = arith.constant 0.001953125 : f32
    %52 = vector.broadcast %cst_19 : f32 to vector<4x1xf32>
    %53 = arith.mulf %51, %52 : vector<4x1xf32>
    %54 = vector.broadcast %53 : vector<4x1xf32> to vector<4x768xf32>
    %55 = arith.subf %47, %54 : vector<4x768xf32>
    %56 = vector.broadcast %1 : vector<1x768xf32> to vector<4x768xf32>
    %57 = arith.mulf %55, %56 : vector<4x768xf32>
    %58 = arith.mulf %57, %57 : vector<4x768xf32>
    %cst_20 = arith.constant dense<0.000000e+00> : vector<4xf32>
    %59 = vector.multi_reduction <add>, %58, %cst_20 [1] : vector<4x768xf32> to vector<4xf32>
    %60 = vector.shape_cast %59 : vector<4xf32> to vector<4x1xf32>
    %cst_21 = arith.constant 0.001953125 : f32
    %61 = vector.broadcast %cst_21 : f32 to vector<4x1xf32>
    %62 = arith.mulf %60, %61 : vector<4x1xf32>
    %cst_22 = arith.constant 9.99999974E-6 : f32
    %63 = vector.broadcast %cst_22 : f32 to vector<4x1xf32>
    %64 = arith.addf %62, %63 : vector<4x1xf32>
    %65 = math.rsqrt %64 : vector<4x1xf32>
    %66 = arith.mulf %3, %65 : vector<4x1xf32>
    %67 = arith.mulf %53, %66 : vector<4x1xf32>
    %68 = arith.subf %4, %67 : vector<4x1xf32>
    %69 = vector.broadcast %66 : vector<4x1xf32> to vector<4x768xf32>
    %70 = arith.mulf %47, %69 : vector<4x768xf32>
    %71 = vector.broadcast %68 : vector<4x1xf32> to vector<4x768xf32>
    %72 = arith.addf %70, %71 : vector<4x768xf32>
    %cst_23 = arith.constant 0.000000e+00 : f32
    %73 = vector.broadcast %cst_23 : f32 to vector<4x768xf32>
    %74 = arith.maximumf %72, %73 : vector<4x768xf32>
    %75 = arith.addf %0, %74 : vector<4x768xf32>
    %76 = vector.broadcast %1 : vector<1x768xf32> to vector<4x768xf32>
    %77 = arith.mulf %75, %76 : vector<4x768xf32>
    %c19_i32_24 = arith.constant 19 : i32
    %78 = tpu.dynamic_rotate %77 by %c19_i32_24 dim 1 : vector<4x768xf32>, i32 -> vector<4x768xf32>
    %79 = vector.extract_strided_slice %2 {offsets = [0, 0, 0], sizes = [1, 4, 4], strides = [1, 1, 1]} : vector<9x4x4xf32> to vector<1x4x4xf32>
    %80 = vector.shape_cast %79 : vector<1x4x4xf32> to vector<4x4xf32>
    %cst_25 = arith.constant dense<0.000000e+00> : vector<4x768xf32>
    %81 = tpu.matmul %80, %78, %cst_25 {dimension_numbers = #tpu.dot_dimension_numbers<[1], [0], [0], [1], [0, 0, 1, 1], [], []>} : vector<4x4xf32>, vector<4x768xf32>, vector<4x768xf32> -> vector<4x768xf32>
    %c18_i32_26 = arith.constant 18 : i32
    %82 = tpu.dynamic_rotate %77 by %c18_i32_26 dim 1 : vector<4x768xf32>, i32 -> vector<4x768xf32>
    %83 = vector.extract_strided_slice %2 {offsets = [1, 0, 0], sizes = [1, 4, 4], strides = [1, 1, 1]} : vector<9x4x4xf32> to vector<1x4x4xf32>
    %84 = vector.shape_cast %83 : vector<1x4x4xf32> to vector<4x4xf32>
    %cst_27 = arith.constant dense<0.000000e+00> : vector<4x768xf32>
    %85 = tpu.matmul %84, %82, %cst_27 {dimension_numbers = #tpu.dot_dimension_numbers<[1], [0], [0], [1], [0, 0, 1, 1], [], []>} : vector<4x4xf32>, vector<4x768xf32>, vector<4x768xf32> -> vector<4x768xf32>
    %86 = arith.addf %81, %85 : vector<4x768xf32>
    %c17_i32_28 = arith.constant 17 : i32
    %87 = tpu.dynamic_rotate %77 by %c17_i32_28 dim 1 : vector<4x768xf32>, i32 -> vector<4x768xf32>
    %88 = vector.extract_strided_slice %2 {offsets = [2, 0, 0], sizes = [1, 4, 4], strides = [1, 1, 1]} : vector<9x4x4xf32> to vector<1x4x4xf32>
    %89 = vector.shape_cast %88 : vector<1x4x4xf32> to vector<4x4xf32>
    %cst_29 = arith.constant dense<0.000000e+00> : vector<4x768xf32>
    %90 = tpu.matmul %89, %87, %cst_29 {dimension_numbers = #tpu.dot_dimension_numbers<[1], [0], [0], [1], [0, 0, 1, 1], [], []>} : vector<4x4xf32>, vector<4x768xf32>, vector<4x768xf32> -> vector<4x768xf32>
    %91 = arith.addf %86, %90 : vector<4x768xf32>
    %c1_i32_30 = arith.constant 1 : i32
    %92 = tpu.dynamic_rotate %77 by %c1_i32_30 dim 1 : vector<4x768xf32>, i32 -> vector<4x768xf32>
    %93 = vector.extract_strided_slice %2 {offsets = [3, 0, 0], sizes = [1, 4, 4], strides = [1, 1, 1]} : vector<9x4x4xf32> to vector<1x4x4xf32>
    %94 = vector.shape_cast %93 : vector<1x4x4xf32> to vector<4x4xf32>
    %cst_31 = arith.constant dense<0.000000e+00> : vector<4x768xf32>
    %95 = tpu.matmul %94, %92, %cst_31 {dimension_numbers = #tpu.dot_dimension_numbers<[1], [0], [0], [1], [0, 0, 1, 1], [], []>} : vector<4x4xf32>, vector<4x768xf32>, vector<4x768xf32> -> vector<4x768xf32>
    %96 = arith.addf %91, %95 : vector<4x768xf32>
    %97 = vector.extract_strided_slice %2 {offsets = [4, 0, 0], sizes = [1, 4, 4], strides = [1, 1, 1]} : vector<9x4x4xf32> to vector<1x4x4xf32>
    %98 = vector.shape_cast %97 : vector<1x4x4xf32> to vector<4x4xf32>
    %cst_32 = arith.constant dense<0.000000e+00> : vector<4x768xf32>
    %99 = tpu.matmul %98, %77, %cst_32 {dimension_numbers = #tpu.dot_dimension_numbers<[1], [0], [0], [1], [0, 0, 1, 1], [], []>} : vector<4x4xf32>, vector<4x768xf32>, vector<4x768xf32> -> vector<4x768xf32>
    %100 = arith.addf %96, %99 : vector<4x768xf32>
    %c767_i32_33 = arith.constant 767 : i32
    %101 = tpu.dynamic_rotate %77 by %c767_i32_33 dim 1 : vector<4x768xf32>, i32 -> vector<4x768xf32>
    %102 = vector.extract_strided_slice %2 {offsets = [5, 0, 0], sizes = [1, 4, 4], strides = [1, 1, 1]} : vector<9x4x4xf32> to vector<1x4x4xf32>
    %103 = vector.shape_cast %102 : vector<1x4x4xf32> to vector<4x4xf32>
    %cst_34 = arith.constant dense<0.000000e+00> : vector<4x768xf32>
    %104 = tpu.matmul %103, %101, %cst_34 {dimension_numbers = #tpu.dot_dimension_numbers<[1], [0], [0], [1], [0, 0, 1, 1], [], []>} : vector<4x4xf32>, vector<4x768xf32>, vector<4x768xf32> -> vector<4x768xf32>
    %105 = arith.addf %100, %104 : vector<4x768xf32>
    %c751_i32_35 = arith.constant 751 : i32
    %106 = tpu.dynamic_rotate %77 by %c751_i32_35 dim 1 : vector<4x768xf32>, i32 -> vector<4x768xf32>
    %107 = vector.extract_strided_slice %2 {offsets = [6, 0, 0], sizes = [1, 4, 4], strides = [1, 1, 1]} : vector<9x4x4xf32> to vector<1x4x4xf32>
    %108 = vector.shape_cast %107 : vector<1x4x4xf32> to vector<4x4xf32>
    %cst_36 = arith.constant dense<0.000000e+00> : vector<4x768xf32>
    %109 = tpu.matmul %108, %106, %cst_36 {dimension_numbers = #tpu.dot_dimension_numbers<[1], [0], [0], [1], [0, 0, 1, 1], [], []>} : vector<4x4xf32>, vector<4x768xf32>, vector<4x768xf32> -> vector<4x768xf32>
    %110 = arith.addf %105, %109 : vector<4x768xf32>
    %c750_i32_37 = arith.constant 750 : i32
    %111 = tpu.dynamic_rotate %77 by %c750_i32_37 dim 1 : vector<4x768xf32>, i32 -> vector<4x768xf32>
    %112 = vector.extract_strided_slice %2 {offsets = [7, 0, 0], sizes = [1, 4, 4], strides = [1, 1, 1]} : vector<9x4x4xf32> to vector<1x4x4xf32>
    %113 = vector.shape_cast %112 : vector<1x4x4xf32> to vector<4x4xf32>
    %cst_38 = arith.constant dense<0.000000e+00> : vector<4x768xf32>
    %114 = tpu.matmul %113, %111, %cst_38 {dimension_numbers = #tpu.dot_dimension_numbers<[1], [0], [0], [1], [0, 0, 1, 1], [], []>} : vector<4x4xf32>, vector<4x768xf32>, vector<4x768xf32> -> vector<4x768xf32>
    %115 = arith.addf %110, %114 : vector<4x768xf32>
    %c749_i32_39 = arith.constant 749 : i32
    %116 = tpu.dynamic_rotate %77 by %c749_i32_39 dim 1 : vector<4x768xf32>, i32 -> vector<4x768xf32>
    %117 = vector.extract_strided_slice %2 {offsets = [8, 0, 0], sizes = [1, 4, 4], strides = [1, 1, 1]} : vector<9x4x4xf32> to vector<1x4x4xf32>
    %118 = vector.shape_cast %117 : vector<1x4x4xf32> to vector<4x4xf32>
    %cst_40 = arith.constant dense<0.000000e+00> : vector<4x768xf32>
    %119 = tpu.matmul %118, %116, %cst_40 {dimension_numbers = #tpu.dot_dimension_numbers<[1], [0], [0], [1], [0, 0, 1, 1], [], []>} : vector<4x4xf32>, vector<4x768xf32>, vector<4x768xf32> -> vector<4x768xf32>
    %120 = arith.addf %115, %119 : vector<4x768xf32>
    %121 = vector.broadcast %1 : vector<1x768xf32> to vector<4x768xf32>
    %122 = arith.mulf %120, %121 : vector<4x768xf32>
    %cst_41 = arith.constant dense<0.000000e+00> : vector<4xf32>
    %123 = vector.multi_reduction <add>, %122, %cst_41 [1] : vector<4x768xf32> to vector<4xf32>
    %124 = vector.shape_cast %123 : vector<4xf32> to vector<4x1xf32>
    %cst_42 = arith.constant 0.001953125 : f32
    %125 = vector.broadcast %cst_42 : f32 to vector<4x1xf32>
    %126 = arith.mulf %124, %125 : vector<4x1xf32>
    %127 = vector.broadcast %126 : vector<4x1xf32> to vector<4x768xf32>
    %128 = arith.subf %120, %127 : vector<4x768xf32>
    %129 = vector.broadcast %1 : vector<1x768xf32> to vector<4x768xf32>
    %130 = arith.mulf %128, %129 : vector<4x768xf32>
    %131 = arith.mulf %130, %130 : vector<4x768xf32>
    %cst_43 = arith.constant dense<0.000000e+00> : vector<4xf32>
    %132 = vector.multi_reduction <add>, %131, %cst_43 [1] : vector<4x768xf32> to vector<4xf32>
    %133 = vector.shape_cast %132 : vector<4xf32> to vector<4x1xf32>
    %cst_44 = arith.constant 0.001953125 : f32
    %134 = vector.broadcast %cst_44 : f32 to vector<4x1xf32>
    %135 = arith.mulf %133, %134 : vector<4x1xf32>
    %cst_45 = arith.constant 9.99999974E-6 : f32
    %136 = vector.broadcast %cst_45 : f32 to vector<4x1xf32>
    %137 = arith.addf %135, %136 : vector<4x1xf32>
    %138 = math.rsqrt %137 : vector<4x1xf32>
    %139 = arith.mulf %3, %138 : vector<4x1xf32>
    %140 = arith.mulf %126, %139 : vector<4x1xf32>
    %141 = arith.subf %4, %140 : vector<4x1xf32>
    %142 = vector.broadcast %139 : vector<4x1xf32> to vector<4x768xf32>
    %143 = arith.mulf %120, %142 : vector<4x768xf32>
    %144 = vector.broadcast %141 : vector<4x1xf32> to vector<4x768xf32>
    %145 = arith.addf %143, %144 : vector<4x768xf32>
    %cst_46 = arith.constant 0.000000e+00 : f32
    %146 = vector.broadcast %cst_46 : f32 to vector<4x768xf32>
    %147 = arith.maximumf %145, %146 : vector<4x768xf32>
    %148 = arith.addf %0, %147 : vector<4x768xf32>
    %149 = vector.broadcast %1 : vector<1x768xf32> to vector<4x768xf32>
    %150 = arith.mulf %148, %149 : vector<4x768xf32>
    %c19_i32_47 = arith.constant 19 : i32
    %151 = tpu.dynamic_rotate %150 by %c19_i32_47 dim 1 : vector<4x768xf32>, i32 -> vector<4x768xf32>
    %152 = vector.extract_strided_slice %2 {offsets = [0, 0, 0], sizes = [1, 4, 4], strides = [1, 1, 1]} : vector<9x4x4xf32> to vector<1x4x4xf32>
    %153 = vector.shape_cast %152 : vector<1x4x4xf32> to vector<4x4xf32>
    %cst_48 = arith.constant dense<0.000000e+00> : vector<4x768xf32>
    %154 = tpu.matmul %153, %151, %cst_48 {dimension_numbers = #tpu.dot_dimension_numbers<[1], [0], [0], [1], [0, 0, 1, 1], [], []>} : vector<4x4xf32>, vector<4x768xf32>, vector<4x768xf32> -> vector<4x768xf32>
    %c18_i32_49 = arith.constant 18 : i32
    %155 = tpu.dynamic_rotate %150 by %c18_i32_49 dim 1 : vector<4x768xf32>, i32 -> vector<4x768xf32>
    %156 = vector.extract_strided_slice %2 {offsets = [1, 0, 0], sizes = [1, 4, 4], strides = [1, 1, 1]} : vector<9x4x4xf32> to vector<1x4x4xf32>
    %157 = vector.shape_cast %156 : vector<1x4x4xf32> to vector<4x4xf32>
    %cst_50 = arith.constant dense<0.000000e+00> : vector<4x768xf32>
    %158 = tpu.matmul %157, %155, %cst_50 {dimension_numbers = #tpu.dot_dimension_numbers<[1], [0], [0], [1], [0, 0, 1, 1], [], []>} : vector<4x4xf32>, vector<4x768xf32>, vector<4x768xf32> -> vector<4x768xf32>
    %159 = arith.addf %154, %158 : vector<4x768xf32>
    %c17_i32_51 = arith.constant 17 : i32
    %160 = tpu.dynamic_rotate %150 by %c17_i32_51 dim 1 : vector<4x768xf32>, i32 -> vector<4x768xf32>
    %161 = vector.extract_strided_slice %2 {offsets = [2, 0, 0], sizes = [1, 4, 4], strides = [1, 1, 1]} : vector<9x4x4xf32> to vector<1x4x4xf32>
    %162 = vector.shape_cast %161 : vector<1x4x4xf32> to vector<4x4xf32>
    %cst_52 = arith.constant dense<0.000000e+00> : vector<4x768xf32>
    %163 = tpu.matmul %162, %160, %cst_52 {dimension_numbers = #tpu.dot_dimension_numbers<[1], [0], [0], [1], [0, 0, 1, 1], [], []>} : vector<4x4xf32>, vector<4x768xf32>, vector<4x768xf32> -> vector<4x768xf32>
    %164 = arith.addf %159, %163 : vector<4x768xf32>
    %c1_i32_53 = arith.constant 1 : i32
    %165 = tpu.dynamic_rotate %150 by %c1_i32_53 dim 1 : vector<4x768xf32>, i32 -> vector<4x768xf32>
    %166 = vector.extract_strided_slice %2 {offsets = [3, 0, 0], sizes = [1, 4, 4], strides = [1, 1, 1]} : vector<9x4x4xf32> to vector<1x4x4xf32>
    %167 = vector.shape_cast %166 : vector<1x4x4xf32> to vector<4x4xf32>
    %cst_54 = arith.constant dense<0.000000e+00> : vector<4x768xf32>
    %168 = tpu.matmul %167, %165, %cst_54 {dimension_numbers = #tpu.dot_dimension_numbers<[1], [0], [0], [1], [0, 0, 1, 1], [], []>} : vector<4x4xf32>, vector<4x768xf32>, vector<4x768xf32> -> vector<4x768xf32>
    %169 = arith.addf %164, %168 : vector<4x768xf32>
    %170 = vector.extract_strided_slice %2 {offsets = [4, 0, 0], sizes = [1, 4, 4], strides = [1, 1, 1]} : vector<9x4x4xf32> to vector<1x4x4xf32>
    %171 = vector.shape_cast %170 : vector<1x4x4xf32> to vector<4x4xf32>
    %cst_55 = arith.constant dense<0.000000e+00> : vector<4x768xf32>
    %172 = tpu.matmul %171, %150, %cst_55 {dimension_numbers = #tpu.dot_dimension_numbers<[1], [0], [0], [1], [0, 0, 1, 1], [], []>} : vector<4x4xf32>, vector<4x768xf32>, vector<4x768xf32> -> vector<4x768xf32>
    %173 = arith.addf %169, %172 : vector<4x768xf32>
    %c767_i32_56 = arith.constant 767 : i32
    %174 = tpu.dynamic_rotate %150 by %c767_i32_56 dim 1 : vector<4x768xf32>, i32 -> vector<4x768xf32>
    %175 = vector.extract_strided_slice %2 {offsets = [5, 0, 0], sizes = [1, 4, 4], strides = [1, 1, 1]} : vector<9x4x4xf32> to vector<1x4x4xf32>
    %176 = vector.shape_cast %175 : vector<1x4x4xf32> to vector<4x4xf32>
    %cst_57 = arith.constant dense<0.000000e+00> : vector<4x768xf32>
    %177 = tpu.matmul %176, %174, %cst_57 {dimension_numbers = #tpu.dot_dimension_numbers<[1], [0], [0], [1], [0, 0, 1, 1], [], []>} : vector<4x4xf32>, vector<4x768xf32>, vector<4x768xf32> -> vector<4x768xf32>
    %178 = arith.addf %173, %177 : vector<4x768xf32>
    %c751_i32_58 = arith.constant 751 : i32
    %179 = tpu.dynamic_rotate %150 by %c751_i32_58 dim 1 : vector<4x768xf32>, i32 -> vector<4x768xf32>
    %180 = vector.extract_strided_slice %2 {offsets = [6, 0, 0], sizes = [1, 4, 4], strides = [1, 1, 1]} : vector<9x4x4xf32> to vector<1x4x4xf32>
    %181 = vector.shape_cast %180 : vector<1x4x4xf32> to vector<4x4xf32>
    %cst_59 = arith.constant dense<0.000000e+00> : vector<4x768xf32>
    %182 = tpu.matmul %181, %179, %cst_59 {dimension_numbers = #tpu.dot_dimension_numbers<[1], [0], [0], [1], [0, 0, 1, 1], [], []>} : vector<4x4xf32>, vector<4x768xf32>, vector<4x768xf32> -> vector<4x768xf32>
    %183 = arith.addf %178, %182 : vector<4x768xf32>
    %c750_i32_60 = arith.constant 750 : i32
    %184 = tpu.dynamic_rotate %150 by %c750_i32_60 dim 1 : vector<4x768xf32>, i32 -> vector<4x768xf32>
    %185 = vector.extract_strided_slice %2 {offsets = [7, 0, 0], sizes = [1, 4, 4], strides = [1, 1, 1]} : vector<9x4x4xf32> to vector<1x4x4xf32>
    %186 = vector.shape_cast %185 : vector<1x4x4xf32> to vector<4x4xf32>
    %cst_61 = arith.constant dense<0.000000e+00> : vector<4x768xf32>
    %187 = tpu.matmul %186, %184, %cst_61 {dimension_numbers = #tpu.dot_dimension_numbers<[1], [0], [0], [1], [0, 0, 1, 1], [], []>} : vector<4x4xf32>, vector<4x768xf32>, vector<4x768xf32> -> vector<4x768xf32>
    %188 = arith.addf %183, %187 : vector<4x768xf32>
    %c749_i32_62 = arith.constant 749 : i32
    %189 = tpu.dynamic_rotate %150 by %c749_i32_62 dim 1 : vector<4x768xf32>, i32 -> vector<4x768xf32>
    %190 = vector.extract_strided_slice %2 {offsets = [8, 0, 0], sizes = [1, 4, 4], strides = [1, 1, 1]} : vector<9x4x4xf32> to vector<1x4x4xf32>
    %191 = vector.shape_cast %190 : vector<1x4x4xf32> to vector<4x4xf32>
    %cst_63 = arith.constant dense<0.000000e+00> : vector<4x768xf32>
    %192 = tpu.matmul %191, %189, %cst_63 {dimension_numbers = #tpu.dot_dimension_numbers<[1], [0], [0], [1], [0, 0, 1, 1], [], []>} : vector<4x4xf32>, vector<4x768xf32>, vector<4x768xf32> -> vector<4x768xf32>
    %193 = arith.addf %188, %192 : vector<4x768xf32>
    %194 = vector.broadcast %1 : vector<1x768xf32> to vector<4x768xf32>
    %195 = arith.mulf %193, %194 : vector<4x768xf32>
    %cst_64 = arith.constant dense<0.000000e+00> : vector<4xf32>
    %196 = vector.multi_reduction <add>, %195, %cst_64 [1] : vector<4x768xf32> to vector<4xf32>
    %197 = vector.shape_cast %196 : vector<4xf32> to vector<4x1xf32>
    %cst_65 = arith.constant 0.001953125 : f32
    %198 = vector.broadcast %cst_65 : f32 to vector<4x1xf32>
    %199 = arith.mulf %197, %198 : vector<4x1xf32>
    %200 = vector.broadcast %199 : vector<4x1xf32> to vector<4x768xf32>
    %201 = arith.subf %193, %200 : vector<4x768xf32>
    %202 = vector.broadcast %1 : vector<1x768xf32> to vector<4x768xf32>
    %203 = arith.mulf %201, %202 : vector<4x768xf32>
    %204 = arith.mulf %203, %203 : vector<4x768xf32>
    %cst_66 = arith.constant dense<0.000000e+00> : vector<4xf32>
    %205 = vector.multi_reduction <add>, %204, %cst_66 [1] : vector<4x768xf32> to vector<4xf32>
    %206 = vector.shape_cast %205 : vector<4xf32> to vector<4x1xf32>
    %cst_67 = arith.constant 0.001953125 : f32
    %207 = vector.broadcast %cst_67 : f32 to vector<4x1xf32>
    %208 = arith.mulf %206, %207 : vector<4x1xf32>
    %cst_68 = arith.constant 9.99999974E-6 : f32
    %209 = vector.broadcast %cst_68 : f32 to vector<4x1xf32>
    %210 = arith.addf %208, %209 : vector<4x1xf32>
    %211 = math.rsqrt %210 : vector<4x1xf32>
    %212 = arith.mulf %3, %211 : vector<4x1xf32>
    %213 = arith.mulf %199, %212 : vector<4x1xf32>
    %214 = arith.subf %4, %213 : vector<4x1xf32>
    %215 = vector.broadcast %212 : vector<4x1xf32> to vector<4x768xf32>
    %216 = arith.mulf %193, %215 : vector<4x768xf32>
    %217 = vector.broadcast %214 : vector<4x1xf32> to vector<4x768xf32>
    %218 = arith.addf %216, %217 : vector<4x768xf32>
    %cst_69 = arith.constant 0.000000e+00 : f32
    %219 = vector.broadcast %cst_69 : f32 to vector<4x768xf32>
    %220 = arith.maximumf %218, %219 : vector<4x768xf32>
    %221 = vector.broadcast %1 : vector<1x768xf32> to vector<4x768xf32>
    %222 = arith.mulf %220, %221 : vector<4x768xf32>
    %c0_70 = arith.constant 0 : index
    %c0_71 = arith.constant 0 : index
    %223 = vector.load %arg5[%c0_70, %c0_71] : memref<4x768xf32, #tpu.memory_space<vmem>>, vector<4x768xf32>
    tpu.vector_store %arg5[%c0_70, %c0_71], %222 {strides = array<i32>} : memref<4x768xf32, #tpu.memory_space<vmem>>, vector<4x768xf32>,
    return
  }
}

</mosaic_0001>

<llo_original>
// kernel: tpu_custom_call.1
$region0: #{tpu_custom_call.1}
  #allocation0 [shape = 'u32[]', space=smem, size = 0x4, offset = 0x4, fixed_abs, tag = 'smem constant byte address 0x4 - core index']
  #allocation1 [shape = 'u32[144,128]{1,0:T(1,128)}', space=vmem, size = 0x12000, scoped, tag = 'internal scratch']
  %s0 = inlined_call_operand.vmem [shape: f32[4,768], index: 0, kind: input, shape index: {}]
  %s1 = inlined_call_operand.vmem [shape: f32[9,4,4], index: 1, kind: input, shape index: {}]
  %s2 = inlined_call_operand.vmem [shape: f32[4,1], index: 2, kind: input, shape index: {}]
  %s3 = inlined_call_operand.vmem [shape: f32[4,1], index: 3, kind: input, shape index: {}]
  %s4 = inlined_call_operand.vmem [shape: f32[1,768], index: 4, kind: input, shape index: {}]
  %s5 = inlined_call_operand.hbm [shape: f32[4,768], index: 5, kind: output, shape index: {}]
  %s6 = sld [smem:[#allocation0]]
  $region30: #{tpu_custom_call.1} parent=0
    _
  %s8 = ssub.s32 1, %s6
  %s9 = scalar_select 0, %s8, %s6
  $region1: #{tpu_custom_call.1} parent=0
    #allocation2 [shape = 'u8[12288]{0}', space=vmem, size = 0x3000, scoped, tag = 'output window, operand 0, single buffered']
    #allocation3 [shape = 's32[1]{0}', space=sflag, size = 0x4, scoped, tag = 'scoped memory for tpu_custom_call.1']
    %10 = vsyncpa [#allocation3], 0
    // Predicated region
    $region2: #{tpu_custom_call.1} parent=1 // pred_check
      _
    $region3: #{tpu_custom_call.1} parent=1 // pred_check_branch
      %12 = sbr.rel (0) target = $region5
    $region4: #{tpu_custom_call.1} parent=1 // pred_region
      _
    $region5: #{tpu_custom_call.1} parent=1 // pred_fallthru
      _
    // Predicated region
    $region6: #{tpu_custom_call.1} parent=1 // pred_check
      _
    $region7: #{tpu_custom_call.1} parent=1 // pred_check_branch
      %14 = sbr.rel (0) target = $region9
    $region8: #{tpu_custom_call.1} parent=1 // pred_region
      _
    $region9: #{tpu_custom_call.1} parent=1 // pred_fallthru
      _
    // Predicated region
    $region10: #{tpu_custom_call.1} parent=1 // pred_check
      _
    $region11: #{tpu_custom_call.1} parent=1 // pred_check_branch
      %16 = sbr.rel (0) target = $region13
    $region12: #{tpu_custom_call.1} parent=1 // pred_region
      _
    $region13: #{tpu_custom_call.1} parent=1 // pred_fallthru
      _
    // Predicated region
    $region14: #{tpu_custom_call.1} parent=1 // pred_check
      _
    $region15: #{tpu_custom_call.1} parent=1 // pred_check_branch
      %18 = sbr.rel (0) target = $region17
    $region16: #{tpu_custom_call.1} parent=1 // pred_region
      _
    $region17: #{tpu_custom_call.1} parent=1 // pred_fallthru
      _
    // Predicated region
    $region18: #{tpu_custom_call.1} parent=1 // pred_check
      _
    $region19: #{tpu_custom_call.1} parent=1 // pred_check_branch
      %20 = sbr.rel (0) target = $region21
    $region20: #{tpu_custom_call.1} parent=1 // pred_region
      _
    $region21: #{tpu_custom_call.1} parent=1 // pred_fallthru
      _
    %v21 = vld [vmem:[%s0] sm:$0xff]
    %v22 = vld [vmem:[%s0 + $0x8] sm:$0xff]
    %v23 = vld [vmem:[%s0 + $0x10] sm:$0xff]
    %v24 = vld [vmem:[%s4] sm:$0x3f]
    %v25 = vld [vmem:[%s1] sm:$0xf]
    %v26 = vld [vmem:[%s1 + $0x4] sm:$0xf]
    %v27 = vld [vmem:[%s1 + $0x8] sm:$0xf]
    %v28 = vld [vmem:[%s1 + $0xc] sm:$0xf]
    %v29 = vld [vmem:[%s1 + $0x10] sm:$0xf]
    %v30 = vld [vmem:[%s1 + $0x14] sm:$0xf]
    %v31 = vld [vmem:[%s1 + $0x18] sm:$0xf]
    %v32 = vld [vmem:[%s1 + $0x1c] sm:$0xf]
    %v33 = vld [vmem:[%s1 + $0x20] sm:$0xf]
    %v34 = vld [vmem:[%s2] sm:$0xf]
    %v35 = vld [vmem:[%s3] sm:$0xf]
    %v39 = vcombine.high %v21, %v21
    %v40 = vcombine.high %v22, %v22
    %v41 = vcombine.high %v23, %v23
    %45 = vrot.lane.b32.xlu0 %v21, 19
    %v46 = vpop.permute.xlu0 %45
    %47 = vrot.lane.b32.xlu0 %v39, 19
    %v48 = vpop.permute.xlu0 %47
    %49 = vrot.lane.b32.xlu0 %v22, 19
    %v50 = vpop.permute.xlu0 %49
    %51 = vrot.lane.b32.xlu0 %v40, 19
    %v52 = vpop.permute.xlu0 %51
    %53 = vrot.lane.b32.xlu0 %v23, 19
    %v54 = vpop.permute.xlu0 %53
    %55 = vrot.lane.b32.xlu0 %v41, 19
    %v56 = vpop.permute.xlu0 %55
    %v57 = vlaneseq
    %v58 = vand.u32 %v57, 127
    %vm59 = vcmp.lt.s32.totalorder %v58, 19
    %v60 = vsel %vm59, %v54, %v56
    %v61 = vsel %vm59, %v52, %v54
    %v62 = vsel %vm59, %v50, %v52
    %v63 = vsel %vm59, %v48, %v50
    %v64 = vsel %vm59, %v46, %v48
    %v65 = vsel %vm59, %v56, %v46
    %66 = vrot.lane.b32.xlu0 %v21, 18
    %v67 = vpop.permute.xlu0 %66
    %68 = vrot.lane.b32.xlu0 %v39, 18
    %v69 = vpop.permute.xlu0 %68
    %70 = vrot.lane.b32.xlu0 %v22, 18
    %v71 = vpop.permute.xlu0 %70
    %72 = vrot.lane.b32.xlu0 %v40, 18
    %v73 = vpop.permute.xlu0 %72
    %74 = vrot.lane.b32.xlu0 %v23, 18
    %v75 = vpop.permute.xlu0 %74
    %76 = vrot.lane.b32.xlu0 %v41, 18
    %v77 = vpop.permute.xlu0 %76
    %vm78 = vcmp.lt.s32.totalorder %v58, 18
    %v79 = vsel %vm78, %v75, %v77
    %v80 = vsel %vm78, %v73, %v75
    %v81 = vsel %vm78, %v71, %v73
    %v82 = vsel %vm78, %v69, %v71
    %v83 = vsel %vm78, %v67, %v69
    %v84 = vsel %vm78, %v77, %v67
    %vm85 = vcmask 31744
    %v87 = vsel %vm85, %v26, 0
    %vm89 = vcmask 1043456
    %v91 = vsel %vm89, %v84, 0
    %v94 = vsel %vm89, %v83, 0
    %v97 = vsel %vm89, %v82, 0
    %v100 = vsel %vm89, %v81, 0
    %v103 = vsel %vm89, %v80, 0
    %v106 = vsel %vm89, %v79, 0
    %108 = vmatprep.subr.mxu0 %v94
    %109 = vmatpush1.msra.mxu0 %v91
    %110 = vmatprep.subr.mxu0 0.0
    %111 = vmatpush1.msra.mxu0 0.0
    %112 = vmatprep.subr.mxu0 0.0
    %113 = vmatpush1.msra.mxu0 0.0
    %114 = vmatprep.subr.mxu0 0.0
    %115 = vmatpush1.msra.mxu0 0.0
    %116 = vmatprep.subr.mxu0 0.0
    %117 = vmatpush1.msra.mxu0 0.0
    %118 = vmatprep.subr.mxu0 0.0
    %119 = vmatpush1.msra.mxu0 0.0
    %120 = vmatprep.subr.mxu0 0.0
    %121 = vmatpush1.msra.mxu0 0.0
    %122 = vmatprep.subr.mxu0 0.0
    %123 = vmatpush1.msra.mxu0 0.0
    %124 = vmatprep.subr.mxu0 0.0
    %125 = vmatpush1.msra.mxu0 0.0
    %126 = vmatprep.subr.mxu0 0.0
    %127 = vmatpush1.msra.mxu0 0.0
    %128 = vmatprep.subr.mxu0 0.0
    %129 = vmatpush1.msra.mxu0 0.0
    %130 = vmatprep.subr.mxu0 0.0
    %131 = vmatpush1.msra.mxu0 0.0
    %132 = vmatprep.subr.mxu0 0.0
    %133 = vmatpush1.msra.mxu0 0.0
    %134 = vmatprep.subr.mxu0 0.0
    %135 = vmatpush1.msra.mxu0 0.0
    %136 = vmatprep.subr.mxu0 0.0
    %137 = vmatpush1.msra.mxu0 0.0
    %138 = vmatprep.subr.mxu0 0.0
    %139 = vmatpush1.msra.mxu0 0.0
    %140 = vmatprep.subr.mxu0 0.0
    %141 = vmatpush1.msra.mxu0 0.0
    %142 = vmatprep.subr.mxu0 0.0
    %143 = vmatpush1.msra.mxu0 0.0
    %144 = vmatprep.subr.mxu0 0.0
    %145 = vmatpush1.msra.mxu0 0.0
    %146 = vmatprep.subr.mxu0 0.0
    %147 = vmatpush1.msra.mxu0 0.0
    %148 = vmatprep.subr.mxu0 0.0
    %149 = vmatpush1.msra.mxu0 0.0
    %150 = vmatprep.subr.mxu0 0.0
    %151 = vmatpush1.msra.mxu0 0.0
    %152 = vmatprep.subr.mxu0 0.0
    %153 = vmatpush1.msra.mxu0 0.0
    %154 = vmatprep.subr.mxu0 0.0
    %155 = vmatpush1.msra.mxu0 0.0
    %156 = vmatprep.subr.mxu0 0.0
    %157 = vmatpush1.msra.mxu0 0.0
    %158 = vmatprep.subr.mxu0 0.0
    %159 = vmatpush1.msra.mxu0 0.0
    %160 = vmatprep.subr.mxu0 0.0
    %161 = vmatpush1.msra.mxu0 0.0
    %162 = vmatprep.subr.mxu0 0.0
    %163 = vmatpush1.msra.mxu0 0.0
    %164 = vmatprep.subr.mxu0 0.0
    %165 = vmatpush1.msra.mxu0 0.0
    %166 = vmatprep.subr.mxu0 0.0
    %167 = vmatpush1.msra.mxu0 0.0
    %168 = vmatprep.subr.mxu0 0.0
    %169 = vmatpush1.msra.mxu0 0.0
    %170 = vmatprep.subr.mxu0 0.0
    %171 = vmatpush1.msra.mxu0 0.0
    %172 = vmatprep.mubr.f32.mxu0 0.0
    %173 = vmatmul.mubr.f32.gmra.mrb[0].mxu0 %v87
    %v174 = vpop.f32.mrb[0].mxu0
    %v175 = vadd.f32 0.0, %v174
    %v176 = vpop.f32.mrb[0].mxu0
    %v177 = vadd.f32 0.0, %v176
    %178 = vdwg.mxu0
    %179 = vmatprep.subr.mxu0 %v100
    %180 = vmatpush1.msra.mxu0 %v97
    %181 = vmatprep.subr.mxu0 0.0
    %182 = vmatpush1.msra.mxu0 0.0
    %183 = vmatprep.subr.mxu0 0.0
    %184 = vmatpush1.msra.mxu0 0.0
    %185 = vmatprep.subr.mxu0 0.0
    %186 = vmatpush1.msra.mxu0 0.0
    %187 = vmatprep.subr.mxu0 0.0
    %188 = vmatpush1.msra.mxu0 0.0
    %189 = vmatprep.subr.mxu0 0.0
    %190 = vmatpush1.msra.mxu0 0.0
    %191 = vmatprep.subr.mxu0 0.0
    %192 = vmatpush1.msra.mxu0 0.0
    %193 = vmatprep.subr.mxu0 0.0
    %194 = vmatpush1.msra.mxu0 0.0
    %195 = vmatprep.subr.mxu0 0.0
    %196 = vmatpush1.msra.mxu0 0.0
    %197 = vmatprep.subr.mxu0 0.0
    %198 = vmatpush1.msra.mxu0 0.0
    %199 = vmatprep.subr.mxu0 0.0
    %200 = vmatpush1.msra.mxu0 0.0
    %201 = vmatprep.subr.mxu0 0.0
    %202 = vmatpush1.msra.mxu0 0.0
    %203 = vmatprep.subr.mxu0 0.0
    %204 = vmatpush1.msra.mxu0 0.0
    %205 = vmatprep.subr.mxu0 0.0
    %206 = vmatpush1.msra.mxu0 0.0
    %207 = vmatprep.subr.mxu0 0.0
    %208 = vmatpush1.msra.mxu0 0.0
    %209 = vmatprep.subr.mxu0 0.0
    %210 = vmatpush1.msra.mxu0 0.0
    %211 = vmatprep.subr.mxu0 0.0
    %212 = vmatpush1.msra.mxu0 0.0
    %213 = vmatprep.subr.mxu0 0.0
    %214 = vmatpush1.msra.mxu0 0.0
    %215 = vmatprep.subr.mxu0 0.0
    %216 = vmatpush1.msra.mxu0 0.0
    %217 = vmatprep.subr.mxu0 0.0
    %218 = vmatpush1.msra.mxu0 0.0
    %219 = vmatprep.subr.mxu0 0.0
    %220 = vmatpush1.msra.mxu0 0.0
    %221 = vmatprep.subr.mxu0 0.0
    %222 = vmatpush1.msra.mxu0 0.0
    %223 = vmatprep.subr.mxu0 0.0
    %224 = vmatpush1.msra.mxu0 0.0
    %225 = vmatprep.subr.mxu0 0.0
    %226 = vmatpush1.msra.mxu0 0.0
    %227 = vmatprep.subr.mxu0 0.0
    %228 = vmatpush1.msra.mxu0 0.0
    %229 = vmatprep.subr.mxu0 0.0
    %230 = vmatpush1.msra.mxu0 0.0
    %231 = vmatprep.subr.mxu0 0.0
    %232 = vmatpush1.msra.mxu0 0.0
    %233 = vmatprep.subr.mxu0 0.0
    %234 = vmatpush1.msra.mxu0 0.0
    %235 = vmatprep.subr.mxu0 0.0
    %236 = vmatpush1.msra.mxu0 0.0
    %237 = vmatprep.subr.mxu0 0.0
    %238 = vmatpush1.msra.mxu0 0.0
    %239 = vmatprep.subr.mxu0 0.0
    %240 = vmatpush1.msra.mxu0 0.0
    %241 = vmatprep.subr.mxu0 0.0
    %242 = vmatpush1.msra.mxu0 0.0
    %243 = vmatprep.mubr.f32.mxu0 0.0
    %244 = vmatmul.mubr.f32.gmra.mrb[0].mxu0 %v87
    %v245 = vpop.f32.mrb[0].mxu0
    %v246 = vadd.f32 0.0, %v245
    %v247 = vpop.f32.mrb[0].mxu0
    %v248 = vadd.f32 0.0, %v247
    %249 = vdwg.mxu0
    %250 = vmatprep.subr.mxu0 %v106
    %251 = vmatpush1.msra.mxu0 %v103
    %252 = vmatprep.subr.mxu0 0.0
    %253 = vmatpush1.msra.mxu0 0.0
    %254 = vmatprep.subr.mxu0 0.0
    %255 = vmatpush1.msra.mxu0 0.0
    %256 = vmatprep.subr.mxu0 0.0
    %257 = vmatpush1.msra.mxu0 0.0
    %258 = vmatprep.subr.mxu0 0.0
    %259 = vmatpush1.msra.mxu0 0.0
    %260 = vmatprep.subr.mxu0 0.0
    %261 = vmatpush1.msra.mxu0 0.0
    %262 = vmatprep.subr.mxu0 0.0
    %263 = vmatpush1.msra.mxu0 0.0
    %264 = vmatprep.subr.mxu0 0.0
    %265 = vmatpush1.msra.mxu0 0.0
    %266 = vmatprep.subr.mxu0 0.0
    %267 = vmatpush1.msra.mxu0 0.0
    %268 = vmatprep.subr.mxu0 0.0
    %269 = vmatpush1.msra.mxu0 0.0
    %270 = vmatprep.subr.mxu0 0.0
    %271 = vmatpush1.msra.mxu0 0.0
    %272 = vmatprep.subr.mxu0 0.0
    %273 = vmatpush1.msra.mxu0 0.0
    %274 = vmatprep.subr.mxu0 0.0
    %275 = vmatpush1.msra.mxu0 0.0
    %276 = vmatprep.subr.mxu0 0.0
    %277 = vmatpush1.msra.mxu0 0.0
    %278 = vmatprep.subr.mxu0 0.0
    %279 = vmatpush1.msra.mxu0 0.0
    %280 = vmatprep.subr.mxu0 0.0
    %281 = vmatpush1.msra.mxu0 0.0
    %282 = vmatprep.subr.mxu0 0.0
    %283 = vmatpush1.msra.mxu0 0.0
    %284 = vmatprep.subr.mxu0 0.0
    %285 = vmatpush1.msra.mxu0 0.0
    %286 = vmatprep.subr.mxu0 0.0
    %287 = vmatpush1.msra.mxu0 0.0
    %288 = vmatprep.subr.mxu0 0.0
    %289 = vmatpush1.msra.mxu0 0.0
    %290 = vmatprep.subr.mxu0 0.0
    %291 = vmatpush1.msra.mxu0 0.0
    %292 = vmatprep.subr.mxu0 0.0
    %293 = vmatpush1.msra.mxu0 0.0
    %294 = vmatprep.subr.mxu0 0.0
    %295 = vmatpush1.msra.mxu0 0.0
    %296 = vmatprep.subr.mxu0 0.0
    %297 = vmatpush1.msra.mxu0 0.0
    %298 = vmatprep.subr.mxu0 0.0
    %299 = vmatpush1.msra.mxu0 0.0
    %300 = vmatprep.subr.mxu0 0.0
    %301 = vmatpush1.msra.mxu0 0.0
    %302 = vmatprep.subr.mxu0 0.0
    %303 = vmatpush1.msra.mxu0 0.0
    %304 = vmatprep.subr.mxu0 0.0
    %305 = vmatpush1.msra.mxu0 0.0
    %306 = vmatprep.subr.mxu0 0.0
    %307 = vmatpush1.msra.mxu0 0.0
    %308 = vmatprep.subr.mxu0 0.0
    %309 = vmatpush1.msra.mxu0 0.0
    %310 = vmatprep.subr.mxu0 0.0
    %311 = vmatpush1.msra.mxu0 0.0
    %312 = vmatprep.subr.mxu0 0.0
    %313 = vmatpush1.msra.mxu0 0.0
    %314 = vmatprep.mubr.f32.mxu0 0.0
    %315 = vmatmul.mubr.f32.gmra.mrb[0].mxu0 %v87
    %v316 = vpop.f32.mrb[0].mxu0
    %v317 = vadd.f32 0.0, %v316
    %v318 = vpop.f32.mrb[0].mxu0
    %v319 = vadd.f32 0.0, %v318
    %320 = vdwg.mxu0
    %v322 = vsel %vm85, %v25, 0
    %v325 = vsel %vm89, %v65, 0
    %v328 = vsel %vm89, %v64, 0
    %v331 = vsel %vm89, %v63, 0
    %v334 = vsel %vm89, %v62, 0
    %v337 = vsel %vm89, %v61, 0
    %v340 = vsel %vm89, %v60, 0
    %342 = vmatprep.subr.mxu0 %v328
    %343 = vmatpush1.msra.mxu0 %v325
    %344 = vmatprep.subr.mxu0 0.0
    %345 = vmatpush1.msra.mxu0 0.0
    %346 = vmatprep.subr.mxu0 0.0
    %347 = vmatpush1.msra.mxu0 0.0
    %348 = vmatprep.subr.mxu0 0.0
    %349 = vmatpush1.msra.mxu0 0.0
    %350 = vmatprep.subr.mxu0 0.0
    %351 = vmatpush1.msra.mxu0 0.0
    %352 = vmatprep.subr.mxu0 0.0
    %353 = vmatpush1.msra.mxu0 0.0
    %354 = vmatprep.subr.mxu0 0.0
    %355 = vmatpush1.msra.mxu0 0.0
    %356 = vmatprep.subr.mxu0 0.0
    %357 = vmatpush1.msra.mxu0 0.0
    %358 = vmatprep.subr.mxu0 0.0
    %359 = vmatpush1.msra.mxu0 0.0
    %360 = vmatprep.subr.mxu0 0.0
    %361 = vmatpush1.msra.mxu0 0.0
    %362 = vmatprep.subr.mxu0 0.0
    %363 = vmatpush1.msra.mxu0 0.0
    %364 = vmatprep.subr.mxu0 0.0
    %365 = vmatpush1.msra.mxu0 0.0
    %366 = vmatprep.subr.mxu0 0.0
    %367 = vmatpush1.msra.mxu0 0.0
    %368 = vmatprep.subr.mxu0 0.0
    %369 = vmatpush1.msra.mxu0 0.0
    %370 = vmatprep.subr.mxu0 0.0
    %371 = vmatpush1.msra.mxu0 0.0
    %372 = vmatprep.subr.mxu0 0.0
    %373 = vmatpush1.msra.mxu0 0.0
    %374 = vmatprep.subr.mxu0 0.0
    %375 = vmatpush1.msra.mxu0 0.0
    %376 = vmatprep.subr.mxu0 0.0
    %377 = vmatpush1.msra.mxu0 0.0
    %378 = vmatprep.subr.mxu0 0.0
    %379 = vmatpush1.msra.mxu0 0.0
    %380 = vmatprep.subr.mxu0 0.0
    %381 = vmatpush1.msra.mxu0 0.0
    %382 = vmatprep.subr.mxu0 0.0
    %383 = vmatpush1.msra.mxu0 0.0
    %384 = vmatprep.subr.mxu0 0.0
    %385 = vmatpush1.msra.mxu0 0.0
    %386 = vmatprep.subr.mxu0 0.0
    %387 = vmatpush1.msra.mxu0 0.0
    %388 = vmatprep.subr.mxu0 0.0
    %389 = vmatpush1.msra.mxu0 0.0
    %390 = vmatprep.subr.mxu0 0.0
    %391 = vmatpush1.msra.mxu0 0.0
    %392 = vmatprep.subr.mxu0 0.0
    %393 = vmatpush1.msra.mxu0 0.0
    %394 = vmatprep.subr.mxu0 0.0
    %395 = vmatpush1.msra.mxu0 0.0
    %396 = vmatprep.subr.mxu0 0.0
    %397 = vmatpush1.msra.mxu0 0.0
    %398 = vmatprep.subr.mxu0 0.0
    %399 = vmatpush1.msra.mxu0 0.0
    %400 = vmatprep.subr.mxu0 0.0
    %401 = vmatpush1.msra.mxu0 0.0
    %402 = vmatprep.subr.mxu0 0.0
    %403 = vmatpush1.msra.mxu0 0.0
    %404 = vmatprep.subr.mxu0 0.0
    %405 = vmatpush1.msra.mxu0 0.0
    %406 = vmatprep.mubr.f32.mxu0 0.0
    %407 = vmatmul.mubr.f32.gmra.mrb[0].mxu0 %v322
    %v408 = vpop.f32.mrb[0].mxu0
    %v409 = vadd.f32 %v175, %v408
    %v410 = vpop.f32.mrb[0].mxu0
    %v411 = vadd.f32 %v177, %v410
    %412 = vdwg.mxu0
    %413 = vmatprep.subr.mxu0 %v334
    %414 = vmatpush1.msra.mxu0 %v331
    %415 = vmatprep.subr.mxu0 0.0
    %416 = vmatpush1.msra.mxu0 0.0
    %417 = vmatprep.subr.mxu0 0.0
    %418 = vmatpush1.msra.mxu0 0.0
    %419 = vmatprep.subr.mxu0 0.0
    %420 = vmatpush1.msra.mxu0 0.0
    %421 = vmatprep.subr.mxu0 0.0
    %422 = vmatpush1.msra.mxu0 0.0
    %423 = vmatprep.subr.mxu0 0.0
    %424 = vmatpush1.msra.mxu0 0.0
    %425 = vmatprep.subr.mxu0 0.0
    %426 = vmatpush1.msra.mxu0 0.0
    %427 = vmatprep.subr.mxu0 0.0
    %428 = vmatpush1.msra.mxu0 0.0
    %429 = vmatprep.subr.mxu0 0.0
    %430 = vmatpush1.msra.mxu0 0.0
    %431 = vmatprep.subr.mxu0 0.0
    %432 = vmatpush1.msra.mxu0 0.0
    %433 = vmatprep.subr.mxu0 0.0
    %434 = vmatpush1.msra.mxu0 0.0
    %435 = vmatprep.subr.mxu0 0.0
    %436 = vmatpush1.msra.mxu0 0.0
    %437 = vmatprep.subr.mxu0 0.0
    %438 = vmatpush1.msra.mxu0 0.0
    %439 = vmatprep.subr.mxu0 0.0
    %440 = vmatpush1.msra.mxu0 0.0
    %441 = vmatprep.subr.mxu0 0.0
    %442 = vmatpush1.msra.mxu0 0.0
    %443 = vmatprep.subr.mxu0 0.0
    %444 = vmatpush1.msra.mxu0 0.0
    %445 = vmatprep.subr.mxu0 0.0
    %446 = vmatpush1.msra.mxu0 0.0
    %447 = vmatprep.subr.mxu0 0.0
    %448 = vmatpush1.msra.mxu0 0.0
    %449 = vmatprep.subr.mxu0 0.0
    %450 = vmatpush1.msra.mxu0 0.0
    %451 = vmatprep.subr.mxu0 0.0
    %452 = vmatpush1.msra.mxu0 0.0
    %453 = vmatprep.subr.mxu0 0.0
    %454 = vmatpush1.msra.mxu0 0.0
    %455 = vmatprep.subr.mxu0 0.0
    %456 = vmatpush1.msra.mxu0 0.0
    %457 = vmatprep.subr.mxu0 0.0
    %458 = vmatpush1.msra.mxu0 0.0
    %459 = vmatprep.subr.mxu0 0.0
    %460 = vmatpush1.msra.mxu0 0.0
    %461 = vmatprep.subr.mxu0 0.0
    %462 = vmatpush1.msra.mxu0 0.0
    %463 = vmatprep.subr.mxu0 0.0
    %464 = vmatpush1.msra.mxu0 0.0
    %465 = vmatprep.subr.mxu0 0.0
    %466 = vmatpush1.msra.mxu0 0.0
    %467 = vmatprep.subr.mxu0 0.0
    %468 = vmatpush1.msra.mxu0 0.0
    %469 = vmatprep.subr.mxu0 0.0
    %470 = vmatpush1.msra.mxu0 0.0
    %471 = vmatprep.subr.mxu0 0.0
    %472 = vmatpush1.msra.mxu0 0.0
    %473 = vmatprep.subr.mxu0 0.0
    %474 = vmatpush1.msra.mxu0 0.0
    %475 = vmatprep.subr.mxu0 0.0
    %476 = vmatpush1.msra.mxu0 0.0
    %477 = vmatprep.mubr.f32.mxu0 0.0
    %478 = vmatmul.mubr.f32.gmra.mrb[0].mxu0 %v322
    %v479 = vpop.f32.mrb[0].mxu0
    %v480 = vadd.f32 %v246, %v479
    %v481 = vpop.f32.mrb[0].mxu0
    %v482 = vadd.f32 %v248, %v481
    %483 = vdwg.mxu0
    %484 = vmatprep.subr.mxu0 %v340
    %485 = vmatpush1.msra.mxu0 %v337
    %486 = vmatprep.subr.mxu0 0.0
    %487 = vmatpush1.msra.mxu0 0.0
    %488 = vmatprep.subr.mxu0 0.0
    %489 = vmatpush1.msra.mxu0 0.0
    %490 = vmatprep.subr.mxu0 0.0
    %491 = vmatpush1.msra.mxu0 0.0
    %492 = vmatprep.subr.mxu0 0.0
    %493 = vmatpush1.msra.mxu0 0.0
    %494 = vmatprep.subr.mxu0 0.0
    %495 = vmatpush1.msra.mxu0 0.0
    %496 = vmatprep.subr.mxu0 0.0
    %497 = vmatpush1.msra.mxu0 0.0
    %498 = vmatprep.subr.mxu0 0.0
    %499 = vmatpush1.msra.mxu0 0.0
    %500 = vmatprep.subr.mxu0 0.0
    %501 = vmatpush1.msra.mxu0 0.0
    %502 = vmatprep.subr.mxu0 0.0
    %503 = vmatpush1.msra.mxu0 0.0
    %504 = vmatprep.subr.mxu0 0.0
    %505 = vmatpush1.msra.mxu0 0.0
    %506 = vmatprep.subr.mxu0 0.0
    %507 = vmatpush1.msra.mxu0 0.0
    %508 = vmatprep.subr.mxu0 0.0
    %509 = vmatpush1.msra.mxu0 0.0
    %510 = vmatprep.subr.mxu0 0.0
    %511 = vmatpush1.msra.mxu0 0.0
    %512 = vmatprep.subr.mxu0 0.0
    %513 = vmatpush1.msra.mxu0 0.0
    %514 = vmatprep.subr.mxu0 0.0
    %515 = vmatpush1.msra.mxu0 0.0
    %516 = vmatprep.subr.mxu0 0.0
    %517 = vmatpush1.msra.mxu0 0.0
    %518 = vmatprep.subr.mxu0 0.0
    %519 = vmatpush1.msra.mxu0 0.0
    %520 = vmatprep.subr.mxu0 0.0
    %521 = vmatpush1.msra.mxu0 0.0
    %522 = vmatprep.subr.mxu0 0.0
    %523 = vmatpush1.msra.mxu0 0.0
    %524 = vmatprep.subr.mxu0 0.0
    %525 = vmatpush1.msra.mxu0 0.0
    %526 = vmatprep.subr.mxu0 0.0
    %527 = vmatpush1.msra.mxu0 0.0
    %528 = vmatprep.subr.mxu0 0.0
    %529 = vmatpush1.msra.mxu0 0.0
    %530 = vmatprep.subr.mxu0 0.0
    %531 = vmatpush1.msra.mxu0 0.0
    %532 = vmatprep.subr.mxu0 0.0
    %533 = vmatpush1.msra.mxu0 0.0
    %534 = vmatprep.subr.mxu0 0.0
    %535 = vmatpush1.msra.mxu0 0.0
    %536 = vmatprep.subr.mxu0 0.0
    %537 = vmatpush1.msra.mxu0 0.0
    %538 = vmatprep.subr.mxu0 0.0
    %539 = vmatpush1.msra.mxu0 0.0
    %540 = vmatprep.subr.mxu0 0.0
    %541 = vmatpush1.msra.mxu0 0.0
    %542 = vmatprep.subr.mxu0 0.0
    %543 = vmatpush1.msra.mxu0 0.0
    %544 = vmatprep.subr.mxu0 0.0
    %545 = vmatpush1.msra.mxu0 0.0
    %546 = vmatprep.subr.mxu0 0.0
    %547 = vmatpush1.msra.mxu0 0.0
    %548 = vmatprep.mubr.f32.mxu0 0.0
    %549 = vmatmul.mubr.f32.gmra.mrb[0].mxu0 %v322
    %v550 = vpop.f32.mrb[0].mxu0
    %v551 = vadd.f32 %v317, %v550
    %v552 = vpop.f32.mrb[0].mxu0
    %v553 = vadd.f32 %v319, %v552
    %554 = vdwg.mxu0
    %555 = vrot.lane.b32.xlu0 %v21, 17
    %v556 = vpop.permute.xlu0 %555
    %557 = vrot.lane.b32.xlu0 %v39, 17
    %v558 = vpop.permute.xlu0 %557
    %559 = vrot.lane.b32.xlu0 %v22, 17
    %v560 = vpop.permute.xlu0 %559
    %561 = vrot.lane.b32.xlu0 %v40, 17
    %v562 = vpop.permute.xlu0 %561
    %563 = vrot.lane.b32.xlu0 %v23, 17
    %v564 = vpop.permute.xlu0 %563
    %565 = vrot.lane.b32.xlu0 %v41, 17
    %v566 = vpop.permute.xlu0 %565
    %vm567 = vcmp.lt.s32.totalorder %v58, 17
    %v568 = vsel %vm567, %v564, %v566
    %v569 = vsel %vm567, %v562, %v564
    %v570 = vsel %vm567, %v560, %v562
    %v571 = vsel %vm567, %v558, %v560
    %v572 = vsel %vm567, %v556, %v558
    %v573 = vsel %vm567, %v566, %v556
    %v575 = vsel %vm85, %v27, 0
    %v578 = vsel %vm89, %v573, 0
    %v581 = vsel %vm89, %v572, 0
    %v584 = vsel %vm89, %v571, 0
    %v587 = vsel %vm89, %v570, 0
    %v590 = vsel %vm89, %v569, 0
    %v593 = vsel %vm89, %v568, 0
    %595 = vmatprep.subr.mxu0 %v581
    %596 = vmatpush1.msra.mxu0 %v578
    %597 = vmatprep.subr.mxu0 0.0
    %598 = vmatpush1.msra.mxu0 0.0
    %599 = vmatprep.subr.mxu0 0.0
    %600 = vmatpush1.msra.mxu0 0.0
    %601 = vmatprep.subr.mxu0 0.0
    %602 = vmatpush1.msra.mxu0 0.0
    %603 = vmatprep.subr.mxu0 0.0
    %604 = vmatpush1.msra.mxu0 0.0
    %605 = vmatprep.subr.mxu0 0.0
    %606 = vmatpush1.msra.mxu0 0.0
    %607 = vmatprep.subr.mxu0 0.0
    %608 = vmatpush1.msra.mxu0 0.0
    %609 = vmatprep.subr.mxu0 0.0
    %610 = vmatpush1.msra.mxu0 0.0
    %611 = vmatprep.subr.mxu0 0.0
    %612 = vmatpush1.msra.mxu0 0.0
    %613 = vmatprep.subr.mxu0 0.0
    %614 = vmatpush1.msra.mxu0 0.0
    %615 = vmatprep.subr.mxu0 0.0
    %616 = vmatpush1.msra.mxu0 0.0
    %617 = vmatprep.subr.mxu0 0.0
    %618 = vmatpush1.msra.mxu0 0.0
    %619 = vmatprep.subr.mxu0 0.0
    %620 = vmatpush1.msra.mxu0 0.0
    %621 = vmatprep.subr.mxu0 0.0
    %622 = vmatpush1.msra.mxu0 0.0
    %623 = vmatprep.subr.mxu0 0.0
    %624 = vmatpush1.msra.mxu0 0.0
    %625 = vmatprep.subr.mxu0 0.0
    %626 = vmatpush1.msra.mxu0 0.0
    %627 = vmatprep.subr.mxu0 0.0
    %628 = vmatpush1.msra.mxu0 0.0
    %629 = vmatprep.subr.mxu0 0.0
    %630 = vmatpush1.msra.mxu0 0.0
    %631 = vmatprep.subr.mxu0 0.0
    %632 = vmatpush1.msra.mxu0 0.0
    %633 = vmatprep.subr.mxu0 0.0
    %634 = vmatpush1.msra.mxu0 0.0
    %635 = vmatprep.subr.mxu0 0.0
    %636 = vmatpush1.msra.mxu0 0.0
    %637 = vmatprep.subr.mxu0 0.0
    %638 = vmatpush1.msra.mxu0 0.0
    %639 = vmatprep.subr.mxu0 0.0
    %640 = vmatpush1.msra.mxu0 0.0
    %641 = vmatprep.subr.mxu0 0.0
    %642 = vmatpush1.msra.mxu0 0.0
    %643 = vmatprep.subr.mxu0 0.0
    %644 = vmatpush1.msra.mxu0 0.0
    %645 = vmatprep.subr.mxu0 0.0
    %646 = vmatpush1.msra.mxu0 0.0
    %647 = vmatprep.subr.mxu0 0.0
    %648 = vmatpush1.msra.mxu0 0.0
    %649 = vmatprep.subr.mxu0 0.0
    %650 = vmatpush1.msra.mxu0 0.0
    %651 = vmatprep.subr.mxu0 0.0
    %652 = vmatpush1.msra.mxu0 0.0
    %653 = vmatprep.subr.mxu0 0.0
    %654 = vmatpush1.msra.mxu0 0.0
    %655 = vmatprep.subr.mxu0 0.0
    %656 = vmatpush1.msra.mxu0 0.0
    %657 = vmatprep.subr.mxu0 0.0
    %658 = vmatpush1.msra.mxu0 0.0
    %659 = vmatprep.mubr.f32.mxu0 0.0
    %660 = vmatmul.mubr.f32.gmra.mrb[0].mxu0 %v575
    %v661 = vpop.f32.mrb[0].mxu0
    %v662 = vadd.f32 0.0, %v661
    %v663 = vpop.f32.mrb[0].mxu0
    %v664 = vadd.f32 0.0, %v663
    %665 = vdwg.mxu0
    %666 = vmatprep.subr.mxu0 %v587
    %667 = vmatpush1.msra.mxu0 %v584
    %668 = vmatprep.subr.mxu0 0.0
    %669 = vmatpush1.msra.mxu0 0.0
    %670 = vmatprep.subr.mxu0 0.0
    %671 = vmatpush1.msra.mxu0 0.0
    %672 = vmatprep.subr.mxu0 0.0
    %673 = vmatpush1.msra.mxu0 0.0
    %674 = vmatprep.subr.mxu0 0.0
    %675 = vmatpush1.msra.mxu0 0.0
    %676 = vmatprep.subr.mxu0 0.0
    %677 = vmatpush1.msra.mxu0 0.0
    %678 = vmatprep.subr.mxu0 0.0
    %679 = vmatpush1.msra.mxu0 0.0
    %680 = vmatprep.subr.mxu0 0.0
    %681 = vmatpush1.msra.mxu0 0.0
    %682 = vmatprep.subr.mxu0 0.0
    %683 = vmatpush1.msra.mxu0 0.0
    %684 = vmatprep.subr.mxu0 0.0
    %685 = vmatpush1.msra.mxu0 0.0
    %686 = vmatprep.subr.mxu0 0.0
    %687 = vmatpush1.msra.mxu0 0.0
    %688 = vmatprep.subr.mxu0 0.0
    %689 = vmatpush1.msra.mxu0 0.0
    %690 = vmatprep.subr.mxu0 0.0
    %691 = vmatpush1.msra.mxu0 0.0
    %692 = vmatprep.subr.mxu0 0.0
    %693 = vmatpush1.msra.mxu0 0.0
    %694 = vmatprep.subr.mxu0 0.0
    %695 = vmatpush1.msra.mxu0 0.0
    %696 = vmatprep.subr.mxu0 0.0
    %697 = vmatpush1.msra.mxu0 0.0
    %698 = vmatprep.subr.mxu0 0.0
    %699 = vmatpush1.msra.mxu0 0.0
    %700 = vmatprep.subr.mxu0 0.0
    %701 = vmatpush1.msra.mxu0 0.0
    %702 = vmatprep.subr.mxu0 0.0
    %703 = vmatpush1.msra.mxu0 0.0
    %704 = vmatprep.subr.mxu0 0.0
    %705 = vmatpush1.msra.mxu0 0.0
    %706 = vmatprep.subr.mxu0 0.0
    %707 = vmatpush1.msra.mxu0 0.0
    %708 = vmatprep.subr.mxu0 0.0
    %709 = vmatpush1.msra.mxu0 0.0
    %710 = vmatprep.subr.mxu0 0.0
    %711 = vmatpush1.msra.mxu0 0.0
    %712 = vmatprep.subr.mxu0 0.0
    %713 = vmatpush1.msra.mxu0 0.0
    %714 = vmatprep.subr.mxu0 0.0
    %715 = vmatpush1.msra.mxu0 0.0
    %716 = vmatprep.subr.mxu0 0.0
    %717 = vmatpush1.msra.mxu0 0.0
    %718 = vmatprep.subr.mxu0 0.0
    %719 = vmatpush1.msra.mxu0 0.0
    %720 = vmatprep.subr.mxu0 0.0
    %721 = vmatpush1.msra.mxu0 0.0
    %722 = vmatprep.subr.mxu0 0.0
    %723 = vmatpush1.msra.mxu0 0.0
    %724 = vmatprep.subr.mxu0 0.0
    %725 = vmatpush1.msra.mxu0 0.0
    %726 = vmatprep.subr.mxu0 0.0
    %727 = vmatpush1.msra.mxu0 0.0
    %728 = vmatprep.subr.mxu0 0.0
    %729 = vmatpush1.msra.mxu0 0.0
    %730 = vmatprep.mubr.f32.mxu0 0.0
    %731 = vmatmul.mubr.f32.gmra.mrb[0].mxu0 %v575
    %v732 = vpop.f32.mrb[0].mxu0
    %v733 = vadd.f32 0.0, %v732
    %v734 = vpop.f32.mrb[0].mxu0
    %v735 = vadd.f32 0.0, %v734
    %736 = vdwg.mxu0
    %737 = vmatprep.subr.mxu0 %v593
    %738 = vmatpush1.msra.mxu0 %v590
    %739 = vmatprep.subr.mxu0 0.0
    %740 = vmatpush1.msra.mxu0 0.0
    %741 = vmatprep.subr.mxu0 0.0
    %742 = vmatpush1.msra.mxu0 0.0
    %743 = vmatprep.subr.mxu0 0.0
    %744 = vmatpush1.msra.mxu0 0.0
    %745 = vmatprep.subr.mxu0 0.0
    %746 = vmatpush1.msra.mxu0 0.0
    %747 = vmatprep.subr.mxu0 0.0
    %748 = vmatpush1.msra.mxu0 0.0
    %749 = vmatprep.subr.mxu0 0.0
    %750 = vmatpush1.msra.mxu0 0.0
    %751 = vmatprep.subr.mxu0 0.0
    %752 = vmatpush1.msra.mxu0 0.0
    %753 = vmatprep.subr.mxu0 0.0
    %754 = vmatpush1.msra.mxu0 0.0
    %755 = vmatprep.subr.mxu0 0.0
    %756 = vmatpush1.msra.mxu0 0.0
    %757 = vmatprep.subr.mxu0 0.0
    %758 = vmatpush1.msra.mxu0 0.0
    %759 = vmatprep.subr.mxu0 0.0
    %760 = vmatpush1.msra.mxu0 0.0
    %761 = vmatprep.subr.mxu0 0.0
    %762 = vmatpush1.msra.mxu0 0.0
    %763 = vmatprep.subr.mxu0 0.0
    %764 = vmatpush1.msra.mxu0 0.0
    %765 = vmatprep.subr.mxu0 0.0
    %766 = vmatpush1.msra.mxu0 0.0
    %767 = vmatprep.subr.mxu0 0.0
    %768 = vmatpush1.msra.mxu0 0.0
    %769 = vmatprep.subr.mxu0 0.0
    %770 = vmatpush1.msra.mxu0 0.0
    %771 = vmatprep.subr.mxu0 0.0
    %772 = vmatpush1.msra.mxu0 0.0
    %773 = vmatprep.subr.mxu0 0.0
    %774 = vmatpush1.msra.mxu0 0.0
    %775 = vmatprep.subr.mxu0 0.0
    %776 = vmatpush1.msra.mxu0 0.0
    %777 = vmatprep.subr.mxu0 0.0
    %778 = vmatpush1.msra.mxu0 0.0
    %779 = vmatprep.subr.mxu0 0.0
    %780 = vmatpush1.msra.mxu0 0.0
    %781 = vmatprep.subr.mxu0 0.0
    %782 = vmatpush1.msra.mxu0 0.0
    %783 = vmatprep.subr.mxu0 0.0
    %784 = vmatpush1.msra.mxu0 0.0
    %785 = vmatprep.subr.mxu0 0.0
    %786 = vmatpush1.msra.mxu0 0.0
    %787 = vmatprep.subr.mxu0 0.0
    %788 = vmatpush1.msra.mxu0 0.0
    %789 = vmatprep.subr.mxu0 0.0
    %790 = vmatpush1.msra.mxu0 0.0
    %791 = vmatprep.subr.mxu0 0.0
    %792 = vmatpush1.msra.mxu0 0.0
    %793 = vmatprep.subr.mxu0 0.0
    %794 = vmatpush1.msra.mxu0 0.0
    %795 = vmatprep.subr.mxu0 0.0
    %796 = vmatpush1.msra.mxu0 0.0
    %797 = vmatprep.subr.mxu0 0.0
    %798 = vmatpush1.msra.mxu0 0.0
    %799 = vmatprep.subr.mxu0 0.0
    %800 = vmatpush1.msra.mxu0 0.0
    %801 = vmatprep.mubr.f32.mxu0 0.0
    %802 = vmatmul.mubr.f32.gmra.mrb[0].mxu0 %v575
    %v803 = vpop.f32.mrb[0].mxu0
    %v804 = vadd.f32 0.0, %v803
    %v805 = vpop.f32.mrb[0].mxu0
    %v806 = vadd.f32 0.0, %v805
    %807 = vdwg.mxu0
    %v808 = vadd.f32 %v409, %v662
    %v809 = vadd.f32 %v411, %v664
    %v810 = vadd.f32 %v480, %v733
    %v811 = vadd.f32 %v482, %v735
    %v812 = vadd.f32 %v551, %v804
    %v813 = vadd.f32 %v553, %v806
    %814 = vrot.lane.b32.xlu0 %v21, 1
    %v815 = vpop.permute.xlu0 %814
    %816 = vrot.lane.b32.xlu0 %v39, 1
    %v817 = vpop.permute.xlu0 %816
    %818 = vrot.lane.b32.xlu0 %v22, 1
    %v819 = vpop.permute.xlu0 %818
    %820 = vrot.lane.b32.xlu0 %v40, 1
    %v821 = vpop.permute.xlu0 %820
    %822 = vrot.lane.b32.xlu0 %v23, 1
    %v823 = vpop.permute.xlu0 %822
    %824 = vrot.lane.b32.xlu0 %v41, 1
    %v825 = vpop.permute.xlu0 %824
    %vm826 = vcmp.lt.s32.totalorder %v58, 1
    %v827 = vsel %vm826, %v823, %v825
    %v828 = vsel %vm826, %v821, %v823
    %v829 = vsel %vm826, %v819, %v821
    %v830 = vsel %vm826, %v817, %v819
    %v831 = vsel %vm826, %v815, %v817
    %v832 = vsel %vm826, %v825, %v815
    %v834 = vsel %vm85, %v28, 0
    %v837 = vsel %vm89, %v832, 0
    %v840 = vsel %vm89, %v831, 0
    %v843 = vsel %vm89, %v830, 0
    %v846 = vsel %vm89, %v829, 0
    %v849 = vsel %vm89, %v828, 0
    %v852 = vsel %vm89, %v827, 0
    %854 = vmatprep.subr.mxu0 %v840
    %855 = vmatpush1.msra.mxu0 %v837
    %856 = vmatprep.subr.mxu0 0.0
    %857 = vmatpush1.msra.mxu0 0.0
    %858 = vmatprep.subr.mxu0 0.0
    %859 = vmatpush1.msra.mxu0 0.0
    %860 = vmatprep.subr.mxu0 0.0
    %861 = vmatpush1.msra.mxu0 0.0
    %862 = vmatprep.subr.mxu0 0.0
    %863 = vmatpush1.msra.mxu0 0.0
    %864 = vmatprep.subr.mxu0 0.0
    %865 = vmatpush1.msra.mxu0 0.0
    %866 = vmatprep.subr.mxu0 0.0
    %867 = vmatpush1.msra.mxu0 0.0
    %868 = vmatprep.subr.mxu0 0.0
    %869 = vmatpush1.msra.mxu0 0.0
    %870 = vmatprep.subr.mxu0 0.0
    %871 = vmatpush1.msra.mxu0 0.0
    %872 = vmatprep.subr.mxu0 0.0
    %873 = vmatpush1.msra.mxu0 0.0
    %874 = vmatprep.subr.mxu0 0.0
    %875 = vmatpush1.msra.mxu0 0.0
    %876 = vmatprep.subr.mxu0 0.0
    %877 = vmatpush1.msra.mxu0 0.0
    %878 = vmatprep.subr.mxu0 0.0
    %879 = vmatpush1.msra.mxu0 0.0
    %880 = vmatprep.subr.mxu0 0.0
    %881 = vmatpush1.msra.mxu0 0.0
    %882 = vmatprep.subr.mxu0 0.0
    %883 = vmatpush1.msra.mxu0 0.0
    %884 = vmatprep.subr.mxu0 0.0
    %885 = vmatpush1.msra.mxu0 0.0
    %886 = vmatprep.subr.mxu0 0.0
    %887 = vmatpush1.msra.mxu0 0.0
    %888 = vmatprep.subr.mxu0 0.0
    %889 = vmatpush1.msra.mxu0 0.0
    %890 = vmatprep.subr.mxu0 0.0
    %891 = vmatpush1.msra.mxu0 0.0
    %892 = vmatprep.subr.mxu0 0.0
    %893 = vmatpush1.msra.mxu0 0.0
    %894 = vmatprep.subr.mxu0 0.0
    %895 = vmatpush1.msra.mxu0 0.0
    %896 = vmatprep.subr.mxu0 0.0
    %897 = vmatpush1.msra.mxu0 0.0
    %898 = vmatprep.subr.mxu0 0.0
    %899 = vmatpush1.msra.mxu0 0.0
    %900 = vmatprep.subr.mxu0 0.0
    %901 = vmatpush1.msra.mxu0 0.0
    %902 = vmatprep.subr.mxu0 0.0
    %903 = vmatpush1.msra.mxu0 0.0
    %904 = vmatprep.subr.mxu0 0.0
    %905 = vmatpush1.msra.mxu0 0.0
    %906 = vmatprep.subr.mxu0 0.0
    %907 = vmatpush1.msra.mxu0 0.0
    %908 = vmatprep.subr.mxu0 0.0
    %909 = vmatpush1.msra.mxu0 0.0
    %910 = vmatprep.subr.mxu0 0.0
    %911 = vmatpush1.msra.mxu0 0.0
    %912 = vmatprep.subr.mxu0 0.0
    %913 = vmatpush1.msra.mxu0 0.0
    %914 = vmatprep.subr.mxu0 0.0
    %915 = vmatpush1.msra.mxu0 0.0
    %916 = vmatprep.subr.mxu0 0.0
    %917 = vmatpush1.msra.mxu0 0.0
    %918 = vmatprep.mubr.f32.mxu0 0.0
    %919 = vmatmul.mubr.f32.gmra.mrb[0].mxu0 %v834
    %v920 = vpop.f32.mrb[0].mxu0
    %v921 = vadd.f32 0.0, %v920
    %v922 = vpop.f32.mrb[0].mxu0
    %v923 = vadd.f32 0.0, %v922
    %924 = vdwg.mxu0
    %925 = vmatprep.subr.mxu0 %v846
    %926 = vmatpush1.msra.mxu0 %v843
    %927 = vmatprep.subr.mxu0 0.0
    %928 = vmatpush1.msra.mxu0 0.0
    %929 = vmatprep.subr.mxu0 0.0
    %930 = vmatpush1.msra.mxu0 0.0
    %931 = vmatprep.subr.mxu0 0.0
    %932 = vmatpush1.msra.mxu0 0.0
    %933 = vmatprep.subr.mxu0 0.0
    %934 = vmatpush1.msra.mxu0 0.0
    %935 = vmatprep.subr.mxu0 0.0
    %936 = vmatpush1.msra.mxu0 0.0
    %937 = vmatprep.subr.mxu0 0.0
    %938 = vmatpush1.msra.mxu0 0.0
    %939 = vmatprep.subr.mxu0 0.0
    %940 = vmatpush1.msra.mxu0 0.0
    %941 = vmatprep.subr.mxu0 0.0
    %942 = vmatpush1.msra.mxu0 0.0
    %943 = vmatprep.subr.mxu0 0.0
    %944 = vmatpush1.msra.mxu0 0.0
    %945 = vmatprep.subr.mxu0 0.0
    %946 = vmatpush1.msra.mxu0 0.0
    %947 = vmatprep.subr.mxu0 0.0
    %948 = vmatpush1.msra.mxu0 0.0
    %949 = vmatprep.subr.mxu0 0.0
    %950 = vmatpush1.msra.mxu0 0.0
    %951 = vmatprep.subr.mxu0 0.0
    %952 = vmatpush1.msra.mxu0 0.0
    %953 = vmatprep.subr.mxu0 0.0
    %954 = vmatpush1.msra.mxu0 0.0
    %955 = vmatprep.subr.mxu0 0.0
    %956 = vmatpush1.msra.mxu0 0.0
    %957 = vmatprep.subr.mxu0 0.0
    %958 = vmatpush1.msra.mxu0 0.0
    %959 = vmatprep.subr.mxu0 0.0
    %960 = vmatpush1.msra.mxu0 0.0
    %961 = vmatprep.subr.mxu0 0.0
    %962 = vmatpush1.msra.mxu0 0.0
    %963 = vmatprep.subr.mxu0 0.0
    %964 = vmatpush1.msra.mxu0 0.0
    %965 = vmatprep.subr.mxu0 0.0
    %966 = vmatpush1.msra.mxu0 0.0
    %967 = vmatprep.subr.mxu0 0.0
    %968 = vmatpush1.msra.mxu0 0.0
    %969 = vmatprep.subr.mxu0 0.0
    %970 = vmatpush1.msra.mxu0 0.0
    %971 = vmatprep.subr.mxu0 0.0
    %972 = vmatpush1.msra.mxu0 0.0
    %973 = vmatprep.subr.mxu0 0.0
    %974 = vmatpush1.msra.mxu0 0.0
    %975 = vmatprep.subr.mxu0 0.0
    %976 = vmatpush1.msra.mxu0 0.0
    %977 = vmatprep.subr.mxu0 0.0
    %978 = vmatpush1.msra.mxu0 0.0
    %979 = vmatprep.subr.mxu0 0.0
    %980 = vmatpush1.msra.mxu0 0.0
    %981 = vmatprep.subr.mxu0 0.0
    %982 = vmatpush1.msra.mxu0 0.0
    %983 = vmatprep.subr.mxu0 0.0
    %984 = vmatpush1.msra.mxu0 0.0
    %985 = vmatprep.subr.mxu0 0.0
    %986 = vmatpush1.msra.mxu0 0.0
    %987 = vmatprep.subr.mxu0 0.0
    %988 = vmatpush1.msra.mxu0 0.0
    %989 = vmatprep.mubr.f32.mxu0 0.0
    %990 = vmatmul.mubr.f32.gmra.mrb[0].mxu0 %v834
    %v991 = vpop.f32.mrb[0].mxu0
    %v992 = vadd.f32 0.0, %v991
    %v993 = vpop.f32.mrb[0].mxu0
    %v994 = vadd.f32 0.0, %v993
    %995 = vdwg.mxu0
    %996 = vmatprep.subr.mxu0 %v852
    %997 = vmatpush1.msra.mxu0 %v849
    %998 = vmatprep.subr.mxu0 0.0
    %999 = vmatpush1.msra.mxu0 0.0
    %1000 = vmatprep.subr.mxu0 0.0
    %1001 = vmatpush1.msra.mxu0 0.0
    %1002 = vmatprep.subr.mxu0 0.0
    %1003 = vmatpush1.msra.mxu0 0.0
    %1004 = vmatprep.subr.mxu0 0.0
    %1005 = vmatpush1.msra.mxu0 0.0
    %1006 = vmatprep.subr.mxu0 0.0
    %1007 = vmatpush1.msra.mxu0 0.0
    %1008 = vmatprep.subr.mxu0 0.0
    %1009 = vmatpush1.msra.mxu0 0.0
    %1010 = vmatprep.subr.mxu0 0.0
    %1011 = vmatpush1.msra.mxu0 0.0
    %1012 = vmatprep.subr.mxu0 0.0
    %1013 = vmatpush1.msra.mxu0 0.0
    %1014 = vmatprep.subr.mxu0 0.0
    %1015 = vmatpush1.msra.mxu0 0.0
    %1016 = vmatprep.subr.mxu0 0.0
    %1017 = vmatpush1.msra.mxu0 0.0
    %1018 = vmatprep.subr.mxu0 0.0
    %1019 = vmatpush1.msra.mxu0 0.0
    %1020 = vmatprep.subr.mxu0 0.0
    %1021 = vmatpush1.msra.mxu0 0.0
    %1022 = vmatprep.subr.mxu0 0.0
    %1023 = vmatpush1.msra.mxu0 0.0
    %1024 = vmatprep.subr.mxu0 0.0
    %1025 = vmatpush1.msra.mxu0 0.0
    %1026 = vmatprep.subr.mxu0 0.0
    %1027 = vmatpush1.msra.mxu0 0.0
    %1028 = vmatprep.subr.mxu0 0.0
    %1029 = vmatpush1.msra.mxu0 0.0
    %1030 = vmatprep.subr.mxu0 0.0
    %1031 = vmatpush1.msra.mxu0 0.0
    %1032 = vmatprep.subr.mxu0 0.0
    %1033 = vmatpush1.msra.mxu0 0.0
    %1034 = vmatprep.subr.mxu0 0.0
    %1035 = vmatpush1.msra.mxu0 0.0
    %1036 = vmatprep.subr.mxu0 0.0
    %1037 = vmatpush1.msra.mxu0 0.0
    %1038 = vmatprep.subr.mxu0 0.0
    %1039 = vmatpush1.msra.mxu0 0.0
    %1040 = vmatprep.subr.mxu0 0.0
    %1041 = vmatpush1.msra.mxu0 0.0
    %1042 = vmatprep.subr.mxu0 0.0
    %1043 = vmatpush1.msra.mxu0 0.0
    %1044 = vmatprep.subr.mxu0 0.0
    %1045 = vmatpush1.msra.mxu0 0.0
    %1046 = vmatprep.subr.mxu0 0.0
    %1047 = vmatpush1.msra.mxu0 0.0
    %1048 = vmatprep.subr.mxu0 0.0
    %1049 = vmatpush1.msra.mxu0 0.0
    %1050 = vmatprep.subr.mxu0 0.0
    %1051 = vmatpush1.msra.mxu0 0.0
    %1052 = vmatprep.subr.mxu0 0.0
    %1053 = vmatpush1.msra.mxu0 0.0
    %1054 = vmatprep.subr.mxu0 0.0
    %1055 = vmatpush1.msra.mxu0 0.0
    %1056 = vmatprep.subr.mxu0 0.0
    %1057 = vmatpush1.msra.mxu0 0.0
    %1058 = vmatprep.subr.mxu0 0.0
    %1059 = vmatpush1.msra.mxu0 0.0
    %1060 = vmatprep.mubr.f32.mxu0 0.0
    %1061 = vmatmul.mubr.f32.gmra.mrb[0].mxu0 %v834
    %v1062 = vpop.f32.mrb[0].mxu0
    %v1063 = vadd.f32 0.0, %v1062
    %v1064 = vpop.f32.mrb[0].mxu0
    %v1065 = vadd.f32 0.0, %v1064
    %1066 = vdwg.mxu0
    %v1067 = vadd.f32 %v808, %v921
    %v1068 = vadd.f32 %v809, %v923
    %v1069 = vadd.f32 %v810, %v992
    %v1070 = vadd.f32 %v811, %v994
    %v1071 = vadd.f32 %v812, %v1063
    %v1072 = vadd.f32 %v813, %v1065
    %v1074 = vsel %vm85, %v29, 0
    %v1076 = vsel %vm89, %v21, 0
    %v1078 = vsel %vm89, %v39, 0
    %v1080 = vsel %vm89, %v22, 0
    %v1082 = vsel %vm89, %v40, 0
    %v1084 = vsel %vm89, %v23, 0
    %v1086 = vsel %vm89, %v41, 0
    %1088 = vmatprep.subr.mxu0 %v1078
    %1089 = vmatpush1.msra.mxu0 %v1076
    %1090 = vmatprep.subr.mxu0 0.0
    %1091 = vmatpush1.msra.mxu0 0.0
    %1092 = vmatprep.subr.mxu0 0.0
    %1093 = vmatpush1.msra.mxu0 0.0
    %1094 = vmatprep.subr.mxu0 0.0
    %1095 = vmatpush1.msra.mxu0 0.0
    %1096 = vmatprep.subr.mxu0 0.0
    %1097 = vmatpush1.msra.mxu0 0.0
    %1098 = vmatprep.subr.mxu0 0.0
    %1099 = vmatpush1.msra.mxu0 0.0
    %1100 = vmatprep.subr.mxu0 0.0
    %1101 = vmatpush1.msra.mxu0 0.0
    %1102 = vmatprep.subr.mxu0 0.0
    %1103 = vmatpush1.msra.mxu0 0.0
    %1104 = vmatprep.subr.mxu0 0.0
    %1105 = vmatpush1.msra.mxu0 0.0
    %1106 = vmatprep.subr.mxu0 0.0
    %1107 = vmatpush1.msra.mxu0 0.0
    %1108 = vmatprep.subr.mxu0 0.0
    %1109 = vmatpush1.msra.mxu0 0.0
    %1110 = vmatprep.subr.mxu0 0.0
    %1111 = vmatpush1.msra.mxu0 0.0
    %1112 = vmatprep.subr.mxu0 0.0
    %1113 = vmatpush1.msra.mxu0 0.0
    %1114 = vmatprep.subr.mxu0 0.0
    %1115 = vmatpush1.msra.mxu0 0.0
    %1116 = vmatprep.subr.mxu0 0.0
    %1117 = vmatpush1.msra.mxu0 0.0
    %1118 = vmatprep.subr.mxu0 0.0
    %1119 = vmatpush1.msra.mxu0 0.0
    %1120 = vmatprep.subr.mxu0 0.0
    %1121 = vmatpush1.msra.mxu0 0.0
    %1122 = vmatprep.subr.mxu0 0.0
    %1123 = vmatpush1.msra.mxu0 0.0
    %1124 = vmatprep.subr.mxu0 0.0
    %1125 = vmatpush1.msra.mxu0 0.0
    %1126 = vmatprep.subr.mxu0 0.0
    %1127 = vmatpush1.msra.mxu0 0.0
    %1128 = vmatprep.subr.mxu0 0.0
    %1129 = vmatpush1.msra.mxu0 0.0
    %1130 = vmatprep.subr.mxu0 0.0
    %1131 = vmatpush1.msra.mxu0 0.0
    %1132 = vmatprep.subr.mxu0 0.0
    %1133 = vmatpush1.msra.mxu0 0.0
    %1134 = vmatprep.subr.mxu0 0.0
    %1135 = vmatpush1.msra.mxu0 0.0
    %1136 = vmatprep.subr.mxu0 0.0
    %1137 = vmatpush1.msra.mxu0 0.0
    %1138 = vmatprep.subr.mxu0 0.0
    %1139 = vmatpush1.msra.mxu0 0.0
    %1140 = vmatprep.subr.mxu0 0.0
    %1141 = vmatpush1.msra.mxu0 0.0
    %1142 = vmatprep.subr.mxu0 0.0
    %1143 = vmatpush1.msra.mxu0 0.0
    %1144 = vmatprep.subr.mxu0 0.0
    %1145 = vmatpush1.msra.mxu0 0.0
    %1146 = vmatprep.subr.mxu0 0.0
    %1147 = vmatpush1.msra.mxu0 0.0
    %1148 = vmatprep.subr.mxu0 0.0
    %1149 = vmatpush1.msra.mxu0 0.0
    %1150 = vmatprep.subr.mxu0 0.0
    %1151 = vmatpush1.msra.mxu0 0.0
    %1152 = vmatprep.mubr.f32.mxu0 0.0
    %1153 = vmatmul.mubr.f32.gmra.mrb[0].mxu0 %v1074
    %v1154 = vpop.f32.mrb[0].mxu0
    %v1155 = vadd.f32 0.0, %v1154
    %v1156 = vpop.f32.mrb[0].mxu0
    %v1157 = vadd.f32 0.0, %v1156
    %1158 = vdwg.mxu0
    %1159 = vmatprep.subr.mxu0 %v1082
    %1160 = vmatpush1.msra.mxu0 %v1080
    %1161 = vmatprep.subr.mxu0 0.0
    %1162 = vmatpush1.msra.mxu0 0.0
    %1163 = vmatprep.subr.mxu0 0.0
    %1164 = vmatpush1.msra.mxu0 0.0
    %1165 = vmatprep.subr.mxu0 0.0
    %1166 = vmatpush1.msra.mxu0 0.0
    %1167 = vmatprep.subr.mxu0 0.0
    %1168 = vmatpush1.msra.mxu0 0.0
    %1169 = vmatprep.subr.mxu0 0.0
    %1170 = vmatpush1.msra.mxu0 0.0
    %1171 = vmatprep.subr.mxu0 0.0
    %1172 = vmatpush1.msra.mxu0 0.0
    %1173 = vmatprep.subr.mxu0 0.0
    %1174 = vmatpush1.msra.mxu0 0.0
    %1175 = vmatprep.subr.mxu0 0.0
    %1176 = vmatpush1.msra.mxu0 0.0
    %1177 = vmatprep.subr.mxu0 0.0
    %1178 = vmatpush1.msra.mxu0 0.0
    %1179 = vmatprep.subr.mxu0 0.0
    %1180 = vmatpush1.msra.mxu0 0.0
    %1181 = vmatprep.subr.mxu0 0.0
    %1182 = vmatpush1.msra.mxu0 0.0
    %1183 = vmatprep.subr.mxu0 0.0
    %1184 = vmatpush1.msra.mxu0 0.0
    %1185 = vmatprep.subr.mxu0 0.0
    %1186 = vmatpush1.msra.mxu0 0.0
    %1187 = vmatprep.subr.mxu0 0.0
    %1188 = vmatpush1.msra.mxu0 0.0
    %1189 = vmatprep.subr.mxu0 0.0
    %1190 = vmatpush1.msra.mxu0 0.0
    %1191 = vmatprep.subr.mxu0 0.0
    %1192 = vmatpush1.msra.mxu0 0.0
    %1193 = vmatprep.subr.mxu0 0.0
    %1194 = vmatpush1.msra.mxu0 0.0
    %1195 = vmatprep.subr.mxu0 0.0
    %1196 = vmatpush1.msra.mxu0 0.0
    %1197 = vmatprep.subr.mxu0 0.0
    %1198 = vmatpush1.msra.mxu0 0.0
    %1199 = vmatprep.subr.mxu0 0.0
    %1200 = vmatpush1.msra.mxu0 0.0
    %1201 = vmatprep.subr.mxu0 0.0
    %1202 = vmatpush1.msra.mxu0 0.0
    %1203 = vmatprep.subr.mxu0 0.0
    %1204 = vmatpush1.msra.mxu0 0.0
    %1205 = vmatprep.subr.mxu0 0.0
    %1206 = vmatpush1.msra.mxu0 0.0
    %1207 = vmatprep.subr.mxu0 0.0
    %1208 = vmatpush1.msra.mxu0 0.0
    %1209 = vmatprep.subr.mxu0 0.0
    %1210 = vmatpush1.msra.mxu0 0.0
    %1211 = vmatprep.subr.mxu0 0.0
    %1212 = vmatpush1.msra.mxu0 0.0
    %1213 = vmatprep.subr.mxu0 0.0
    %1214 = vmatpush1.msra.mxu0 0.0
    %1215 = vmatprep.subr.mxu0 0.0
    %1216 = vmatpush1.msra.mxu0 0.0
    %1217 = vmatprep.subr.mxu0 0.0
    %1218 = vmatpush1.msra.mxu0 0.0
    %1219 = vmatprep.subr.mxu0 0.0
    %1220 = vmatpush1.msra.mxu0 0.0
    %1221 = vmatprep.subr.mxu0 0.0
    %1222 = vmatpush1.msra.mxu0 0.0
    %1223 = vmatprep.mubr.f32.mxu0 0.0
    %1224 = vmatmul.mubr.f32.gmra.mrb[0].mxu0 %v1074
    %v1225 = vpop.f32.mrb[0].mxu0
    %v1226 = vadd.f32 0.0, %v1225
    %v1227 = vpop.f32.mrb[0].mxu0
    %v1228 = vadd.f32 0.0, %v1227
    %1229 = vdwg.mxu0
    %1230 = vmatprep.subr.mxu0 %v1086
    %1231 = vmatpush1.msra.mxu0 %v1084
    %1232 = vmatprep.subr.mxu0 0.0
    %1233 = vmatpush1.msra.mxu0 0.0
    %1234 = vmatprep.subr.mxu0 0.0
    %1235 = vmatpush1.msra.mxu0 0.0
    %1236 = vmatprep.subr.mxu0 0.0
    %1237 = vmatpush1.msra.mxu0 0.0
    %1238 = vmatprep.subr.mxu0 0.0
    %1239 = vmatpush1.msra.mxu0 0.0
    %1240 = vmatprep.subr.mxu0 0.0
    %1241 = vmatpush1.msra.mxu0 0.0
    %1242 = vmatprep.subr.mxu0 0.0
    %1243 = vmatpush1.msra.mxu0 0.0
    %1244 = vmatprep.subr.mxu0 0.0
    %1245 = vmatpush1.msra.mxu0 0.0
    %1246 = vmatprep.subr.mxu0 0.0
    %1247 = vmatpush1.msra.mxu0 0.0
    %1248 = vmatprep.subr.mxu0 0.0
    %1249 = vmatpush1.msra.mxu0 0.0
    %1250 = vmatprep.subr.mxu0 0.0
    %1251 = vmatpush1.msra.mxu0 0.0
    %1252 = vmatprep.subr.mxu0 0.0
    %1253 = vmatpush1.msra.mxu0 0.0
    %1254 = vmatprep.subr.mxu0 0.0
    %1255 = vmatpush1.msra.mxu0 0.0
    %1256 = vmatprep.subr.mxu0 0.0
    %1257 = vmatpush1.msra.mxu0 0.0
    %1258 = vmatprep.subr.mxu0 0.0
    %1259 = vmatpush1.msra.mxu0 0.0
    %1260 = vmatprep.subr.mxu0 0.0
    %1261 = vmatpush1.msra.mxu0 0.0
    %1262 = vmatprep.subr.mxu0 0.0
    %1263 = vmatpush1.msra.mxu0 0.0
    %1264 = vmatprep.subr.mxu0 0.0
    %1265 = vmatpush1.msra.mxu0 0.0
    %1266 = vmatprep.subr.mxu0 0.0
    %1267 = vmatpush1.msra.mxu0 0.0
    %1268 = vmatprep.subr.mxu0 0.0
    %1269 = vmatpush1.msra.mxu0 0.0
    %1270 = vmatprep.subr.mxu0 0.0
    %1271 = vmatpush1.msra.mxu0 0.0
    %1272 = vmatprep.subr.mxu0 0.0
    %1273 = vmatpush1.msra.mxu0 0.0
    %1274 = vmatprep.subr.mxu0 0.0
    %1275 = vmatpush1.msra.mxu0 0.0
    %1276 = vmatprep.subr.mxu0 0.0
    %1277 = vmatpush1.msra.mxu0 0.0
    %1278 = vmatprep.subr.mxu0 0.0
    %1279 = vmatpush1.msra.mxu0 0.0
    %1280 = vmatprep.subr.mxu0 0.0
    %1281 = vmatpush1.msra.mxu0 0.0
    %1282 = vmatprep.subr.mxu0 0.0
    %1283 = vmatpush1.msra.mxu0 0.0
    %1284 = vmatprep.subr.mxu0 0.0
    %1285 = vmatpush1.msra.mxu0 0.0
    %1286 = vmatprep.subr.mxu0 0.0
    %1287 = vmatpush1.msra.mxu0 0.0
    %1288 = vmatprep.subr.mxu0 0.0
    %1289 = vmatpush1.msra.mxu0 0.0
    %1290 = vmatprep.subr.mxu0 0.0
    %1291 = vmatpush1.msra.mxu0 0.0
    %1292 = vmatprep.subr.mxu0 0.0
    %1293 = vmatpush1.msra.mxu0 0.0
    %1294 = vmatprep.mubr.f32.mxu0 0.0
    %1295 = vmatmul.mubr.f32.gmra.mrb[0].mxu0 %v1074
    %v1296 = vpop.f32.mrb[0].mxu0
    %v1297 = vadd.f32 0.0, %v1296
    %v1298 = vpop.f32.mrb[0].mxu0
    %v1299 = vadd.f32 0.0, %v1298
    %1300 = vdwg.mxu0
    %v1301 = vadd.f32 %v1067, %v1155
    %v1302 = vadd.f32 %v1068, %v1157
    %v1303 = vadd.f32 %v1069, %v1226
    %v1304 = vadd.f32 %v1070, %v1228
    %v1305 = vadd.f32 %v1071, %v1297
    %v1306 = vadd.f32 %v1072, %v1299
    %1307 = vrot.lane.b32.xlu0 %v21, 127
    %v1308 = vpop.permute.xlu0 %1307
    %1309 = vrot.lane.b32.xlu0 %v39, 127
    %v1310 = vpop.permute.xlu0 %1309
    %1311 = vrot.lane.b32.xlu0 %v22, 127
    %v1312 = vpop.permute.xlu0 %1311
    %1313 = vrot.lane.b32.xlu0 %v40, 127
    %v1314 = vpop.permute.xlu0 %1313
    %1315 = vrot.lane.b32.xlu0 %v23, 127
    %v1316 = vpop.permute.xlu0 %1315
    %1317 = vrot.lane.b32.xlu0 %v41, 127
    %v1318 = vpop.permute.xlu0 %1317
    %vm1319 = vcmp.lt.s32.totalorder %v58, 127
    %v1320 = vsel %vm1319, %v1316, %v1318
    %v1321 = vsel %vm1319, %v1314, %v1316
    %v1322 = vsel %vm1319, %v1312, %v1314
    %v1323 = vsel %vm1319, %v1310, %v1312
    %v1324 = vsel %vm1319, %v1308, %v1310
    %v1325 = vsel %vm1319, %v1318, %v1308
    %v1327 = vsel %vm85, %v30, 0
    %v1330 = vsel %vm89, %v1324, 0
    %v1333 = vsel %vm89, %v1323, 0
    %v1336 = vsel %vm89, %v1322, 0
    %v1339 = vsel %vm89, %v1321, 0
    %v1342 = vsel %vm89, %v1320, 0
    %v1345 = vsel %vm89, %v1325, 0
    %1347 = vmatprep.subr.mxu0 %v1333
    %1348 = vmatpush1.msra.mxu0 %v1330
    %1349 = vmatprep.subr.mxu0 0.0
    %1350 = vmatpush1.msra.mxu0 0.0
    %1351 = vmatprep.subr.mxu0 0.0
    %1352 = vmatpush1.msra.mxu0 0.0
    %1353 = vmatprep.subr.mxu0 0.0
    %1354 = vmatpush1.msra.mxu0 0.0
    %1355 = vmatprep.subr.mxu0 0.0
    %1356 = vmatpush1.msra.mxu0 0.0
    %1357 = vmatprep.subr.mxu0 0.0
    %1358 = vmatpush1.msra.mxu0 0.0
    %1359 = vmatprep.subr.mxu0 0.0
    %1360 = vmatpush1.msra.mxu0 0.0
    %1361 = vmatprep.subr.mxu0 0.0
    %1362 = vmatpush1.msra.mxu0 0.0
    %1363 = vmatprep.subr.mxu0 0.0
    %1364 = vmatpush1.msra.mxu0 0.0
    %1365 = vmatprep.subr.mxu0 0.0
    %1366 = vmatpush1.msra.mxu0 0.0
    %1367 = vmatprep.subr.mxu0 0.0
    %1368 = vmatpush1.msra.mxu0 0.0
    %1369 = vmatprep.subr.mxu0 0.0
    %1370 = vmatpush1.msra.mxu0 0.0
    %1371 = vmatprep.subr.mxu0 0.0
    %1372 = vmatpush1.msra.mxu0 0.0
    %1373 = vmatprep.subr.mxu0 0.0
    %1374 = vmatpush1.msra.mxu0 0.0
    %1375 = vmatprep.subr.mxu0 0.0
    %1376 = vmatpush1.msra.mxu0 0.0
    %1377 = vmatprep.subr.mxu0 0.0
    %1378 = vmatpush1.msra.mxu0 0.0
    %1379 = vmatprep.subr.mxu0 0.0
    %1380 = vmatpush1.msra.mxu0 0.0
    %1381 = vmatprep.subr.mxu0 0.0
    %1382 = vmatpush1.msra.mxu0 0.0
    %1383 = vmatprep.subr.mxu0 0.0
    %1384 = vmatpush1.msra.mxu0 0.0
    %1385 = vmatprep.subr.mxu0 0.0
    %1386 = vmatpush1.msra.mxu0 0.0
    %1387 = vmatprep.subr.mxu0 0.0
    %1388 = vmatpush1.msra.mxu0 0.0
    %1389 = vmatprep.subr.mxu0 0.0
    %1390 = vmatpush1.msra.mxu0 0.0
    %1391 = vmatprep.subr.mxu0 0.0
    %1392 = vmatpush1.msra.mxu0 0.0
    %1393 = vmatprep.subr.mxu0 0.0
    %1394 = vmatpush1.msra.mxu0 0.0
    %1395 = vmatprep.subr.mxu0 0.0
    %1396 = vmatpush1.msra.mxu0 0.0
    %1397 = vmatprep.subr.mxu0 0.0
    %1398 = vmatpush1.msra.mxu0 0.0
    %1399 = vmatprep.subr.mxu0 0.0
    %1400 = vmatpush1.msra.mxu0 0.0
    %1401 = vmatprep.subr.mxu0 0.0
    %1402 = vmatpush1.msra.mxu0 0.0
    %1403 = vmatprep.subr.mxu0 0.0
    %1404 = vmatpush1.msra.mxu0 0.0
    %1405 = vmatprep.subr.mxu0 0.0
    %1406 = vmatpush1.msra.mxu0 0.0
    %1407 = vmatprep.subr.mxu0 0.0
    %1408 = vmatpush1.msra.mxu0 0.0
    %1409 = vmatprep.subr.mxu0 0.0
    %1410 = vmatpush1.msra.mxu0 0.0
    %1411 = vmatprep.mubr.f32.mxu0 0.0
    %1412 = vmatmul.mubr.f32.gmra.mrb[0].mxu0 %v1327
    %v1413 = vpop.f32.mrb[0].mxu0
    %v1414 = vadd.f32 0.0, %v1413
    %v1415 = vpop.f32.mrb[0].mxu0
    %v1416 = vadd.f32 0.0, %v1415
    %1417 = vdwg.mxu0
    %1418 = vmatprep.subr.mxu0 %v1339
    %1419 = vmatpush1.msra.mxu0 %v1336
    %1420 = vmatprep.subr.mxu0 0.0
    %1421 = vmatpush1.msra.mxu0 0.0
    %1422 = vmatprep.subr.mxu0 0.0
    %1423 = vmatpush1.msra.mxu0 0.0
    %1424 = vmatprep.subr.mxu0 0.0
    %1425 = vmatpush1.msra.mxu0 0.0
    %1426 = vmatprep.subr.mxu0 0.0
    %1427 = vmatpush1.msra.mxu0 0.0
    %1428 = vmatprep.subr.mxu0 0.0
    %1429 = vmatpush1.msra.mxu0 0.0
    %1430 = vmatprep.subr.mxu0 0.0
    %1431 = vmatpush1.msra.mxu0 0.0
    %1432 = vmatprep.subr.mxu0 0.0
    %1433 = vmatpush1.msra.mxu0 0.0
    %1434 = vmatprep.subr.mxu0 0.0
    %1435 = vmatpush1.msra.mxu0 0.0
    %1436 = vmatprep.subr.mxu0 0.0
    %1437 = vmatpush1.msra.mxu0 0.0
    %1438 = vmatprep.subr.mxu0 0.0
    %1439 = vmatpush1.msra.mxu0 0.0
    %1440 = vmatprep.subr.mxu0 0.0
    %1441 = vmatpush1.msra.mxu0 0.0
    %1442 = vmatprep.subr.mxu0 0.0
    %1443 = vmatpush1.msra.mxu0 0.0
    %1444 = vmatprep.subr.mxu0 0.0
    %1445 = vmatpush1.msra.mxu0 0.0
    %1446 = vmatprep.subr.mxu0 0.0
    %1447 = vmatpush1.msra.mxu0 0.0
    %1448 = vmatprep.subr.mxu0 0.0
    %1449 = vmatpush1.msra.mxu0 0.0
    %1450 = vmatprep.subr.mxu0 0.0
    %1451 = vmatpush1.msra.mxu0 0.0
    %1452 = vmatprep.subr.mxu0 0.0
    %1453 = vmatpush1.msra.mxu0 0.0
    %1454 = vmatprep.subr.mxu0 0.0
    %1455 = vmatpush1.msra.mxu0 0.0
    %1456 = vmatprep.subr.mxu0 0.0
    %1457 = vmatpush1.msra.mxu0 0.0
    %1458 = vmatprep.subr.mxu0 0.0
    %1459 = vmatpush1.msra.mxu0 0.0
    %1460 = vmatprep.subr.mxu0 0.0
    %1461 = vmatpush1.msra.mxu0 0.0
    %1462 = vmatprep.subr.mxu0 0.0
    %1463 = vmatpush1.msra.mxu0 0.0
    %1464 = vmatprep.subr.mxu0 0.0
    %1465 = vmatpush1.msra.mxu0 0.0
    %1466 = vmatprep.subr.mxu0 0.0
    %1467 = vmatpush1.msra.mxu0 0.0
    %1468 = vmatprep.subr.mxu0 0.0
    %1469 = vmatpush1.msra.mxu0 0.0
    %1470 = vmatprep.subr.mxu0 0.0
    %1471 = vmatpush1.msra.mxu0 0.0
    %1472 = vmatprep.subr.mxu0 0.0
    %1473 = vmatpush1.msra.mxu0 0.0
    %1474 = vmatprep.subr.mxu0 0.0
    %1475 = vmatpush1.msra.mxu0 0.0
    %1476 = vmatprep.subr.mxu0 0.0
    %1477 = vmatpush1.msra.mxu0 0.0
    %1478 = vmatprep.subr.mxu0 0.0
    %1479 = vmatpush1.msra.mxu0 0.0
    %1480 = vmatprep.subr.mxu0 0.0
    %1481 = vmatpush1.msra.mxu0 0.0
    %1482 = vmatprep.mubr.f32.mxu0 0.0
    %1483 = vmatmul.mubr.f32.gmra.mrb[0].mxu0 %v1327
    %v1484 = vpop.f32.mrb[0].mxu0
    %v1485 = vadd.f32 0.0, %v1484
    %v1486 = vpop.f32.mrb[0].mxu0
    %v1487 = vadd.f32 0.0, %v1486
    %1488 = vdwg.mxu0
    %1489 = vmatprep.subr.mxu0 %v1345
    %1490 = vmatpush1.msra.mxu0 %v1342
    %1491 = vmatprep.subr.mxu0 0.0
    %1492 = vmatpush1.msra.mxu0 0.0
    %1493 = vmatprep.subr.mxu0 0.0
    %1494 = vmatpush1.msra.mxu0 0.0
    %1495 = vmatprep.subr.mxu0 0.0
    %1496 = vmatpush1.msra.mxu0 0.0
    %1497 = vmatprep.subr.mxu0 0.0
    %1498 = vmatpush1.msra.mxu0 0.0
    %1499 = vmatprep.subr.mxu0 0.0
    %1500 = vmatpush1.msra.mxu0 0.0
    %1501 = vmatprep.subr.mxu0 0.0
    %1502 = vmatpush1.msra.mxu0 0.0
    %1503 = vmatprep.subr.mxu0 0.0
    %1504 = vmatpush1.msra.mxu0 0.0
    %1505 = vmatprep.subr.mxu0 0.0
    %1506 = vmatpush1.msra.mxu0 0.0
    %1507 = vmatprep.subr.mxu0 0.0
    %1508 = vmatpush1.msra.mxu0 0.0
    %1509 = vmatprep.subr.mxu0 0.0
    %1510 = vmatpush1.msra.mxu0 0.0
    %1511 = vmatprep.subr.mxu0 0.0
    %1512 = vmatpush1.msra.mxu0 0.0
    %1513 = vmatprep.subr.mxu0 0.0
    %1514 = vmatpush1.msra.mxu0 0.0
    %1515 = vmatprep.subr.mxu0 0.0
    %1516 = vmatpush1.msra.mxu0 0.0
    %1517 = vmatprep.subr.mxu0 0.0
    %1518 = vmatpush1.msra.mxu0 0.0
    %1519 = vmatprep.subr.mxu0 0.0
    %1520 = vmatpush1.msra.mxu0 0.0
    %1521 = vmatprep.subr.mxu0 0.0
    %1522 = vmatpush1.msra.mxu0 0.0
    %1523 = vmatprep.subr.mxu0 0.0
    %1524 = vmatpush1.msra.mxu0 0.0
    %1525 = vmatprep.subr.mxu0 0.0
    %1526 = vmatpush1.msra.mxu0 0.0
    %1527 = vmatprep.subr.mxu0 0.0
    %1528 = vmatpush1.msra.mxu0 0.0
    %1529 = vmatprep.subr.mxu0 0.0
    %1530 = vmatpush1.msra.mxu0 0.0
    %1531 = vmatprep.subr.mxu0 0.0
    %1532 = vmatpush1.msra.mxu0 0.0
    %1533 = vmatprep.subr.mxu0 0.0
    %1534 = vmatpush1.msra.mxu0 0.0
    %1535 = vmatprep.subr.mxu0 0.0
    %1536 = vmatpush1.msra.mxu0 0.0
    %1537 = vmatprep.subr.mxu0 0.0
    %1538 = vmatpush1.msra.mxu0 0.0
    %1539 = vmatprep.subr.mxu0 0.0
    %1540 = vmatpush1.msra.mxu0 0.0
    %1541 = vmatprep.subr.mxu0 0.0
    %1542 = vmatpush1.msra.mxu0 0.0
    %1543 = vmatprep.subr.mxu0 0.0
    %1544 = vmatpush1.msra.mxu0 0.0
    %1545 = vmatprep.subr.mxu0 0.0
    %1546 = vmatpush1.msra.mxu0 0.0
    %1547 = vmatprep.subr.mxu0 0.0
    %1548 = vmatpush1.msra.mxu0 0.0
    %1549 = vmatprep.subr.mxu0 0.0
    %1550 = vmatpush1.msra.mxu0 0.0
    %1551 = vmatprep.subr.mxu0 0.0
    %1552 = vmatpush1.msra.mxu0 0.0
    %1553 = vmatprep.mubr.f32.mxu0 0.0
    %1554 = vmatmul.mubr.f32.gmra.mrb[0].mxu0 %v1327
    %v1555 = vpop.f32.mrb[0].mxu0
    %v1556 = vadd.f32 0.0, %v1555
    %v1557 = vpop.f32.mrb[0].mxu0
    %v1558 = vadd.f32 0.0, %v1557
    %1559 = vdwg.mxu0
    %v1560 = vadd.f32 %v1301, %v1414
    %v1561 = vadd.f32 %v1302, %v1416
    %v1562 = vadd.f32 %v1303, %v1485
    %v1563 = vadd.f32 %v1304, %v1487
    %v1564 = vadd.f32 %v1305, %v1556
    %v1565 = vadd.f32 %v1306, %v1558
    %1566 = vrot.lane.b32.xlu0 %v21, 111
    %v1567 = vpop.permute.xlu0 %1566
    %1568 = vrot.lane.b32.xlu0 %v39, 111
    %v1569 = vpop.permute.xlu0 %1568
    %1570 = vrot.lane.b32.xlu0 %v22, 111
    %v1571 = vpop.permute.xlu0 %1570
    %1572 = vrot.lane.b32.xlu0 %v40, 111
    %v1573 = vpop.permute.xlu0 %1572
    %1574 = vrot.lane.b32.xlu0 %v23, 111
    %v1575 = vpop.permute.xlu0 %1574
    %1576 = vrot.lane.b32.xlu0 %v41, 111
    %v1577 = vpop.permute.xlu0 %1576
    %vm1578 = vcmp.lt.s32.totalorder %v58, 111
    %v1579 = vsel %vm1578, %v1575, %v1577
    %v1580 = vsel %vm1578, %v1573, %v1575
    %v1581 = vsel %vm1578, %v1571, %v1573
    %v1582 = vsel %vm1578, %v1569, %v1571
    %v1583 = vsel %vm1578, %v1567, %v1569
    %v1584 = vsel %vm1578, %v1577, %v1567
    %v1586 = vsel %vm85, %v31, 0
    %v1589 = vsel %vm89, %v1583, 0
    %v1592 = vsel %vm89, %v1582, 0
    %v1595 = vsel %vm89, %v1581, 0
    %v1598 = vsel %vm89, %v1580, 0
    %v1601 = vsel %vm89, %v1579, 0
    %v1604 = vsel %vm89, %v1584, 0
    %1606 = vmatprep.subr.mxu0 %v1592
    %1607 = vmatpush1.msra.mxu0 %v1589
    %1608 = vmatprep.subr.mxu0 0.0
    %1609 = vmatpush1.msra.mxu0 0.0
    %1610 = vmatprep.subr.mxu0 0.0
    %1611 = vmatpush1.msra.mxu0 0.0
    %1612 = vmatprep.subr.mxu0 0.0
    %1613 = vmatpush1.msra.mxu0 0.0
    %1614 = vmatprep.subr.mxu0 0.0
    %1615 = vmatpush1.msra.mxu0 0.0
    %1616 = vmatprep.subr.mxu0 0.0
    %1617 = vmatpush1.msra.mxu0 0.0
    %1618 = vmatprep.subr.mxu0 0.0
    %1619 = vmatpush1.msra.mxu0 0.0
    %1620 = vmatprep.subr.mxu0 0.0
    %1621 = vmatpush1.msra.mxu0 0.0
    %1622 = vmatprep.subr.mxu0 0.0
    %1623 = vmatpush1.msra.mxu0 0.0
    %1624 = vmatprep.subr.mxu0 0.0
    %1625 = vmatpush1.msra.mxu0 0.0
    %1626 = vmatprep.subr.mxu0 0.0
    %1627 = vmatpush1.msra.mxu0 0.0
    %1628 = vmatprep.subr.mxu0 0.0
    %1629 = vmatpush1.msra.mxu0 0.0
    %1630 = vmatprep.subr.mxu0 0.0
    %1631 = vmatpush1.msra.mxu0 0.0
    %1632 = vmatprep.subr.mxu0 0.0
    %1633 = vmatpush1.msra.mxu0 0.0
    %1634 = vmatprep.subr.mxu0 0.0
    %1635 = vmatpush1.msra.mxu0 0.0
    %1636 = vmatprep.subr.mxu0 0.0
    %1637 = vmatpush1.msra.mxu0 0.0
    %1638 = vmatprep.subr.mxu0 0.0
    %1639 = vmatpush1.msra.mxu0 0.0
    %1640 = vmatprep.subr.mxu0 0.0
    %1641 = vmatpush1.msra.mxu0 0.0
    %1642 = vmatprep.subr.mxu0 0.0
    %1643 = vmatpush1.msra.mxu0 0.0
    %1644 = vmatprep.subr.mxu0 0.0
    %1645 = vmatpush1.msra.mxu0 0.0
    %1646 = vmatprep.subr.mxu0 0.0
    %1647 = vmatpush1.msra.mxu0 0.0
    %1648 = vmatprep.subr.mxu0 0.0
    %1649 = vmatpush1.msra.mxu0 0.0
    %1650 = vmatprep.subr.mxu0 0.0
    %1651 = vmatpush1.msra.mxu0 0.0
    %1652 = vmatprep.subr.mxu0 0.0
    %1653 = vmatpush1.msra.mxu0 0.0
    %1654 = vmatprep.subr.mxu0 0.0
    %1655 = vmatpush1.msra.mxu0 0.0
    %1656 = vmatprep.subr.mxu0 0.0
    %1657 = vmatpush1.msra.mxu0 0.0
    %1658 = vmatprep.subr.mxu0 0.0
    %1659 = vmatpush1.msra.mxu0 0.0
    %1660 = vmatprep.subr.mxu0 0.0
    %1661 = vmatpush1.msra.mxu0 0.0
    %1662 = vmatprep.subr.mxu0 0.0
    %1663 = vmatpush1.msra.mxu0 0.0
    %1664 = vmatprep.subr.mxu0 0.0
    %1665 = vmatpush1.msra.mxu0 0.0
    %1666 = vmatprep.subr.mxu0 0.0
    %1667 = vmatpush1.msra.mxu0 0.0
    %1668 = vmatprep.subr.mxu0 0.0
    %1669 = vmatpush1.msra.mxu0 0.0
    %1670 = vmatprep.mubr.f32.mxu0 0.0
    %1671 = vmatmul.mubr.f32.gmra.mrb[0].mxu0 %v1586
    %v1672 = vpop.f32.mrb[0].mxu0
    %v1673 = vadd.f32 0.0, %v1672
    %v1674 = vpop.f32.mrb[0].mxu0
    %v1675 = vadd.f32 0.0, %v1674
    %1676 = vdwg.mxu0
    %1677 = vmatprep.subr.mxu0 %v1598
    %1678 = vmatpush1.msra.mxu0 %v1595
    %1679 = vmatprep.subr.mxu0 0.0
    %1680 = vmatpush1.msra.mxu0 0.0
    %1681 = vmatprep.subr.mxu0 0.0
    %1682 = vmatpush1.msra.mxu0 0.0
    %1683 = vmatprep.subr.mxu0 0.0
    %1684 = vmatpush1.msra.mxu0 0.0
    %1685 = vmatprep.subr.mxu0 0.0
    %1686 = vmatpush1.msra.mxu0 0.0
    %1687 = vmatprep.subr.mxu0 0.0
    %1688 = vmatpush1.msra.mxu0 0.0
    %1689 = vmatprep.subr.mxu0 0.0
    %1690 = vmatpush1.msra.mxu0 0.0
    %1691 = vmatprep.subr.mxu0 0.0
    %1692 = vmatpush1.msra.mxu0 0.0
    %1693 = vmatprep.subr.mxu0 0.0
    %1694 = vmatpush1.msra.mxu0 0.0
    %1695 = vmatprep.subr.mxu0 0.0
    %1696 = vmatpush1.msra.mxu0 0.0
    %1697 = vmatprep.subr.mxu0 0.0
    %1698 = vmatpush1.msra.mxu0 0.0
    %1699 = vmatprep.subr.mxu0 0.0
    %1700 = vmatpush1.msra.mxu0 0.0
    %1701 = vmatprep.subr.mxu0 0.0
    %1702 = vmatpush1.msra.mxu0 0.0
    %1703 = vmatprep.subr.mxu0 0.0
    %1704 = vmatpush1.msra.mxu0 0.0
    %1705 = vmatprep.subr.mxu0 0.0
    %1706 = vmatpush1.msra.mxu0 0.0
    %1707 = vmatprep.subr.mxu0 0.0
    %1708 = vmatpush1.msra.mxu0 0.0
    %1709 = vmatprep.subr.mxu0 0.0
    %1710 = vmatpush1.msra.mxu0 0.0
    %1711 = vmatprep.subr.mxu0 0.0
    %1712 = vmatpush1.msra.mxu0 0.0
    %1713 = vmatprep.subr.mxu0 0.0
    %1714 = vmatpush1.msra.mxu0 0.0
    %1715 = vmatprep.subr.mxu0 0.0
    %1716 = vmatpush1.msra.mxu0 0.0
    %1717 = vmatprep.subr.mxu0 0.0
    %1718 = vmatpush1.msra.mxu0 0.0
    %1719 = vmatprep.subr.mxu0 0.0
    %1720 = vmatpush1.msra.mxu0 0.0
    %1721 = vmatprep.subr.mxu0 0.0
    %1722 = vmatpush1.msra.mxu0 0.0
    %1723 = vmatprep.subr.mxu0 0.0
    %1724 = vmatpush1.msra.mxu0 0.0
    %1725 = vmatprep.subr.mxu0 0.0
    %1726 = vmatpush1.msra.mxu0 0.0
    %1727 = vmatprep.subr.mxu0 0.0
    %1728 = vmatpush1.msra.mxu0 0.0
    %1729 = vmatprep.subr.mxu0 0.0
    %1730 = vmatpush1.msra.mxu0 0.0
    %1731 = vmatprep.subr.mxu0 0.0
    %1732 = vmatpush1.msra.mxu0 0.0
    %1733 = vmatprep.subr.mxu0 0.0
    %1734 = vmatpush1.msra.mxu0 0.0
    %1735 = vmatprep.subr.mxu0 0.0
    %1736 = vmatpush1.msra.mxu0 0.0
    %1737 = vmatprep.subr.mxu0 0.0
    %1738 = vmatpush1.msra.mxu0 0.0
    %1739 = vmatprep.subr.mxu0 0.0
    %1740 = vmatpush1.msra.mxu0 0.0
    %1741 = vmatprep.mubr.f32.mxu0 0.0
    %1742 = vmatmul.mubr.f32.gmra.mrb[0].mxu0 %v1586
    %v1743 = vpop.f32.mrb[0].mxu0
    %v1744 = vadd.f32 0.0, %v1743
    %v1745 = vpop.f32.mrb[0].mxu0
    %v1746 = vadd.f32 0.0, %v1745
    %1747 = vdwg.mxu0
    %1748 = vmatprep.subr.mxu0 %v1604
    %1749 = vmatpush1.msra.mxu0 %v1601
    %1750 = vmatprep.subr.mxu0 0.0
    %1751 = vmatpush1.msra.mxu0 0.0
    %1752 = vmatprep.subr.mxu0 0.0
    %1753 = vmatpush1.msra.mxu0 0.0
    %1754 = vmatprep.subr.mxu0 0.0
    %1755 = vmatpush1.msra.mxu0 0.0
    %1756 = vmatprep.subr.mxu0 0.0
    %1757 = vmatpush1.msra.mxu0 0.0
    %1758 = vmatprep.subr.mxu0 0.0
    %1759 = vmatpush1.msra.mxu0 0.0
    %1760 = vmatprep.subr.mxu0 0.0
    %1761 = vmatpush1.msra.mxu0 0.0
    %1762 = vmatprep.subr.mxu0 0.0
    %1763 = vmatpush1.msra.mxu0 0.0
    %1764 = vmatprep.subr.mxu0 0.0
    %1765 = vmatpush1.msra.mxu0 0.0
    %1766 = vmatprep.subr.mxu0 0.0
    %1767 = vmatpush1.msra.mxu0 0.0
    %1768 = vmatprep.subr.mxu0 0.0
    %1769 = vmatpush1.msra.mxu0 0.0
    %1770 = vmatprep.subr.mxu0 0.0
    %1771 = vmatpush1.msra.mxu0 0.0
    %1772 = vmatprep.subr.mxu0 0.0
    %1773 = vmatpush1.msra.mxu0 0.0
    %1774 = vmatprep.subr.mxu0 0.0
    %1775 = vmatpush1.msra.mxu0 0.0
    %1776 = vmatprep.subr.mxu0 0.0
    %1777 = vmatpush1.msra.mxu0 0.0
    %1778 = vmatprep.subr.mxu0 0.0
    %1779 = vmatpush1.msra.mxu0 0.0
    %1780 = vmatprep.subr.mxu0 0.0
    %1781 = vmatpush1.msra.mxu0 0.0
    %1782 = vmatprep.subr.mxu0 0.0
    %1783 = vmatpush1.msra.mxu0 0.0
    %1784 = vmatprep.subr.mxu0 0.0
    %1785 = vmatpush1.msra.mxu0 0.0
    %1786 = vmatprep.subr.mxu0 0.0
    %1787 = vmatpush1.msra.mxu0 0.0
    %1788 = vmatprep.subr.mxu0 0.0
    %1789 = vmatpush1.msra.mxu0 0.0
    %1790 = vmatprep.subr.mxu0 0.0
    %1791 = vmatpush1.msra.mxu0 0.0
    %1792 = vmatprep.subr.mxu0 0.0
    %1793 = vmatpush1.msra.mxu0 0.0
    %1794 = vmatprep.subr.mxu0 0.0
    %1795 = vmatpush1.msra.mxu0 0.0
    %1796 = vmatprep.subr.mxu0 0.0
    %1797 = vmatpush1.msra.mxu0 0.0
    %1798 = vmatprep.subr.mxu0 0.0
    %1799 = vmatpush1.msra.mxu0 0.0
    %1800 = vmatprep.subr.mxu0 0.0
    %1801 = vmatpush1.msra.mxu0 0.0
    %1802 = vmatprep.subr.mxu0 0.0
    %1803 = vmatpush1.msra.mxu0 0.0
    %1804 = vmatprep.subr.mxu0 0.0
    %1805 = vmatpush1.msra.mxu0 0.0
    %1806 = vmatprep.subr.mxu0 0.0
    %1807 = vmatpush1.msra.mxu0 0.0
    %1808 = vmatprep.subr.mxu0 0.0
    %1809 = vmatpush1.msra.mxu0 0.0
    %1810 = vmatprep.subr.mxu0 0.0
    %1811 = vmatpush1.msra.mxu0 0.0
    %1812 = vmatprep.mubr.f32.mxu0 0.0
    %1813 = vmatmul.mubr.f32.gmra.mrb[0].mxu0 %v1586
    %v1814 = vpop.f32.mrb[0].mxu0
    %v1815 = vadd.f32 0.0, %v1814
    %v1816 = vpop.f32.mrb[0].mxu0
    %v1817 = vadd.f32 0.0, %v1816
    %1818 = vdwg.mxu0
    %v1819 = vadd.f32 %v1560, %v1673
    %v1820 = vadd.f32 %v1561, %v1675
    %v1821 = vadd.f32 %v1562, %v1744
    %v1822 = vadd.f32 %v1563, %v1746
    %v1823 = vadd.f32 %v1564, %v1815
    %v1824 = vadd.f32 %v1565, %v1817
    %1825 = vrot.lane.b32.xlu0 %v21, 110
    %v1826 = vpop.permute.xlu0 %1825
    %1827 = vrot.lane.b32.xlu0 %v39, 110
    %v1828 = vpop.permute.xlu0 %1827
    %1829 = vrot.lane.b32.xlu0 %v22, 110
    %v1830 = vpop.permute.xlu0 %1829
    %1831 = vrot.lane.b32.xlu0 %v40, 110
    %v1832 = vpop.permute.xlu0 %1831
    %1833 = vrot.lane.b32.xlu0 %v23, 110
    %v1834 = vpop.permute.xlu0 %1833
    %1835 = vrot.lane.b32.xlu0 %v41, 110
    %v1836 = vpop.permute.xlu0 %1835
    %vm1837 = vcmp.lt.s32.totalorder %v58, 110
    %v1838 = vsel %vm1837, %v1834, %v1836
    %v1839 = vsel %vm1837, %v1832, %v1834
    %v1840 = vsel %vm1837, %v1830, %v1832
    %v1841 = vsel %vm1837, %v1828, %v1830
    %v1842 = vsel %vm1837, %v1826, %v1828
    %v1843 = vsel %vm1837, %v1836, %v1826
    %v1845 = vsel %vm85, %v32, 0
    %v1848 = vsel %vm89, %v1842, 0
    %v1851 = vsel %vm89, %v1841, 0
    %v1854 = vsel %vm89, %v1840, 0
    %v1857 = vsel %vm89, %v1839, 0
    %v1860 = vsel %vm89, %v1838, 0
    %v1863 = vsel %vm89, %v1843, 0
    %1865 = vmatprep.subr.mxu0 %v1851
    %1866 = vmatpush1.msra.mxu0 %v1848
    %1867 = vmatprep.subr.mxu0 0.0
    %1868 = vmatpush1.msra.mxu0 0.0
    %1869 = vmatprep.subr.mxu0 0.0
    %1870 = vmatpush1.msra.mxu0 0.0
    %1871 = vmatprep.subr.mxu0 0.0
    %1872 = vmatpush1.msra.mxu0 0.0
    %1873 = vmatprep.subr.mxu0 0.0
    %1874 = vmatpush1.msra.mxu0 0.0
    %1875 = vmatprep.subr.mxu0 0.0
    %1876 = vmatpush1.msra.mxu0 0.0
    %1877 = vmatprep.subr.mxu0 0.0
    %1878 = vmatpush1.msra.mxu0 0.0
    %1879 = vmatprep.subr.mxu0 0.0
    %1880 = vmatpush1.msra.mxu0 0.0
    %1881 = vmatprep.subr.mxu0 0.0
    %1882 = vmatpush1.msra.mxu0 0.0
    %1883 = vmatprep.subr.mxu0 0.0
    %1884 = vmatpush1.msra.mxu0 0.0
    %1885 = vmatprep.subr.mxu0 0.0
    %1886 = vmatpush1.msra.mxu0 0.0
    %1887 = vmatprep.subr.mxu0 0.0
    %1888 = vmatpush1.msra.mxu0 0.0
    %1889 = vmatprep.subr.mxu0 0.0
    %1890 = vmatpush1.msra.mxu0 0.0
    %1891 = vmatprep.subr.mxu0 0.0
    %1892 = vmatpush1.msra.mxu0 0.0
    %1893 = vmatprep.subr.mxu0 0.0
    %1894 = vmatpush1.msra.mxu0 0.0
    %1895 = vmatprep.subr.mxu0 0.0
    %1896 = vmatpush1.msra.mxu0 0.0
    %1897 = vmatprep.subr.mxu0 0.0
    %1898 = vmatpush1.msra.mxu0 0.0
    %1899 = vmatprep.subr.mxu0 0.0
    %1900 = vmatpush1.msra.mxu0 0.0
    %1901 = vmatprep.subr.mxu0 0.0
    %1902 = vmatpush1.msra.mxu0 0.0
    %1903 = vmatprep.subr.mxu0 0.0
    %1904 = vmatpush1.msra.mxu0 0.0
    %1905 = vmatprep.subr.mxu0 0.0
    %1906 = vmatpush1.msra.mxu0 0.0
    %1907 = vmatprep.subr.mxu0 0.0
    %1908 = vmatpush1.msra.mxu0 0.0
    %1909 = vmatprep.subr.mxu0 0.0
    %1910 = vmatpush1.msra.mxu0 0.0
    %1911 = vmatprep.subr.mxu0 0.0
    %1912 = vmatpush1.msra.mxu0 0.0
    %1913 = vmatprep.subr.mxu0 0.0
    %1914 = vmatpush1.msra.mxu0 0.0
    %1915 = vmatprep.subr.mxu0 0.0
    %1916 = vmatpush1.msra.mxu0 0.0
    %1917 = vmatprep.subr.mxu0 0.0
    %1918 = vmatpush1.msra.mxu0 0.0
    %1919 = vmatprep.subr.mxu0 0.0
    %1920 = vmatpush1.msra.mxu0 0.0
    %1921 = vmatprep.subr.mxu0 0.0
    %1922 = vmatpush1.msra.mxu0 0.0
    %1923 = vmatprep.subr.mxu0 0.0
    %1924 = vmatpush1.msra.mxu0 0.0
    %1925 = vmatprep.subr.mxu0 0.0
    %1926 = vmatpush1.msra.mxu0 0.0
    %1927 = vmatprep.subr.mxu0 0.0
    %1928 = vmatpush1.msra.mxu0 0.0
    %1929 = vmatprep.mubr.f32.mxu0 0.0
    %1930 = vmatmul.mubr.f32.gmra.mrb[0].mxu0 %v1845
    %v1931 = vpop.f32.mrb[0].mxu0
    %v1932 = vadd.f32 0.0, %v1931
    %v1933 = vpop.f32.mrb[0].mxu0
    %v1934 = vadd.f32 0.0, %v1933
    %1935 = vdwg.mxu0
    %1936 = vmatprep.subr.mxu0 %v1857
    %1937 = vmatpush1.msra.mxu0 %v1854
    %1938 = vmatprep.subr.mxu0 0.0
    %1939 = vmatpush1.msra.mxu0 0.0
    %1940 = vmatprep.subr.mxu0 0.0
    %1941 = vmatpush1.msra.mxu0 0.0
    %1942 = vmatprep.subr.mxu0 0.0
    %1943 = vmatpush1.msra.mxu0 0.0
    %1944 = vmatprep.subr.mxu0 0.0
    %1945 = vmatpush1.msra.mxu0 0.0
    %1946 = vmatprep.subr.mxu0 0.0
    %1947 = vmatpush1.msra.mxu0 0.0
    %1948 = vmatprep.subr.mxu0 0.0
    %1949 = vmatpush1.msra.mxu0 0.0
    %1950 = vmatprep.subr.mxu0 0.0
    %1951 = vmatpush1.msra.mxu0 0.0
    %1952 = vmatprep.subr.mxu0 0.0
    %1953 = vmatpush1.msra.mxu0 0.0
    %1954 = vmatprep.subr.mxu0 0.0
    %1955 = vmatpush1.msra.mxu0 0.0
    %1956 = vmatprep.subr.mxu0 0.0
    %1957 = vmatpush1.msra.mxu0 0.0
    %1958 = vmatprep.subr.mxu0 0.0
    %1959 = vmatpush1.msra.mxu0 0.0
    %1960 = vmatprep.subr.mxu0 0.0
    %1961 = vmatpush1.msra.mxu0 0.0
    %1962 = vmatprep.subr.mxu0 0.0
    %1963 = vmatpush1.msra.mxu0 0.0
    %1964 = vmatprep.subr.mxu0 0.0
    %1965 = vmatpush1.msra.mxu0 0.0
    %1966 = vmatprep.subr.mxu0 0.0
    %1967 = vmatpush1.msra.mxu0 0.0
    %1968 = vmatprep.subr.mxu0 0.0
    %1969 = vmatpush1.msra.mxu0 0.0
    %1970 = vmatprep.subr.mxu0 0.0
    %1971 = vmatpush1.msra.mxu0 0.0
    %1972 = vmatprep.subr.mxu0 0.0
    %1973 = vmatpush1.msra.mxu0 0.0
    %1974 = vmatprep.subr.mxu0 0.0
    %1975 = vmatpush1.msra.mxu0 0.0
    %1976 = vmatprep.subr.mxu0 0.0
    %1977 = vmatpush1.msra.mxu0 0.0
    %1978 = vmatprep.subr.mxu0 0.0
    %1979 = vmatpush1.msra.mxu0 0.0
    %1980 = vmatprep.subr.mxu0 0.0
    %1981 = vmatpush1.msra.mxu0 0.0
    %1982 = vmatprep.subr.mxu0 0.0
    %1983 = vmatpush1.msra.mxu0 0.0
    %1984 = vmatprep.subr.mxu0 0.0
    %1985 = vmatpush1.msra.mxu0 0.0
    %1986 = vmatprep.subr.mxu0 0.0
    %1987 = vmatpush1.msra.mxu0 0.0
    %1988 = vmatprep.subr.mxu0 0.0
    %1989 = vmatpush1.msra.mxu0 0.0
    %1990 = vmatprep.subr.mxu0 0.0
    %1991 = vmatpush1.msra.mxu0 0.0
    %1992 = vmatprep.subr.mxu0 0.0
    %1993 = vmatpush1.msra.mxu0 0.0
    %1994 = vmatprep.subr.mxu0 0.0
    %1995 = vmatpush1.msra.mxu0 0.0
    %1996 = vmatprep.subr.mxu0 0.0
    %1997 = vmatpush1.msra.mxu0 0.0
    %1998 = vmatprep.subr.mxu0 0.0
    %1999 = vmatpush1.msra.mxu0 0.0
    %2000 = vmatprep.mubr.f32.mxu0 0.0
    %2001 = vmatmul.mubr.f32.gmra.mrb[0].mxu0 %v1845
    %v2002 = vpop.f32.mrb[0].mxu0
    %v2003 = vadd.f32 0.0, %v2002
    %v2004 = vpop.f32.mrb[0].mxu0
    %v2005 = vadd.f32 0.0, %v2004
    %2006 = vdwg.mxu0
    %2007 = vmatprep.subr.mxu0 %v1863
    %2008 = vmatpush1.msra.mxu0 %v1860
    %2009 = vmatprep.subr.mxu0 0.0
    %2010 = vmatpush1.msra.mxu0 0.0
    %2011 = vmatprep.subr.mxu0 0.0
    %2012 = vmatpush1.msra.mxu0 0.0
    %2013 = vmatprep.subr.mxu0 0.0
    %2014 = vmatpush1.msra.mxu0 0.0
    %2015 = vmatprep.subr.mxu0 0.0
    %2016 = vmatpush1.msra.mxu0 0.0
    %2017 = vmatprep.subr.mxu0 0.0
    %2018 = vmatpush1.msra.mxu0 0.0
    %2019 = vmatprep.subr.mxu0 0.0
    %2020 = vmatpush1.msra.mxu0 0.0
    %2021 = vmatprep.subr.mxu0 0.0
    %2022 = vmatpush1.msra.mxu0 0.0
    %2023 = vmatprep.subr.mxu0 0.0
    %2024 = vmatpush1.msra.mxu0 0.0
    %2025 = vmatprep.subr.mxu0 0.0
    %2026 = vmatpush1.msra.mxu0 0.0
    %2027 = vmatprep.subr.mxu0 0.0
    %2028 = vmatpush1.msra.mxu0 0.0
    %2029 = vmatprep.subr.mxu0 0.0
    %2030 = vmatpush1.msra.mxu0 0.0
    %2031 = vmatprep.subr.mxu0 0.0
    %2032 = vmatpush1.msra.mxu0 0.0
    %2033 = vmatprep.subr.mxu0 0.0
    %2034 = vmatpush1.msra.mxu0 0.0
    %2035 = vmatprep.subr.mxu0 0.0
    %2036 = vmatpush1.msra.mxu0 0.0
    %2037 = vmatprep.subr.mxu0 0.0
    %2038 = vmatpush1.msra.mxu0 0.0
    %2039 = vmatprep.subr.mxu0 0.0
    %2040 = vmatpush1.msra.mxu0 0.0
    %2041 = vmatprep.subr.mxu0 0.0
    %2042 = vmatpush1.msra.mxu0 0.0
    %2043 = vmatprep.subr.mxu0 0.0
    %2044 = vmatpush1.msra.mxu0 0.0
    %2045 = vmatprep.subr.mxu0 0.0
    %2046 = vmatpush1.msra.mxu0 0.0
    %2047 = vmatprep.subr.mxu0 0.0
    %2048 = vmatpush1.msra.mxu0 0.0
    %2049 = vmatprep.subr.mxu0 0.0
    %2050 = vmatpush1.msra.mxu0 0.0
    %2051 = vmatprep.subr.mxu0 0.0
    %2052 = vmatpush1.msra.mxu0 0.0
    %2053 = vmatprep.subr.mxu0 0.0
    %2054 = vmatpush1.msra.mxu0 0.0
    %2055 = vmatprep.subr.mxu0 0.0
    %2056 = vmatpush1.msra.mxu0 0.0
    %2057 = vmatprep.subr.mxu0 0.0
    %2058 = vmatpush1.msra.mxu0 0.0
    %2059 = vmatprep.subr.mxu0 0.0
    %2060 = vmatpush1.msra.mxu0 0.0
    %2061 = vmatprep.subr.mxu0 0.0
    %2062 = vmatpush1.msra.mxu0 0.0
    %2063 = vmatprep.subr.mxu0 0.0
    %2064 = vmatpush1.msra.mxu0 0.0
    %2065 = vmatprep.subr.mxu0 0.0
    %2066 = vmatpush1.msra.mxu0 0.0
    %2067 = vmatprep.subr.mxu0 0.0
    %2068 = vmatpush1.msra.mxu0 0.0
    %2069 = vmatprep.subr.mxu0 0.0
    %2070 = vmatpush1.msra.mxu0 0.0
    %2071 = vmatprep.mubr.f32.mxu0 0.0
    %2072 = vmatmul.mubr.f32.gmra.mrb[0].mxu0 %v1845
    %v2073 = vpop.f32.mrb[0].mxu0
    %v2074 = vadd.f32 0.0, %v2073
    %v2075 = vpop.f32.mrb[0].mxu0
    %v2076 = vadd.f32 0.0, %v2075
    %2077 = vdwg.mxu0
    %v2078 = vadd.f32 %v1819, %v1932
    %v2079 = vadd.f32 %v1820, %v1934
    %v2080 = vadd.f32 %v1821, %v2003
    %v2081 = vadd.f32 %v1822, %v2005
    %v2082 = vadd.f32 %v1823, %v2074
    %v2083 = vadd.f32 %v1824, %v2076
    %2084 = vrot.lane.b32.xlu0 %v21, 109
    %v2085 = vpop.permute.xlu0 %2084
    %2086 = vrot.lane.b32.xlu0 %v39, 109
    %v2087 = vpop.permute.xlu0 %2086
    %2088 = vrot.lane.b32.xlu0 %v22, 109
    %v2089 = vpop.permute.xlu0 %2088
    %2090 = vrot.lane.b32.xlu0 %v40, 109
    %v2091 = vpop.permute.xlu0 %2090
    %2092 = vrot.lane.b32.xlu0 %v23, 109
    %v2093 = vpop.permute.xlu0 %2092
    %2094 = vrot.lane.b32.xlu0 %v41, 109
    %v2095 = vpop.permute.xlu0 %2094
    %vm2096 = vcmp.lt.s32.totalorder %v58, 109
    %v2097 = vsel %vm2096, %v2093, %v2095
    %v2098 = vsel %vm2096, %v2091, %v2093
    %v2099 = vsel %vm2096, %v2089, %v2091
    %v2100 = vsel %vm2096, %v2087, %v2089
    %v2101 = vsel %vm2096, %v2085, %v2087
    %v2102 = vsel %vm2096, %v2095, %v2085
    %v2104 = vsel %vm85, %v33, 0
    %v2107 = vsel %vm89, %v2101, 0
    %v2110 = vsel %vm89, %v2100, 0
    %v2113 = vsel %vm89, %v2099, 0
    %v2116 = vsel %vm89, %v2098, 0
    %v2119 = vsel %vm89, %v2097, 0
    %v2122 = vsel %vm89, %v2102, 0
    %2124 = vmatprep.subr.mxu0 %v2110
    %2125 = vmatpush1.msra.mxu0 %v2107
    %2126 = vmatprep.subr.mxu0 0.0
    %2127 = vmatpush1.msra.mxu0 0.0
    %2128 = vmatprep.subr.mxu0 0.0
    %2129 = vmatpush1.msra.mxu0 0.0
    %2130 = vmatprep.subr.mxu0 0.0
    %2131 = vmatpush1.msra.mxu0 0.0
    %2132 = vmatprep.subr.mxu0 0.0
    %2133 = vmatpush1.msra.mxu0 0.0
    %2134 = vmatprep.subr.mxu0 0.0
    %2135 = vmatpush1.msra.mxu0 0.0
    %2136 = vmatprep.subr.mxu0 0.0
    %2137 = vmatpush1.msra.mxu0 0.0
    %2138 = vmatprep.subr.mxu0 0.0
    %2139 = vmatpush1.msra.mxu0 0.0
    %2140 = vmatprep.subr.mxu0 0.0
    %2141 = vmatpush1.msra.mxu0 0.0
    %2142 = vmatprep.subr.mxu0 0.0
    %2143 = vmatpush1.msra.mxu0 0.0
    %2144 = vmatprep.subr.mxu0 0.0
    %2145 = vmatpush1.msra.mxu0 0.0
    %2146 = vmatprep.subr.mxu0 0.0
    %2147 = vmatpush1.msra.mxu0 0.0
    %2148 = vmatprep.subr.mxu0 0.0
    %2149 = vmatpush1.msra.mxu0 0.0
    %2150 = vmatprep.subr.mxu0 0.0
    %2151 = vmatpush1.msra.mxu0 0.0
    %2152 = vmatprep.subr.mxu0 0.0
    %2153 = vmatpush1.msra.mxu0 0.0
    %2154 = vmatprep.subr.mxu0 0.0
    %2155 = vmatpush1.msra.mxu0 0.0
    %2156 = vmatprep.subr.mxu0 0.0
    %2157 = vmatpush1.msra.mxu0 0.0
    %2158 = vmatprep.subr.mxu0 0.0
    %2159 = vmatpush1.msra.mxu0 0.0
    %2160 = vmatprep.subr.mxu0 0.0
    %2161 = vmatpush1.msra.mxu0 0.0
    %2162 = vmatprep.subr.mxu0 0.0
    %2163 = vmatpush1.msra.mxu0 0.0
    %2164 = vmatprep.subr.mxu0 0.0
    %2165 = vmatpush1.msra.mxu0 0.0
    %2166 = vmatprep.subr.mxu0 0.0
    %2167 = vmatpush1.msra.mxu0 0.0
    %2168 = vmatprep.subr.mxu0 0.0
    %2169 = vmatpush1.msra.mxu0 0.0
    %2170 = vmatprep.subr.mxu0 0.0
    %2171 = vmatpush1.msra.mxu0 0.0
    %2172 = vmatprep.subr.mxu0 0.0
    %2173 = vmatpush1.msra.mxu0 0.0
    %2174 = vmatprep.subr.mxu0 0.0
    %2175 = vmatpush1.msra.mxu0 0.0
    %2176 = vmatprep.subr.mxu0 0.0
    %2177 = vmatpush1.msra.mxu0 0.0
    %2178 = vmatprep.subr.mxu0 0.0
    %2179 = vmatpush1.msra.mxu0 0.0
    %2180 = vmatprep.subr.mxu0 0.0
    %2181 = vmatpush1.msra.mxu0 0.0
    %2182 = vmatprep.subr.mxu0 0.0
    %2183 = vmatpush1.msra.mxu0 0.0
    %2184 = vmatprep.subr.mxu0 0.0
    %2185 = vmatpush1.msra.mxu0 0.0
    %2186 = vmatprep.subr.mxu0 0.0
    %2187 = vmatpush1.msra.mxu0 0.0
    %2188 = vmatprep.mubr.f32.mxu0 0.0
    %2189 = vmatmul.mubr.f32.gmra.mrb[0].mxu0 %v2104
    %v2190 = vpop.f32.mrb[0].mxu0
    %v2191 = vadd.f32 0.0, %v2190
    %v2192 = vpop.f32.mrb[0].mxu0
    %v2193 = vadd.f32 0.0, %v2192
    %2194 = vdwg.mxu0
    %2195 = vmatprep.subr.mxu0 %v2116
    %2196 = vmatpush1.msra.mxu0 %v2113
    %2197 = vmatprep.subr.mxu0 0.0
    %2198 = vmatpush1.msra.mxu0 0.0
    %2199 = vmatprep.subr.mxu0 0.0
    %2200 = vmatpush1.msra.mxu0 0.0
    %2201 = vmatprep.subr.mxu0 0.0
    %2202 = vmatpush1.msra.mxu0 0.0
    %2203 = vmatprep.subr.mxu0 0.0
    %2204 = vmatpush1.msra.mxu0 0.0
    %2205 = vmatprep.subr.mxu0 0.0
    %2206 = vmatpush1.msra.mxu0 0.0
    %2207 = vmatprep.subr.mxu0 0.0
    %2208 = vmatpush1.msra.mxu0 0.0
    %2209 = vmatprep.subr.mxu0 0.0
    %2210 = vmatpush1.msra.mxu0 0.0
    %2211 = vmatprep.subr.mxu0 0.0
    %2212 = vmatpush1.msra.mxu0 0.0
    %2213 = vmatprep.subr.mxu0 0.0
    %2214 = vmatpush1.msra.mxu0 0.0
    %2215 = vmatprep.subr.mxu0 0.0
    %2216 = vmatpush1.msra.mxu0 0.0
    %2217 = vmatprep.subr.mxu0 0.0
    %2218 = vmatpush1.msra.mxu0 0.0
    %2219 = vmatprep.subr.mxu0 0.0
    %2220 = vmatpush1.msra.mxu0 0.0
    %2221 = vmatprep.subr.mxu0 0.0
    %2222 = vmatpush1.msra.mxu0 0.0
    %2223 = vmatprep.subr.mxu0 0.0
    %2224 = vmatpush1.msra.mxu0 0.0
    %2225 = vmatprep.subr.mxu0 0.0
    %2226 = vmatpush1.msra.mxu0 0.0
    %2227 = vmatprep.subr.mxu0 0.0
    %2228 = vmatpush1.msra.mxu0 0.0
    %2229 = vmatprep.subr.mxu0 0.0
    %2230 = vmatpush1.msra.mxu0 0.0
    %2231 = vmatprep.subr.mxu0 0.0
    %2232 = vmatpush1.msra.mxu0 0.0
    %2233 = vmatprep.subr.mxu0 0.0
    %2234 = vmatpush1.msra.mxu0 0.0
    %2235 = vmatprep.subr.mxu0 0.0
    %2236 = vmatpush1.msra.mxu0 0.0
    %2237 = vmatprep.subr.mxu0 0.0
    %2238 = vmatpush1.msra.mxu0 0.0
    %2239 = vmatprep.subr.mxu0 0.0
    %2240 = vmatpush1.msra.mxu0 0.0
    %2241 = vmatprep.subr.mxu0 0.0
    %2242 = vmatpush1.msra.mxu0 0.0
    %2243 = vmatprep.subr.mxu0 0.0
    %2244 = vmatpush1.msra.mxu0 0.0
    %2245 = vmatprep.subr.mxu0 0.0
    %2246 = vmatpush1.msra.mxu0 0.0
    %2247 = vmatprep.subr.mxu0 0.0
    %2248 = vmatpush1.msra.mxu0 0.0
    %2249 = vmatprep.subr.mxu0 0.0
    %2250 = vmatpush1.msra.mxu0 0.0
    %2251 = vmatprep.subr.mxu0 0.0
    %2252 = vmatpush1.msra.mxu0 0.0
    %2253 = vmatprep.subr.mxu0 0.0
    %2254 = vmatpush1.msra.mxu0 0.0
    %2255 = vmatprep.subr.mxu0 0.0
    %2256 = vmatpush1.msra.mxu0 0.0
    %2257 = vmatprep.subr.mxu0 0.0
    %2258 = vmatpush1.msra.mxu0 0.0
    %2259 = vmatprep.mubr.f32.mxu0 0.0
    %2260 = vmatmul.mubr.f32.gmra.mrb[0].mxu0 %v2104
    %v2261 = vpop.f32.mrb[0].mxu0
    %v2262 = vadd.f32 0.0, %v2261
    %v2263 = vpop.f32.mrb[0].mxu0
    %v2264 = vadd.f32 0.0, %v2263
    %2265 = vdwg.mxu0
    %2266 = vmatprep.subr.mxu0 %v2122
    %2267 = vmatpush1.msra.mxu0 %v2119
    %2268 = vmatprep.subr.mxu0 0.0
    %2269 = vmatpush1.msra.mxu0 0.0
    %2270 = vmatprep.subr.mxu0 0.0
    %2271 = vmatpush1.msra.mxu0 0.0
    %2272 = vmatprep.subr.mxu0 0.0
    %2273 = vmatpush1.msra.mxu0 0.0
    %2274 = vmatprep.subr.mxu0 0.0
    %2275 = vmatpush1.msra.mxu0 0.0
    %2276 = vmatprep.subr.mxu0 0.0
    %2277 = vmatpush1.msra.mxu0 0.0
    %2278 = vmatprep.subr.mxu0 0.0
    %2279 = vmatpush1.msra.mxu0 0.0
    %2280 = vmatprep.subr.mxu0 0.0
    %2281 = vmatpush1.msra.mxu0 0.0
    %2282 = vmatprep.subr.mxu0 0.0
    %2283 = vmatpush1.msra.mxu0 0.0
    %2284 = vmatprep.subr.mxu0 0.0
    %2285 = vmatpush1.msra.mxu0 0.0
    %2286 = vmatprep.subr.mxu0 0.0
    %2287 = vmatpush1.msra.mxu0 0.0
    %2288 = vmatprep.subr.mxu0 0.0
    %2289 = vmatpush1.msra.mxu0 0.0
    %2290 = vmatprep.subr.mxu0 0.0
    %2291 = vmatpush1.msra.mxu0 0.0
    %2292 = vmatprep.subr.mxu0 0.0
    %2293 = vmatpush1.msra.mxu0 0.0
    %2294 = vmatprep.subr.mxu0 0.0
    %2295 = vmatpush1.msra.mxu0 0.0
    %2296 = vmatprep.subr.mxu0 0.0
    %2297 = vmatpush1.msra.mxu0 0.0
    %2298 = vmatprep.subr.mxu0 0.0
    %2299 = vmatpush1.msra.mxu0 0.0
    %2300 = vmatprep.subr.mxu0 0.0
    %2301 = vmatpush1.msra.mxu0 0.0
    %2302 = vmatprep.subr.mxu0 0.0
    %2303 = vmatpush1.msra.mxu0 0.0
    %2304 = vmatprep.subr.mxu0 0.0
    %2305 = vmatpush1.msra.mxu0 0.0
    %2306 = vmatprep.subr.mxu0 0.0
    %2307 = vmatpush1.msra.mxu0 0.0
    %2308 = vmatprep.subr.mxu0 0.0
    %2309 = vmatpush1.msra.mxu0 0.0
    %2310 = vmatprep.subr.mxu0 0.0
    %2311 = vmatpush1.msra.mxu0 0.0
    %2312 = vmatprep.subr.mxu0 0.0
    %2313 = vmatpush1.msra.mxu0 0.0
    %2314 = vmatprep.subr.mxu0 0.0
    %2315 = vmatpush1.msra.mxu0 0.0
    %2316 = vmatprep.subr.mxu0 0.0
    %2317 = vmatpush1.msra.mxu0 0.0
    %2318 = vmatprep.subr.mxu0 0.0
    %2319 = vmatpush1.msra.mxu0 0.0
    %2320 = vmatprep.subr.mxu0 0.0
    %2321 = vmatpush1.msra.mxu0 0.0
    %2322 = vmatprep.subr.mxu0 0.0
    %2323 = vmatpush1.msra.mxu0 0.0
    %2324 = vmatprep.subr.mxu0 0.0
    %2325 = vmatpush1.msra.mxu0 0.0
    %2326 = vmatprep.subr.mxu0 0.0
    %2327 = vmatpush1.msra.mxu0 0.0
    %2328 = vmatprep.subr.mxu0 0.0
    %2329 = vmatpush1.msra.mxu0 0.0
    %2330 = vmatprep.mubr.f32.mxu0 0.0
    %2331 = vmatmul.mubr.f32.gmra.mrb[0].mxu0 %v2104
    %v2332 = vpop.f32.mrb[0].mxu0
    %v2333 = vadd.f32 0.0, %v2332
    %v2334 = vpop.f32.mrb[0].mxu0
    %v2335 = vadd.f32 0.0, %v2334
    %2336 = vdwg.mxu0
    %v2337 = vadd.f32 %v2078, %v2191
    %v2338 = vadd.f32 %v2079, %v2193
    %v2339 = vadd.f32 %v2080, %v2262
    %v2340 = vadd.f32 %v2081, %v2264
    %v2341 = vadd.f32 %v2082, %v2333
    %v2342 = vadd.f32 %v2083, %v2335
    %v2344 = vlaneseq
    %v2345 = vshrl.u32 %v2344, 7
    %v2346 = vsub.s32 0, %v2345
    %v2347 = vrot.slane %v24, %v2346
    %v2348 = vlaneseq
    %v2349 = vshrl.u32 %v2348, 7
    %v2350 = vsub.s32 1, %v2349
    %v2351 = vrot.slane %v24, %v2350
    %v2352 = vlaneseq
    %v2353 = vshrl.u32 %v2352, 7
    %v2354 = vsub.s32 2, %v2353
    %v2355 = vrot.slane %v24, %v2354
    %v2356 = vlaneseq
    %v2357 = vshrl.u32 %v2356, 7
    %v2358 = vsub.s32 3, %v2357
    %v2359 = vrot.slane %v24, %v2358
    %v2360 = vlaneseq
    %v2361 = vshrl.u32 %v2360, 7
    %v2362 = vsub.s32 4, %v2361
    %v2363 = vrot.slane %v24, %v2362
    %v2364 = vlaneseq
    %v2365 = vshrl.u32 %v2364, 7
    %v2366 = vsub.s32 5, %v2365
    %v2367 = vrot.slane %v24, %v2366
    %v2374 = vmul.f32 %v2337, %v2347
    %v2375 = vmul.f32 %v2338, %v2351
    %v2376 = vmul.f32 %v2339, %v2355
    %v2377 = vmul.f32 %v2340, %v2359
    %v2378 = vmul.f32 %v2341, %v2363
    %v2379 = vmul.f32 %v2342, %v2367
    %v2380 = vsel %vm89, %v2374, 0.0
    %v2381 = vsel %vm89, %v2375, 0.0
    %v2382 = vadd.f32 %v2380, %v2381
    %v2383 = vsel %vm89, %v2376, 0.0
    %v2384 = vadd.f32 %v2382, %v2383
    %v2385 = vsel %vm89, %v2377, 0.0
    %v2386 = vadd.f32 %v2384, %v2385
    %v2387 = vsel %vm89, %v2378, 0.0
    %v2388 = vadd.f32 %v2386, %v2387
    %v2389 = vsel %vm89, %v2379, 0.0
    %v2390 = vadd.f32 %v2388, %v2389
    %2391 = vadd.xlane.f32.xlu0 %v2390
    %v2392 = vpop.xlane.xlu0 %2391
    %v2393 = vmul.f32 %v2392, 0.001953125
    %v2394 = vsub.f32 %v2337, %v2393
    %v2395 = vsub.f32 %v2338, %v2393
    %v2396 = vsub.f32 %v2339, %v2393
    %v2397 = vsub.f32 %v2340, %v2393
    %v2398 = vsub.f32 %v2341, %v2393
    %v2399 = vsub.f32 %v2342, %v2393
    %v2400 = vmul.f32 %v2394, %v2347
    %v2401 = vmul.f32 %v2395, %v2351
    %v2402 = vmul.f32 %v2396, %v2355
    %v2403 = vmul.f32 %v2397, %v2359
    %v2404 = vmul.f32 %v2398, %v2363
    %v2405 = vmul.f32 %v2399, %v2367
    %v2406 = vmul.f32 %v2400, %v2400
    %v2407 = vmul.f32 %v2401, %v2401
    %v2408 = vmul.f32 %v2402, %v2402
    %v2409 = vmul.f32 %v2403, %v2403
    %v2410 = vmul.f32 %v2404, %v2404
    %v2411 = vmul.f32 %v2405, %v2405
    %v2412 = vsel %vm89, %v2406, 0.0
    %v2413 = vsel %vm89, %v2407, 0.0
    %v2414 = vadd.f32 %v2412, %v2413
    %v2415 = vsel %vm89, %v2408, 0.0
    %v2416 = vadd.f32 %v2414, %v2415
    %v2417 = vsel %vm89, %v2409, 0.0
    %v2418 = vadd.f32 %v2416, %v2417
    %v2419 = vsel %vm89, %v2410, 0.0
    %v2420 = vadd.f32 %v2418, %v2419
    %v2421 = vsel %vm89, %v2411, 0.0
    %v2422 = vadd.f32 %v2420, %v2421
    %2423 = vadd.xlane.f32.xlu0 %v2422
    %v2424 = vpop.xlane.xlu0 %2423
    %v2425 = vmul.f32 %v2424, 0.001953125
    %v2426 = vadd.f32 %v2425, 1e-05
    %v2427 = vrsqrt.pop %v2426
    %v2428 = vmul.f32 %v34, %v2427
    %v2429 = vmul.f32 %v2393, %v2428
    %v2430 = vsub.f32 %v35, %v2429
    %2432 = vset.pattern.permute.xlu0 0
    %2433 = vperm.xlu0 %2432, %v2428
    %v2434 = vpop.permute.xlu0 %2433
    %v2436 = vmul.f32 %v2337, %v2434
    %v2437 = vmul.f32 %v2338, %v2434
    %v2438 = vmul.f32 %v2339, %v2434
    %v2439 = vmul.f32 %v2340, %v2434
    %v2440 = vmul.f32 %v2341, %v2434
    %v2441 = vmul.f32 %v2342, %v2434
    %2443 = vset.pattern.permute.xlu0 0
    %2444 = vperm.xlu0 %2443, %v2430
    %v2445 = vpop.permute.xlu0 %2444
    %v2447 = vadd.f32 %v2436, %v2445
    %v2448 = vadd.f32 %v2437, %v2445
    %v2449 = vadd.f32 %v2438, %v2445
    %v2450 = vadd.f32 %v2439, %v2445
    %v2451 = vadd.f32 %v2440, %v2445
    %v2452 = vadd.f32 %v2441, %v2445
    %v2453 = vmax.f32 %v2447, 0.0
    %v2454 = vmax.f32 %v2448, 0.0
    %v2455 = vmax.f32 %v2449, 0.0
    %v2456 = vmax.f32 %v2450, 0.0
    %v2457 = vmax.f32 %v2451, 0.0
    %v2458 = vmax.f32 %v2452, 0.0
    %v2465 = vcombine.low %v2453, %v2454
    %v2466 = vcombine.low %v2455, %v2456
    %v2467 = vcombine.low %v2457, %v2458
    %v2471 = vadd.f32 %v21, %v2465
    %v2472 = vadd.f32 %v22, %v2466
    %v2473 = vadd.f32 %v23, %v2467
    %v2474 = vcombine.low %v2347, %v2351
    %v2475 = vcombine.low %v2355, %v2359
    %v2476 = vcombine.low %v2363, %v2367
    %v2480 = vmul.f32 %v2471, %v2474
    %v2481 = vmul.f32 %v2472, %v2475
    %v2482 = vmul.f32 %v2473, %v2476
    %v2486 = vcombine.high %v2480, %v2480
    %v2487 = vcombine.high %v2481, %v2481
    %v2488 = vcombine.high %v2482, %v2482
    %2492 = vrot.lane.b32.xlu0 %v2480, 19
    %v2493 = vpop.permute.xlu0 %2492
    %2494 = vrot.lane.b32.xlu0 %v2486, 19
    %v2495 = vpop.permute.xlu0 %2494
    %2496 = vrot.lane.b32.xlu0 %v2481, 19
    %v2497 = vpop.permute.xlu0 %2496
    %2498 = vrot.lane.b32.xlu0 %v2487, 19
    %v2499 = vpop.permute.xlu0 %2498
    %2500 = vrot.lane.b32.xlu0 %v2482, 19
    %v2501 = vpop.permute.xlu0 %2500
    %2502 = vrot.lane.b32.xlu0 %v2488, 19
    %v2503 = vpop.permute.xlu0 %2502
    %v2504 = vsel %vm59, %v2501, %v2503
    %v2505 = vsel %vm59, %v2499, %v2501
    %v2506 = vsel %vm59, %v2497, %v2499
    %v2507 = vsel %vm59, %v2495, %v2497
    %v2508 = vsel %vm59, %v2493, %v2495
    %v2509 = vsel %vm59, %v2503, %v2493
    %2510 = vrot.lane.b32.xlu0 %v2480, 18
    %v2511 = vpop.permute.xlu0 %2510
    %2512 = vrot.lane.b32.xlu0 %v2486, 18
    %v2513 = vpop.permute.xlu0 %2512
    %2514 = vrot.lane.b32.xlu0 %v2481, 18
    %v2515 = vpop.permute.xlu0 %2514
    %2516 = vrot.lane.b32.xlu0 %v2487, 18
    %v2517 = vpop.permute.xlu0 %2516
    %2518 = vrot.lane.b32.xlu0 %v2482, 18
    %v2519 = vpop.permute.xlu0 %2518
    %2520 = vrot.lane.b32.xlu0 %v2488, 18
    %v2521 = vpop.permute.xlu0 %2520
    %v2522 = vsel %vm78, %v2519, %v2521
    %v2523 = vsel %vm78, %v2517, %v2519
    %v2524 = vsel %vm78, %v2515, %v2517
    %v2525 = vsel %vm78, %v2513, %v2515
    %v2526 = vsel %vm78, %v2511, %v2513
    %v2527 = vsel %vm78, %v2521, %v2511
    %v2529 = vsel %vm89, %v2527, 0
    %v2532 = vsel %vm89, %v2526, 0
    %v2535 = vsel %vm89, %v2525, 0
    %v2538 = vsel %vm89, %v2524, 0
    %v2541 = vsel %vm89, %v2523, 0
    %v2544 = vsel %vm89, %v2522, 0
    %2546 = vmatprep.subr.mxu0 %v2532
    %2547 = vmatpush1.msra.mxu0 %v2529
    %2548 = vmatprep.subr.mxu0 0.0
    %2549 = vmatpush1.msra.mxu0 0.0
    %2550 = vmatprep.subr.mxu0 0.0
    %2551 = vmatpush1.msra.mxu0 0.0
    %2552 = vmatprep.subr.mxu0 0.0
    %2553 = vmatpush1.msra.mxu0 0.0
    %2554 = vmatprep.subr.mxu0 0.0
    %2555 = vmatpush1.msra.mxu0 0.0
    %2556 = vmatprep.subr.mxu0 0.0
    %2557 = vmatpush1.msra.mxu0 0.0
    %2558 = vmatprep.subr.mxu0 0.0
    %2559 = vmatpush1.msra.mxu0 0.0
    %2560 = vmatprep.subr.mxu0 0.0
    %2561 = vmatpush1.msra.mxu0 0.0
    %2562 = vmatprep.subr.mxu0 0.0
    %2563 = vmatpush1.msra.mxu0 0.0
    %2564 = vmatprep.subr.mxu0 0.0
    %2565 = vmatpush1.msra.mxu0 0.0
    %2566 = vmatprep.subr.mxu0 0.0
    %2567 = vmatpush1.msra.mxu0 0.0
    %2568 = vmatprep.subr.mxu0 0.0
    %2569 = vmatpush1.msra.mxu0 0.0
    %2570 = vmatprep.subr.mxu0 0.0
    %2571 = vmatpush1.msra.mxu0 0.0
    %2572 = vmatprep.subr.mxu0 0.0
    %2573 = vmatpush1.msra.mxu0 0.0
    %2574 = vmatprep.subr.mxu0 0.0
    %2575 = vmatpush1.msra.mxu0 0.0
    %2576 = vmatprep.subr.mxu0 0.0
    %2577 = vmatpush1.msra.mxu0 0.0
    %2578 = vmatprep.subr.mxu0 0.0
    %2579 = vmatpush1.msra.mxu0 0.0
    %2580 = vmatprep.subr.mxu0 0.0
    %2581 = vmatpush1.msra.mxu0 0.0
    %2582 = vmatprep.subr.mxu0 0.0
    %2583 = vmatpush1.msra.mxu0 0.0
    %2584 = vmatprep.subr.mxu0 0.0
    %2585 = vmatpush1.msra.mxu0 0.0
    %2586 = vmatprep.subr.mxu0 0.0
    %2587 = vmatpush1.msra.mxu0 0.0
    %2588 = vmatprep.subr.mxu0 0.0
    %2589 = vmatpush1.msra.mxu0 0.0
    %2590 = vmatprep.subr.mxu0 0.0
    %2591 = vmatpush1.msra.mxu0 0.0
    %2592 = vmatprep.subr.mxu0 0.0
    %2593 = vmatpush1.msra.mxu0 0.0
    %2594 = vmatprep.subr.mxu0 0.0
    %2595 = vmatpush1.msra.mxu0 0.0
    %2596 = vmatprep.subr.mxu0 0.0
    %2597 = vmatpush1.msra.mxu0 0.0
    %2598 = vmatprep.subr.mxu0 0.0
    %2599 = vmatpush1.msra.mxu0 0.0
    %2600 = vmatprep.subr.mxu0 0.0
    %2601 = vmatpush1.msra.mxu0 0.0
    %2602 = vmatprep.subr.mxu0 0.0
    %2603 = vmatpush1.msra.mxu0 0.0
    %2604 = vmatprep.subr.mxu0 0.0
    %2605 = vmatpush1.msra.mxu0 0.0
    %2606 = vmatprep.subr.mxu0 0.0
    %2607 = vmatpush1.msra.mxu0 0.0
    %2608 = vmatprep.subr.mxu0 0.0
    %2609 = vmatpush1.msra.mxu0 0.0
    %2610 = vmatprep.mubr.f32.mxu0 0.0
    %2611 = vmatmul.mubr.f32.gmra.mrb[0].mxu0 %v87
    %v2612 = vpop.f32.mrb[0].mxu0
    %v2613 = vadd.f32 0.0, %v2612
    %v2614 = vpop.f32.mrb[0].mxu0
    %v2615 = vadd.f32 0.0, %v2614
    %2616 = vdwg.mxu0
    %2617 = vmatprep.subr.mxu0 %v2538
    %2618 = vmatpush1.msra.mxu0 %v2535
    %2619 = vmatprep.subr.mxu0 0.0
    %2620 = vmatpush1.msra.mxu0 0.0
    %2621 = vmatprep.subr.mxu0 0.0
    %2622 = vmatpush1.msra.mxu0 0.0
    %2623 = vmatprep.subr.mxu0 0.0
    %2624 = vmatpush1.msra.mxu0 0.0
    %2625 = vmatprep.subr.mxu0 0.0
    %2626 = vmatpush1.msra.mxu0 0.0
    %2627 = vmatprep.subr.mxu0 0.0
    %2628 = vmatpush1.msra.mxu0 0.0
    %2629 = vmatprep.subr.mxu0 0.0
    %2630 = vmatpush1.msra.mxu0 0.0
    %2631 = vmatprep.subr.mxu0 0.0
    %2632 = vmatpush1.msra.mxu0 0.0
    %2633 = vmatprep.subr.mxu0 0.0
    %2634 = vmatpush1.msra.mxu0 0.0
    %2635 = vmatprep.subr.mxu0 0.0
    %2636 = vmatpush1.msra.mxu0 0.0
    %2637 = vmatprep.subr.mxu0 0.0
    %2638 = vmatpush1.msra.mxu0 0.0
    %2639 = vmatprep.subr.mxu0 0.0
    %2640 = vmatpush1.msra.mxu0 0.0
    %2641 = vmatprep.subr.mxu0 0.0
    %2642 = vmatpush1.msra.mxu0 0.0
    %2643 = vmatprep.subr.mxu0 0.0
    %2644 = vmatpush1.msra.mxu0 0.0
    %2645 = vmatprep.subr.mxu0 0.0
    %2646 = vmatpush1.msra.mxu0 0.0
    %2647 = vmatprep.subr.mxu0 0.0
    %2648 = vmatpush1.msra.mxu0 0.0
    %2649 = vmatprep.subr.mxu0 0.0
    %2650 = vmatpush1.msra.mxu0 0.0
    %2651 = vmatprep.subr.mxu0 0.0
    %2652 = vmatpush1.msra.mxu0 0.0
    %2653 = vmatprep.subr.mxu0 0.0
    %2654 = vmatpush1.msra.mxu0 0.0
    %2655 = vmatprep.subr.mxu0 0.0
    %2656 = vmatpush1.msra.mxu0 0.0
    %2657 = vmatprep.subr.mxu0 0.0
    %2658 = vmatpush1.msra.mxu0 0.0
    %2659 = vmatprep.subr.mxu0 0.0
    %2660 = vmatpush1.msra.mxu0 0.0
    %2661 = vmatprep.subr.mxu0 0.0
    %2662 = vmatpush1.msra.mxu0 0.0
    %2663 = vmatprep.subr.mxu0 0.0
    %2664 = vmatpush1.msra.mxu0 0.0
    %2665 = vmatprep.subr.mxu0 0.0
    %2666 = vmatpush1.msra.mxu0 0.0
    %2667 = vmatprep.subr.mxu0 0.0
    %2668 = vmatpush1.msra.mxu0 0.0
    %2669 = vmatprep.subr.mxu0 0.0
    %2670 = vmatpush1.msra.mxu0 0.0
    %2671 = vmatprep.subr.mxu0 0.0
    %2672 = vmatpush1.msra.mxu0 0.0
    %2673 = vmatprep.subr.mxu0 0.0
    %2674 = vmatpush1.msra.mxu0 0.0
    %2675 = vmatprep.subr.mxu0 0.0
    %2676 = vmatpush1.msra.mxu0 0.0
    %2677 = vmatprep.subr.mxu0 0.0
    %2678 = vmatpush1.msra.mxu0 0.0
    %2679 = vmatprep.subr.mxu0 0.0
    %2680 = vmatpush1.msra.mxu0 0.0
    %2681 = vmatprep.mubr.f32.mxu0 0.0
    %2682 = vmatmul.mubr.f32.gmra.mrb[0].mxu0 %v87
    %v2683 = vpop.f32.mrb[0].mxu0
    %v2684 = vadd.f32 0.0, %v2683
    %v2685 = vpop.f32.mrb[0].mxu0
    %v2686 = vadd.f32 0.0, %v2685
    %2687 = vdwg.mxu0
    %2688 = vmatprep.subr.mxu0 %v2544
    %2689 = vmatpush1.msra.mxu0 %v2541
    %2690 = vmatprep.subr.mxu0 0.0
    %2691 = vmatpush1.msra.mxu0 0.0
    %2692 = vmatprep.subr.mxu0 0.0
    %2693 = vmatpush1.msra.mxu0 0.0
    %2694 = vmatprep.subr.mxu0 0.0
    %2695 = vmatpush1.msra.mxu0 0.0
    %2696 = vmatprep.subr.mxu0 0.0
    %2697 = vmatpush1.msra.mxu0 0.0
    %2698 = vmatprep.subr.mxu0 0.0
    %2699 = vmatpush1.msra.mxu0 0.0
    %2700 = vmatprep.subr.mxu0 0.0
    %2701 = vmatpush1.msra.mxu0 0.0
    %2702 = vmatprep.subr.mxu0 0.0
    %2703 = vmatpush1.msra.mxu0 0.0
    %2704 = vmatprep.subr.mxu0 0.0
    %2705 = vmatpush1.msra.mxu0 0.0
    %2706 = vmatprep.subr.mxu0 0.0
    %2707 = vmatpush1.msra.mxu0 0.0
    %2708 = vmatprep.subr.mxu0 0.0
    %2709 = vmatpush1.msra.mxu0 0.0
    %2710 = vmatprep.subr.mxu0 0.0
    %2711 = vmatpush1.msra.mxu0 0.0
    %2712 = vmatprep.subr.mxu0 0.0
    %2713 = vmatpush1.msra.mxu0 0.0
    %2714 = vmatprep.subr.mxu0 0.0
    %2715 = vmatpush1.msra.mxu0 0.0
    %2716 = vmatprep.subr.mxu0 0.0
    %2717 = vmatpush1.msra.mxu0 0.0
    %2718 = vmatprep.subr.mxu0 0.0
    %2719 = vmatpush1.msra.mxu0 0.0
    %2720 = vmatprep.subr.mxu0 0.0
    %2721 = vmatpush1.msra.mxu0 0.0
    %2722 = vmatprep.subr.mxu0 0.0
    %2723 = vmatpush1.msra.mxu0 0.0
    %2724 = vmatprep.subr.mxu0 0.0
    %2725 = vmatpush1.msra.mxu0 0.0
    %2726 = vmatprep.subr.mxu0 0.0
    %2727 = vmatpush1.msra.mxu0 0.0
    %2728 = vmatprep.subr.mxu0 0.0
    %2729 = vmatpush1.msra.mxu0 0.0
    %2730 = vmatprep.subr.mxu0 0.0
    %2731 = vmatpush1.msra.mxu0 0.0
    %2732 = vmatprep.subr.mxu0 0.0
    %2733 = vmatpush1.msra.mxu0 0.0
    %2734 = vmatprep.subr.mxu0 0.0
    %2735 = vmatpush1.msra.mxu0 0.0
    %2736 = vmatprep.subr.mxu0 0.0
    %2737 = vmatpush1.msra.mxu0 0.0
    %2738 = vmatprep.subr.mxu0 0.0
    %2739 = vmatpush1.msra.mxu0 0.0
    %2740 = vmatprep.subr.mxu0 0.0
    %2741 = vmatpush1.msra.mxu0 0.0
    %2742 = vmatprep.subr.mxu0 0.0
    %2743 = vmatpush1.msra.mxu0 0.0
    %2744 = vmatprep.subr.mxu0 0.0
    %2745 = vmatpush1.msra.mxu0 0.0
    %2746 = vmatprep.subr.mxu0 0.0
    %2747 = vmatpush1.msra.mxu0 0.0
    %2748 = vmatprep.subr.mxu0 0.0
    %2749 = vmatpush1.msra.mxu0 0.0
    %2750 = vmatprep.subr.mxu0 0.0
    %2751 = vmatpush1.msra.mxu0 0.0
    %2752 = vmatprep.mubr.f32.mxu0 0.0
    %2753 = vmatmul.mubr.f32.gmra.mrb[0].mxu0 %v87
    %v2754 = vpop.f32.mrb[0].mxu0
    %v2755 = vadd.f32 0.0, %v2754
    %v2756 = vpop.f32.mrb[0].mxu0
    %v2757 = vadd.f32 0.0, %v2756
    %2758 = vdwg.mxu0
    %v2760 = vsel %vm89, %v2509, 0
    %v2763 = vsel %vm89, %v2508, 0
    %v2766 = vsel %vm89, %v2507, 0
    %v2769 = vsel %vm89, %v2506, 0
    %v2772 = vsel %vm89, %v2505, 0
    %v2775 = vsel %vm89, %v2504, 0
    %2777 = vmatprep.subr.mxu0 %v2763
    %2778 = vmatpush1.msra.mxu0 %v2760
    %2779 = vmatprep.subr.mxu0 0.0
    %2780 = vmatpush1.msra.mxu0 0.0
    %2781 = vmatprep.subr.mxu0 0.0
    %2782 = vmatpush1.msra.mxu0 0.0
    %2783 = vmatprep.subr.mxu0 0.0
    %2784 = vmatpush1.msra.mxu0 0.0
    %2785 = vmatprep.subr.mxu0 0.0
    %2786 = vmatpush1.msra.mxu0 0.0
    %2787 = vmatprep.subr.mxu0 0.0
    %2788 = vmatpush1.msra.mxu0 0.0
    %2789 = vmatprep.subr.mxu0 0.0
    %2790 = vmatpush1.msra.mxu0 0.0
    %2791 = vmatprep.subr.mxu0 0.0
    %2792 = vmatpush1.msra.mxu0 0.0
    %2793 = vmatprep.subr.mxu0 0.0
    %2794 = vmatpush1.msra.mxu0 0.0
    %2795 = vmatprep.subr.mxu0 0.0
    %2796 = vmatpush1.msra.mxu0 0.0
    %2797 = vmatprep.subr.mxu0 0.0
    %2798 = vmatpush1.msra.mxu0 0.0
    %2799 = vmatprep.subr.mxu0 0.0
    %2800 = vmatpush1.msra.mxu0 0.0
    %2801 = vmatprep.subr.mxu0 0.0
    %2802 = vmatpush1.msra.mxu0 0.0
    %2803 = vmatprep.subr.mxu0 0.0
    %2804 = vmatpush1.msra.mxu0 0.0
    %2805 = vmatprep.subr.mxu0 0.0
    %2806 = vmatpush1.msra.mxu0 0.0
    %2807 = vmatprep.subr.mxu0 0.0
    %2808 = vmatpush1.msra.mxu0 0.0
    %2809 = vmatprep.subr.mxu0 0.0
    %2810 = vmatpush1.msra.mxu0 0.0
    %2811 = vmatprep.subr.mxu0 0.0
    %2812 = vmatpush1.msra.mxu0 0.0
    %2813 = vmatprep.subr.mxu0 0.0
    %2814 = vmatpush1.msra.mxu0 0.0
    %2815 = vmatprep.subr.mxu0 0.0
    %2816 = vmatpush1.msra.mxu0 0.0
    %2817 = vmatprep.subr.mxu0 0.0
    %2818 = vmatpush1.msra.mxu0 0.0
    %2819 = vmatprep.subr.mxu0 0.0
    %2820 = vmatpush1.msra.mxu0 0.0
    %2821 = vmatprep.subr.mxu0 0.0
    %2822 = vmatpush1.msra.mxu0 0.0
    %2823 = vmatprep.subr.mxu0 0.0
    %2824 = vmatpush1.msra.mxu0 0.0
    %2825 = vmatprep.subr.mxu0 0.0
    %2826 = vmatpush1.msra.mxu0 0.0
    %2827 = vmatprep.subr.mxu0 0.0
    %2828 = vmatpush1.msra.mxu0 0.0
    %2829 = vmatprep.subr.mxu0 0.0
    %2830 = vmatpush1.msra.mxu0 0.0
    %2831 = vmatprep.subr.mxu0 0.0
    %2832 = vmatpush1.msra.mxu0 0.0
    %2833 = vmatprep.subr.mxu0 0.0
    %2834 = vmatpush1.msra.mxu0 0.0
    %2835 = vmatprep.subr.mxu0 0.0
    %2836 = vmatpush1.msra.mxu0 0.0
    %2837 = vmatprep.subr.mxu0 0.0
    %2838 = vmatpush1.msra.mxu0 0.0
    %2839 = vmatprep.subr.mxu0 0.0
    %2840 = vmatpush1.msra.mxu0 0.0
    %2841 = vmatprep.mubr.f32.mxu0 0.0
    %2842 = vmatmul.mubr.f32.gmra.mrb[0].mxu0 %v322
    %v2843 = vpop.f32.mrb[0].mxu0
    %v2844 = vadd.f32 %v2613, %v2843
    %v2845 = vpop.f32.mrb[0].mxu0
    %v2846 = vadd.f32 %v2615, %v2845
    %2847 = vdwg.mxu0
    %2848 = vmatprep.subr.mxu0 %v2769
    %2849 = vmatpush1.msra.mxu0 %v2766
    %2850 = vmatprep.subr.mxu0 0.0
    %2851 = vmatpush1.msra.mxu0 0.0
    %2852 = vmatprep.subr.mxu0 0.0
    %2853 = vmatpush1.msra.mxu0 0.0
    %2854 = vmatprep.subr.mxu0 0.0
    %2855 = vmatpush1.msra.mxu0 0.0
    %2856 = vmatprep.subr.mxu0 0.0
    %2857 = vmatpush1.msra.mxu0 0.0
    %2858 = vmatprep.subr.mxu0 0.0
    %2859 = vmatpush1.msra.mxu0 0.0
    %2860 = vmatprep.subr.mxu0 0.0
    %2861 = vmatpush1.msra.mxu0 0.0
    %2862 = vmatprep.subr.mxu0 0.0
    %2863 = vmatpush1.msra.mxu0 0.0
    %2864 = vmatprep.subr.mxu0 0.0
    %2865 = vmatpush1.msra.mxu0 0.0
    %2866 = vmatprep.subr.mxu0 0.0
    %2867 = vmatpush1.msra.mxu0 0.0
    %2868 = vmatprep.subr.mxu0 0.0
    %2869 = vmatpush1.msra.mxu0 0.0
    %2870 = vmatprep.subr.mxu0 0.0
    %2871 = vmatpush1.msra.mxu0 0.0
    %2872 = vmatprep.subr.mxu0 0.0
    %2873 = vmatpush1.msra.mxu0 0.0
    %2874 = vmatprep.subr.mxu0 0.0
    %2875 = vmatpush1.msra.mxu0 0.0
    %2876 = vmatprep.subr.mxu0 0.0
    %2877 = vmatpush1.msra.mxu0 0.0
    %2878 = vmatprep.subr.mxu0 0.0
    %2879 = vmatpush1.msra.mxu0 0.0
    %2880 = vmatprep.subr.mxu0 0.0
    %2881 = vmatpush1.msra.mxu0 0.0
    %2882 = vmatprep.subr.mxu0 0.0
    %2883 = vmatpush1.msra.mxu0 0.0
    %2884 = vmatprep.subr.mxu0 0.0
    %2885 = vmatpush1.msra.mxu0 0.0
    %2886 = vmatprep.subr.mxu0 0.0
    %2887 = vmatpush1.msra.mxu0 0.0
    %2888 = vmatprep.subr.mxu0 0.0
    %2889 = vmatpush1.msra.mxu0 0.0
    %2890 = vmatprep.subr.mxu0 0.0
    %2891 = vmatpush1.msra.mxu0 0.0
    %2892 = vmatprep.subr.mxu0 0.0
    %2893 = vmatpush1.msra.mxu0 0.0
    %2894 = vmatprep.subr.mxu0 0.0
    %2895 = vmatpush1.msra.mxu0 0.0
    %2896 = vmatprep.subr.mxu0 0.0
    %2897 = vmatpush1.msra.mxu0 0.0
    %2898 = vmatprep.subr.mxu0 0.0
    %2899 = vmatpush1.msra.mxu0 0.0
    %2900 = vmatprep.subr.mxu0 0.0
    %2901 = vmatpush1.msra.mxu0 0.0
    %2902 = vmatprep.subr.mxu0 0.0
    %2903 = vmatpush1.msra.mxu0 0.0
    %2904 = vmatprep.subr.mxu0 0.0
    %2905 = vmatpush1.msra.mxu0 0.0
    %2906 = vmatprep.subr.mxu0 0.0
    %2907 = vmatpush1.msra.mxu0 0.0
    %2908 = vmatprep.subr.mxu0 0.0
    %2909 = vmatpush1.msra.mxu0 0.0
    %2910 = vmatprep.subr.mxu0 0.0
    %2911 = vmatpush1.msra.mxu0 0.0
    %2912 = vmatprep.mubr.f32.mxu0 0.0
    %2913 = vmatmul.mubr.f32.gmra.mrb[0].mxu0 %v322
    %v2914 = vpop.f32.mrb[0].mxu0
    %v2915 = vadd.f32 %v2684, %v2914
    %v2916 = vpop.f32.mrb[0].mxu0
    %v2917 = vadd.f32 %v2686, %v2916
    %2918 = vdwg.mxu0
    %2919 = vmatprep.subr.mxu0 %v2775
    %2920 = vmatpush1.msra.mxu0 %v2772
    %2921 = vmatprep.subr.mxu0 0.0
    %2922 = vmatpush1.msra.mxu0 0.0
    %2923 = vmatprep.subr.mxu0 0.0
    %2924 = vmatpush1.msra.mxu0 0.0
    %2925 = vmatprep.subr.mxu0 0.0
    %2926 = vmatpush1.msra.mxu0 0.0
    %2927 = vmatprep.subr.mxu0 0.0
    %2928 = vmatpush1.msra.mxu0 0.0
    %2929 = vmatprep.subr.mxu0 0.0
    %2930 = vmatpush1.msra.mxu0 0.0
    %2931 = vmatprep.subr.mxu0 0.0
    %2932 = vmatpush1.msra.mxu0 0.0
    %2933 = vmatprep.subr.mxu0 0.0
    %2934 = vmatpush1.msra.mxu0 0.0
    %2935 = vmatprep.subr.mxu0 0.0
    %2936 = vmatpush1.msra.mxu0 0.0
    %2937 = vmatprep.subr.mxu0 0.0
    %2938 = vmatpush1.msra.mxu0 0.0
    %2939 = vmatprep.subr.mxu0 0.0
    %2940 = vmatpush1.msra.mxu0 0.0
    %2941 = vmatprep.subr.mxu0 0.0
    %2942 = vmatpush1.msra.mxu0 0.0
    %2943 = vmatprep.subr.mxu0 0.0
    %2944 = vmatpush1.msra.mxu0 0.0
    %2945 = vmatprep.subr.mxu0 0.0
    %2946 = vmatpush1.msra.mxu0 0.0
    %2947 = vmatprep.subr.mxu0 0.0
    %2948 = vmatpush1.msra.mxu0 0.0
    %2949 = vmatprep.subr.mxu0 0.0
    %2950 = vmatpush1.msra.mxu0 0.0
    %2951 = vmatprep.subr.mxu0 0.0
    %2952 = vmatpush1.msra.mxu0 0.0
    %2953 = vmatprep.subr.mxu0 0.0
    %2954 = vmatpush1.msra.mxu0 0.0
    %2955 = vmatprep.subr.mxu0 0.0
    %2956 = vmatpush1.msra.mxu0 0.0
    %2957 = vmatprep.subr.mxu0 0.0
    %2958 = vmatpush1.msra.mxu0 0.0
    %2959 = vmatprep.subr.mxu0 0.0
    %2960 = vmatpush1.msra.mxu0 0.0
    %2961 = vmatprep.subr.mxu0 0.0
    %2962 = vmatpush1.msra.mxu0 0.0
    %2963 = vmatprep.subr.mxu0 0.0
    %2964 = vmatpush1.msra.mxu0 0.0
    %2965 = vmatprep.subr.mxu0 0.0
    %2966 = vmatpush1.msra.mxu0 0.0
    %2967 = vmatprep.subr.mxu0 0.0
    %2968 = vmatpush1.msra.mxu0 0.0
    %2969 = vmatprep.subr.mxu0 0.0
    %2970 = vmatpush1.msra.mxu0 0.0
    %2971 = vmatprep.subr.mxu0 0.0
    %2972 = vmatpush1.msra.mxu0 0.0
    %2973 = vmatprep.subr.mxu0 0.0
    %2974 = vmatpush1.msra.mxu0 0.0
    %2975 = vmatprep.subr.mxu0 0.0
    %2976 = vmatpush1.msra.mxu0 0.0
    %2977 = vmatprep.subr.mxu0 0.0
    %2978 = vmatpush1.msra.mxu0 0.0
    %2979 = vmatprep.subr.mxu0 0.0
    %2980 = vmatpush1.msra.mxu0 0.0
    %2981 = vmatprep.subr.mxu0 0.0
    %2982 = vmatpush1.msra.mxu0 0.0
    %2983 = vmatprep.mubr.f32.mxu0 0.0
    %2984 = vmatmul.mubr.f32.gmra.mrb[0].mxu0 %v322
    %v2985 = vpop.f32.mrb[0].mxu0
    %v2986 = vadd.f32 %v2755, %v2985
    %v2987 = vpop.f32.mrb[0].mxu0
    %v2988 = vadd.f32 %v2757, %v2987
    %2989 = vdwg.mxu0
    %2990 = vrot.lane.b32.xlu0 %v2480, 17
    %v2991 = vpop.permute.xlu0 %2990
    %2992 = vrot.lane.b32.xlu0 %v2486, 17
    %v2993 = vpop.permute.xlu0 %2992
    %2994 = vrot.lane.b32.xlu0 %v2481, 17
    %v2995 = vpop.permute.xlu0 %2994
    %2996 = vrot.lane.b32.xlu0 %v2487, 17
    %v2997 = vpop.permute.xlu0 %2996
    %2998 = vrot.lane.b32.xlu0 %v2482, 17
    %v2999 = vpop.permute.xlu0 %2998
    %3000 = vrot.lane.b32.xlu0 %v2488, 17
    %v3001 = vpop.permute.xlu0 %3000
    %v3002 = vsel %vm567, %v2999, %v3001
    %v3003 = vsel %vm567, %v2997, %v2999
    %v3004 = vsel %vm567, %v2995, %v2997
    %v3005 = vsel %vm567, %v2993, %v2995
    %v3006 = vsel %vm567, %v2991, %v2993
    %v3007 = vsel %vm567, %v3001, %v2991
    %v3009 = vsel %vm89, %v3007, 0
    %v3012 = vsel %vm89, %v3006, 0
    %v3015 = vsel %vm89, %v3005, 0
    %v3018 = vsel %vm89, %v3004, 0
    %v3021 = vsel %vm89, %v3003, 0
    %v3024 = vsel %vm89, %v3002, 0
    %3026 = vmatprep.subr.mxu0 %v3012
    %3027 = vmatpush1.msra.mxu0 %v3009
    %3028 = vmatprep.subr.mxu0 0.0
    %3029 = vmatpush1.msra.mxu0 0.0
    %3030 = vmatprep.subr.mxu0 0.0
    %3031 = vmatpush1.msra.mxu0 0.0
    %3032 = vmatprep.subr.mxu0 0.0
    %3033 = vmatpush1.msra.mxu0 0.0
    %3034 = vmatprep.subr.mxu0 0.0
    %3035 = vmatpush1.msra.mxu0 0.0
    %3036 = vmatprep.subr.mxu0 0.0
    %3037 = vmatpush1.msra.mxu0 0.0
    %3038 = vmatprep.subr.mxu0 0.0
    %3039 = vmatpush1.msra.mxu0 0.0
    %3040 = vmatprep.subr.mxu0 0.0
    %3041 = vmatpush1.msra.mxu0 0.0
    %3042 = vmatprep.subr.mxu0 0.0
    %3043 = vmatpush1.msra.mxu0 0.0
    %3044 = vmatprep.subr.mxu0 0.0
    %3045 = vmatpush1.msra.mxu0 0.0
    %3046 = vmatprep.subr.mxu0 0.0
    %3047 = vmatpush1.msra.mxu0 0.0
    %3048 = vmatprep.subr.mxu0 0.0
    %3049 = vmatpush1.msra.mxu0 0.0
    %3050 = vmatprep.subr.mxu0 0.0
    %3051 = vmatpush1.msra.mxu0 0.0
    %3052 = vmatprep.subr.mxu0 0.0
    %3053 = vmatpush1.msra.mxu0 0.0
    %3054 = vmatprep.subr.mxu0 0.0
    %3055 = vmatpush1.msra.mxu0 0.0
    %3056 = vmatprep.subr.mxu0 0.0
    %3057 = vmatpush1.msra.mxu0 0.0
    %3058 = vmatprep.subr.mxu0 0.0
    %3059 = vmatpush1.msra.mxu0 0.0
    %3060 = vmatprep.subr.mxu0 0.0
    %3061 = vmatpush1.msra.mxu0 0.0
    %3062 = vmatprep.subr.mxu0 0.0
    %3063 = vmatpush1.msra.mxu0 0.0
    %3064 = vmatprep.subr.mxu0 0.0
    %3065 = vmatpush1.msra.mxu0 0.0
    %3066 = vmatprep.subr.mxu0 0.0
    %3067 = vmatpush1.msra.mxu0 0.0
    %3068 = vmatprep.subr.mxu0 0.0
    %3069 = vmatpush1.msra.mxu0 0.0
    %3070 = vmatprep.subr.mxu0 0.0
    %3071 = vmatpush1.msra.mxu0 0.0
    %3072 = vmatprep.subr.mxu0 0.0
    %3073 = vmatpush1.msra.mxu0 0.0
    %3074 = vmatprep.subr.mxu0 0.0
    %3075 = vmatpush1.msra.mxu0 0.0
    %3076 = vmatprep.subr.mxu0 0.0
    %3077 = vmatpush1.msra.mxu0 0.0
    %3078 = vmatprep.subr.mxu0 0.0
    %3079 = vmatpush1.msra.mxu0 0.0
    %3080 = vmatprep.subr.mxu0 0.0
    %3081 = vmatpush1.msra.mxu0 0.0
    %3082 = vmatprep.subr.mxu0 0.0
    %3083 = vmatpush1.msra.mxu0 0.0
    %3084 = vmatprep.subr.mxu0 0.0
    %3085 = vmatpush1.msra.mxu0 0.0
    %3086 = vmatprep.subr.mxu0 0.0
    %3087 = vmatpush1.msra.mxu0 0.0
    %3088 = vmatprep.subr.mxu0 0.0
    %3089 = vmatpush1.msra.mxu0 0.0
    %3090 = vmatprep.mubr.f32.mxu0 0.0
    %3091 = vmatmul.mubr.f32.gmra.mrb[0].mxu0 %v575
    %v3092 = vpop.f32.mrb[0].mxu0
    %v3093 = vadd.f32 0.0, %v3092
    %v3094 = vpop.f32.mrb[0].mxu0
    %v3095 = vadd.f32 0.0, %v3094
    %3096 = vdwg.mxu0
    %3097 = vmatprep.subr.mxu0 %v3018
    %3098 = vmatpush1.msra.mxu0 %v3015
    %3099 = vmatprep.subr.mxu0 0.0
    %3100 = vmatpush1.msra.mxu0 0.0
    %3101 = vmatprep.subr.mxu0 0.0
    %3102 = vmatpush1.msra.mxu0 0.0
    %3103 = vmatprep.subr.mxu0 0.0
    %3104 = vmatpush1.msra.mxu0 0.0
    %3105 = vmatprep.subr.mxu0 0.0
    %3106 = vmatpush1.msra.mxu0 0.0
    %3107 = vmatprep.subr.mxu0 0.0
    %3108 = vmatpush1.msra.mxu0 0.0
    %3109 = vmatprep.subr.mxu0 0.0
    %3110 = vmatpush1.msra.mxu0 0.0
    %3111 = vmatprep.subr.mxu0 0.0
    %3112 = vmatpush1.msra.mxu0 0.0
    %3113 = vmatprep.subr.mxu0 0.0
    %3114 = vmatpush1.msra.mxu0 0.0
    %3115 = vmatprep.subr.mxu0 0.0
    %3116 = vmatpush1.msra.mxu0 0.0
    %3117 = vmatprep.subr.mxu0 0.0
    %3118 = vmatpush1.msra.mxu0 0.0
    %3119 = vmatprep.subr.mxu0 0.0
    %3120 = vmatpush1.msra.mxu0 0.0
    %3121 = vmatprep.subr.mxu0 0.0
    %3122 = vmatpush1.msra.mxu0 0.0
    %3123 = vmatprep.subr.mxu0 0.0
    %3124 = vmatpush1.msra.mxu0 0.0
    %3125 = vmatprep.subr.mxu0 0.0
    %3126 = vmatpush1.msra.mxu0 0.0
    %3127 = vmatprep.subr.mxu0 0.0
    %3128 = vmatpush1.msra.mxu0 0.0
    %3129 = vmatprep.subr.mxu0 0.0
    %3130 = vmatpush1.msra.mxu0 0.0
    %3131 = vmatprep.subr.mxu0 0.0
    %3132 = vmatpush1.msra.mxu0 0.0
    %3133 = vmatprep.subr.mxu0 0.0
    %3134 = vmatpush1.msra.mxu0 0.0
    %3135 = vmatprep.subr.mxu0 0.0
    %3136 = vmatpush1.msra.mxu0 0.0
    %3137 = vmatprep.subr.mxu0 0.0
    %3138 = vmatpush1.msra.mxu0 0.0
    %3139 = vmatprep.subr.mxu0 0.0
    %3140 = vmatpush1.msra.mxu0 0.0
    %3141 = vmatprep.subr.mxu0 0.0
    %3142 = vmatpush1.msra.mxu0 0.0
    %3143 = vmatprep.subr.mxu0 0.0
    %3144 = vmatpush1.msra.mxu0 0.0
    %3145 = vmatprep.subr.mxu0 0.0
    %3146 = vmatpush1.msra.mxu0 0.0
    %3147 = vmatprep.subr.mxu0 0.0
    %3148 = vmatpush1.msra.mxu0 0.0
    %3149 = vmatprep.subr.mxu0 0.0
    %3150 = vmatpush1.msra.mxu0 0.0
    %3151 = vmatprep.subr.mxu0 0.0
    %3152 = vmatpush1.msra.mxu0 0.0
    %3153 = vmatprep.subr.mxu0 0.0
    %3154 = vmatpush1.msra.mxu0 0.0
    %3155 = vmatprep.subr.mxu0 0.0
    %3156 = vmatpush1.msra.mxu0 0.0
    %3157 = vmatprep.subr.mxu0 0.0
    %3158 = vmatpush1.msra.mxu0 0.0
    %3159 = vmatprep.subr.mxu0 0.0
    %3160 = vmatpush1.msra.mxu0 0.0
    %3161 = vmatprep.mubr.f32.mxu0 0.0
    %3162 = vmatmul.mubr.f32.gmra.mrb[0].mxu0 %v575
    %v3163 = vpop.f32.mrb[0].mxu0
    %v3164 = vadd.f32 0.0, %v3163
    %v3165 = vpop.f32.mrb[0].mxu0
    %v3166 = vadd.f32 0.0, %v3165
    %3167 = vdwg.mxu0
    %3168 = vmatprep.subr.mxu0 %v3024
    %3169 = vmatpush1.msra.mxu0 %v3021
    %3170 = vmatprep.subr.mxu0 0.0
    %3171 = vmatpush1.msra.mxu0 0.0
    %3172 = vmatprep.subr.mxu0 0.0
    %3173 = vmatpush1.msra.mxu0 0.0
    %3174 = vmatprep.subr.mxu0 0.0
    %3175 = vmatpush1.msra.mxu0 0.0
    %3176 = vmatprep.subr.mxu0 0.0
    %3177 = vmatpush1.msra.mxu0 0.0
    %3178 = vmatprep.subr.mxu0 0.0
    %3179 = vmatpush1.msra.mxu0 0.0
    %3180 = vmatprep.subr.mxu0 0.0
    %3181 = vmatpush1.msra.mxu0 0.0
    %3182 = vmatprep.subr.mxu0 0.0
    %3183 = vmatpush1.msra.mxu0 0.0
    %3184 = vmatprep.subr.mxu0 0.0
    %3185 = vmatpush1.msra.mxu0 0.0
    %3186 = vmatprep.subr.mxu0 0.0
    %3187 = vmatpush1.msra.mxu0 0.0
    %3188 = vmatprep.subr.mxu0 0.0
    %3189 = vmatpush1.msra.mxu0 0.0
    %3190 = vmatprep.subr.mxu0 0.0
    %3191 = vmatpush1.msra.mxu0 0.0
    %3192 = vmatprep.subr.mxu0 0.0
    %3193 = vmatpush1.msra.mxu0 0.0
    %3194 = vmatprep.subr.mxu0 0.0
    %3195 = vmatpush1.msra.mxu0 0.0
    %3196 = vmatprep.subr.mxu0 0.0
    %3197 = vmatpush1.msra.mxu0 0.0
    %3198 = vmatprep.subr.mxu0 0.0
    %3199 = vmatpush1.msra.mxu0 0.0
    %3200 = vmatprep.subr.mxu0 0.0
    %3201 = vmatpush1.msra.mxu0 0.0
    %3202 = vmatprep.subr.mxu0 0.0
    %3203 = vmatpush1.msra.mxu0 0.0
    %3204 = vmatprep.subr.mxu0 0.0
    %3205 = vmatpush1.msra.mxu0 0.0
    %3206 = vmatprep.subr.mxu0 0.0
    %3207 = vmatpush1.msra.mxu0 0.0
    %3208 = vmatprep.subr.mxu0 0.0
    %3209 = vmatpush1.msra.mxu0 0.0
    %3210 = vmatprep.subr.mxu0 0.0
    %3211 = vmatpush1.msra.mxu0 0.0
    %3212 = vmatprep.subr.mxu0 0.0
    %3213 = vmatpush1.msra.mxu0 0.0
    %3214 = vmatprep.subr.mxu0 0.0
    %3215 = vmatpush1.msra.mxu0 0.0
    %3216 = vmatprep.subr.mxu0 0.0
    %3217 = vmatpush1.msra.mxu0 0.0
    %3218 = vmatprep.subr.mxu0 0.0
    %3219 = vmatpush1.msra.mxu0 0.0
    %3220 = vmatprep.subr.mxu0 0.0
    %3221 = vmatpush1.msra.mxu0 0.0
    %3222 = vmatprep.subr.mxu0 0.0
    %3223 = vmatpush1.msra.mxu0 0.0
    %3224 = vmatprep.subr.mxu0 0.0
    %3225 = vmatpush1.msra.mxu0 0.0
    %3226 = vmatprep.subr.mxu0 0.0
    %3227 = vmatpush1.msra.mxu0 0.0
    %3228 = vmatprep.subr.mxu0 0.0
    %3229 = vmatpush1.msra.mxu0 0.0
    %3230 = vmatprep.subr.mxu0 0.0
    %3231 = vmatpush1.msra.mxu0 0.0
    %3232 = vmatprep.mubr.f32.mxu0 0.0
    %3233 = vmatmul.mubr.f32.gmra.mrb[0].mxu0 %v575
    %v3234 = vpop.f32.mrb[0].mxu0
    %v3235 = vadd.f32 0.0, %v3234
    %v3236 = vpop.f32.mrb[0].mxu0
    %v3237 = vadd.f32 0.0, %v3236
    %3238 = vdwg.mxu0
    %v3239 = vadd.f32 %v2844, %v3093
    %v3240 = vadd.f32 %v2846, %v3095
    %v3241 = vadd.f32 %v2915, %v3164
    %v3242 = vadd.f32 %v2917, %v3166
    %v3243 = vadd.f32 %v2986, %v3235
    %v3244 = vadd.f32 %v2988, %v3237
    %3245 = vrot.lane.b32.xlu0 %v2480, 1
    %v3246 = vpop.permute.xlu0 %3245
    %3247 = vrot.lane.b32.xlu0 %v2486, 1
    %v3248 = vpop.permute.xlu0 %3247
    %3249 = vrot.lane.b32.xlu0 %v2481, 1
    %v3250 = vpop.permute.xlu0 %3249
    %3251 = vrot.lane.b32.xlu0 %v2487, 1
    %v3252 = vpop.permute.xlu0 %3251
    %3253 = vrot.lane.b32.xlu0 %v2482, 1
    %v3254 = vpop.permute.xlu0 %3253
    %3255 = vrot.lane.b32.xlu0 %v2488, 1
    %v3256 = vpop.permute.xlu0 %3255
    %v3257 = vsel %vm826, %v3254, %v3256
    %v3258 = vsel %vm826, %v3252, %v3254
    %v3259 = vsel %vm826, %v3250, %v3252
    %v3260 = vsel %vm826, %v3248, %v3250
    %v3261 = vsel %vm826, %v3246, %v3248
    %v3262 = vsel %vm826, %v3256, %v3246
    %v3264 = vsel %vm89, %v3262, 0
    %v3267 = vsel %vm89, %v3261, 0
    %v3270 = vsel %vm89, %v3260, 0
    %v3273 = vsel %vm89, %v3259, 0
    %v3276 = vsel %vm89, %v3258, 0
    %v3279 = vsel %vm89, %v3257, 0
    %3281 = vmatprep.subr.mxu0 %v3267
    %3282 = vmatpush1.msra.mxu0 %v3264
    %3283 = vmatprep.subr.mxu0 0.0
    %3284 = vmatpush1.msra.mxu0 0.0
    %3285 = vmatprep.subr.mxu0 0.0
    %3286 = vmatpush1.msra.mxu0 0.0
    %3287 = vmatprep.subr.mxu0 0.0
    %3288 = vmatpush1.msra.mxu0 0.0
    %3289 = vmatprep.subr.mxu0 0.0
    %3290 = vmatpush1.msra.mxu0 0.0
    %3291 = vmatprep.subr.mxu0 0.0
    %3292 = vmatpush1.msra.mxu0 0.0
    %3293 = vmatprep.subr.mxu0 0.0
    %3294 = vmatpush1.msra.mxu0 0.0
    %3295 = vmatprep.subr.mxu0 0.0
    %3296 = vmatpush1.msra.mxu0 0.0
    %3297 = vmatprep.subr.mxu0 0.0
    %3298 = vmatpush1.msra.mxu0 0.0
    %3299 = vmatprep.subr.mxu0 0.0
    %3300 = vmatpush1.msra.mxu0 0.0
    %3301 = vmatprep.subr.mxu0 0.0
    %3302 = vmatpush1.msra.mxu0 0.0
    %3303 = vmatprep.subr.mxu0 0.0
    %3304 = vmatpush1.msra.mxu0 0.0
    %3305 = vmatprep.subr.mxu0 0.0
    %3306 = vmatpush1.msra.mxu0 0.0
    %3307 = vmatprep.subr.mxu0 0.0
    %3308 = vmatpush1.msra.mxu0 0.0
    %3309 = vmatprep.subr.mxu0 0.0
    %3310 = vmatpush1.msra.mxu0 0.0
    %3311 = vmatprep.subr.mxu0 0.0
    %3312 = vmatpush1.msra.mxu0 0.0
    %3313 = vmatprep.subr.mxu0 0.0
    %3314 = vmatpush1.msra.mxu0 0.0
    %3315 = vmatprep.subr.mxu0 0.0
    %3316 = vmatpush1.msra.mxu0 0.0
    %3317 = vmatprep.subr.mxu0 0.0
    %3318 = vmatpush1.msra.mxu0 0.0
    %3319 = vmatprep.subr.mxu0 0.0
    %3320 = vmatpush1.msra.mxu0 0.0
    %3321 = vmatprep.subr.mxu0 0.0
    %3322 = vmatpush1.msra.mxu0 0.0
    %3323 = vmatprep.subr.mxu0 0.0
    %3324 = vmatpush1.msra.mxu0 0.0
    %3325 = vmatprep.subr.mxu0 0.0
    %3326 = vmatpush1.msra.mxu0 0.0
    %3327 = vmatprep.subr.mxu0 0.0
    %3328 = vmatpush1.msra.mxu0 0.0
    %3329 = vmatprep.subr.mxu0 0.0
    %3330 = vmatpush1.msra.mxu0 0.0
    %3331 = vmatprep.subr.mxu0 0.0
    %3332 = vmatpush1.msra.mxu0 0.0
    %3333 = vmatprep.subr.mxu0 0.0
    %3334 = vmatpush1.msra.mxu0 0.0
    %3335 = vmatprep.subr.mxu0 0.0
    %3336 = vmatpush1.msra.mxu0 0.0
    %3337 = vmatprep.subr.mxu0 0.0
    %3338 = vmatpush1.msra.mxu0 0.0
    %3339 = vmatprep.subr.mxu0 0.0
    %3340 = vmatpush1.msra.mxu0 0.0
    %3341 = vmatprep.subr.mxu0 0.0
    %3342 = vmatpush1.msra.mxu0 0.0
    %3343 = vmatprep.subr.mxu0 0.0
    %3344 = vmatpush1.msra.mxu0 0.0
    %3345 = vmatprep.mubr.f32.mxu0 0.0
    %3346 = vmatmul.mubr.f32.gmra.mrb[0].mxu0 %v834
    %v3347 = vpop.f32.mrb[0].mxu0
    %v3348 = vadd.f32 0.0, %v3347
    %v3349 = vpop.f32.mrb[0].mxu0
    %v3350 = vadd.f32 0.0, %v3349
    %3351 = vdwg.mxu0
    %3352 = vmatprep.subr.mxu0 %v3273
    %3353 = vmatpush1.msra.mxu0 %v3270
    %3354 = vmatprep.subr.mxu0 0.0
    %3355 = vmatpush1.msra.mxu0 0.0
    %3356 = vmatprep.subr.mxu0 0.0
    %3357 = vmatpush1.msra.mxu0 0.0
    %3358 = vmatprep.subr.mxu0 0.0
    %3359 = vmatpush1.msra.mxu0 0.0
    %3360 = vmatprep.subr.mxu0 0.0
    %3361 = vmatpush1.msra.mxu0 0.0
    %3362 = vmatprep.subr.mxu0 0.0
    %3363 = vmatpush1.msra.mxu0 0.0
    %3364 = vmatprep.subr.mxu0 0.0
    %3365 = vmatpush1.msra.mxu0 0.0
    %3366 = vmatprep.subr.mxu0 0.0
    %3367 = vmatpush1.msra.mxu0 0.0
    %3368 = vmatprep.subr.mxu0 0.0
    %3369 = vmatpush1.msra.mxu0 0.0
    %3370 = vmatprep.subr.mxu0 0.0
    %3371 = vmatpush1.msra.mxu0 0.0
    %3372 = vmatprep.subr.mxu0 0.0
    %3373 = vmatpush1.msra.mxu0 0.0
    %3374 = vmatprep.subr.mxu0 0.0
    %3375 = vmatpush1.msra.mxu0 0.0
    %3376 = vmatprep.subr.mxu0 0.0
    %3377 = vmatpush1.msra.mxu0 0.0
    %3378 = vmatprep.subr.mxu0 0.0
    %3379 = vmatpush1.msra.mxu0 0.0
    %3380 = vmatprep.subr.mxu0 0.0
    %3381 = vmatpush1.msra.mxu0 0.0
    %3382 = vmatprep.subr.mxu0 0.0
    %3383 = vmatpush1.msra.mxu0 0.0
    %3384 = vmatprep.subr.mxu0 0.0
    %3385 = vmatpush1.msra.mxu0 0.0
    %3386 = vmatprep.subr.mxu0 0.0
    %3387 = vmatpush1.msra.mxu0 0.0
    %3388 = vmatprep.subr.mxu0 0.0
    %3389 = vmatpush1.msra.mxu0 0.0
    %3390 = vmatprep.subr.mxu0 0.0
    %3391 = vmatpush1.msra.mxu0 0.0
    %3392 = vmatprep.subr.mxu0 0.0
    %3393 = vmatpush1.msra.mxu0 0.0
    %3394 = vmatprep.subr.mxu0 0.0
    %3395 = vmatpush1.msra.mxu0 0.0
    %3396 = vmatprep.subr.mxu0 0.0
    %3397 = vmatpush1.msra.mxu0 0.0
    %3398 = vmatprep.subr.mxu0 0.0
    %3399 = vmatpush1.msra.mxu0 0.0
    %3400 = vmatprep.subr.mxu0 0.0
    %3401 = vmatpush1.msra.mxu0 0.0
    %3402 = vmatprep.subr.mxu0 0.0
    %3403 = vmatpush1.msra.mxu0 0.0
    %3404 = vmatprep.subr.mxu0 0.0
    %3405 = vmatpush1.msra.mxu0 0.0
    %3406 = vmatprep.subr.mxu0 0.0
    %3407 = vmatpush1.msra.mxu0 0.0
    %3408 = vmatprep.subr.mxu0 0.0
    %3409 = vmatpush1.msra.mxu0 0.0
    %3410 = vmatprep.subr.mxu0 0.0
    %3411 = vmatpush1.msra.mxu0 0.0
    %3412 = vmatprep.subr.mxu0 0.0
    %3413 = vmatpush1.msra.mxu0 0.0
    %3414 = vmatprep.subr.mxu0 0.0
    %3415 = vmatpush1.msra.mxu0 0.0
    %3416 = vmatprep.mubr.f32.mxu0 0.0
    %3417 = vmatmul.mubr.f32.gmra.mrb[0].mxu0 %v834
    %v3418 = vpop.f32.mrb[0].mxu0
    %v3419 = vadd.f32 0.0, %v3418
    %v3420 = vpop.f32.mrb[0].mxu0
    %v3421 = vadd.f32 0.0, %v3420
    %3422 = vdwg.mxu0
    %3423 = vmatprep.subr.mxu0 %v3279
    %3424 = vmatpush1.msra.mxu0 %v3276
    %3425 = vmatprep.subr.mxu0 0.0
    %3426 = vmatpush1.msra.mxu0 0.0
    %3427 = vmatprep.subr.mxu0 0.0
    %3428 = vmatpush1.msra.mxu0 0.0
    %3429 = vmatprep.subr.mxu0 0.0
    %3430 = vmatpush1.msra.mxu0 0.0
    %3431 = vmatprep.subr.mxu0 0.0
    %3432 = vmatpush1.msra.mxu0 0.0
    %3433 = vmatprep.subr.mxu0 0.0
    %3434 = vmatpush1.msra.mxu0 0.0
    %3435 = vmatprep.subr.mxu0 0.0
    %3436 = vmatpush1.msra.mxu0 0.0
    %3437 = vmatprep.subr.mxu0 0.0
    %3438 = vmatpush1.msra.mxu0 0.0
    %3439 = vmatprep.subr.mxu0 0.0
    %3440 = vmatpush1.msra.mxu0 0.0
    %3441 = vmatprep.subr.mxu0 0.0
    %3442 = vmatpush1.msra.mxu0 0.0
    %3443 = vmatprep.subr.mxu0 0.0
    %3444 = vmatpush1.msra.mxu0 0.0
    %3445 = vmatprep.subr.mxu0 0.0
    %3446 = vmatpush1.msra.mxu0 0.0
    %3447 = vmatprep.subr.mxu0 0.0
    %3448 = vmatpush1.msra.mxu0 0.0
    %3449 = vmatprep.subr.mxu0 0.0
    %3450 = vmatpush1.msra.mxu0 0.0
    %3451 = vmatprep.subr.mxu0 0.0
    %3452 = vmatpush1.msra.mxu0 0.0
    %3453 = vmatprep.subr.mxu0 0.0
    %3454 = vmatpush1.msra.mxu0 0.0
    %3455 = vmatprep.subr.mxu0 0.0
    %3456 = vmatpush1.msra.mxu0 0.0
    %3457 = vmatprep.subr.mxu0 0.0
    %3458 = vmatpush1.msra.mxu0 0.0
    %3459 = vmatprep.subr.mxu0 0.0
    %3460 = vmatpush1.msra.mxu0 0.0
    %3461 = vmatprep.subr.mxu0 0.0
    %3462 = vmatpush1.msra.mxu0 0.0
    %3463 = vmatprep.subr.mxu0 0.0
    %3464 = vmatpush1.msra.mxu0 0.0
    %3465 = vmatprep.subr.mxu0 0.0
    %3466 = vmatpush1.msra.mxu0 0.0
    %3467 = vmatprep.subr.mxu0 0.0
    %3468 = vmatpush1.msra.mxu0 0.0
    %3469 = vmatprep.subr.mxu0 0.0
    %3470 = vmatpush1.msra.mxu0 0.0
    %3471 = vmatprep.subr.mxu0 0.0
    %3472 = vmatpush1.msra.mxu0 0.0
    %3473 = vmatprep.subr.mxu0 0.0
    %3474 = vmatpush1.msra.mxu0 0.0
    %3475 = vmatprep.subr.mxu0 0.0
    %3476 = vmatpush1.msra.mxu0 0.0
    %3477 = vmatprep.subr.mxu0 0.0
    %3478 = vmatpush1.msra.mxu0 0.0
    %3479 = vmatprep.subr.mxu0 0.0
    %3480 = vmatpush1.msra.mxu0 0.0
    %3481 = vmatprep.subr.mxu0 0.0
    %3482 = vmatpush1.msra.mxu0 0.0
    %3483 = vmatprep.subr.mxu0 0.0
    %3484 = vmatpush1.msra.mxu0 0.0
    %3485 = vmatprep.subr.mxu0 0.0
    %3486 = vmatpush1.msra.mxu0 0.0
    %3487 = vmatprep.mubr.f32.mxu0 0.0
    %3488 = vmatmul.mubr.f32.gmra.mrb[0].mxu0 %v834
    %v3489 = vpop.f32.mrb[0].mxu0
    %v3490 = vadd.f32 0.0, %v3489
    %v3491 = vpop.f32.mrb[0].mxu0
    %v3492 = vadd.f32 0.0, %v3491
    %3493 = vdwg.mxu0
    %v3494 = vadd.f32 %v3239, %v3348
    %v3495 = vadd.f32 %v3240, %v3350
    %v3496 = vadd.f32 %v3241, %v3419
    %v3497 = vadd.f32 %v3242, %v3421
    %v3498 = vadd.f32 %v3243, %v3490
    %v3499 = vadd.f32 %v3244, %v3492
    %v3500 = vsel %vm89, %v2480, 0
    %v3502 = vsel %vm89, %v2486, 0
    %v3504 = vsel %vm89, %v2481, 0
    %v3506 = vsel %vm89, %v2487, 0
    %v3508 = vsel %vm89, %v2482, 0
    %v3510 = vsel %vm89, %v2488, 0
    %3512 = vmatprep.subr.mxu0 %v3502
    %3513 = vmatpush1.msra.mxu0 %v3500
    %3514 = vmatprep.subr.mxu0 0.0
    %3515 = vmatpush1.msra.mxu0 0.0
    %3516 = vmatprep.subr.mxu0 0.0
    %3517 = vmatpush1.msra.mxu0 0.0
    %3518 = vmatprep.subr.mxu0 0.0
    %3519 = vmatpush1.msra.mxu0 0.0
    %3520 = vmatprep.subr.mxu0 0.0
    %3521 = vmatpush1.msra.mxu0 0.0
    %3522 = vmatprep.subr.mxu0 0.0
    %3523 = vmatpush1.msra.mxu0 0.0
    %3524 = vmatprep.subr.mxu0 0.0
    %3525 = vmatpush1.msra.mxu0 0.0
    %3526 = vmatprep.subr.mxu0 0.0
    %3527 = vmatpush1.msra.mxu0 0.0
    %3528 = vmatprep.subr.mxu0 0.0
    %3529 = vmatpush1.msra.mxu0 0.0
    %3530 = vmatprep.subr.mxu0 0.0
    %3531 = vmatpush1.msra.mxu0 0.0
    %3532 = vmatprep.subr.mxu0 0.0
    %3533 = vmatpush1.msra.mxu0 0.0
    %3534 = vmatprep.subr.mxu0 0.0
    %3535 = vmatpush1.msra.mxu0 0.0
    %3536 = vmatprep.subr.mxu0 0.0
    %3537 = vmatpush1.msra.mxu0 0.0
    %3538 = vmatprep.subr.mxu0 0.0
    %3539 = vmatpush1.msra.mxu0 0.0
    %3540 = vmatprep.subr.mxu0 0.0
    %3541 = vmatpush1.msra.mxu0 0.0
    %3542 = vmatprep.subr.mxu0 0.0
    %3543 = vmatpush1.msra.mxu0 0.0
    %3544 = vmatprep.subr.mxu0 0.0
    %3545 = vmatpush1.msra.mxu0 0.0
    %3546 = vmatprep.subr.mxu0 0.0
    %3547 = vmatpush1.msra.mxu0 0.0
    %3548 = vmatprep.subr.mxu0 0.0
    %3549 = vmatpush1.msra.mxu0 0.0
    %3550 = vmatprep.subr.mxu0 0.0
    %3551 = vmatpush1.msra.mxu0 0.0
    %3552 = vmatprep.subr.mxu0 0.0
    %3553 = vmatpush1.msra.mxu0 0.0
    %3554 = vmatprep.subr.mxu0 0.0
    %3555 = vmatpush1.msra.mxu0 0.0
    %3556 = vmatprep.subr.mxu0 0.0
    %3557 = vmatpush1.msra.mxu0 0.0
    %3558 = vmatprep.subr.mxu0 0.0
    %3559 = vmatpush1.msra.mxu0 0.0
    %3560 = vmatprep.subr.mxu0 0.0
    %3561 = vmatpush1.msra.mxu0 0.0
    %3562 = vmatprep.subr.mxu0 0.0
    %3563 = vmatpush1.msra.mxu0 0.0
    %3564 = vmatprep.subr.mxu0 0.0
    %3565 = vmatpush1.msra.mxu0 0.0
    %3566 = vmatprep.subr.mxu0 0.0
    %3567 = vmatpush1.msra.mxu0 0.0
    %3568 = vmatprep.subr.mxu0 0.0
    %3569 = vmatpush1.msra.mxu0 0.0
    %3570 = vmatprep.subr.mxu0 0.0
    %3571 = vmatpush1.msra.mxu0 0.0
    %3572 = vmatprep.subr.mxu0 0.0
    %3573 = vmatpush1.msra.mxu0 0.0
    %3574 = vmatprep.subr.mxu0 0.0
    %3575 = vmatpush1.msra.mxu0 0.0
    %3576 = vmatprep.mubr.f32.mxu0 0.0
    %3577 = vmatmul.mubr.f32.gmra.mrb[0].mxu0 %v1074
    %v3578 = vpop.f32.mrb[0].mxu0
    %v3579 = vadd.f32 0.0, %v3578
    %v3580 = vpop.f32.mrb[0].mxu0
    %v3581 = vadd.f32 0.0, %v3580
    %3582 = vdwg.mxu0
    %3583 = vmatprep.subr.mxu0 %v3506
    %3584 = vmatpush1.msra.mxu0 %v3504
    %3585 = vmatprep.subr.mxu0 0.0
    %3586 = vmatpush1.msra.mxu0 0.0
    %3587 = vmatprep.subr.mxu0 0.0
    %3588 = vmatpush1.msra.mxu0 0.0
    %3589 = vmatprep.subr.mxu0 0.0
    %3590 = vmatpush1.msra.mxu0 0.0
    %3591 = vmatprep.subr.mxu0 0.0
    %3592 = vmatpush1.msra.mxu0 0.0
    %3593 = vmatprep.subr.mxu0 0.0
    %3594 = vmatpush1.msra.mxu0 0.0
    %3595 = vmatprep.subr.mxu0 0.0
    %3596 = vmatpush1.msra.mxu0 0.0
    %3597 = vmatprep.subr.mxu0 0.0
    %3598 = vmatpush1.msra.mxu0 0.0
    %3599 = vmatprep.subr.mxu0 0.0
    %3600 = vmatpush1.msra.mxu0 0.0
    %3601 = vmatprep.subr.mxu0 0.0
    %3602 = vmatpush1.msra.mxu0 0.0
    %3603 = vmatprep.subr.mxu0 0.0
    %3604 = vmatpush1.msra.mxu0 0.0
    %3605 = vmatprep.subr.mxu0 0.0
    %3606 = vmatpush1.msra.mxu0 0.0
    %3607 = vmatprep.subr.mxu0 0.0
    %3608 = vmatpush1.msra.mxu0 0.0
    %3609 = vmatprep.subr.mxu0 0.0
    %3610 = vmatpush1.msra.mxu0 0.0
    %3611 = vmatprep.subr.mxu0 0.0
    %3612 = vmatpush1.msra.mxu0 0.0
    %3613 = vmatprep.subr.mxu0 0.0
    %3614 = vmatpush1.msra.mxu0 0.0
    %3615 = vmatprep.subr.mxu0 0.0
    %3616 = vmatpush1.msra.mxu0 0.0
    %3617 = vmatprep.subr.mxu0 0.0
    %3618 = vmatpush1.msra.mxu0 0.0
    %3619 = vmatprep.subr.mxu0 0.0
    %3620 = vmatpush1.msra.mxu0 0.0
    %3621 = vmatprep.subr.mxu0 0.0
    %3622 = vmatpush1.msra.mxu0 0.0
    %3623 = vmatprep.subr.mxu0 0.0
    %3624 = vmatpush1.msra.mxu0 0.0
    %3625 = vmatprep.subr.mxu0 0.0
    %3626 = vmatpush1.msra.mxu0 0.0
    %3627 = vmatprep.subr.mxu0 0.0
    %3628 = vmatpush1.msra.mxu0 0.0
    %3629 = vmatprep.subr.mxu0 0.0
    %3630 = vmatpush1.msra.mxu0 0.0
    %3631 = vmatprep.subr.mxu0 0.0
    %3632 = vmatpush1.msra.mxu0 0.0
    %3633 = vmatprep.subr.mxu0 0.0
    %3634 = vmatpush1.msra.mxu0 0.0
    %3635 = vmatprep.subr.mxu0 0.0
    %3636 = vmatpush1.msra.mxu0 0.0
    %3637 = vmatprep.subr.mxu0 0.0
    %3638 = vmatpush1.msra.mxu0 0.0
    %3639 = vmatprep.subr.mxu0 0.0
    %3640 = vmatpush1.msra.mxu0 0.0
    %3641 = vmatprep.subr.mxu0 0.0
    %3642 = vmatpush1.msra.mxu0 0.0
    %3643 = vmatprep.subr.mxu0 0.0
    %3644 = vmatpush1.msra.mxu0 0.0
    %3645 = vmatprep.subr.mxu0 0.0
    %3646 = vmatpush1.msra.mxu0 0.0
    %3647 = vmatprep.mubr.f32.mxu0 0.0
    %3648 = vmatmul.mubr.f32.gmra.mrb[0].mxu0 %v1074
    %v3649 = vpop.f32.mrb[0].mxu0
    %v3650 = vadd.f32 0.0, %v3649
    %v3651 = vpop.f32.mrb[0].mxu0
    %v3652 = vadd.f32 0.0, %v3651
    %3653 = vdwg.mxu0
    %3654 = vmatprep.subr.mxu0 %v3510
    %3655 = vmatpush1.msra.mxu0 %v3508
    %3656 = vmatprep.subr.mxu0 0.0
    %3657 = vmatpush1.msra.mxu0 0.0
    %3658 = vmatprep.subr.mxu0 0.0
    %3659 = vmatpush1.msra.mxu0 0.0
    %3660 = vmatprep.subr.mxu0 0.0
    %3661 = vmatpush1.msra.mxu0 0.0
    %3662 = vmatprep.subr.mxu0 0.0
    %3663 = vmatpush1.msra.mxu0 0.0
    %3664 = vmatprep.subr.mxu0 0.0
    %3665 = vmatpush1.msra.mxu0 0.0
    %3666 = vmatprep.subr.mxu0 0.0
    %3667 = vmatpush1.msra.mxu0 0.0
    %3668 = vmatprep.subr.mxu0 0.0
    %3669 = vmatpush1.msra.mxu0 0.0
    %3670 = vmatprep.subr.mxu0 0.0
    %3671 = vmatpush1.msra.mxu0 0.0
    %3672 = vmatprep.subr.mxu0 0.0
    %3673 = vmatpush1.msra.mxu0 0.0
    %3674 = vmatprep.subr.mxu0 0.0
    %3675 = vmatpush1.msra.mxu0 0.0
    %3676 = vmatprep.subr.mxu0 0.0
    %3677 = vmatpush1.msra.mxu0 0.0
    %3678 = vmatprep.subr.mxu0 0.0
    %3679 = vmatpush1.msra.mxu0 0.0
    %3680 = vmatprep.subr.mxu0 0.0
    %3681 = vmatpush1.msra.mxu0 0.0
    %3682 = vmatprep.subr.mxu0 0.0
    %3683 = vmatpush1.msra.mxu0 0.0
    %3684 = vmatprep.subr.mxu0 0.0
    %3685 = vmatpush1.msra.mxu0 0.0
    %3686 = vmatprep.subr.mxu0 0.0
    %3687 = vmatpush1.msra.mxu0 0.0
    %3688 = vmatprep.subr.mxu0 0.0
    %3689 = vmatpush1.msra.mxu0 0.0
    %3690 = vmatprep.subr.mxu0 0.0
    %3691 = vmatpush1.msra.mxu0 0.0
    %3692 = vmatprep.subr.mxu0 0.0
    %3693 = vmatpush1.msra.mxu0 0.0
    %3694 = vmatprep.subr.mxu0 0.0
    %3695 = vmatpush1.msra.mxu0 0.0
    %3696 = vmatprep.subr.mxu0 0.0
    %3697 = vmatpush1.msra.mxu0 0.0
    %3698 = vmatprep.subr.mxu0 0.0
    %3699 = vmatpush1.msra.mxu0 0.0
    %3700 = vmatprep.subr.mxu0 0.0
    %3701 = vmatpush1.msra.mxu0 0.0
    %3702 = vmatprep.subr.mxu0 0.0
    %3703 = vmatpush1.msra.mxu0 0.0
    %3704 = vmatprep.subr.mxu0 0.0
    %3705 = vmatpush1.msra.mxu0 0.0
    %3706 = vmatprep.subr.mxu0 0.0
    %3707 = vmatpush1.msra.mxu0 0.0
    %3708 = vmatprep.subr.mxu0 0.0
    %3709 = vmatpush1.msra.mxu0 0.0
    %3710 = vmatprep.subr.mxu0 0.0
    %3711 = vmatpush1.msra.mxu0 0.0
    %3712 = vmatprep.subr.mxu0 0.0
    %3713 = vmatpush1.msra.mxu0 0.0
    %3714 = vmatprep.subr.mxu0 0.0
    %3715 = vmatpush1.msra.mxu0 0.0
    %3716 = vmatprep.subr.mxu0 0.0
    %3717 = vmatpush1.msra.mxu0 0.0
    %3718 = vmatprep.mubr.f32.mxu0 0.0
    %3719 = vmatmul.mubr.f32.gmra.mrb[0].mxu0 %v1074
    %v3720 = vpop.f32.mrb[0].mxu0
    %v3721 = vadd.f32 0.0, %v3720
    %v3722 = vpop.f32.mrb[0].mxu0
    %v3723 = vadd.f32 0.0, %v3722
    %3724 = vdwg.mxu0
    %v3725 = vadd.f32 %v3494, %v3579
    %v3726 = vadd.f32 %v3495, %v3581
    %v3727 = vadd.f32 %v3496, %v3650
    %v3728 = vadd.f32 %v3497, %v3652
    %v3729 = vadd.f32 %v3498, %v3721
    %v3730 = vadd.f32 %v3499, %v3723
    %3731 = vrot.lane.b32.xlu0 %v2480, 127
    %v3732 = vpop.permute.xlu0 %3731
    %3733 = vrot.lane.b32.xlu0 %v2486, 127
    %v3734 = vpop.permute.xlu0 %3733
    %3735 = vrot.lane.b32.xlu0 %v2481, 127
    %v3736 = vpop.permute.xlu0 %3735
    %3737 = vrot.lane.b32.xlu0 %v2487, 127
    %v3738 = vpop.permute.xlu0 %3737
    %3739 = vrot.lane.b32.xlu0 %v2482, 127
    %v3740 = vpop.permute.xlu0 %3739
    %3741 = vrot.lane.b32.xlu0 %v2488, 127
    %v3742 = vpop.permute.xlu0 %3741
    %v3743 = vsel %vm1319, %v3740, %v3742
    %v3744 = vsel %vm1319, %v3738, %v3740
    %v3745 = vsel %vm1319, %v3736, %v3738
    %v3746 = vsel %vm1319, %v3734, %v3736
    %v3747 = vsel %vm1319, %v3732, %v3734
    %v3748 = vsel %vm1319, %v3742, %v3732
    %v3750 = vsel %vm89, %v3747, 0
    %v3753 = vsel %vm89, %v3746, 0
    %v3756 = vsel %vm89, %v3745, 0
    %v3759 = vsel %vm89, %v3744, 0
    %v3762 = vsel %vm89, %v3743, 0
    %v3765 = vsel %vm89, %v3748, 0
    %3767 = vmatprep.subr.mxu0 %v3753
    %3768 = vmatpush1.msra.mxu0 %v3750
    %3769 = vmatprep.subr.mxu0 0.0
    %3770 = vmatpush1.msra.mxu0 0.0
    %3771 = vmatprep.subr.mxu0 0.0
    %3772 = vmatpush1.msra.mxu0 0.0
    %3773 = vmatprep.subr.mxu0 0.0
    %3774 = vmatpush1.msra.mxu0 0.0
    %3775 = vmatprep.subr.mxu0 0.0
    %3776 = vmatpush1.msra.mxu0 0.0
    %3777 = vmatprep.subr.mxu0 0.0
    %3778 = vmatpush1.msra.mxu0 0.0
    %3779 = vmatprep.subr.mxu0 0.0
    %3780 = vmatpush1.msra.mxu0 0.0
    %3781 = vmatprep.subr.mxu0 0.0
    %3782 = vmatpush1.msra.mxu0 0.0
    %3783 = vmatprep.subr.mxu0 0.0
    %3784 = vmatpush1.msra.mxu0 0.0
    %3785 = vmatprep.subr.mxu0 0.0
    %3786 = vmatpush1.msra.mxu0 0.0
    %3787 = vmatprep.subr.mxu0 0.0
    %3788 = vmatpush1.msra.mxu0 0.0
    %3789 = vmatprep.subr.mxu0 0.0
    %3790 = vmatpush1.msra.mxu0 0.0
    %3791 = vmatprep.subr.mxu0 0.0
    %3792 = vmatpush1.msra.mxu0 0.0
    %3793 = vmatprep.subr.mxu0 0.0
    %3794 = vmatpush1.msra.mxu0 0.0
    %3795 = vmatprep.subr.mxu0 0.0
    %3796 = vmatpush1.msra.mxu0 0.0
    %3797 = vmatprep.subr.mxu0 0.0
    %3798 = vmatpush1.msra.mxu0 0.0
    %3799 = vmatprep.subr.mxu0 0.0
    %3800 = vmatpush1.msra.mxu0 0.0
    %3801 = vmatprep.subr.mxu0 0.0
    %3802 = vmatpush1.msra.mxu0 0.0
    %3803 = vmatprep.subr.mxu0 0.0
    %3804 = vmatpush1.msra.mxu0 0.0
    %3805 = vmatprep.subr.mxu0 0.0
    %3806 = vmatpush1.msra.mxu0 0.0
    %3807 = vmatprep.subr.mxu0 0.0
    %3808 = vmatpush1.msra.mxu0 0.0
    %3809 = vmatprep.subr.mxu0 0.0
    %3810 = vmatpush1.msra.mxu0 0.0
    %3811 = vmatprep.subr.mxu0 0.0
    %3812 = vmatpush1.msra.mxu0 0.0
    %3813 = vmatprep.subr.mxu0 0.0
    %3814 = vmatpush1.msra.mxu0 0.0
    %3815 = vmatprep.subr.mxu0 0.0
    %3816 = vmatpush1.msra.mxu0 0.0
    %3817 = vmatprep.subr.mxu0 0.0
    %3818 = vmatpush1.msra.mxu0 0.0
    %3819 = vmatprep.subr.mxu0 0.0
    %3820 = vmatpush1.msra.mxu0 0.0
    %3821 = vmatprep.subr.mxu0 0.0
    %3822 = vmatpush1.msra.mxu0 0.0
    %3823 = vmatprep.subr.mxu0 0.0
    %3824 = vmatpush1.msra.mxu0 0.0
    %3825 = vmatprep.subr.mxu0 0.0
    %3826 = vmatpush1.msra.mxu0 0.0
    %3827 = vmatprep.subr.mxu0 0.0
    %3828 = vmatpush1.msra.mxu0 0.0
    %3829 = vmatprep.subr.mxu0 0.0
    %3830 = vmatpush1.msra.mxu0 0.0
    %3831 = vmatprep.mubr.f32.mxu0 0.0
    %3832 = vmatmul.mubr.f32.gmra.mrb[0].mxu0 %v1327
    %v3833 = vpop.f32.mrb[0].mxu0
    %v3834 = vadd.f32 0.0, %v3833
    %v3835 = vpop.f32.mrb[0].mxu0
    %v3836 = vadd.f32 0.0, %v3835
    %3837 = vdwg.mxu0
    %3838 = vmatprep.subr.mxu0 %v3759
    %3839 = vmatpush1.msra.mxu0 %v3756
    %3840 = vmatprep.subr.mxu0 0.0
    %3841 = vmatpush1.msra.mxu0 0.0
    %3842 = vmatprep.subr.mxu0 0.0
    %3843 = vmatpush1.msra.mxu0 0.0
    %3844 = vmatprep.subr.mxu0 0.0
    %3845 = vmatpush1.msra.mxu0 0.0
    %3846 = vmatprep.subr.mxu0 0.0
    %3847 = vmatpush1.msra.mxu0 0.0
    %3848 = vmatprep.subr.mxu0 0.0
    %3849 = vmatpush1.msra.mxu0 0.0
    %3850 = vmatprep.subr.mxu0 0.0
    %3851 = vmatpush1.msra.mxu0 0.0
    %3852 = vmatprep.subr.mxu0 0.0
    %3853 = vmatpush1.msra.mxu0 0.0
    %3854 = vmatprep.subr.mxu0 0.0
    %3855 = vmatpush1.msra.mxu0 0.0
    %3856 = vmatprep.subr.mxu0 0.0
    %3857 = vmatpush1.msra.mxu0 0.0
    %3858 = vmatprep.subr.mxu0 0.0
    %3859 = vmatpush1.msra.mxu0 0.0
    %3860 = vmatprep.subr.mxu0 0.0
    %3861 = vmatpush1.msra.mxu0 0.0
    %3862 = vmatprep.subr.mxu0 0.0
    %3863 = vmatpush1.msra.mxu0 0.0
    %3864 = vmatprep.subr.mxu0 0.0
    %3865 = vmatpush1.msra.mxu0 0.0
    %3866 = vmatprep.subr.mxu0 0.0
    %3867 = vmatpush1.msra.mxu0 0.0
    %3868 = vmatprep.subr.mxu0 0.0
    %3869 = vmatpush1.msra.mxu0 0.0
    %3870 = vmatprep.subr.mxu0 0.0
    %3871 = vmatpush1.msra.mxu0 0.0
    %3872 = vmatprep.subr.mxu0 0.0
    %3873 = vmatpush1.msra.mxu0 0.0
    %3874 = vmatprep.subr.mxu0 0.0
    %3875 = vmatpush1.msra.mxu0 0.0
    %3876 = vmatprep.subr.mxu0 0.0
    %3877 = vmatpush1.msra.mxu0 0.0
    %3878 = vmatprep.subr.mxu0 0.0
    %3879 = vmatpush1.msra.mxu0 0.0
    %3880 = vmatprep.subr.mxu0 0.0
    %3881 = vmatpush1.msra.mxu0 0.0
    %3882 = vmatprep.subr.mxu0 0.0
    %3883 = vmatpush1.msra.mxu0 0.0
    %3884 = vmatprep.subr.mxu0 0.0
    %3885 = vmatpush1.msra.mxu0 0.0
    %3886 = vmatprep.subr.mxu0 0.0
    %3887 = vmatpush1.msra.mxu0 0.0
    %3888 = vmatprep.subr.mxu0 0.0
    %3889 = vmatpush1.msra.mxu0 0.0
    %3890 = vmatprep.subr.mxu0 0.0
    %3891 = vmatpush1.msra.mxu0 0.0
    %3892 = vmatprep.subr.mxu0 0.0
    %3893 = vmatpush1.msra.mxu0 0.0
    %3894 = vmatprep.subr.mxu0 0.0
    %3895 = vmatpush1.msra.mxu0 0.0
    %3896 = vmatprep.subr.mxu0 0.0
    %3897 = vmatpush1.msra.mxu0 0.0
    %3898 = vmatprep.subr.mxu0 0.0
    %3899 = vmatpush1.msra.mxu0 0.0
    %3900 = vmatprep.subr.mxu0 0.0
    %3901 = vmatpush1.msra.mxu0 0.0
    %3902 = vmatprep.mubr.f32.mxu0 0.0
    %3903 = vmatmul.mubr.f32.gmra.mrb[0].mxu0 %v1327
    %v3904 = vpop.f32.mrb[0].mxu0
    %v3905 = vadd.f32 0.0, %v3904
    %v3906 = vpop.f32.mrb[0].mxu0
    %v3907 = vadd.f32 0.0, %v3906
    %3908 = vdwg.mxu0
    %3909 = vmatprep.subr.mxu0 %v3765
    %3910 = vmatpush1.msra.mxu0 %v3762
    %3911 = vmatprep.subr.mxu0 0.0
    %3912 = vmatpush1.msra.mxu0 0.0
    %3913 = vmatprep.subr.mxu0 0.0
    %3914 = vmatpush1.msra.mxu0 0.0
    %3915 = vmatprep.subr.mxu0 0.0
    %3916 = vmatpush1.msra.mxu0 0.0
    %3917 = vmatprep.subr.mxu0 0.0
    %3918 = vmatpush1.msra.mxu0 0.0
    %3919 = vmatprep.subr.mxu0 0.0
    %3920 = vmatpush1.msra.mxu0 0.0
    %3921 = vmatprep.subr.mxu0 0.0
    %3922 = vmatpush1.msra.mxu0 0.0
    %3923 = vmatprep.subr.mxu0 0.0
    %3924 = vmatpush1.msra.mxu0 0.0
    %3925 = vmatprep.subr.mxu0 0.0
    %3926 = vmatpush1.msra.mxu0 0.0
    %3927 = vmatprep.subr.mxu0 0.0
    %3928 = vmatpush1.msra.mxu0 0.0
    %3929 = vmatprep.subr.mxu0 0.0
    %3930 = vmatpush1.msra.mxu0 0.0
    %3931 = vmatprep.subr.mxu0 0.0
    %3932 = vmatpush1.msra.mxu0 0.0
    %3933 = vmatprep.subr.mxu0 0.0
    %3934 = vmatpush1.msra.mxu0 0.0
    %3935 = vmatprep.subr.mxu0 0.0
    %3936 = vmatpush1.msra.mxu0 0.0
    %3937 = vmatprep.subr.mxu0 0.0
    %3938 = vmatpush1.msra.mxu0 0.0
    %3939 = vmatprep.subr.mxu0 0.0
    %3940 = vmatpush1.msra.mxu0 0.0
    %3941 = vmatprep.subr.mxu0 0.0
    %3942 = vmatpush1.msra.mxu0 0.0
    %3943 = vmatprep.subr.mxu0 0.0
    %3944 = vmatpush1.msra.mxu0 0.0
    %3945 = vmatprep.subr.mxu0 0.0
    %3946 = vmatpush1.msra.mxu0 0.0
    %3947 = vmatprep.subr.mxu0 0.0
    %3948 = vmatpush1.msra.mxu0 0.0
    %3949 = vmatprep.subr.mxu0 0.0
    %3950 = vmatpush1.msra.mxu0 0.0
    %3951 = vmatprep.subr.mxu0 0.0
    %3952 = vmatpush1.msra.mxu0 0.0
    %3953 = vmatprep.subr.mxu0 0.0
    %3954 = vmatpush1.msra.mxu0 0.0
    %3955 = vmatprep.subr.mxu0 0.0
    %3956 = vmatpush1.msra.mxu0 0.0
    %3957 = vmatprep.subr.mxu0 0.0
    %3958 = vmatpush1.msra.mxu0 0.0
    %3959 = vmatprep.subr.mxu0 0.0
    %3960 = vmatpush1.msra.mxu0 0.0
    %3961 = vmatprep.subr.mxu0 0.0
    %3962 = vmatpush1.msra.mxu0 0.0
    %3963 = vmatprep.subr.mxu0 0.0
    %3964 = vmatpush1.msra.mxu0 0.0
    %3965 = vmatprep.subr.mxu0 0.0
    %3966 = vmatpush1.msra.mxu0 0.0
    %3967 = vmatprep.subr.mxu0 0.0
    %3968 = vmatpush1.msra.mxu0 0.0
    %3969 = vmatprep.subr.mxu0 0.0
    %3970 = vmatpush1.msra.mxu0 0.0
    %3971 = vmatprep.subr.mxu0 0.0
    %3972 = vmatpush1.msra.mxu0 0.0
    %3973 = vmatprep.mubr.f32.mxu0 0.0
    %3974 = vmatmul.mubr.f32.gmra.mrb[0].mxu0 %v1327
    %v3975 = vpop.f32.mrb[0].mxu0
    %v3976 = vadd.f32 0.0, %v3975
    %v3977 = vpop.f32.mrb[0].mxu0
    %v3978 = vadd.f32 0.0, %v3977
    %3979 = vdwg.mxu0
    %v3980 = vadd.f32 %v3725, %v3834
    %v3981 = vadd.f32 %v3726, %v3836
    %v3982 = vadd.f32 %v3727, %v3905
    %v3983 = vadd.f32 %v3728, %v3907
    %v3984 = vadd.f32 %v3729, %v3976
    %v3985 = vadd.f32 %v3730, %v3978
    %3986 = vrot.lane.b32.xlu0 %v2480, 111
    %v3987 = vpop.permute.xlu0 %3986
    %3988 = vrot.lane.b32.xlu0 %v2486, 111
    %v3989 = vpop.permute.xlu0 %3988
    %3990 = vrot.lane.b32.xlu0 %v2481, 111
    %v3991 = vpop.permute.xlu0 %3990
    %3992 = vrot.lane.b32.xlu0 %v2487, 111
    %v3993 = vpop.permute.xlu0 %3992
    %3994 = vrot.lane.b32.xlu0 %v2482, 111
    %v3995 = vpop.permute.xlu0 %3994
    %3996 = vrot.lane.b32.xlu0 %v2488, 111
    %v3997 = vpop.permute.xlu0 %3996
    %v3998 = vsel %vm1578, %v3995, %v3997
    %v3999 = vsel %vm1578, %v3993, %v3995
    %v4000 = vsel %vm1578, %v3991, %v3993
    %v4001 = vsel %vm1578, %v3989, %v3991
    %v4002 = vsel %vm1578, %v3987, %v3989
    %v4003 = vsel %vm1578, %v3997, %v3987
    %v4005 = vsel %vm89, %v4002, 0
    %v4008 = vsel %vm89, %v4001, 0
    %v4011 = vsel %vm89, %v4000, 0
    %v4014 = vsel %vm89, %v3999, 0
    %v4017 = vsel %vm89, %v3998, 0
    %v4020 = vsel %vm89, %v4003, 0
    %4022 = vmatprep.subr.mxu0 %v4008
    %4023 = vmatpush1.msra.mxu0 %v4005
    %4024 = vmatprep.subr.mxu0 0.0
    %4025 = vmatpush1.msra.mxu0 0.0
    %4026 = vmatprep.subr.mxu0 0.0
    %4027 = vmatpush1.msra.mxu0 0.0
    %4028 = vmatprep.subr.mxu0 0.0
    %4029 = vmatpush1.msra.mxu0 0.0
    %4030 = vmatprep.subr.mxu0 0.0
    %4031 = vmatpush1.msra.mxu0 0.0
    %4032 = vmatprep.subr.mxu0 0.0
    %4033 = vmatpush1.msra.mxu0 0.0
    %4034 = vmatprep.subr.mxu0 0.0
    %4035 = vmatpush1.msra.mxu0 0.0
    %4036 = vmatprep.subr.mxu0 0.0
    %4037 = vmatpush1.msra.mxu0 0.0
    %4038 = vmatprep.subr.mxu0 0.0
    %4039 = vmatpush1.msra.mxu0 0.0
    %4040 = vmatprep.subr.mxu0 0.0
    %4041 = vmatpush1.msra.mxu0 0.0
    %4042 = vmatprep.subr.mxu0 0.0
    %4043 = vmatpush1.msra.mxu0 0.0
    %4044 = vmatprep.subr.mxu0 0.0
    %4045 = vmatpush1.msra.mxu0 0.0
    %4046 = vmatprep.subr.mxu0 0.0
    %4047 = vmatpush1.msra.mxu0 0.0
    %4048 = vmatprep.subr.mxu0 0.0
    %4049 = vmatpush1.msra.mxu0 0.0
    %4050 = vmatprep.subr.mxu0 0.0
    %4051 = vmatpush1.msra.mxu0 0.0
    %4052 = vmatprep.subr.mxu0 0.0
    %4053 = vmatpush1.msra.mxu0 0.0
    %4054 = vmatprep.subr.mxu0 0.0
    %4055 = vmatpush1.msra.mxu0 0.0
    %4056 = vmatprep.subr.mxu0 0.0
    %4057 = vmatpush1.msra.mxu0 0.0
    %4058 = vmatprep.subr.mxu0 0.0
    %4059 = vmatpush1.msra.mxu0 0.0
    %4060 = vmatprep.subr.mxu0 0.0
    %4061 = vmatpush1.msra.mxu0 0.0
    %4062 = vmatprep.subr.mxu0 0.0
    %4063 = vmatpush1.msra.mxu0 0.0
    %4064 = vmatprep.subr.mxu0 0.0
    %4065 = vmatpush1.msra.mxu0 0.0
    %4066 = vmatprep.subr.mxu0 0.0
    %4067 = vmatpush1.msra.mxu0 0.0
    %4068 = vmatprep.subr.mxu0 0.0
    %4069 = vmatpush1.msra.mxu0 0.0
    %4070 = vmatprep.subr.mxu0 0.0
    %4071 = vmatpush1.msra.mxu0 0.0
    %4072 = vmatprep.subr.mxu0 0.0
    %4073 = vmatpush1.msra.mxu0 0.0
    %4074 = vmatprep.subr.mxu0 0.0
    %4075 = vmatpush1.msra.mxu0 0.0
    %4076 = vmatprep.subr.mxu0 0.0
    %4077 = vmatpush1.msra.mxu0 0.0
    %4078 = vmatprep.subr.mxu0 0.0
    %4079 = vmatpush1.msra.mxu0 0.0
    %4080 = vmatprep.subr.mxu0 0.0
    %4081 = vmatpush1.msra.mxu0 0.0
    %4082 = vmatprep.subr.mxu0 0.0
    %4083 = vmatpush1.msra.mxu0 0.0
    %4084 = vmatprep.subr.mxu0 0.0
    %4085 = vmatpush1.msra.mxu0 0.0
    %4086 = vmatprep.mubr.f32.mxu0 0.0
    %4087 = vmatmul.mubr.f32.gmra.mrb[0].mxu0 %v1586
    %v4088 = vpop.f32.mrb[0].mxu0
    %v4089 = vadd.f32 0.0, %v4088
    %v4090 = vpop.f32.mrb[0].mxu0
    %v4091 = vadd.f32 0.0, %v4090
    %4092 = vdwg.mxu0
    %4093 = vmatprep.subr.mxu0 %v4014
    %4094 = vmatpush1.msra.mxu0 %v4011
    %4095 = vmatprep.subr.mxu0 0.0
    %4096 = vmatpush1.msra.mxu0 0.0
    %4097 = vmatprep.subr.mxu0 0.0
    %4098 = vmatpush1.msra.mxu0 0.0
    %4099 = vmatprep.subr.mxu0 0.0
    %4100 = vmatpush1.msra.mxu0 0.0
    %4101 = vmatprep.subr.mxu0 0.0
    %4102 = vmatpush1.msra.mxu0 0.0
    %4103 = vmatprep.subr.mxu0 0.0
    %4104 = vmatpush1.msra.mxu0 0.0
    %4105 = vmatprep.subr.mxu0 0.0
    %4106 = vmatpush1.msra.mxu0 0.0
    %4107 = vmatprep.subr.mxu0 0.0
    %4108 = vmatpush1.msra.mxu0 0.0
    %4109 = vmatprep.subr.mxu0 0.0
    %4110 = vmatpush1.msra.mxu0 0.0
    %4111 = vmatprep.subr.mxu0 0.0
    %4112 = vmatpush1.msra.mxu0 0.0
    %4113 = vmatprep.subr.mxu0 0.0
    %4114 = vmatpush1.msra.mxu0 0.0
    %4115 = vmatprep.subr.mxu0 0.0
    %4116 = vmatpush1.msra.mxu0 0.0
    %4117 = vmatprep.subr.mxu0 0.0
    %4118 = vmatpush1.msra.mxu0 0.0
    %4119 = vmatprep.subr.mxu0 0.0
    %4120 = vmatpush1.msra.mxu0 0.0
    %4121 = vmatprep.subr.mxu0 0.0
    %4122 = vmatpush1.msra.mxu0 0.0
    %4123 = vmatprep.subr.mxu0 0.0
    %4124 = vmatpush1.msra.mxu0 0.0
    %4125 = vmatprep.subr.mxu0 0.0
    %4126 = vmatpush1.msra.mxu0 0.0
    %4127 = vmatprep.subr.mxu0 0.0
    %4128 = vmatpush1.msra.mxu0 0.0
    %4129 = vmatprep.subr.mxu0 0.0
    %4130 = vmatpush1.msra.mxu0 0.0
    %4131 = vmatprep.subr.mxu0 0.0
    %4132 = vmatpush1.msra.mxu0 0.0
    %4133 = vmatprep.subr.mxu0 0.0
    %4134 = vmatpush1.msra.mxu0 0.0
    %4135 = vmatprep.subr.mxu0 0.0
    %4136 = vmatpush1.msra.mxu0 0.0
    %4137 = vmatprep.subr.mxu0 0.0
    %4138 = vmatpush1.msra.mxu0 0.0
    %4139 = vmatprep.subr.mxu0 0.0
    %4140 = vmatpush1.msra.mxu0 0.0
    %4141 = vmatprep.subr.mxu0 0.0
    %4142 = vmatpush1.msra.mxu0 0.0
    %4143 = vmatprep.subr.mxu0 0.0
    %4144 = vmatpush1.msra.mxu0 0.0
    %4145 = vmatprep.subr.mxu0 0.0
    %4146 = vmatpush1.msra.mxu0 0.0
    %4147 = vmatprep.subr.mxu0 0.0
    %4148 = vmatpush1.msra.mxu0 0.0
    %4149 = vmatprep.subr.mxu0 0.0
    %4150 = vmatpush1.msra.mxu0 0.0
    %4151 = vmatprep.subr.mxu0 0.0
    %4152 = vmatpush1.msra.mxu0 0.0
    %4153 = vmatprep.subr.mxu0 0.0
    %4154 = vmatpush1.msra.mxu0 0.0
    %4155 = vmatprep.subr.mxu0 0.0
    %4156 = vmatpush1.msra.mxu0 0.0
    %4157 = vmatprep.mubr.f32.mxu0 0.0
    %4158 = vmatmul.mubr.f32.gmra.mrb[0].mxu0 %v1586
    %v4159 = vpop.f32.mrb[0].mxu0
    %v4160 = vadd.f32 0.0, %v4159
    %v4161 = vpop.f32.mrb[0].mxu0
    %v4162 = vadd.f32 0.0, %v4161
    %4163 = vdwg.mxu0
    %4164 = vmatprep.subr.mxu0 %v4020
    %4165 = vmatpush1.msra.mxu0 %v4017
    %4166 = vmatprep.subr.mxu0 0.0
    %4167 = vmatpush1.msra.mxu0 0.0
    %4168 = vmatprep.subr.mxu0 0.0
    %4169 = vmatpush1.msra.mxu0 0.0
    %4170 = vmatprep.subr.mxu0 0.0
    %4171 = vmatpush1.msra.mxu0 0.0
    %4172 = vmatprep.subr.mxu0 0.0
    %4173 = vmatpush1.msra.mxu0 0.0
    %4174 = vmatprep.subr.mxu0 0.0
    %4175 = vmatpush1.msra.mxu0 0.0
    %4176 = vmatprep.subr.mxu0 0.0
    %4177 = vmatpush1.msra.mxu0 0.0
    %4178 = vmatprep.subr.mxu0 0.0
    %4179 = vmatpush1.msra.mxu0 0.0
    %4180 = vmatprep.subr.mxu0 0.0
    %4181 = vmatpush1.msra.mxu0 0.0
    %4182 = vmatprep.subr.mxu0 0.0
    %4183 = vmatpush1.msra.mxu0 0.0
    %4184 = vmatprep.subr.mxu0 0.0
    %4185 = vmatpush1.msra.mxu0 0.0
    %4186 = vmatprep.subr.mxu0 0.0
    %4187 = vmatpush1.msra.mxu0 0.0
    %4188 = vmatprep.subr.mxu0 0.0
    %4189 = vmatpush1.msra.mxu0 0.0
    %4190 = vmatprep.subr.mxu0 0.0
    %4191 = vmatpush1.msra.mxu0 0.0
    %4192 = vmatprep.subr.mxu0 0.0
    %4193 = vmatpush1.msra.mxu0 0.0
    %4194 = vmatprep.subr.mxu0 0.0
    %4195 = vmatpush1.msra.mxu0 0.0
    %4196 = vmatprep.subr.mxu0 0.0
    %4197 = vmatpush1.msra.mxu0 0.0
    %4198 = vmatprep.subr.mxu0 0.0
    %4199 = vmatpush1.msra.mxu0 0.0
    %4200 = vmatprep.subr.mxu0 0.0
    %4201 = vmatpush1.msra.mxu0 0.0
    %4202 = vmatprep.subr.mxu0 0.0
    %4203 = vmatpush1.msra.mxu0 0.0
    %4204 = vmatprep.subr.mxu0 0.0
    %4205 = vmatpush1.msra.mxu0 0.0
    %4206 = vmatprep.subr.mxu0 0.0
    %4207 = vmatpush1.msra.mxu0 0.0
    %4208 = vmatprep.subr.mxu0 0.0
    %4209 = vmatpush1.msra.mxu0 0.0
    %4210 = vmatprep.subr.mxu0 0.0
    %4211 = vmatpush1.msra.mxu0 0.0
    %4212 = vmatprep.subr.mxu0 0.0
    %4213 = vmatpush1.msra.mxu0 0.0
    %4214 = vmatprep.subr.mxu0 0.0
    %4215 = vmatpush1.msra.mxu0 0.0
    %4216 = vmatprep.subr.mxu0 0.0
    %4217 = vmatpush1.msra.mxu0 0.0
    %4218 = vmatprep.subr.mxu0 0.0
    %4219 = vmatpush1.msra.mxu0 0.0
    %4220 = vmatprep.subr.mxu0 0.0
    %4221 = vmatpush1.msra.mxu0 0.0
    %4222 = vmatprep.subr.mxu0 0.0
    %4223 = vmatpush1.msra.mxu0 0.0
    %4224 = vmatprep.subr.mxu0 0.0
    %4225 = vmatpush1.msra.mxu0 0.0
    %4226 = vmatprep.subr.mxu0 0.0
    %4227 = vmatpush1.msra.mxu0 0.0
    %4228 = vmatprep.mubr.f32.mxu0 0.0
    %4229 = vmatmul.mubr.f32.gmra.mrb[0].mxu0 %v1586
    %v4230 = vpop.f32.mrb[0].mxu0
    %v4231 = vadd.f32 0.0, %v4230
    %v4232 = vpop.f32.mrb[0].mxu0
    %v4233 = vadd.f32 0.0, %v4232
    %4234 = vdwg.mxu0
    %v4235 = vadd.f32 %v3980, %v4089
    %v4236 = vadd.f32 %v3981, %v4091
    %v4237 = vadd.f32 %v3982, %v4160
    %v4238 = vadd.f32 %v3983, %v4162
    %v4239 = vadd.f32 %v3984, %v4231
    %v4240 = vadd.f32 %v3985, %v4233
    %4241 = vrot.lane.b32.xlu0 %v2480, 110
    %v4242 = vpop.permute.xlu0 %4241
    %4243 = vrot.lane.b32.xlu0 %v2486, 110
    %v4244 = vpop.permute.xlu0 %4243
    %4245 = vrot.lane.b32.xlu0 %v2481, 110
    %v4246 = vpop.permute.xlu0 %4245
    %4247 = vrot.lane.b32.xlu0 %v2487, 110
    %v4248 = vpop.permute.xlu0 %4247
    %4249 = vrot.lane.b32.xlu0 %v2482, 110
    %v4250 = vpop.permute.xlu0 %4249
    %4251 = vrot.lane.b32.xlu0 %v2488, 110
    %v4252 = vpop.permute.xlu0 %4251
    %v4253 = vsel %vm1837, %v4250, %v4252
    %v4254 = vsel %vm1837, %v4248, %v4250
    %v4255 = vsel %vm1837, %v4246, %v4248
    %v4256 = vsel %vm1837, %v4244, %v4246
    %v4257 = vsel %vm1837, %v4242, %v4244
    %v4258 = vsel %vm1837, %v4252, %v4242
    %v4260 = vsel %vm89, %v4257, 0
    %v4263 = vsel %vm89, %v4256, 0
    %v4266 = vsel %vm89, %v4255, 0
    %v4269 = vsel %vm89, %v4254, 0
    %v4272 = vsel %vm89, %v4253, 0
    %v4275 = vsel %vm89, %v4258, 0
    %4277 = vmatprep.subr.mxu0 %v4263
    %4278 = vmatpush1.msra.mxu0 %v4260
    %4279 = vmatprep.subr.mxu0 0.0
    %4280 = vmatpush1.msra.mxu0 0.0
    %4281 = vmatprep.subr.mxu0 0.0
    %4282 = vmatpush1.msra.mxu0 0.0
    %4283 = vmatprep.subr.mxu0 0.0
    %4284 = vmatpush1.msra.mxu0 0.0
    %4285 = vmatprep.subr.mxu0 0.0
    %4286 = vmatpush1.msra.mxu0 0.0
    %4287 = vmatprep.subr.mxu0 0.0
    %4288 = vmatpush1.msra.mxu0 0.0
    %4289 = vmatprep.subr.mxu0 0.0
    %4290 = vmatpush1.msra.mxu0 0.0
    %4291 = vmatprep.subr.mxu0 0.0
    %4292 = vmatpush1.msra.mxu0 0.0
    %4293 = vmatprep.subr.mxu0 0.0
    %4294 = vmatpush1.msra.mxu0 0.0
    %4295 = vmatprep.subr.mxu0 0.0
    %4296 = vmatpush1.msra.mxu0 0.0
    %4297 = vmatprep.subr.mxu0 0.0
    %4298 = vmatpush1.msra.mxu0 0.0
    %4299 = vmatprep.subr.mxu0 0.0
    %4300 = vmatpush1.msra.mxu0 0.0
    %4301 = vmatprep.subr.mxu0 0.0
    %4302 = vmatpush1.msra.mxu0 0.0
    %4303 = vmatprep.subr.mxu0 0.0
    %4304 = vmatpush1.msra.mxu0 0.0
    %4305 = vmatprep.subr.mxu0 0.0
    %4306 = vmatpush1.msra.mxu0 0.0
    %4307 = vmatprep.subr.mxu0 0.0
    %4308 = vmatpush1.msra.mxu0 0.0
    %4309 = vmatprep.subr.mxu0 0.0
    %4310 = vmatpush1.msra.mxu0 0.0
    %4311 = vmatprep.subr.mxu0 0.0
    %4312 = vmatpush1.msra.mxu0 0.0
    %4313 = vmatprep.subr.mxu0 0.0
    %4314 = vmatpush1.msra.mxu0 0.0
    %4315 = vmatprep.subr.mxu0 0.0
    %4316 = vmatpush1.msra.mxu0 0.0
    %4317 = vmatprep.subr.mxu0 0.0
    %4318 = vmatpush1.msra.mxu0 0.0
    %4319 = vmatprep.subr.mxu0 0.0
    %4320 = vmatpush1.msra.mxu0 0.0
    %4321 = vmatprep.subr.mxu0 0.0
    %4322 = vmatpush1.msra.mxu0 0.0
    %4323 = vmatprep.subr.mxu0 0.0
    %4324 = vmatpush1.msra.mxu0 0.0
    %4325 = vmatprep.subr.mxu0 0.0
    %4326 = vmatpush1.msra.mxu0 0.0
    %4327 = vmatprep.subr.mxu0 0.0
    %4328 = vmatpush1.msra.mxu0 0.0
    %4329 = vmatprep.subr.mxu0 0.0
    %4330 = vmatpush1.msra.mxu0 0.0
    %4331 = vmatprep.subr.mxu0 0.0
    %4332 = vmatpush1.msra.mxu0 0.0
    %4333 = vmatprep.subr.mxu0 0.0
    %4334 = vmatpush1.msra.mxu0 0.0
    %4335 = vmatprep.subr.mxu0 0.0
    %4336 = vmatpush1.msra.mxu0 0.0
    %4337 = vmatprep.subr.mxu0 0.0
    %4338 = vmatpush1.msra.mxu0 0.0
    %4339 = vmatprep.subr.mxu0 0.0
    %4340 = vmatpush1.msra.mxu0 0.0
    %4341 = vmatprep.mubr.f32.mxu0 0.0
    %4342 = vmatmul.mubr.f32.gmra.mrb[0].mxu0 %v1845
    %v4343 = vpop.f32.mrb[0].mxu0
    %v4344 = vadd.f32 0.0, %v4343
    %v4345 = vpop.f32.mrb[0].mxu0
    %v4346 = vadd.f32 0.0, %v4345
    %4347 = vdwg.mxu0
    %4348 = vmatprep.subr.mxu0 %v4269
    %4349 = vmatpush1.msra.mxu0 %v4266
    %4350 = vmatprep.subr.mxu0 0.0
    %4351 = vmatpush1.msra.mxu0 0.0
    %4352 = vmatprep.subr.mxu0 0.0
    %4353 = vmatpush1.msra.mxu0 0.0
    %4354 = vmatprep.subr.mxu0 0.0
    %4355 = vmatpush1.msra.mxu0 0.0
    %4356 = vmatprep.subr.mxu0 0.0
    %4357 = vmatpush1.msra.mxu0 0.0
    %4358 = vmatprep.subr.mxu0 0.0
    %4359 = vmatpush1.msra.mxu0 0.0
    %4360 = vmatprep.subr.mxu0 0.0
    %4361 = vmatpush1.msra.mxu0 0.0
    %4362 = vmatprep.subr.mxu0 0.0
    %4363 = vmatpush1.msra.mxu0 0.0
    %4364 = vmatprep.subr.mxu0 0.0
    %4365 = vmatpush1.msra.mxu0 0.0
    %4366 = vmatprep.subr.mxu0 0.0
    %4367 = vmatpush1.msra.mxu0 0.0
    %4368 = vmatprep.subr.mxu0 0.0
    %4369 = vmatpush1.msra.mxu0 0.0
    %4370 = vmatprep.subr.mxu0 0.0
    %4371 = vmatpush1.msra.mxu0 0.0
    %4372 = vmatprep.subr.mxu0 0.0
    %4373 = vmatpush1.msra.mxu0 0.0
    %4374 = vmatprep.subr.mxu0 0.0
    %4375 = vmatpush1.msra.mxu0 0.0
    %4376 = vmatprep.subr.mxu0 0.0
    %4377 = vmatpush1.msra.mxu0 0.0
    %4378 = vmatprep.subr.mxu0 0.0
    %4379 = vmatpush1.msra.mxu0 0.0
    %4380 = vmatprep.subr.mxu0 0.0
    %4381 = vmatpush1.msra.mxu0 0.0
    %4382 = vmatprep.subr.mxu0 0.0
    %4383 = vmatpush1.msra.mxu0 0.0
    %4384 = vmatprep.subr.mxu0 0.0
    %4385 = vmatpush1.msra.mxu0 0.0
    %4386 = vmatprep.subr.mxu0 0.0
    %4387 = vmatpush1.msra.mxu0 0.0
    %4388 = vmatprep.subr.mxu0 0.0
    %4389 = vmatpush1.msra.mxu0 0.0
    %4390 = vmatprep.subr.mxu0 0.0
    %4391 = vmatpush1.msra.mxu0 0.0
    %4392 = vmatprep.subr.mxu0 0.0
    %4393 = vmatpush1.msra.mxu0 0.0
    %4394 = vmatprep.subr.mxu0 0.0
    %4395 = vmatpush1.msra.mxu0 0.0
    %4396 = vmatprep.subr.mxu0 0.0
    %4397 = vmatpush1.msra.mxu0 0.0
    %4398 = vmatprep.subr.mxu0 0.0
    %4399 = vmatpush1.msra.mxu0 0.0
    %4400 = vmatprep.subr.mxu0 0.0
    %4401 = vmatpush1.msra.mxu0 0.0
    %4402 = vmatprep.subr.mxu0 0.0
    %4403 = vmatpush1.msra.mxu0 0.0
    %4404 = vmatprep.subr.mxu0 0.0
    %4405 = vmatpush1.msra.mxu0 0.0
    %4406 = vmatprep.subr.mxu0 0.0
    %4407 = vmatpush1.msra.mxu0 0.0
    %4408 = vmatprep.subr.mxu0 0.0
    %4409 = vmatpush1.msra.mxu0 0.0
    %4410 = vmatprep.subr.mxu0 0.0
    %4411 = vmatpush1.msra.mxu0 0.0
    %4412 = vmatprep.mubr.f32.mxu0 0.0
    %4413 = vmatmul.mubr.f32.gmra.mrb[0].mxu0 %v1845
    %v4414 = vpop.f32.mrb[0].mxu0
    %v4415 = vadd.f32 0.0, %v4414
    %v4416 = vpop.f32.mrb[0].mxu0
    %v4417 = vadd.f32 0.0, %v4416
    %4418 = vdwg.mxu0
    %4419 = vmatprep.subr.mxu0 %v4275
    %4420 = vmatpush1.msra.mxu0 %v4272
    %4421 = vmatprep.subr.mxu0 0.0
    %4422 = vmatpush1.msra.mxu0 0.0
    %4423 = vmatprep.subr.mxu0 0.0
    %4424 = vmatpush1.msra.mxu0 0.0
    %4425 = vmatprep.subr.mxu0 0.0
    %4426 = vmatpush1.msra.mxu0 0.0
    %4427 = vmatprep.subr.mxu0 0.0
    %4428 = vmatpush1.msra.mxu0 0.0
    %4429 = vmatprep.subr.mxu0 0.0
    %4430 = vmatpush1.msra.mxu0 0.0
    %4431 = vmatprep.subr.mxu0 0.0
    %4432 = vmatpush1.msra.mxu0 0.0
    %4433 = vmatprep.subr.mxu0 0.0
    %4434 = vmatpush1.msra.mxu0 0.0
    %4435 = vmatprep.subr.mxu0 0.0
    %4436 = vmatpush1.msra.mxu0 0.0
    %4437 = vmatprep.subr.mxu0 0.0
    %4438 = vmatpush1.msra.mxu0 0.0
    %4439 = vmatprep.subr.mxu0 0.0
    %4440 = vmatpush1.msra.mxu0 0.0
    %4441 = vmatprep.subr.mxu0 0.0
    %4442 = vmatpush1.msra.mxu0 0.0
    %4443 = vmatprep.subr.mxu0 0.0
    %4444 = vmatpush1.msra.mxu0 0.0
    %4445 = vmatprep.subr.mxu0 0.0
    %4446 = vmatpush1.msra.mxu0 0.0
    %4447 = vmatprep.subr.mxu0 0.0
    %4448 = vmatpush1.msra.mxu0 0.0
    %4449 = vmatprep.subr.mxu0 0.0
    %4450 = vmatpush1.msra.mxu0 0.0
    %4451 = vmatprep.subr.mxu0 0.0
    %4452 = vmatpush1.msra.mxu0 0.0
    %4453 = vmatprep.subr.mxu0 0.0
    %4454 = vmatpush1.msra.mxu0 0.0
    %4455 = vmatprep.subr.mxu0 0.0
    %4456 = vmatpush1.msra.mxu0 0.0
    %4457 = vmatprep.subr.mxu0 0.0
    %4458 = vmatpush1.msra.mxu0 0.0
    %4459 = vmatprep.subr.mxu0 0.0
    %4460 = vmatpush1.msra.mxu0 0.0
    %4461 = vmatprep.subr.mxu0 0.0
    %4462 = vmatpush1.msra.mxu0 0.0
    %4463 = vmatprep.subr.mxu0 0.0
    %4464 = vmatpush1.msra.mxu0 0.0
    %4465 = vmatprep.subr.mxu0 0.0
    %4466 = vmatpush1.msra.mxu0 0.0
    %4467 = vmatprep.subr.mxu0 0.0
    %4468 = vmatpush1.msra.mxu0 0.0
    %4469 = vmatprep.subr.mxu0 0.0
    %4470 = vmatpush1.msra.mxu0 0.0
    %4471 = vmatprep.subr.mxu0 0.0
    %4472 = vmatpush1.msra.mxu0 0.0
    %4473 = vmatprep.subr.mxu0 0.0
    %4474 = vmatpush1.msra.mxu0 0.0
    %4475 = vmatprep.subr.mxu0 0.0
    %4476 = vmatpush1.msra.mxu0 0.0
    %4477 = vmatprep.subr.mxu0 0.0
    %4478 = vmatpush1.msra.mxu0 0.0
    %4479 = vmatprep.subr.mxu0 0.0
    %4480 = vmatpush1.msra.mxu0 0.0
    %4481 = vmatprep.subr.mxu0 0.0
    %4482 = vmatpush1.msra.mxu0 0.0
    %4483 = vmatprep.mubr.f32.mxu0 0.0
    %4484 = vmatmul.mubr.f32.gmra.mrb[0].mxu0 %v1845
    %v4485 = vpop.f32.mrb[0].mxu0
    %v4486 = vadd.f32 0.0, %v4485
    %v4487 = vpop.f32.mrb[0].mxu0
    %v4488 = vadd.f32 0.0, %v4487
    %4489 = vdwg.mxu0
    %v4490 = vadd.f32 %v4235, %v4344
    %v4491 = vadd.f32 %v4236, %v4346
    %v4492 = vadd.f32 %v4237, %v4415
    %v4493 = vadd.f32 %v4238, %v4417
    %v4494 = vadd.f32 %v4239, %v4486
    %v4495 = vadd.f32 %v4240, %v4488
    %4496 = vrot.lane.b32.xlu0 %v2480, 109
    %v4497 = vpop.permute.xlu0 %4496
    %4498 = vrot.lane.b32.xlu0 %v2486, 109
    %v4499 = vpop.permute.xlu0 %4498
    %4500 = vrot.lane.b32.xlu0 %v2481, 109
    %v4501 = vpop.permute.xlu0 %4500
    %4502 = vrot.lane.b32.xlu0 %v2487, 109
    %v4503 = vpop.permute.xlu0 %4502
    %4504 = vrot.lane.b32.xlu0 %v2482, 109
    %v4505 = vpop.permute.xlu0 %4504
    %4506 = vrot.lane.b32.xlu0 %v2488, 109
    %v4507 = vpop.permute.xlu0 %4506
    %v4508 = vsel %vm2096, %v4505, %v4507
    %v4509 = vsel %vm2096, %v4503, %v4505
    %v4510 = vsel %vm2096, %v4501, %v4503
    %v4511 = vsel %vm2096, %v4499, %v4501
    %v4512 = vsel %vm2096, %v4497, %v4499
    %v4513 = vsel %vm2096, %v4507, %v4497
    %v4515 = vsel %vm89, %v4512, 0
    %v4518 = vsel %vm89, %v4511, 0
    %v4521 = vsel %vm89, %v4510, 0
    %v4524 = vsel %vm89, %v4509, 0
    %v4527 = vsel %vm89, %v4508, 0
    %v4530 = vsel %vm89, %v4513, 0
    %4532 = vmatprep.subr.mxu0 %v4518
    %4533 = vmatpush1.msra.mxu0 %v4515
    %4534 = vmatprep.subr.mxu0 0.0
    %4535 = vmatpush1.msra.mxu0 0.0
    %4536 = vmatprep.subr.mxu0 0.0
    %4537 = vmatpush1.msra.mxu0 0.0
    %4538 = vmatprep.subr.mxu0 0.0
    %4539 = vmatpush1.msra.mxu0 0.0
    %4540 = vmatprep.subr.mxu0 0.0
    %4541 = vmatpush1.msra.mxu0 0.0
    %4542 = vmatprep.subr.mxu0 0.0
    %4543 = vmatpush1.msra.mxu0 0.0
    %4544 = vmatprep.subr.mxu0 0.0
    %4545 = vmatpush1.msra.mxu0 0.0
    %4546 = vmatprep.subr.mxu0 0.0
    %4547 = vmatpush1.msra.mxu0 0.0
    %4548 = vmatprep.subr.mxu0 0.0
    %4549 = vmatpush1.msra.mxu0 0.0
    %4550 = vmatprep.subr.mxu0 0.0
    %4551 = vmatpush1.msra.mxu0 0.0
    %4552 = vmatprep.subr.mxu0 0.0
    %4553 = vmatpush1.msra.mxu0 0.0
    %4554 = vmatprep.subr.mxu0 0.0
    %4555 = vmatpush1.msra.mxu0 0.0
    %4556 = vmatprep.subr.mxu0 0.0
    %4557 = vmatpush1.msra.mxu0 0.0
    %4558 = vmatprep.subr.mxu0 0.0
    %4559 = vmatpush1.msra.mxu0 0.0
    %4560 = vmatprep.subr.mxu0 0.0
    %4561 = vmatpush1.msra.mxu0 0.0
    %4562 = vmatprep.subr.mxu0 0.0
    %4563 = vmatpush1.msra.mxu0 0.0
    %4564 = vmatprep.subr.mxu0 0.0
    %4565 = vmatpush1.msra.mxu0 0.0
    %4566 = vmatprep.subr.mxu0 0.0
    %4567 = vmatpush1.msra.mxu0 0.0
    %4568 = vmatprep.subr.mxu0 0.0
    %4569 = vmatpush1.msra.mxu0 0.0
    %4570 = vmatprep.subr.mxu0 0.0
    %4571 = vmatpush1.msra.mxu0 0.0
    %4572 = vmatprep.subr.mxu0 0.0
    %4573 = vmatpush1.msra.mxu0 0.0
    %4574 = vmatprep.subr.mxu0 0.0
    %4575 = vmatpush1.msra.mxu0 0.0
    %4576 = vmatprep.subr.mxu0 0.0
    %4577 = vmatpush1.msra.mxu0 0.0
    %4578 = vmatprep.subr.mxu0 0.0
    %4579 = vmatpush1.msra.mxu0 0.0
    %4580 = vmatprep.subr.mxu0 0.0
    %4581 = vmatpush1.msra.mxu0 0.0
    %4582 = vmatprep.subr.mxu0 0.0
    %4583 = vmatpush1.msra.mxu0 0.0
    %4584 = vmatprep.subr.mxu0 0.0
    %4585 = vmatpush1.msra.mxu0 0.0
    %4586 = vmatprep.subr.mxu0 0.0
    %4587 = vmatpush1.msra.mxu0 0.0
    %4588 = vmatprep.subr.mxu0 0.0
    %4589 = vmatpush1.msra.mxu0 0.0
    %4590 = vmatprep.subr.mxu0 0.0
    %4591 = vmatpush1.msra.mxu0 0.0
    %4592 = vmatprep.subr.mxu0 0.0
    %4593 = vmatpush1.msra.mxu0 0.0
    %4594 = vmatprep.subr.mxu0 0.0
    %4595 = vmatpush1.msra.mxu0 0.0
    %4596 = vmatprep.mubr.f32.mxu0 0.0
    %4597 = vmatmul.mubr.f32.gmra.mrb[0].mxu0 %v2104
    %v4598 = vpop.f32.mrb[0].mxu0
    %v4599 = vadd.f32 0.0, %v4598
    %v4600 = vpop.f32.mrb[0].mxu0
    %v4601 = vadd.f32 0.0, %v4600
    %4602 = vdwg.mxu0
    %4603 = vmatprep.subr.mxu0 %v4524
    %4604 = vmatpush1.msra.mxu0 %v4521
    %4605 = vmatprep.subr.mxu0 0.0
    %4606 = vmatpush1.msra.mxu0 0.0
    %4607 = vmatprep.subr.mxu0 0.0
    %4608 = vmatpush1.msra.mxu0 0.0
    %4609 = vmatprep.subr.mxu0 0.0
    %4610 = vmatpush1.msra.mxu0 0.0
    %4611 = vmatprep.subr.mxu0 0.0
    %4612 = vmatpush1.msra.mxu0 0.0
    %4613 = vmatprep.subr.mxu0 0.0
    %4614 = vmatpush1.msra.mxu0 0.0
    %4615 = vmatprep.subr.mxu0 0.0
    %4616 = vmatpush1.msra.mxu0 0.0
    %4617 = vmatprep.subr.mxu0 0.0
    %4618 = vmatpush1.msra.mxu0 0.0
    %4619 = vmatprep.subr.mxu0 0.0
    %4620 = vmatpush1.msra.mxu0 0.0
    %4621 = vmatprep.subr.mxu0 0.0
    %4622 = vmatpush1.msra.mxu0 0.0
    %4623 = vmatprep.subr.mxu0 0.0
    %4624 = vmatpush1.msra.mxu0 0.0
    %4625 = vmatprep.subr.mxu0 0.0
    %4626 = vmatpush1.msra.mxu0 0.0
    %4627 = vmatprep.subr.mxu0 0.0
    %4628 = vmatpush1.msra.mxu0 0.0
    %4629 = vmatprep.subr.mxu0 0.0
    %4630 = vmatpush1.msra.mxu0 0.0
    %4631 = vmatprep.subr.mxu0 0.0
    %4632 = vmatpush1.msra.mxu0 0.0
    %4633 = vmatprep.subr.mxu0 0.0
    %4634 = vmatpush1.msra.mxu0 0.0
    %4635 = vmatprep.subr.mxu0 0.0
    %4636 = vmatpush1.msra.mxu0 0.0
    %4637 = vmatprep.subr.mxu0 0.0
    %4638 = vmatpush1.msra.mxu0 0.0
    %4639 = vmatprep.subr.mxu0 0.0
    %4640 = vmatpush1.msra.mxu0 0.0
    %4641 = vmatprep.subr.mxu0 0.0
    %4642 = vmatpush1.msra.mxu0 0.0
    %4643 = vmatprep.subr.mxu0 0.0
    %4644 = vmatpush1.msra.mxu0 0.0
    %4645 = vmatprep.subr.mxu0 0.0
    %4646 = vmatpush1.msra.mxu0 0.0
    %4647 = vmatprep.subr.mxu0 0.0
    %4648 = vmatpush1.msra.mxu0 0.0
    %4649 = vmatprep.subr.mxu0 0.0
    %4650 = vmatpush1.msra.mxu0 0.0
    %4651 = vmatprep.subr.mxu0 0.0
    %4652 = vmatpush1.msra.mxu0 0.0
    %4653 = vmatprep.subr.mxu0 0.0
    %4654 = vmatpush1.msra.mxu0 0.0
    %4655 = vmatprep.subr.mxu0 0.0
    %4656 = vmatpush1.msra.mxu0 0.0
    %4657 = vmatprep.subr.mxu0 0.0
    %4658 = vmatpush1.msra.mxu0 0.0
    %4659 = vmatprep.subr.mxu0 0.0
    %4660 = vmatpush1.msra.mxu0 0.0
    %4661 = vmatprep.subr.mxu0 0.0
    %4662 = vmatpush1.msra.mxu0 0.0
    %4663 = vmatprep.subr.mxu0 0.0
    %4664 = vmatpush1.msra.mxu0 0.0
    %4665 = vmatprep.subr.mxu0 0.0
    %4666 = vmatpush1.msra.mxu0 0.0
    %4667 = vmatprep.mubr.f32.mxu0 0.0
    %4668 = vmatmul.mubr.f32.gmra.mrb[0].mxu0 %v2104
    %v4669 = vpop.f32.mrb[0].mxu0
    %v4670 = vadd.f32 0.0, %v4669
    %v4671 = vpop.f32.mrb[0].mxu0
    %v4672 = vadd.f32 0.0, %v4671
    %4673 = vdwg.mxu0
    %4674 = vmatprep.subr.mxu0 %v4530
    %4675 = vmatpush1.msra.mxu0 %v4527
    %4676 = vmatprep.subr.mxu0 0.0
    %4677 = vmatpush1.msra.mxu0 0.0
    %4678 = vmatprep.subr.mxu0 0.0
    %4679 = vmatpush1.msra.mxu0 0.0
    %4680 = vmatprep.subr.mxu0 0.0
    %4681 = vmatpush1.msra.mxu0 0.0
    %4682 = vmatprep.subr.mxu0 0.0
    %4683 = vmatpush1.msra.mxu0 0.0
    %4684 = vmatprep.subr.mxu0 0.0
    %4685 = vmatpush1.msra.mxu0 0.0
    %4686 = vmatprep.subr.mxu0 0.0
    %4687 = vmatpush1.msra.mxu0 0.0
    %4688 = vmatprep.subr.mxu0 0.0
    %4689 = vmatpush1.msra.mxu0 0.0
    %4690 = vmatprep.subr.mxu0 0.0
    %4691 = vmatpush1.msra.mxu0 0.0
    %4692 = vmatprep.subr.mxu0 0.0
    %4693 = vmatpush1.msra.mxu0 0.0
    %4694 = vmatprep.subr.mxu0 0.0
    %4695 = vmatpush1.msra.mxu0 0.0
    %4696 = vmatprep.subr.mxu0 0.0
    %4697 = vmatpush1.msra.mxu0 0.0
    %4698 = vmatprep.subr.mxu0 0.0
    %4699 = vmatpush1.msra.mxu0 0.0
    %4700 = vmatprep.subr.mxu0 0.0
    %4701 = vmatpush1.msra.mxu0 0.0
    %4702 = vmatprep.subr.mxu0 0.0
    %4703 = vmatpush1.msra.mxu0 0.0
    %4704 = vmatprep.subr.mxu0 0.0
    %4705 = vmatpush1.msra.mxu0 0.0
    %4706 = vmatprep.subr.mxu0 0.0
    %4707 = vmatpush1.msra.mxu0 0.0
    %4708 = vmatprep.subr.mxu0 0.0
    %4709 = vmatpush1.msra.mxu0 0.0
    %4710 = vmatprep.subr.mxu0 0.0
    %4711 = vmatpush1.msra.mxu0 0.0
    %4712 = vmatprep.subr.mxu0 0.0
    %4713 = vmatpush1.msra.mxu0 0.0
    %4714 = vmatprep.subr.mxu0 0.0
    %4715 = vmatpush1.msra.mxu0 0.0
    %4716 = vmatprep.subr.mxu0 0.0
    %4717 = vmatpush1.msra.mxu0 0.0
    %4718 = vmatprep.subr.mxu0 0.0
    %4719 = vmatpush1.msra.mxu0 0.0
    %4720 = vmatprep.subr.mxu0 0.0
    %4721 = vmatpush1.msra.mxu0 0.0
    %4722 = vmatprep.subr.mxu0 0.0
    %4723 = vmatpush1.msra.mxu0 0.0
    %4724 = vmatprep.subr.mxu0 0.0
    %4725 = vmatpush1.msra.mxu0 0.0
    %4726 = vmatprep.subr.mxu0 0.0
    %4727 = vmatpush1.msra.mxu0 0.0
    %4728 = vmatprep.subr.mxu0 0.0
    %4729 = vmatpush1.msra.mxu0 0.0
    %4730 = vmatprep.subr.mxu0 0.0
    %4731 = vmatpush1.msra.mxu0 0.0
    %4732 = vmatprep.subr.mxu0 0.0
    %4733 = vmatpush1.msra.mxu0 0.0
    %4734 = vmatprep.subr.mxu0 0.0
    %4735 = vmatpush1.msra.mxu0 0.0
    %4736 = vmatprep.subr.mxu0 0.0
    %4737 = vmatpush1.msra.mxu0 0.0
    %4738 = vmatprep.mubr.f32.mxu0 0.0
    %4739 = vmatmul.mubr.f32.gmra.mrb[0].mxu0 %v2104
    %v4740 = vpop.f32.mrb[0].mxu0
    %v4741 = vadd.f32 0.0, %v4740
    %v4742 = vpop.f32.mrb[0].mxu0
    %v4743 = vadd.f32 0.0, %v4742
    %4744 = vdwg.mxu0
    %v4745 = vadd.f32 %v4490, %v4599
    %v4746 = vadd.f32 %v4491, %v4601
    %v4747 = vadd.f32 %v4492, %v4670
    %v4748 = vadd.f32 %v4493, %v4672
    %v4749 = vadd.f32 %v4494, %v4741
    %v4750 = vadd.f32 %v4495, %v4743
    %v4751 = vmul.f32 %v4745, %v2347
    %v4752 = vmul.f32 %v4746, %v2351
    %v4753 = vmul.f32 %v4747, %v2355
    %v4754 = vmul.f32 %v4748, %v2359
    %v4755 = vmul.f32 %v4749, %v2363
    %v4756 = vmul.f32 %v4750, %v2367
    %v4757 = vsel %vm89, %v4751, 0.0
    %v4758 = vsel %vm89, %v4752, 0.0
    %v4759 = vadd.f32 %v4757, %v4758
    %v4760 = vsel %vm89, %v4753, 0.0
    %v4761 = vadd.f32 %v4759, %v4760
    %v4762 = vsel %vm89, %v4754, 0.0
    %v4763 = vadd.f32 %v4761, %v4762
    %v4764 = vsel %vm89, %v4755, 0.0
    %v4765 = vadd.f32 %v4763, %v4764
    %v4766 = vsel %vm89, %v4756, 0.0
    %v4767 = vadd.f32 %v4765, %v4766
    %4768 = vadd.xlane.f32.xlu0 %v4767
    %v4769 = vpop.xlane.xlu0 %4768
    %v4770 = vmul.f32 %v4769, 0.001953125
    %v4771 = vsub.f32 %v4745, %v4770
    %v4772 = vsub.f32 %v4746, %v4770
    %v4773 = vsub.f32 %v4747, %v4770
    %v4774 = vsub.f32 %v4748, %v4770
    %v4775 = vsub.f32 %v4749, %v4770
    %v4776 = vsub.f32 %v4750, %v4770
    %v4777 = vmul.f32 %v4771, %v2347
    %v4778 = vmul.f32 %v4772, %v2351
    %v4779 = vmul.f32 %v4773, %v2355
    %v4780 = vmul.f32 %v4774, %v2359
    %v4781 = vmul.f32 %v4775, %v2363
    %v4782 = vmul.f32 %v4776, %v2367
    %v4783 = vmul.f32 %v4777, %v4777
    %v4784 = vmul.f32 %v4778, %v4778
    %v4785 = vmul.f32 %v4779, %v4779
    %v4786 = vmul.f32 %v4780, %v4780
    %v4787 = vmul.f32 %v4781, %v4781
    %v4788 = vmul.f32 %v4782, %v4782
    %v4789 = vsel %vm89, %v4783, 0.0
    %v4790 = vsel %vm89, %v4784, 0.0
    %v4791 = vadd.f32 %v4789, %v4790
    %v4792 = vsel %vm89, %v4785, 0.0
    %v4793 = vadd.f32 %v4791, %v4792
    %v4794 = vsel %vm89, %v4786, 0.0
    %v4795 = vadd.f32 %v4793, %v4794
    %v4796 = vsel %vm89, %v4787, 0.0
    %v4797 = vadd.f32 %v4795, %v4796
    %v4798 = vsel %vm89, %v4788, 0.0
    %v4799 = vadd.f32 %v4797, %v4798
    %4800 = vadd.xlane.f32.xlu0 %v4799
    %v4801 = vpop.xlane.xlu0 %4800
    %v4802 = vmul.f32 %v4801, 0.001953125
    %v4803 = vadd.f32 %v4802, 1e-05
    %v4804 = vrsqrt.pop %v4803
    %v4805 = vmul.f32 %v34, %v4804
    %v4806 = vmul.f32 %v4770, %v4805
    %v4807 = vsub.f32 %v35, %v4806
    %4809 = vset.pattern.permute.xlu0 0
    %4810 = vperm.xlu0 %4809, %v4805
    %v4811 = vpop.permute.xlu0 %4810
    %v4813 = vmul.f32 %v4745, %v4811
    %v4814 = vmul.f32 %v4746, %v4811
    %v4815 = vmul.f32 %v4747, %v4811
    %v4816 = vmul.f32 %v4748, %v4811
    %v4817 = vmul.f32 %v4749, %v4811
    %v4818 = vmul.f32 %v4750, %v4811
    %4820 = vset.pattern.permute.xlu0 0
    %4821 = vperm.xlu0 %4820, %v4807
    %v4822 = vpop.permute.xlu0 %4821
    %v4824 = vadd.f32 %v4813, %v4822
    %v4825 = vadd.f32 %v4814, %v4822
    %v4826 = vadd.f32 %v4815, %v4822
    %v4827 = vadd.f32 %v4816, %v4822
    %v4828 = vadd.f32 %v4817, %v4822
    %v4829 = vadd.f32 %v4818, %v4822
    %v4830 = vmax.f32 %v4824, 0.0
    %v4831 = vmax.f32 %v4825, 0.0
    %v4832 = vmax.f32 %v4826, 0.0
    %v4833 = vmax.f32 %v4827, 0.0
    %v4834 = vmax.f32 %v4828, 0.0
    %v4835 = vmax.f32 %v4829, 0.0
    %v4842 = vcombine.low %v4830, %v4831
    %v4843 = vcombine.low %v4832, %v4833
    %v4844 = vcombine.low %v4834, %v4835
    %v4848 = vadd.f32 %v21, %v4842
    %v4849 = vadd.f32 %v22, %v4843
    %v4850 = vadd.f32 %v23, %v4844
    %v4851 = vmul.f32 %v4848, %v2474
    %v4852 = vmul.f32 %v4849, %v2475
    %v4853 = vmul.f32 %v4850, %v2476
    %v4857 = vcombine.high %v4851, %v4851
    %v4858 = vcombine.high %v4852, %v4852
    %v4859 = vcombine.high %v4853, %v4853
    %4863 = vrot.lane.b32.xlu0 %v4851, 19
    %v4864 = vpop.permute.xlu0 %4863
    %4865 = vrot.lane.b32.xlu0 %v4857, 19
    %v4866 = vpop.permute.xlu0 %4865
    %4867 = vrot.lane.b32.xlu0 %v4852, 19
    %v4868 = vpop.permute.xlu0 %4867
    %4869 = vrot.lane.b32.xlu0 %v4858, 19
    %v4870 = vpop.permute.xlu0 %4869
    %4871 = vrot.lane.b32.xlu0 %v4853, 19
    %v4872 = vpop.permute.xlu0 %4871
    %4873 = vrot.lane.b32.xlu0 %v4859, 19
    %v4874 = vpop.permute.xlu0 %4873
    %v4875 = vsel %vm59, %v4872, %v4874
    %v4876 = vsel %vm59, %v4870, %v4872
    %v4877 = vsel %vm59, %v4868, %v4870
    %v4878 = vsel %vm59, %v4866, %v4868
    %v4879 = vsel %vm59, %v4864, %v4866
    %v4880 = vsel %vm59, %v4874, %v4864
    %4881 = vrot.lane.b32.xlu0 %v4851, 18
    %v4882 = vpop.permute.xlu0 %4881
    %4883 = vrot.lane.b32.xlu0 %v4857, 18
    %v4884 = vpop.permute.xlu0 %4883
    %4885 = vrot.lane.b32.xlu0 %v4852, 18
    %v4886 = vpop.permute.xlu0 %4885
    %4887 = vrot.lane.b32.xlu0 %v4858, 18
    %v4888 = vpop.permute.xlu0 %4887
    %4889 = vrot.lane.b32.xlu0 %v4853, 18
    %v4890 = vpop.permute.xlu0 %4889
    %4891 = vrot.lane.b32.xlu0 %v4859, 18
    %v4892 = vpop.permute.xlu0 %4891
    %v4893 = vsel %vm78, %v4890, %v4892
    %v4894 = vsel %vm78, %v4888, %v4890
    %v4895 = vsel %vm78, %v4886, %v4888
    %v4896 = vsel %vm78, %v4884, %v4886
    %v4897 = vsel %vm78, %v4882, %v4884
    %v4898 = vsel %vm78, %v4892, %v4882
    %v4900 = vsel %vm89, %v4898, 0
    %v4903 = vsel %vm89, %v4897, 0
    %v4906 = vsel %vm89, %v4896, 0
    %v4909 = vsel %vm89, %v4895, 0
    %v4912 = vsel %vm89, %v4894, 0
    %v4915 = vsel %vm89, %v4893, 0
    %4917 = vmatprep.subr.mxu0 %v4903
    %4918 = vmatpush1.msra.mxu0 %v4900
    %4919 = vmatprep.subr.mxu0 0.0
    %4920 = vmatpush1.msra.mxu0 0.0
    %4921 = vmatprep.subr.mxu0 0.0
    %4922 = vmatpush1.msra.mxu0 0.0
    %4923 = vmatprep.subr.mxu0 0.0
    %4924 = vmatpush1.msra.mxu0 0.0
    %4925 = vmatprep.subr.mxu0 0.0
    %4926 = vmatpush1.msra.mxu0 0.0
    %4927 = vmatprep.subr.mxu0 0.0
    %4928 = vmatpush1.msra.mxu0 0.0
    %4929 = vmatprep.subr.mxu0 0.0
    %4930 = vmatpush1.msra.mxu0 0.0
    %4931 = vmatprep.subr.mxu0 0.0
    %4932 = vmatpush1.msra.mxu0 0.0
    %4933 = vmatprep.subr.mxu0 0.0
    %4934 = vmatpush1.msra.mxu0 0.0
    %4935 = vmatprep.subr.mxu0 0.0
    %4936 = vmatpush1.msra.mxu0 0.0
    %4937 = vmatprep.subr.mxu0 0.0
    %4938 = vmatpush1.msra.mxu0 0.0
    %4939 = vmatprep.subr.mxu0 0.0
    %4940 = vmatpush1.msra.mxu0 0.0
    %4941 = vmatprep.subr.mxu0 0.0
    %4942 = vmatpush1.msra.mxu0 0.0
    %4943 = vmatprep.subr.mxu0 0.0
    %4944 = vmatpush1.msra.mxu0 0.0
    %4945 = vmatprep.subr.mxu0 0.0
    %4946 = vmatpush1.msra.mxu0 0.0
    %4947 = vmatprep.subr.mxu0 0.0
    %4948 = vmatpush1.msra.mxu0 0.0
    %4949 = vmatprep.subr.mxu0 0.0
    %4950 = vmatpush1.msra.mxu0 0.0
    %4951 = vmatprep.subr.mxu0 0.0
    %4952 = vmatpush1.msra.mxu0 0.0
    %4953 = vmatprep.subr.mxu0 0.0
    %4954 = vmatpush1.msra.mxu0 0.0
    %4955 = vmatprep.subr.mxu0 0.0
    %4956 = vmatpush1.msra.mxu0 0.0
    %4957 = vmatprep.subr.mxu0 0.0
    %4958 = vmatpush1.msra.mxu0 0.0
    %4959 = vmatprep.subr.mxu0 0.0
    %4960 = vmatpush1.msra.mxu0 0.0
    %4961 = vmatprep.subr.mxu0 0.0
    %4962 = vmatpush1.msra.mxu0 0.0
    %4963 = vmatprep.subr.mxu0 0.0
    %4964 = vmatpush1.msra.mxu0 0.0
    %4965 = vmatprep.subr.mxu0 0.0
    %4966 = vmatpush1.msra.mxu0 0.0
    %4967 = vmatprep.subr.mxu0 0.0
    %4968 = vmatpush1.msra.mxu0 0.0
    %4969 = vmatprep.subr.mxu0 0.0
    %4970 = vmatpush1.msra.mxu0 0.0
    %4971 = vmatprep.subr.mxu0 0.0
    %4972 = vmatpush1.msra.mxu0 0.0
    %4973 = vmatprep.subr.mxu0 0.0
    %4974 = vmatpush1.msra.mxu0 0.0
    %4975 = vmatprep.subr.mxu0 0.0
    %4976 = vmatpush1.msra.mxu0 0.0
    %4977 = vmatprep.subr.mxu0 0.0
    %4978 = vmatpush1.msra.mxu0 0.0
    %4979 = vmatprep.subr.mxu0 0.0
    %4980 = vmatpush1.msra.mxu0 0.0
    %4981 = vmatprep.mubr.f32.mxu0 0.0
    %4982 = vmatmul.mubr.f32.gmra.mrb[0].mxu0 %v87
    %v4983 = vpop.f32.mrb[0].mxu0
    %v4984 = vadd.f32 0.0, %v4983
    %v4985 = vpop.f32.mrb[0].mxu0
    %v4986 = vadd.f32 0.0, %v4985
    %4987 = vdwg.mxu0
    %4988 = vmatprep.subr.mxu0 %v4909
    %4989 = vmatpush1.msra.mxu0 %v4906
    %4990 = vmatprep.subr.mxu0 0.0
    %4991 = vmatpush1.msra.mxu0 0.0
    %4992 = vmatprep.subr.mxu0 0.0
    %4993 = vmatpush1.msra.mxu0 0.0
    %4994 = vmatprep.subr.mxu0 0.0
    %4995 = vmatpush1.msra.mxu0 0.0
    %4996 = vmatprep.subr.mxu0 0.0
    %4997 = vmatpush1.msra.mxu0 0.0
    %4998 = vmatprep.subr.mxu0 0.0
    %4999 = vmatpush1.msra.mxu0 0.0
    %5000 = vmatprep.subr.mxu0 0.0
    %5001 = vmatpush1.msra.mxu0 0.0
    %5002 = vmatprep.subr.mxu0 0.0
    %5003 = vmatpush1.msra.mxu0 0.0
    %5004 = vmatprep.subr.mxu0 0.0
    %5005 = vmatpush1.msra.mxu0 0.0
    %5006 = vmatprep.subr.mxu0 0.0
    %5007 = vmatpush1.msra.mxu0 0.0
    %5008 = vmatprep.subr.mxu0 0.0
    %5009 = vmatpush1.msra.mxu0 0.0
    %5010 = vmatprep.subr.mxu0 0.0
    %5011 = vmatpush1.msra.mxu0 0.0
    %5012 = vmatprep.subr.mxu0 0.0
    %5013 = vmatpush1.msra.mxu0 0.0
    %5014 = vmatprep.subr.mxu0 0.0
    %5015 = vmatpush1.msra.mxu0 0.0
    %5016 = vmatprep.subr.mxu0 0.0
    %5017 = vmatpush1.msra.mxu0 0.0
    %5018 = vmatprep.subr.mxu0 0.0
    %5019 = vmatpush1.msra.mxu0 0.0
    %5020 = vmatprep.subr.mxu0 0.0
    %5021 = vmatpush1.msra.mxu0 0.0
    %5022 = vmatprep.subr.mxu0 0.0
    %5023 = vmatpush1.msra.mxu0 0.0
    %5024 = vmatprep.subr.mxu0 0.0
    %5025 = vmatpush1.msra.mxu0 0.0
    %5026 = vmatprep.subr.mxu0 0.0
    %5027 = vmatpush1.msra.mxu0 0.0
    %5028 = vmatprep.subr.mxu0 0.0
    %5029 = vmatpush1.msra.mxu0 0.0
    %5030 = vmatprep.subr.mxu0 0.0
    %5031 = vmatpush1.msra.mxu0 0.0
    %5032 = vmatprep.subr.mxu0 0.0
    %5033 = vmatpush1.msra.mxu0 0.0
    %5034 = vmatprep.subr.mxu0 0.0
    %5035 = vmatpush1.msra.mxu0 0.0
    %5036 = vmatprep.subr.mxu0 0.0
    %5037 = vmatpush1.msra.mxu0 0.0
    %5038 = vmatprep.subr.mxu0 0.0
    %5039 = vmatpush1.msra.mxu0 0.0
    %5040 = vmatprep.subr.mxu0 0.0
    %5041 = vmatpush1.msra.mxu0 0.0
    %5042 = vmatprep.subr.mxu0 0.0
    %5043 = vmatpush1.msra.mxu0 0.0
    %5044 = vmatprep.subr.mxu0 0.0
    %5045 = vmatpush1.msra.mxu0 0.0
    %5046 = vmatprep.subr.mxu0 0.0
    %5047 = vmatpush1.msra.mxu0 0.0
    %5048 = vmatprep.subr.mxu0 0.0
    %5049 = vmatpush1.msra.mxu0 0.0
    %5050 = vmatprep.subr.mxu0 0.0
    %5051 = vmatpush1.msra.mxu0 0.0
    %5052 = vmatprep.mubr.f32.mxu0 0.0
    %5053 = vmatmul.mubr.f32.gmra.mrb[0].mxu0 %v87
    %v5054 = vpop.f32.mrb[0].mxu0
    %v5055 = vadd.f32 0.0, %v5054
    %v5056 = vpop.f32.mrb[0].mxu0
    %v5057 = vadd.f32 0.0, %v5056
    %5058 = vdwg.mxu0
    %5059 = vmatprep.subr.mxu0 %v4915
    %5060 = vmatpush1.msra.mxu0 %v4912
    %5061 = vmatprep.subr.mxu0 0.0
    %5062 = vmatpush1.msra.mxu0 0.0
    %5063 = vmatprep.subr.mxu0 0.0
    %5064 = vmatpush1.msra.mxu0 0.0
    %5065 = vmatprep.subr.mxu0 0.0
    %5066 = vmatpush1.msra.mxu0 0.0
    %5067 = vmatprep.subr.mxu0 0.0
    %5068 = vmatpush1.msra.mxu0 0.0
    %5069 = vmatprep.subr.mxu0 0.0
    %5070 = vmatpush1.msra.mxu0 0.0
    %5071 = vmatprep.subr.mxu0 0.0
    %5072 = vmatpush1.msra.mxu0 0.0
    %5073 = vmatprep.subr.mxu0 0.0
    %5074 = vmatpush1.msra.mxu0 0.0
    %5075 = vmatprep.subr.mxu0 0.0
    %5076 = vmatpush1.msra.mxu0 0.0
    %5077 = vmatprep.subr.mxu0 0.0
    %5078 = vmatpush1.msra.mxu0 0.0
    %5079 = vmatprep.subr.mxu0 0.0
    %5080 = vmatpush1.msra.mxu0 0.0
    %5081 = vmatprep.subr.mxu0 0.0
    %5082 = vmatpush1.msra.mxu0 0.0
    %5083 = vmatprep.subr.mxu0 0.0
    %5084 = vmatpush1.msra.mxu0 0.0
    %5085 = vmatprep.subr.mxu0 0.0
    %5086 = vmatpush1.msra.mxu0 0.0
    %5087 = vmatprep.subr.mxu0 0.0
    %5088 = vmatpush1.msra.mxu0 0.0
    %5089 = vmatprep.subr.mxu0 0.0
    %5090 = vmatpush1.msra.mxu0 0.0
    %5091 = vmatprep.subr.mxu0 0.0
    %5092 = vmatpush1.msra.mxu0 0.0
    %5093 = vmatprep.subr.mxu0 0.0
    %5094 = vmatpush1.msra.mxu0 0.0
    %5095 = vmatprep.subr.mxu0 0.0
    %5096 = vmatpush1.msra.mxu0 0.0
    %5097 = vmatprep.subr.mxu0 0.0
    %5098 = vmatpush1.msra.mxu0 0.0
    %5099 = vmatprep.subr.mxu0 0.0
    %5100 = vmatpush1.msra.mxu0 0.0
    %5101 = vmatprep.subr.mxu0 0.0
    %5102 = vmatpush1.msra.mxu0 0.0
    %5103 = vmatprep.subr.mxu0 0.0
    %5104 = vmatpush1.msra.mxu0 0.0
    %5105 = vmatprep.subr.mxu0 0.0
    %5106 = vmatpush1.msra.mxu0 0.0
    %5107 = vmatprep.subr.mxu0 0.0
    %5108 = vmatpush1.msra.mxu0 0.0
    %5109 = vmatprep.subr.mxu0 0.0
    %5110 = vmatpush1.msra.mxu0 0.0
    %5111 = vmatprep.subr.mxu0 0.0
    %5112 = vmatpush1.msra.mxu0 0.0
    %5113 = vmatprep.subr.mxu0 0.0
    %5114 = vmatpush1.msra.mxu0 0.0
    %5115 = vmatprep.subr.mxu0 0.0
    %5116 = vmatpush1.msra.mxu0 0.0
    %5117 = vmatprep.subr.mxu0 0.0
    %5118 = vmatpush1.msra.mxu0 0.0
    %5119 = vmatprep.subr.mxu0 0.0
    %5120 = vmatpush1.msra.mxu0 0.0
    %5121 = vmatprep.subr.mxu0 0.0
    %5122 = vmatpush1.msra.mxu0 0.0
    %5123 = vmatprep.mubr.f32.mxu0 0.0
    %5124 = vmatmul.mubr.f32.gmra.mrb[0].mxu0 %v87
    %v5125 = vpop.f32.mrb[0].mxu0
    %v5126 = vadd.f32 0.0, %v5125
    %v5127 = vpop.f32.mrb[0].mxu0
    %v5128 = vadd.f32 0.0, %v5127
    %5129 = vdwg.mxu0
    %v5131 = vsel %vm89, %v4880, 0
    %v5134 = vsel %vm89, %v4879, 0
    %v5137 = vsel %vm89, %v4878, 0
    %v5140 = vsel %vm89, %v4877, 0
    %v5143 = vsel %vm89, %v4876, 0
    %v5146 = vsel %vm89, %v4875, 0
    %5148 = vmatprep.subr.mxu0 %v5134
    %5149 = vmatpush1.msra.mxu0 %v5131
    %5150 = vmatprep.subr.mxu0 0.0
    %5151 = vmatpush1.msra.mxu0 0.0
    %5152 = vmatprep.subr.mxu0 0.0
    %5153 = vmatpush1.msra.mxu0 0.0
    %5154 = vmatprep.subr.mxu0 0.0
    %5155 = vmatpush1.msra.mxu0 0.0
    %5156 = vmatprep.subr.mxu0 0.0
    %5157 = vmatpush1.msra.mxu0 0.0
    %5158 = vmatprep.subr.mxu0 0.0
    %5159 = vmatpush1.msra.mxu0 0.0
    %5160 = vmatprep.subr.mxu0 0.0
    %5161 = vmatpush1.msra.mxu0 0.0
    %5162 = vmatprep.subr.mxu0 0.0
    %5163 = vmatpush1.msra.mxu0 0.0
    %5164 = vmatprep.subr.mxu0 0.0
    %5165 = vmatpush1.msra.mxu0 0.0
    %5166 = vmatprep.subr.mxu0 0.0
    %5167 = vmatpush1.msra.mxu0 0.0
    %5168 = vmatprep.subr.mxu0 0.0
    %5169 = vmatpush1.msra.mxu0 0.0
    %5170 = vmatprep.subr.mxu0 0.0
    %5171 = vmatpush1.msra.mxu0 0.0
    %5172 = vmatprep.subr.mxu0 0.0
    %5173 = vmatpush1.msra.mxu0 0.0
    %5174 = vmatprep.subr.mxu0 0.0
    %5175 = vmatpush1.msra.mxu0 0.0
    %5176 = vmatprep.subr.mxu0 0.0
    %5177 = vmatpush1.msra.mxu0 0.0
    %5178 = vmatprep.subr.mxu0 0.0
    %5179 = vmatpush1.msra.mxu0 0.0
    %5180 = vmatprep.subr.mxu0 0.0
    %5181 = vmatpush1.msra.mxu0 0.0
    %5182 = vmatprep.subr.mxu0 0.0
    %5183 = vmatpush1.msra.mxu0 0.0
    %5184 = vmatprep.subr.mxu0 0.0
    %5185 = vmatpush1.msra.mxu0 0.0
    %5186 = vmatprep.subr.mxu0 0.0
    %5187 = vmatpush1.msra.mxu0 0.0
    %5188 = vmatprep.subr.mxu0 0.0
    %5189 = vmatpush1.msra.mxu0 0.0
    %5190 = vmatprep.subr.mxu0 0.0
    %5191 = vmatpush1.msra.mxu0 0.0
    %5192 = vmatprep.subr.mxu0 0.0
    %5193 = vmatpush1.msra.mxu0 0.0
    %5194 = vmatprep.subr.mxu0 0.0
    %5195 = vmatpush1.msra.mxu0 0.0
    %5196 = vmatprep.subr.mxu0 0.0
    %5197 = vmatpush1.msra.mxu0 0.0
    %5198 = vmatprep.subr.mxu0 0.0
    %5199 = vmatpush1.msra.mxu0 0.0
    %5200 = vmatprep.subr.mxu0 0.0
    %5201 = vmatpush1.msra.mxu0 0.0
    %5202 = vmatprep.subr.mxu0 0.0
    %5203 = vmatpush1.msra.mxu0 0.0
    %5204 = vmatprep.subr.mxu0 0.0
    %5205 = vmatpush1.msra.mxu0 0.0
    %5206 = vmatprep.subr.mxu0 0.0
    %5207 = vmatpush1.msra.mxu0 0.0
    %5208 = vmatprep.subr.mxu0 0.0
    %5209 = vmatpush1.msra.mxu0 0.0
    %5210 = vmatprep.subr.mxu0 0.0
    %5211 = vmatpush1.msra.mxu0 0.0
    %5212 = vmatprep.mubr.f32.mxu0 0.0
    %5213 = vmatmul.mubr.f32.gmra.mrb[0].mxu0 %v322
    %v5214 = vpop.f32.mrb[0].mxu0
    %v5215 = vadd.f32 %v4984, %v5214
    %v5216 = vpop.f32.mrb[0].mxu0
    %v5217 = vadd.f32 %v4986, %v5216
    %5218 = vdwg.mxu0
    %5219 = vmatprep.subr.mxu0 %v5140
    %5220 = vmatpush1.msra.mxu0 %v5137
    %5221 = vmatprep.subr.mxu0 0.0
    %5222 = vmatpush1.msra.mxu0 0.0
    %5223 = vmatprep.subr.mxu0 0.0
    %5224 = vmatpush1.msra.mxu0 0.0
    %5225 = vmatprep.subr.mxu0 0.0
    %5226 = vmatpush1.msra.mxu0 0.0
    %5227 = vmatprep.subr.mxu0 0.0
    %5228 = vmatpush1.msra.mxu0 0.0
    %5229 = vmatprep.subr.mxu0 0.0
    %5230 = vmatpush1.msra.mxu0 0.0
    %5231 = vmatprep.subr.mxu0 0.0
    %5232 = vmatpush1.msra.mxu0 0.0
    %5233 = vmatprep.subr.mxu0 0.0
    %5234 = vmatpush1.msra.mxu0 0.0
    %5235 = vmatprep.subr.mxu0 0.0
    %5236 = vmatpush1.msra.mxu0 0.0
    %5237 = vmatprep.subr.mxu0 0.0
    %5238 = vmatpush1.msra.mxu0 0.0
    %5239 = vmatprep.subr.mxu0 0.0
    %5240 = vmatpush1.msra.mxu0 0.0
    %5241 = vmatprep.subr.mxu0 0.0
    %5242 = vmatpush1.msra.mxu0 0.0
    %5243 = vmatprep.subr.mxu0 0.0
    %5244 = vmatpush1.msra.mxu0 0.0
    %5245 = vmatprep.subr.mxu0 0.0
    %5246 = vmatpush1.msra.mxu0 0.0
    %5247 = vmatprep.subr.mxu0 0.0
    %5248 = vmatpush1.msra.mxu0 0.0
    %5249 = vmatprep.subr.mxu0 0.0
    %5250 = vmatpush1.msra.mxu0 0.0
    %5251 = vmatprep.subr.mxu0 0.0
    %5252 = vmatpush1.msra.mxu0 0.0
    %5253 = vmatprep.subr.mxu0 0.0
    %5254 = vmatpush1.msra.mxu0 0.0
    %5255 = vmatprep.subr.mxu0 0.0
    %5256 = vmatpush1.msra.mxu0 0.0
    %5257 = vmatprep.subr.mxu0 0.0
    %5258 = vmatpush1.msra.mxu0 0.0
    %5259 = vmatprep.subr.mxu0 0.0
    %5260 = vmatpush1.msra.mxu0 0.0
    %5261 = vmatprep.subr.mxu0 0.0
    %5262 = vmatpush1.msra.mxu0 0.0
    %5263 = vmatprep.subr.mxu0 0.0
    %5264 = vmatpush1.msra.mxu0 0.0
    %5265 = vmatprep.subr.mxu0 0.0
    %5266 = vmatpush1.msra.mxu0 0.0
    %5267 = vmatprep.subr.mxu0 0.0
    %5268 = vmatpush1.msra.mxu0 0.0
    %5269 = vmatprep.subr.mxu0 0.0
    %5270 = vmatpush1.msra.mxu0 0.0
    %5271 = vmatprep.subr.mxu0 0.0
    %5272 = vmatpush1.msra.mxu0 0.0
    %5273 = vmatprep.subr.mxu0 0.0
    %5274 = vmatpush1.msra.mxu0 0.0
    %5275 = vmatprep.subr.mxu0 0.0
    %5276 = vmatpush1.msra.mxu0 0.0
    %5277 = vmatprep.subr.mxu0 0.0
    %5278 = vmatpush1.msra.mxu0 0.0
    %5279 = vmatprep.subr.mxu0 0.0
    %5280 = vmatpush1.msra.mxu0 0.0
    %5281 = vmatprep.subr.mxu0 0.0
    %5282 = vmatpush1.msra.mxu0 0.0
    %5283 = vmatprep.mubr.f32.mxu0 0.0
    %5284 = vmatmul.mubr.f32.gmra.mrb[0].mxu0 %v322
    %v5285 = vpop.f32.mrb[0].mxu0
    %v5286 = vadd.f32 %v5055, %v5285
    %v5287 = vpop.f32.mrb[0].mxu0
    %v5288 = vadd.f32 %v5057, %v5287
    %5289 = vdwg.mxu0
    %5290 = vmatprep.subr.mxu0 %v5146
    %5291 = vmatpush1.msra.mxu0 %v5143
    %5292 = vmatprep.subr.mxu0 0.0
    %5293 = vmatpush1.msra.mxu0 0.0
    %5294 = vmatprep.subr.mxu0 0.0
    %5295 = vmatpush1.msra.mxu0 0.0
    %5296 = vmatprep.subr.mxu0 0.0
    %5297 = vmatpush1.msra.mxu0 0.0
    %5298 = vmatprep.subr.mxu0 0.0
    %5299 = vmatpush1.msra.mxu0 0.0
    %5300 = vmatprep.subr.mxu0 0.0
    %5301 = vmatpush1.msra.mxu0 0.0
    %5302 = vmatprep.subr.mxu0 0.0
    %5303 = vmatpush1.msra.mxu0 0.0
    %5304 = vmatprep.subr.mxu0 0.0
    %5305 = vmatpush1.msra.mxu0 0.0
    %5306 = vmatprep.subr.mxu0 0.0
    %5307 = vmatpush1.msra.mxu0 0.0
    %5308 = vmatprep.subr.mxu0 0.0
    %5309 = vmatpush1.msra.mxu0 0.0
    %5310 = vmatprep.subr.mxu0 0.0
    %5311 = vmatpush1.msra.mxu0 0.0
    %5312 = vmatprep.subr.mxu0 0.0
    %5313 = vmatpush1.msra.mxu0 0.0
    %5314 = vmatprep.subr.mxu0 0.0
    %5315 = vmatpush1.msra.mxu0 0.0
    %5316 = vmatprep.subr.mxu0 0.0
    %5317 = vmatpush1.msra.mxu0 0.0
    %5318 = vmatprep.subr.mxu0 0.0
    %5319 = vmatpush1.msra.mxu0 0.0
    %5320 = vmatprep.subr.mxu0 0.0
    %5321 = vmatpush1.msra.mxu0 0.0
    %5322 = vmatprep.subr.mxu0 0.0
    %5323 = vmatpush1.msra.mxu0 0.0
    %5324 = vmatprep.subr.mxu0 0.0
    %5325 = vmatpush1.msra.mxu0 0.0
    %5326 = vmatprep.subr.mxu0 0.0
    %5327 = vmatpush1.msra.mxu0 0.0
    %5328 = vmatprep.subr.mxu0 0.0
    %5329 = vmatpush1.msra.mxu0 0.0
    %5330 = vmatprep.subr.mxu0 0.0
    %5331 = vmatpush1.msra.mxu0 0.0
    %5332 = vmatprep.subr.mxu0 0.0
    %5333 = vmatpush1.msra.mxu0 0.0
    %5334 = vmatprep.subr.mxu0 0.0
    %5335 = vmatpush1.msra.mxu0 0.0
    %5336 = vmatprep.subr.mxu0 0.0
    %5337 = vmatpush1.msra.mxu0 0.0
    %5338 = vmatprep.subr.mxu0 0.0
    %5339 = vmatpush1.msra.mxu0 0.0
    %5340 = vmatprep.subr.mxu0 0.0
    %5341 = vmatpush1.msra.mxu0 0.0
    %5342 = vmatprep.subr.mxu0 0.0
    %5343 = vmatpush1.msra.mxu0 0.0
    %5344 = vmatprep.subr.mxu0 0.0
    %5345 = vmatpush1.msra.mxu0 0.0
    %5346 = vmatprep.subr.mxu0 0.0
    %5347 = vmatpush1.msra.mxu0 0.0
    %5348 = vmatprep.subr.mxu0 0.0
    %5349 = vmatpush1.msra.mxu0 0.0
    %5350 = vmatprep.subr.mxu0 0.0
    %5351 = vmatpush1.msra.mxu0 0.0
    %5352 = vmatprep.subr.mxu0 0.0
    %5353 = vmatpush1.msra.mxu0 0.0
    %5354 = vmatprep.mubr.f32.mxu0 0.0
    %5355 = vmatmul.mubr.f32.gmra.mrb[0].mxu0 %v322
    %v5356 = vpop.f32.mrb[0].mxu0
    %v5357 = vadd.f32 %v5126, %v5356
    %v5358 = vpop.f32.mrb[0].mxu0
    %v5359 = vadd.f32 %v5128, %v5358
    %5360 = vdwg.mxu0
    %5361 = vrot.lane.b32.xlu0 %v4851, 17
    %v5362 = vpop.permute.xlu0 %5361
    %5363 = vrot.lane.b32.xlu0 %v4857, 17
    %v5364 = vpop.permute.xlu0 %5363
    %5365 = vrot.lane.b32.xlu0 %v4852, 17
    %v5366 = vpop.permute.xlu0 %5365
    %5367 = vrot.lane.b32.xlu0 %v4858, 17
    %v5368 = vpop.permute.xlu0 %5367
    %5369 = vrot.lane.b32.xlu0 %v4853, 17
    %v5370 = vpop.permute.xlu0 %5369
    %5371 = vrot.lane.b32.xlu0 %v4859, 17
    %v5372 = vpop.permute.xlu0 %5371
    %v5373 = vsel %vm567, %v5370, %v5372
    %v5374 = vsel %vm567, %v5368, %v5370
    %v5375 = vsel %vm567, %v5366, %v5368
    %v5376 = vsel %vm567, %v5364, %v5366
    %v5377 = vsel %vm567, %v5362, %v5364
    %v5378 = vsel %vm567, %v5372, %v5362
    %v5380 = vsel %vm89, %v5378, 0
    %v5383 = vsel %vm89, %v5377, 0
    %v5386 = vsel %vm89, %v5376, 0
    %v5389 = vsel %vm89, %v5375, 0
    %v5392 = vsel %vm89, %v5374, 0
    %v5395 = vsel %vm89, %v5373, 0
    %5397 = vmatprep.subr.mxu0 %v5383
    %5398 = vmatpush1.msra.mxu0 %v5380
    %5399 = vmatprep.subr.mxu0 0.0
    %5400 = vmatpush1.msra.mxu0 0.0
    %5401 = vmatprep.subr.mxu0 0.0
    %5402 = vmatpush1.msra.mxu0 0.0
    %5403 = vmatprep.subr.mxu0 0.0
    %5404 = vmatpush1.msra.mxu0 0.0
    %5405 = vmatprep.subr.mxu0 0.0
    %5406 = vmatpush1.msra.mxu0 0.0
    %5407 = vmatprep.subr.mxu0 0.0
    %5408 = vmatpush1.msra.mxu0 0.0
    %5409 = vmatprep.subr.mxu0 0.0
    %5410 = vmatpush1.msra.mxu0 0.0
    %5411 = vmatprep.subr.mxu0 0.0
    %5412 = vmatpush1.msra.mxu0 0.0
    %5413 = vmatprep.subr.mxu0 0.0
    %5414 = vmatpush1.msra.mxu0 0.0
    %5415 = vmatprep.subr.mxu0 0.0
    %5416 = vmatpush1.msra.mxu0 0.0
    %5417 = vmatprep.subr.mxu0 0.0
    %5418 = vmatpush1.msra.mxu0 0.0
    %5419 = vmatprep.subr.mxu0 0.0
    %5420 = vmatpush1.msra.mxu0 0.0
    %5421 = vmatprep.subr.mxu0 0.0
    %5422 = vmatpush1.msra.mxu0 0.0
    %5423 = vmatprep.subr.mxu0 0.0
    %5424 = vmatpush1.msra.mxu0 0.0
    %5425 = vmatprep.subr.mxu0 0.0
    %5426 = vmatpush1.msra.mxu0 0.0
    %5427 = vmatprep.subr.mxu0 0.0
    %5428 = vmatpush1.msra.mxu0 0.0
    %5429 = vmatprep.subr.mxu0 0.0
    %5430 = vmatpush1.msra.mxu0 0.0
    %5431 = vmatprep.subr.mxu0 0.0
    %5432 = vmatpush1.msra.mxu0 0.0
    %5433 = vmatprep.subr.mxu0 0.0
    %5434 = vmatpush1.msra.mxu0 0.0
    %5435 = vmatprep.subr.mxu0 0.0
    %5436 = vmatpush1.msra.mxu0 0.0
    %5437 = vmatprep.subr.mxu0 0.0
    %5438 = vmatpush1.msra.mxu0 0.0
    %5439 = vmatprep.subr.mxu0 0.0
    %5440 = vmatpush1.msra.mxu0 0.0
    %5441 = vmatprep.subr.mxu0 0.0
    %5442 = vmatpush1.msra.mxu0 0.0
    %5443 = vmatprep.subr.mxu0 0.0
    %5444 = vmatpush1.msra.mxu0 0.0
    %5445 = vmatprep.subr.mxu0 0.0
    %5446 = vmatpush1.msra.mxu0 0.0
    %5447 = vmatprep.subr.mxu0 0.0
    %5448 = vmatpush1.msra.mxu0 0.0
    %5449 = vmatprep.subr.mxu0 0.0
    %5450 = vmatpush1.msra.mxu0 0.0
    %5451 = vmatprep.subr.mxu0 0.0
    %5452 = vmatpush1.msra.mxu0 0.0
    %5453 = vmatprep.subr.mxu0 0.0
    %5454 = vmatpush1.msra.mxu0 0.0
    %5455 = vmatprep.subr.mxu0 0.0
    %5456 = vmatpush1.msra.mxu0 0.0
    %5457 = vmatprep.subr.mxu0 0.0
    %5458 = vmatpush1.msra.mxu0 0.0
    %5459 = vmatprep.subr.mxu0 0.0
    %5460 = vmatpush1.msra.mxu0 0.0
    %5461 = vmatprep.mubr.f32.mxu0 0.0
    %5462 = vmatmul.mubr.f32.gmra.mrb[0].mxu0 %v575
    %v5463 = vpop.f32.mrb[0].mxu0
    %v5464 = vadd.f32 0.0, %v5463
    %v5465 = vpop.f32.mrb[0].mxu0
    %v5466 = vadd.f32 0.0, %v5465
    %5467 = vdwg.mxu0
    %5468 = vmatprep.subr.mxu0 %v5389
    %5469 = vmatpush1.msra.mxu0 %v5386
    %5470 = vmatprep.subr.mxu0 0.0
    %5471 = vmatpush1.msra.mxu0 0.0
    %5472 = vmatprep.subr.mxu0 0.0
    %5473 = vmatpush1.msra.mxu0 0.0
    %5474 = vmatprep.subr.mxu0 0.0
    %5475 = vmatpush1.msra.mxu0 0.0
    %5476 = vmatprep.subr.mxu0 0.0
    %5477 = vmatpush1.msra.mxu0 0.0
    %5478 = vmatprep.subr.mxu0 0.0
    %5479 = vmatpush1.msra.mxu0 0.0
    %5480 = vmatprep.subr.mxu0 0.0
    %5481 = vmatpush1.msra.mxu0 0.0
    %5482 = vmatprep.subr.mxu0 0.0
    %5483 = vmatpush1.msra.mxu0 0.0
    %5484 = vmatprep.subr.mxu0 0.0
    %5485 = vmatpush1.msra.mxu0 0.0
    %5486 = vmatprep.subr.mxu0 0.0
    %5487 = vmatpush1.msra.mxu0 0.0
    %5488 = vmatprep.subr.mxu0 0.0
    %5489 = vmatpush1.msra.mxu0 0.0
    %5490 = vmatprep.subr.mxu0 0.0
    %5491 = vmatpush1.msra.mxu0 0.0
    %5492 = vmatprep.subr.mxu0 0.0
    %5493 = vmatpush1.msra.mxu0 0.0
    %5494 = vmatprep.subr.mxu0 0.0
    %5495 = vmatpush1.msra.mxu0 0.0
    %5496 = vmatprep.subr.mxu0 0.0
    %5497 = vmatpush1.msra.mxu0 0.0
    %5498 = vmatprep.subr.mxu0 0.0
    %5499 = vmatpush1.msra.mxu0 0.0
    %5500 = vmatprep.subr.mxu0 0.0
    %5501 = vmatpush1.msra.mxu0 0.0
    %5502 = vmatprep.subr.mxu0 0.0
    %5503 = vmatpush1.msra.mxu0 0.0
    %5504 = vmatprep.subr.mxu0 0.0
    %5505 = vmatpush1.msra.mxu0 0.0
    %5506 = vmatprep.subr.mxu0 0.0
    %5507 = vmatpush1.msra.mxu0 0.0
    %5508 = vmatprep.subr.mxu0 0.0
    %5509 = vmatpush1.msra.mxu0 0.0
    %5510 = vmatprep.subr.mxu0 0.0
    %5511 = vmatpush1.msra.mxu0 0.0
    %5512 = vmatprep.subr.mxu0 0.0
    %5513 = vmatpush1.msra.mxu0 0.0
    %5514 = vmatprep.subr.mxu0 0.0
    %5515 = vmatpush1.msra.mxu0 0.0
    %5516 = vmatprep.subr.mxu0 0.0
    %5517 = vmatpush1.msra.mxu0 0.0
    %5518 = vmatprep.subr.mxu0 0.0
    %5519 = vmatpush1.msra.mxu0 0.0
    %5520 = vmatprep.subr.mxu0 0.0
    %5521 = vmatpush1.msra.mxu0 0.0
    %5522 = vmatprep.subr.mxu0 0.0
    %5523 = vmatpush1.msra.mxu0 0.0
    %5524 = vmatprep.subr.mxu0 0.0
    %5525 = vmatpush1.msra.mxu0 0.0
    %5526 = vmatprep.subr.mxu0 0.0
    %5527 = vmatpush1.msra.mxu0 0.0
    %5528 = vmatprep.subr.mxu0 0.0
    %5529 = vmatpush1.msra.mxu0 0.0
    %5530 = vmatprep.subr.mxu0 0.0
    %5531 = vmatpush1.msra.mxu0 0.0
    %5532 = vmatprep.mubr.f32.mxu0 0.0
    %5533 = vmatmul.mubr.f32.gmra.mrb[0].mxu0 %v575
    %v5534 = vpop.f32.mrb[0].mxu0
    %v5535 = vadd.f32 0.0, %v5534
    %v5536 = vpop.f32.mrb[0].mxu0
    %v5537 = vadd.f32 0.0, %v5536
    %5538 = vdwg.mxu0
    %5539 = vmatprep.subr.mxu0 %v5395
    %5540 = vmatpush1.msra.mxu0 %v5392
    %5541 = vmatprep.subr.mxu0 0.0
    %5542 = vmatpush1.msra.mxu0 0.0
    %5543 = vmatprep.subr.mxu0 0.0
    %5544 = vmatpush1.msra.mxu0 0.0
    %5545 = vmatprep.subr.mxu0 0.0
    %5546 = vmatpush1.msra.mxu0 0.0
    %5547 = vmatprep.subr.mxu0 0.0
    %5548 = vmatpush1.msra.mxu0 0.0
    %5549 = vmatprep.subr.mxu0 0.0
    %5550 = vmatpush1.msra.mxu0 0.0
    %5551 = vmatprep.subr.mxu0 0.0
    %5552 = vmatpush1.msra.mxu0 0.0
    %5553 = vmatprep.subr.mxu0 0.0
    %5554 = vmatpush1.msra.mxu0 0.0
    %5555 = vmatprep.subr.mxu0 0.0
    %5556 = vmatpush1.msra.mxu0 0.0
    %5557 = vmatprep.subr.mxu0 0.0
    %5558 = vmatpush1.msra.mxu0 0.0
    %5559 = vmatprep.subr.mxu0 0.0
    %5560 = vmatpush1.msra.mxu0 0.0
    %5561 = vmatprep.subr.mxu0 0.0
    %5562 = vmatpush1.msra.mxu0 0.0
    %5563 = vmatprep.subr.mxu0 0.0
    %5564 = vmatpush1.msra.mxu0 0.0
    %5565 = vmatprep.subr.mxu0 0.0
    %5566 = vmatpush1.msra.mxu0 0.0
    %5567 = vmatprep.subr.mxu0 0.0
    %5568 = vmatpush1.msra.mxu0 0.0
    %5569 = vmatprep.subr.mxu0 0.0
    %5570 = vmatpush1.msra.mxu0 0.0
    %5571 = vmatprep.subr.mxu0 0.0
    %5572 = vmatpush1.msra.mxu0 0.0
    %5573 = vmatprep.subr.mxu0 0.0
    %5574 = vmatpush1.msra.mxu0 0.0
    %5575 = vmatprep.subr.mxu0 0.0
    %5576 = vmatpush1.msra.mxu0 0.0
    %5577 = vmatprep.subr.mxu0 0.0
    %5578 = vmatpush1.msra.mxu0 0.0
    %5579 = vmatprep.subr.mxu0 0.0
    %5580 = vmatpush1.msra.mxu0 0.0
    %5581 = vmatprep.subr.mxu0 0.0
    %5582 = vmatpush1.msra.mxu0 0.0
    %5583 = vmatprep.subr.mxu0 0.0
    %5584 = vmatpush1.msra.mxu0 0.0
    %5585 = vmatprep.subr.mxu0 0.0
    %5586 = vmatpush1.msra.mxu0 0.0
    %5587 = vmatprep.subr.mxu0 0.0
    %5588 = vmatpush1.msra.mxu0 0.0
    %5589 = vmatprep.subr.mxu0 0.0
    %5590 = vmatpush1.msra.mxu0 0.0
    %5591 = vmatprep.subr.mxu0 0.0
    %5592 = vmatpush1.msra.mxu0 0.0
    %5593 = vmatprep.subr.mxu0 0.0
    %5594 = vmatpush1.msra.mxu0 0.0
    %5595 = vmatprep.subr.mxu0 0.0
    %5596 = vmatpush1.msra.mxu0 0.0
    %5597 = vmatprep.subr.mxu0 0.0
    %5598 = vmatpush1.msra.mxu0 0.0
    %5599 = vmatprep.subr.mxu0 0.0
    %5600 = vmatpush1.msra.mxu0 0.0
    %5601 = vmatprep.subr.mxu0 0.0
    %5602 = vmatpush1.msra.mxu0 0.0
    %5603 = vmatprep.mubr.f32.mxu0 0.0
    %5604 = vmatmul.mubr.f32.gmra.mrb[0].mxu0 %v575
    %v5605 = vpop.f32.mrb[0].mxu0
    %v5606 = vadd.f32 0.0, %v5605
    %v5607 = vpop.f32.mrb[0].mxu0
    %v5608 = vadd.f32 0.0, %v5607
    %5609 = vdwg.mxu0
    %v5610 = vadd.f32 %v5215, %v5464
    %v5611 = vadd.f32 %v5217, %v5466
    %v5612 = vadd.f32 %v5286, %v5535
    %v5613 = vadd.f32 %v5288, %v5537
    %v5614 = vadd.f32 %v5357, %v5606
    %v5615 = vadd.f32 %v5359, %v5608
    %5616 = vrot.lane.b32.xlu0 %v4851, 1
    %v5617 = vpop.permute.xlu0 %5616
    %5618 = vrot.lane.b32.xlu0 %v4857, 1
    %v5619 = vpop.permute.xlu0 %5618
    %5620 = vrot.lane.b32.xlu0 %v4852, 1
    %v5621 = vpop.permute.xlu0 %5620
    %5622 = vrot.lane.b32.xlu0 %v4858, 1
    %v5623 = vpop.permute.xlu0 %5622
    %5624 = vrot.lane.b32.xlu0 %v4853, 1
    %v5625 = vpop.permute.xlu0 %5624
    %5626 = vrot.lane.b32.xlu0 %v4859, 1
    %v5627 = vpop.permute.xlu0 %5626
    %v5628 = vsel %vm826, %v5625, %v5627
    %v5629 = vsel %vm826, %v5623, %v5625
    %v5630 = vsel %vm826, %v5621, %v5623
    %v5631 = vsel %vm826, %v5619, %v5621
    %v5632 = vsel %vm826, %v5617, %v5619
    %v5633 = vsel %vm826, %v5627, %v5617
    %v5635 = vsel %vm89, %v5633, 0
    %v5638 = vsel %vm89, %v5632, 0
    %v5641 = vsel %vm89, %v5631, 0
    %v5644 = vsel %vm89, %v5630, 0
    %v5647 = vsel %vm89, %v5629, 0
    %v5650 = vsel %vm89, %v5628, 0
    %5652 = vmatprep.subr.mxu0 %v5638
    %5653 = vmatpush1.msra.mxu0 %v5635
    %5654 = vmatprep.subr.mxu0 0.0
    %5655 = vmatpush1.msra.mxu0 0.0
    %5656 = vmatprep.subr.mxu0 0.0
    %5657 = vmatpush1.msra.mxu0 0.0
    %5658 = vmatprep.subr.mxu0 0.0
    %5659 = vmatpush1.msra.mxu0 0.0
    %5660 = vmatprep.subr.mxu0 0.0
    %5661 = vmatpush1.msra.mxu0 0.0
    %5662 = vmatprep.subr.mxu0 0.0
    %5663 = vmatpush1.msra.mxu0 0.0
    %5664 = vmatprep.subr.mxu0 0.0
    %5665 = vmatpush1.msra.mxu0 0.0
    %5666 = vmatprep.subr.mxu0 0.0
    %5667 = vmatpush1.msra.mxu0 0.0
    %5668 = vmatprep.subr.mxu0 0.0
    %5669 = vmatpush1.msra.mxu0 0.0
    %5670 = vmatprep.subr.mxu0 0.0
    %5671 = vmatpush1.msra.mxu0 0.0
    %5672 = vmatprep.subr.mxu0 0.0
    %5673 = vmatpush1.msra.mxu0 0.0
    %5674 = vmatprep.subr.mxu0 0.0
    %5675 = vmatpush1.msra.mxu0 0.0
    %5676 = vmatprep.subr.mxu0 0.0
    %5677 = vmatpush1.msra.mxu0 0.0
    %5678 = vmatprep.subr.mxu0 0.0
    %5679 = vmatpush1.msra.mxu0 0.0
    %5680 = vmatprep.subr.mxu0 0.0
    %5681 = vmatpush1.msra.mxu0 0.0
    %5682 = vmatprep.subr.mxu0 0.0
    %5683 = vmatpush1.msra.mxu0 0.0
    %5684 = vmatprep.subr.mxu0 0.0
    %5685 = vmatpush1.msra.mxu0 0.0
    %5686 = vmatprep.subr.mxu0 0.0
    %5687 = vmatpush1.msra.mxu0 0.0
    %5688 = vmatprep.subr.mxu0 0.0
    %5689 = vmatpush1.msra.mxu0 0.0
    %5690 = vmatprep.subr.mxu0 0.0
    %5691 = vmatpush1.msra.mxu0 0.0
    %5692 = vmatprep.subr.mxu0 0.0
    %5693 = vmatpush1.msra.mxu0 0.0
    %5694 = vmatprep.subr.mxu0 0.0
    %5695 = vmatpush1.msra.mxu0 0.0
    %5696 = vmatprep.subr.mxu0 0.0
    %5697 = vmatpush1.msra.mxu0 0.0
    %5698 = vmatprep.subr.mxu0 0.0
    %5699 = vmatpush1.msra.mxu0 0.0
    %5700 = vmatprep.subr.mxu0 0.0
    %5701 = vmatpush1.msra.mxu0 0.0
    %5702 = vmatprep.subr.mxu0 0.0
    %5703 = vmatpush1.msra.mxu0 0.0
    %5704 = vmatprep.subr.mxu0 0.0
    %5705 = vmatpush1.msra.mxu0 0.0
    %5706 = vmatprep.subr.mxu0 0.0
    %5707 = vmatpush1.msra.mxu0 0.0
    %5708 = vmatprep.subr.mxu0 0.0
    %5709 = vmatpush1.msra.mxu0 0.0
    %5710 = vmatprep.subr.mxu0 0.0
    %5711 = vmatpush1.msra.mxu0 0.0
    %5712 = vmatprep.subr.mxu0 0.0
    %5713 = vmatpush1.msra.mxu0 0.0
    %5714 = vmatprep.subr.mxu0 0.0
    %5715 = vmatpush1.msra.mxu0 0.0
    %5716 = vmatprep.mubr.f32.mxu0 0.0
    %5717 = vmatmul.mubr.f32.gmra.mrb[0].mxu0 %v834
    %v5718 = vpop.f32.mrb[0].mxu0
    %v5719 = vadd.f32 0.0, %v5718
    %v5720 = vpop.f32.mrb[0].mxu0
    %v5721 = vadd.f32 0.0, %v5720
    %5722 = vdwg.mxu0
    %5723 = vmatprep.subr.mxu0 %v5644
    %5724 = vmatpush1.msra.mxu0 %v5641
    %5725 = vmatprep.subr.mxu0 0.0
    %5726 = vmatpush1.msra.mxu0 0.0
    %5727 = vmatprep.subr.mxu0 0.0
    %5728 = vmatpush1.msra.mxu0 0.0
    %5729 = vmatprep.subr.mxu0 0.0
    %5730 = vmatpush1.msra.mxu0 0.0
    %5731 = vmatprep.subr.mxu0 0.0
    %5732 = vmatpush1.msra.mxu0 0.0
    %5733 = vmatprep.subr.mxu0 0.0
    %5734 = vmatpush1.msra.mxu0 0.0
    %5735 = vmatprep.subr.mxu0 0.0
    %5736 = vmatpush1.msra.mxu0 0.0
    %5737 = vmatprep.subr.mxu0 0.0
    %5738 = vmatpush1.msra.mxu0 0.0
    %5739 = vmatprep.subr.mxu0 0.0
    %5740 = vmatpush1.msra.mxu0 0.0
    %5741 = vmatprep.subr.mxu0 0.0
    %5742 = vmatpush1.msra.mxu0 0.0
    %5743 = vmatprep.subr.mxu0 0.0
    %5744 = vmatpush1.msra.mxu0 0.0
    %5745 = vmatprep.subr.mxu0 0.0
    %5746 = vmatpush1.msra.mxu0 0.0
    %5747 = vmatprep.subr.mxu0 0.0
    %5748 = vmatpush1.msra.mxu0 0.0
    %5749 = vmatprep.subr.mxu0 0.0
    %5750 = vmatpush1.msra.mxu0 0.0
    %5751 = vmatprep.subr.mxu0 0.0
    %5752 = vmatpush1.msra.mxu0 0.0
    %5753 = vmatprep.subr.mxu0 0.0
    %5754 = vmatpush1.msra.mxu0 0.0
    %5755 = vmatprep.subr.mxu0 0.0
    %5756 = vmatpush1.msra.mxu0 0.0
    %5757 = vmatprep.subr.mxu0 0.0
    %5758 = vmatpush1.msra.mxu0 0.0
    %5759 = vmatprep.subr.mxu0 0.0
    %5760 = vmatpush1.msra.mxu0 0.0
    %5761 = vmatprep.subr.mxu0 0.0
    %5762 = vmatpush1.msra.mxu0 0.0
    %5763 = vmatprep.subr.mxu0 0.0
    %5764 = vmatpush1.msra.mxu0 0.0
    %5765 = vmatprep.subr.mxu0 0.0
    %5766 = vmatpush1.msra.mxu0 0.0
    %5767 = vmatprep.subr.mxu0 0.0
    %5768 = vmatpush1.msra.mxu0 0.0
    %5769 = vmatprep.subr.mxu0 0.0
    %5770 = vmatpush1.msra.mxu0 0.0
    %5771 = vmatprep.subr.mxu0 0.0
    %5772 = vmatpush1.msra.mxu0 0.0
    %5773 = vmatprep.subr.mxu0 0.0
    %5774 = vmatpush1.msra.mxu0 0.0
    %5775 = vmatprep.subr.mxu0 0.0
    %5776 = vmatpush1.msra.mxu0 0.0
    %5777 = vmatprep.subr.mxu0 0.0
    %5778 = vmatpush1.msra.mxu0 0.0
    %5779 = vmatprep.subr.mxu0 0.0
    %5780 = vmatpush1.msra.mxu0 0.0
    %5781 = vmatprep.subr.mxu0 0.0
    %5782 = vmatpush1.msra.mxu0 0.0
    %5783 = vmatprep.subr.mxu0 0.0
    %5784 = vmatpush1.msra.mxu0 0.0
    %5785 = vmatprep.subr.mxu0 0.0
    %5786 = vmatpush1.msra.mxu0 0.0
    %5787 = vmatprep.mubr.f32.mxu0 0.0
    %5788 = vmatmul.mubr.f32.gmra.mrb[0].mxu0 %v834
    %v5789 = vpop.f32.mrb[0].mxu0
    %v5790 = vadd.f32 0.0, %v5789
    %v5791 = vpop.f32.mrb[0].mxu0
    %v5792 = vadd.f32 0.0, %v5791
    %5793 = vdwg.mxu0
    %5794 = vmatprep.subr.mxu0 %v5650
    %5795 = vmatpush1.msra.mxu0 %v5647
    %5796 = vmatprep.subr.mxu0 0.0
    %5797 = vmatpush1.msra.mxu0 0.0
    %5798 = vmatprep.subr.mxu0 0.0
    %5799 = vmatpush1.msra.mxu0 0.0
    %5800 = vmatprep.subr.mxu0 0.0
    %5801 = vmatpush1.msra.mxu0 0.0
    %5802 = vmatprep.subr.mxu0 0.0
    %5803 = vmatpush1.msra.mxu0 0.0
    %5804 = vmatprep.subr.mxu0 0.0
    %5805 = vmatpush1.msra.mxu0 0.0
    %5806 = vmatprep.subr.mxu0 0.0
    %5807 = vmatpush1.msra.mxu0 0.0
    %5808 = vmatprep.subr.mxu0 0.0
    %5809 = vmatpush1.msra.mxu0 0.0
    %5810 = vmatprep.subr.mxu0 0.0
    %5811 = vmatpush1.msra.mxu0 0.0
    %5812 = vmatprep.subr.mxu0 0.0
    %5813 = vmatpush1.msra.mxu0 0.0
    %5814 = vmatprep.subr.mxu0 0.0
    %5815 = vmatpush1.msra.mxu0 0.0
    %5816 = vmatprep.subr.mxu0 0.0
    %5817 = vmatpush1.msra.mxu0 0.0
    %5818 = vmatprep.subr.mxu0 0.0
    %5819 = vmatpush1.msra.mxu0 0.0
    %5820 = vmatprep.subr.mxu0 0.0
    %5821 = vmatpush1.msra.mxu0 0.0
    %5822 = vmatprep.subr.mxu0 0.0
    %5823 = vmatpush1.msra.mxu0 0.0
    %5824 = vmatprep.subr.mxu0 0.0
    %5825 = vmatpush1.msra.mxu0 0.0
    %5826 = vmatprep.subr.mxu0 0.0
    %5827 = vmatpush1.msra.mxu0 0.0
    %5828 = vmatprep.subr.mxu0 0.0
    %5829 = vmatpush1.msra.mxu0 0.0
    %5830 = vmatprep.subr.mxu0 0.0
    %5831 = vmatpush1.msra.mxu0 0.0
    %5832 = vmatprep.subr.mxu0 0.0
    %5833 = vmatpush1.msra.mxu0 0.0
    %5834 = vmatprep.subr.mxu0 0.0
    %5835 = vmatpush1.msra.mxu0 0.0
    %5836 = vmatprep.subr.mxu0 0.0
    %5837 = vmatpush1.msra.mxu0 0.0
    %5838 = vmatprep.subr.mxu0 0.0
    %5839 = vmatpush1.msra.mxu0 0.0
    %5840 = vmatprep.subr.mxu0 0.0
    %5841 = vmatpush1.msra.mxu0 0.0
    %5842 = vmatprep.subr.mxu0 0.0
    %5843 = vmatpush1.msra.mxu0 0.0
    %5844 = vmatprep.subr.mxu0 0.0
    %5845 = vmatpush1.msra.mxu0 0.0
    %5846 = vmatprep.subr.mxu0 0.0
    %5847 = vmatpush1.msra.mxu0 0.0
    %5848 = vmatprep.subr.mxu0 0.0
    %5849 = vmatpush1.msra.mxu0 0.0
    %5850 = vmatprep.subr.mxu0 0.0
    %5851 = vmatpush1.msra.mxu0 0.0
    %5852 = vmatprep.subr.mxu0 0.0
    %5853 = vmatpush1.msra.mxu0 0.0
    %5854 = vmatprep.subr.mxu0 0.0
    %5855 = vmatpush1.msra.mxu0 0.0
    %5856 = vmatprep.subr.mxu0 0.0
    %5857 = vmatpush1.msra.mxu0 0.0
    %5858 = vmatprep.mubr.f32.mxu0 0.0
    %5859 = vmatmul.mubr.f32.gmra.mrb[0].mxu0 %v834
    %v5860 = vpop.f32.mrb[0].mxu0
    %v5861 = vadd.f32 0.0, %v5860
    %v5862 = vpop.f32.mrb[0].mxu0
    %v5863 = vadd.f32 0.0, %v5862
    %5864 = vdwg.mxu0
    %v5865 = vadd.f32 %v5610, %v5719
    %v5866 = vadd.f32 %v5611, %v5721
    %v5867 = vadd.f32 %v5612, %v5790
    %v5868 = vadd.f32 %v5613, %v5792
    %v5869 = vadd.f32 %v5614, %v5861
    %v5870 = vadd.f32 %v5615, %v5863
    %v5871 = vsel %vm89, %v4851, 0
    %v5873 = vsel %vm89, %v4857, 0
    %v5875 = vsel %vm89, %v4852, 0
    %v5877 = vsel %vm89, %v4858, 0
    %v5879 = vsel %vm89, %v4853, 0
    %v5881 = vsel %vm89, %v4859, 0
    %5883 = vmatprep.subr.mxu0 %v5873
    %5884 = vmatpush1.msra.mxu0 %v5871
    %5885 = vmatprep.subr.mxu0 0.0
    %5886 = vmatpush1.msra.mxu0 0.0
    %5887 = vmatprep.subr.mxu0 0.0
    %5888 = vmatpush1.msra.mxu0 0.0
    %5889 = vmatprep.subr.mxu0 0.0
    %5890 = vmatpush1.msra.mxu0 0.0
    %5891 = vmatprep.subr.mxu0 0.0
    %5892 = vmatpush1.msra.mxu0 0.0
    %5893 = vmatprep.subr.mxu0 0.0
    %5894 = vmatpush1.msra.mxu0 0.0
    %5895 = vmatprep.subr.mxu0 0.0
    %5896 = vmatpush1.msra.mxu0 0.0
    %5897 = vmatprep.subr.mxu0 0.0
    %5898 = vmatpush1.msra.mxu0 0.0
    %5899 = vmatprep.subr.mxu0 0.0
    %5900 = vmatpush1.msra.mxu0 0.0
    %5901 = vmatprep.subr.mxu0 0.0
    %5902 = vmatpush1.msra.mxu0 0.0
    %5903 = vmatprep.subr.mxu0 0.0
    %5904 = vmatpush1.msra.mxu0 0.0
    %5905 = vmatprep.subr.mxu0 0.0
    %5906 = vmatpush1.msra.mxu0 0.0
    %5907 = vmatprep.subr.mxu0 0.0
    %5908 = vmatpush1.msra.mxu0 0.0
    %5909 = vmatprep.subr.mxu0 0.0
    %5910 = vmatpush1.msra.mxu0 0.0
    %5911 = vmatprep.subr.mxu0 0.0
    %5912 = vmatpush1.msra.mxu0 0.0
    %5913 = vmatprep.subr.mxu0 0.0
    %5914 = vmatpush1.msra.mxu0 0.0
    %5915 = vmatprep.subr.mxu0 0.0
    %5916 = vmatpush1.msra.mxu0 0.0
    %5917 = vmatprep.subr.mxu0 0.0
    %5918 = vmatpush1.msra.mxu0 0.0
    %5919 = vmatprep.subr.mxu0 0.0
    %5920 = vmatpush1.msra.mxu0 0.0
    %5921 = vmatprep.subr.mxu0 0.0
    %5922 = vmatpush1.msra.mxu0 0.0
    %5923 = vmatprep.subr.mxu0 0.0
    %5924 = vmatpush1.msra.mxu0 0.0
    %5925 = vmatprep.subr.mxu0 0.0
    %5926 = vmatpush1.msra.mxu0 0.0
    %5927 = vmatprep.subr.mxu0 0.0
    %5928 = vmatpush1.msra.mxu0 0.0
    %5929 = vmatprep.subr.mxu0 0.0
    %5930 = vmatpush1.msra.mxu0 0.0
    %5931 = vmatprep.subr.mxu0 0.0
    %5932 = vmatpush1.msra.mxu0 0.0
    %5933 = vmatprep.subr.mxu0 0.0
    %5934 = vmatpush1.msra.mxu0 0.0
    %5935 = vmatprep.subr.mxu0 0.0
    %5936 = vmatpush1.msra.mxu0 0.0
    %5937 = vmatprep.subr.mxu0 0.0
    %5938 = vmatpush1.msra.mxu0 0.0
    %5939 = vmatprep.subr.mxu0 0.0
    %5940 = vmatpush1.msra.mxu0 0.0
    %5941 = vmatprep.subr.mxu0 0.0
    %5942 = vmatpush1.msra.mxu0 0.0
    %5943 = vmatprep.subr.mxu0 0.0
    %5944 = vmatpush1.msra.mxu0 0.0
    %5945 = vmatprep.subr.mxu0 0.0
    %5946 = vmatpush1.msra.mxu0 0.0
    %5947 = vmatprep.mubr.f32.mxu0 0.0
    %5948 = vmatmul.mubr.f32.gmra.mrb[0].mxu0 %v1074
    %v5949 = vpop.f32.mrb[0].mxu0
    %v5950 = vadd.f32 0.0, %v5949
    %v5951 = vpop.f32.mrb[0].mxu0
    %v5952 = vadd.f32 0.0, %v5951
    %5953 = vdwg.mxu0
    %5954 = vmatprep.subr.mxu0 %v5877
    %5955 = vmatpush1.msra.mxu0 %v5875
    %5956 = vmatprep.subr.mxu0 0.0
    %5957 = vmatpush1.msra.mxu0 0.0
    %5958 = vmatprep.subr.mxu0 0.0
    %5959 = vmatpush1.msra.mxu0 0.0
    %5960 = vmatprep.subr.mxu0 0.0
    %5961 = vmatpush1.msra.mxu0 0.0
    %5962 = vmatprep.subr.mxu0 0.0
    %5963 = vmatpush1.msra.mxu0 0.0
    %5964 = vmatprep.subr.mxu0 0.0
    %5965 = vmatpush1.msra.mxu0 0.0
    %5966 = vmatprep.subr.mxu0 0.0
    %5967 = vmatpush1.msra.mxu0 0.0
    %5968 = vmatprep.subr.mxu0 0.0
    %5969 = vmatpush1.msra.mxu0 0.0
    %5970 = vmatprep.subr.mxu0 0.0
    %5971 = vmatpush1.msra.mxu0 0.0
    %5972 = vmatprep.subr.mxu0 0.0
    %5973 = vmatpush1.msra.mxu0 0.0
    %5974 = vmatprep.subr.mxu0 0.0
    %5975 = vmatpush1.msra.mxu0 0.0
    %5976 = vmatprep.subr.mxu0 0.0
    %5977 = vmatpush1.msra.mxu0 0.0
    %5978 = vmatprep.subr.mxu0 0.0
    %5979 = vmatpush1.msra.mxu0 0.0
    %5980 = vmatprep.subr.mxu0 0.0
    %5981 = vmatpush1.msra.mxu0 0.0
    %5982 = vmatprep.subr.mxu0 0.0
    %5983 = vmatpush1.msra.mxu0 0.0
    %5984 = vmatprep.subr.mxu0 0.0
    %5985 = vmatpush1.msra.mxu0 0.0
    %5986 = vmatprep.subr.mxu0 0.0
    %5987 = vmatpush1.msra.mxu0 0.0
    %5988 = vmatprep.subr.mxu0 0.0
    %5989 = vmatpush1.msra.mxu0 0.0
    %5990 = vmatprep.subr.mxu0 0.0
    %5991 = vmatpush1.msra.mxu0 0.0
    %5992 = vmatprep.subr.mxu0 0.0
    %5993 = vmatpush1.msra.mxu0 0.0
    %5994 = vmatprep.subr.mxu0 0.0
    %5995 = vmatpush1.msra.mxu0 0.0
    %5996 = vmatprep.subr.mxu0 0.0
    %5997 = vmatpush1.msra.mxu0 0.0
    %5998 = vmatprep.subr.mxu0 0.0
    %5999 = vmatpush1.msra.mxu0 0.0
    %6000 = vmatprep.subr.mxu0 0.0
    %6001 = vmatpush1.msra.mxu0 0.0
    %6002 = vmatprep.subr.mxu0 0.0
    %6003 = vmatpush1.msra.mxu0 0.0
    %6004 = vmatprep.subr.mxu0 0.0
    %6005 = vmatpush1.msra.mxu0 0.0
    %6006 = vmatprep.subr.mxu0 0.0
    %6007 = vmatpush1.msra.mxu0 0.0
    %6008 = vmatprep.subr.mxu0 0.0
    %6009 = vmatpush1.msra.mxu0 0.0
    %6010 = vmatprep.subr.mxu0 0.0
    %6011 = vmatpush1.msra.mxu0 0.0
    %6012 = vmatprep.subr.mxu0 0.0
    %6013 = vmatpush1.msra.mxu0 0.0
    %6014 = vmatprep.subr.mxu0 0.0
    %6015 = vmatpush1.msra.mxu0 0.0
    %6016 = vmatprep.subr.mxu0 0.0
    %6017 = vmatpush1.msra.mxu0 0.0
    %6018 = vmatprep.mubr.f32.mxu0 0.0
    %6019 = vmatmul.mubr.f32.gmra.mrb[0].mxu0 %v1074
    %v6020 = vpop.f32.mrb[0].mxu0
    %v6021 = vadd.f32 0.0, %v6020
    %v6022 = vpop.f32.mrb[0].mxu0
    %v6023 = vadd.f32 0.0, %v6022
    %6024 = vdwg.mxu0
    %6025 = vmatprep.subr.mxu0 %v5881
    %6026 = vmatpush1.msra.mxu0 %v5879
    %6027 = vmatprep.subr.mxu0 0.0
    %6028 = vmatpush1.msra.mxu0 0.0
    %6029 = vmatprep.subr.mxu0 0.0
    %6030 = vmatpush1.msra.mxu0 0.0
    %6031 = vmatprep.subr.mxu0 0.0
    %6032 = vmatpush1.msra.mxu0 0.0
    %6033 = vmatprep.subr.mxu0 0.0
    %6034 = vmatpush1.msra.mxu0 0.0
    %6035 = vmatprep.subr.mxu0 0.0
    %6036 = vmatpush1.msra.mxu0 0.0
    %6037 = vmatprep.subr.mxu0 0.0
    %6038 = vmatpush1.msra.mxu0 0.0
    %6039 = vmatprep.subr.mxu0 0.0
    %6040 = vmatpush1.msra.mxu0 0.0
    %6041 = vmatprep.subr.mxu0 0.0
    %6042 = vmatpush1.msra.mxu0 0.0
    %6043 = vmatprep.subr.mxu0 0.0
    %6044 = vmatpush1.msra.mxu0 0.0
    %6045 = vmatprep.subr.mxu0 0.0
    %6046 = vmatpush1.msra.mxu0 0.0
    %6047 = vmatprep.subr.mxu0 0.0
    %6048 = vmatpush1.msra.mxu0 0.0
    %6049 = vmatprep.subr.mxu0 0.0
    %6050 = vmatpush1.msra.mxu0 0.0
    %6051 = vmatprep.subr.mxu0 0.0
    %6052 = vmatpush1.msra.mxu0 0.0
    %6053 = vmatprep.subr.mxu0 0.0
    %6054 = vmatpush1.msra.mxu0 0.0
    %6055 = vmatprep.subr.mxu0 0.0
    %6056 = vmatpush1.msra.mxu0 0.0
    %6057 = vmatprep.subr.mxu0 0.0
    %6058 = vmatpush1.msra.mxu0 0.0
    %6059 = vmatprep.subr.mxu0 0.0
    %6060 = vmatpush1.msra.mxu0 0.0
    %6061 = vmatprep.subr.mxu0 0.0
    %6062 = vmatpush1.msra.mxu0 0.0
    %6063 = vmatprep.subr.mxu0 0.0
    %6064 = vmatpush1.msra.mxu0 0.0
    %6065 = vmatprep.subr.mxu0 0.0
    %6066 = vmatpush1.msra.mxu0 0.0
    %6067 = vmatprep.subr.mxu0 0.0
    %6068 = vmatpush1.msra.mxu0 0.0
    %6069 = vmatprep.subr.mxu0 0.0
    %6070 = vmatpush1.msra.mxu0 0.0
    %6071 = vmatprep.subr.mxu0 0.0
    %6072 = vmatpush1.msra.mxu0 0.0
    %6073 = vmatprep.subr.mxu0 0.0
    %6074 = vmatpush1.msra.mxu0 0.0
    %6075 = vmatprep.subr.mxu0 0.0
    %6076 = vmatpush1.msra.mxu0 0.0
    %6077 = vmatprep.subr.mxu0 0.0
    %6078 = vmatpush1.msra.mxu0 0.0
    %6079 = vmatprep.subr.mxu0 0.0
    %6080 = vmatpush1.msra.mxu0 0.0
    %6081 = vmatprep.subr.mxu0 0.0
    %6082 = vmatpush1.msra.mxu0 0.0
    %6083 = vmatprep.subr.mxu0 0.0
    %6084 = vmatpush1.msra.mxu0 0.0
    %6085 = vmatprep.subr.mxu0 0.0
    %6086 = vmatpush1.msra.mxu0 0.0
    %6087 = vmatprep.subr.mxu0 0.0
    %6088 = vmatpush1.msra.mxu0 0.0
    %6089 = vmatprep.mubr.f32.mxu0 0.0
    %6090 = vmatmul.mubr.f32.gmra.mrb[0].mxu0 %v1074
    %v6091 = vpop.f32.mrb[0].mxu0
    %v6092 = vadd.f32 0.0, %v6091
    %v6093 = vpop.f32.mrb[0].mxu0
    %v6094 = vadd.f32 0.0, %v6093
    %6095 = vdwg.mxu0
    %v6096 = vadd.f32 %v5865, %v5950
    %v6097 = vadd.f32 %v5866, %v5952
    %v6098 = vadd.f32 %v5867, %v6021
    %v6099 = vadd.f32 %v5868, %v6023
    %v6100 = vadd.f32 %v5869, %v6092
    %v6101 = vadd.f32 %v5870, %v6094
    %6102 = vrot.lane.b32.xlu0 %v4851, 127
    %v6103 = vpop.permute.xlu0 %6102
    %6104 = vrot.lane.b32.xlu0 %v4857, 127
    %v6105 = vpop.permute.xlu0 %6104
    %6106 = vrot.lane.b32.xlu0 %v4852, 127
    %v6107 = vpop.permute.xlu0 %6106
    %6108 = vrot.lane.b32.xlu0 %v4858, 127
    %v6109 = vpop.permute.xlu0 %6108
    %6110 = vrot.lane.b32.xlu0 %v4853, 127
    %v6111 = vpop.permute.xlu0 %6110
    %6112 = vrot.lane.b32.xlu0 %v4859, 127
    %v6113 = vpop.permute.xlu0 %6112
    %v6114 = vsel %vm1319, %v6111, %v6113
    %v6115 = vsel %vm1319, %v6109, %v6111
    %v6116 = vsel %vm1319, %v6107, %v6109
    %v6117 = vsel %vm1319, %v6105, %v6107
    %v6118 = vsel %vm1319, %v6103, %v6105
    %v6119 = vsel %vm1319, %v6113, %v6103
    %v6121 = vsel %vm89, %v6118, 0
    %v6124 = vsel %vm89, %v6117, 0
    %v6127 = vsel %vm89, %v6116, 0
    %v6130 = vsel %vm89, %v6115, 0
    %v6133 = vsel %vm89, %v6114, 0
    %v6136 = vsel %vm89, %v6119, 0
    %6138 = vmatprep.subr.mxu0 %v6124
    %6139 = vmatpush1.msra.mxu0 %v6121
    %6140 = vmatprep.subr.mxu0 0.0
    %6141 = vmatpush1.msra.mxu0 0.0
    %6142 = vmatprep.subr.mxu0 0.0
    %6143 = vmatpush1.msra.mxu0 0.0
    %6144 = vmatprep.subr.mxu0 0.0
    %6145 = vmatpush1.msra.mxu0 0.0
    %6146 = vmatprep.subr.mxu0 0.0
    %6147 = vmatpush1.msra.mxu0 0.0
    %6148 = vmatprep.subr.mxu0 0.0
    %6149 = vmatpush1.msra.mxu0 0.0
    %6150 = vmatprep.subr.mxu0 0.0
    %6151 = vmatpush1.msra.mxu0 0.0
    %6152 = vmatprep.subr.mxu0 0.0
    %6153 = vmatpush1.msra.mxu0 0.0
    %6154 = vmatprep.subr.mxu0 0.0
    %6155 = vmatpush1.msra.mxu0 0.0
    %6156 = vmatprep.subr.mxu0 0.0
    %6157 = vmatpush1.msra.mxu0 0.0
    %6158 = vmatprep.subr.mxu0 0.0
    %6159 = vmatpush1.msra.mxu0 0.0
    %6160 = vmatprep.subr.mxu0 0.0
    %6161 = vmatpush1.msra.mxu0 0.0
    %6162 = vmatprep.subr.mxu0 0.0
    %6163 = vmatpush1.msra.mxu0 0.0
    %6164 = vmatprep.subr.mxu0 0.0
    %6165 = vmatpush1.msra.mxu0 0.0
    %6166 = vmatprep.subr.mxu0 0.0
    %6167 = vmatpush1.msra.mxu0 0.0
    %6168 = vmatprep.subr.mxu0 0.0
    %6169 = vmatpush1.msra.mxu0 0.0
    %6170 = vmatprep.subr.mxu0 0.0
    %6171 = vmatpush1.msra.mxu0 0.0
    %6172 = vmatprep.subr.mxu0 0.0
    %6173 = vmatpush1.msra.mxu0 0.0
    %6174 = vmatprep.subr.mxu0 0.0
    %6175 = vmatpush1.msra.mxu0 0.0
    %6176 = vmatprep.subr.mxu0 0.0
    %6177 = vmatpush1.msra.mxu0 0.0
    %6178 = vmatprep.subr.mxu0 0.0
    %6179 = vmatpush1.msra.mxu0 0.0
    %6180 = vmatprep.subr.mxu0 0.0
    %6181 = vmatpush1.msra.mxu0 0.0
    %6182 = vmatprep.subr.mxu0 0.0
    %6183 = vmatpush1.msra.mxu0 0.0
    %6184 = vmatprep.subr.mxu0 0.0
    %6185 = vmatpush1.msra.mxu0 0.0
    %6186 = vmatprep.subr.mxu0 0.0
    %6187 = vmatpush1.msra.mxu0 0.0
    %6188 = vmatprep.subr.mxu0 0.0
    %6189 = vmatpush1.msra.mxu0 0.0
    %6190 = vmatprep.subr.mxu0 0.0
    %6191 = vmatpush1.msra.mxu0 0.0
    %6192 = vmatprep.subr.mxu0 0.0
    %6193 = vmatpush1.msra.mxu0 0.0
    %6194 = vmatprep.subr.mxu0 0.0
    %6195 = vmatpush1.msra.mxu0 0.0
    %6196 = vmatprep.subr.mxu0 0.0
    %6197 = vmatpush1.msra.mxu0 0.0
    %6198 = vmatprep.subr.mxu0 0.0
    %6199 = vmatpush1.msra.mxu0 0.0
    %6200 = vmatprep.subr.mxu0 0.0
    %6201 = vmatpush1.msra.mxu0 0.0
    %6202 = vmatprep.mubr.f32.mxu0 0.0
    %6203 = vmatmul.mubr.f32.gmra.mrb[0].mxu0 %v1327
    %v6204 = vpop.f32.mrb[0].mxu0
    %v6205 = vadd.f32 0.0, %v6204
    %v6206 = vpop.f32.mrb[0].mxu0
    %v6207 = vadd.f32 0.0, %v6206
    %6208 = vdwg.mxu0
    %6209 = vmatprep.subr.mxu0 %v6130
    %6210 = vmatpush1.msra.mxu0 %v6127
    %6211 = vmatprep.subr.mxu0 0.0
    %6212 = vmatpush1.msra.mxu0 0.0
    %6213 = vmatprep.subr.mxu0 0.0
    %6214 = vmatpush1.msra.mxu0 0.0
    %6215 = vmatprep.subr.mxu0 0.0
    %6216 = vmatpush1.msra.mxu0 0.0
    %6217 = vmatprep.subr.mxu0 0.0
    %6218 = vmatpush1.msra.mxu0 0.0
    %6219 = vmatprep.subr.mxu0 0.0
    %6220 = vmatpush1.msra.mxu0 0.0
    %6221 = vmatprep.subr.mxu0 0.0
    %6222 = vmatpush1.msra.mxu0 0.0
    %6223 = vmatprep.subr.mxu0 0.0
    %6224 = vmatpush1.msra.mxu0 0.0
    %6225 = vmatprep.subr.mxu0 0.0
    %6226 = vmatpush1.msra.mxu0 0.0
    %6227 = vmatprep.subr.mxu0 0.0
    %6228 = vmatpush1.msra.mxu0 0.0
    %6229 = vmatprep.subr.mxu0 0.0
    %6230 = vmatpush1.msra.mxu0 0.0
    %6231 = vmatprep.subr.mxu0 0.0
    %6232 = vmatpush1.msra.mxu0 0.0
    %6233 = vmatprep.subr.mxu0 0.0
    %6234 = vmatpush1.msra.mxu0 0.0
    %6235 = vmatprep.subr.mxu0 0.0
    %6236 = vmatpush1.msra.mxu0 0.0
    %6237 = vmatprep.subr.mxu0 0.0
    %6238 = vmatpush1.msra.mxu0 0.0
    %6239 = vmatprep.subr.mxu0 0.0
    %6240 = vmatpush1.msra.mxu0 0.0
    %6241 = vmatprep.subr.mxu0 0.0
    %6242 = vmatpush1.msra.mxu0 0.0
    %6243 = vmatprep.subr.mxu0 0.0
    %6244 = vmatpush1.msra.mxu0 0.0
    %6245 = vmatprep.subr.mxu0 0.0
    %6246 = vmatpush1.msra.mxu0 0.0
    %6247 = vmatprep.subr.mxu0 0.0
    %6248 = vmatpush1.msra.mxu0 0.0
    %6249 = vmatprep.subr.mxu0 0.0
    %6250 = vmatpush1.msra.mxu0 0.0
    %6251 = vmatprep.subr.mxu0 0.0
    %6252 = vmatpush1.msra.mxu0 0.0
    %6253 = vmatprep.subr.mxu0 0.0
    %6254 = vmatpush1.msra.mxu0 0.0
    %6255 = vmatprep.subr.mxu0 0.0
    %6256 = vmatpush1.msra.mxu0 0.0
    %6257 = vmatprep.subr.mxu0 0.0
    %6258 = vmatpush1.msra.mxu0 0.0
    %6259 = vmatprep.subr.mxu0 0.0
    %6260 = vmatpush1.msra.mxu0 0.0
    %6261 = vmatprep.subr.mxu0 0.0
    %6262 = vmatpush1.msra.mxu0 0.0
    %6263 = vmatprep.subr.mxu0 0.0
    %6264 = vmatpush1.msra.mxu0 0.0
    %6265 = vmatprep.subr.mxu0 0.0
    %6266 = vmatpush1.msra.mxu0 0.0
    %6267 = vmatprep.subr.mxu0 0.0
    %6268 = vmatpush1.msra.mxu0 0.0
    %6269 = vmatprep.subr.mxu0 0.0
    %6270 = vmatpush1.msra.mxu0 0.0
    %6271 = vmatprep.subr.mxu0 0.0
    %6272 = vmatpush1.msra.mxu0 0.0
    %6273 = vmatprep.mubr.f32.mxu0 0.0
    %6274 = vmatmul.mubr.f32.gmra.mrb[0].mxu0 %v1327
    %v6275 = vpop.f32.mrb[0].mxu0
    %v6276 = vadd.f32 0.0, %v6275
    %v6277 = vpop.f32.mrb[0].mxu0
    %v6278 = vadd.f32 0.0, %v6277
    %6279 = vdwg.mxu0
    %6280 = vmatprep.subr.mxu0 %v6136
    %6281 = vmatpush1.msra.mxu0 %v6133
    %6282 = vmatprep.subr.mxu0 0.0
    %6283 = vmatpush1.msra.mxu0 0.0
    %6284 = vmatprep.subr.mxu0 0.0
    %6285 = vmatpush1.msra.mxu0 0.0
    %6286 = vmatprep.subr.mxu0 0.0
    %6287 = vmatpush1.msra.mxu0 0.0
    %6288 = vmatprep.subr.mxu0 0.0
    %6289 = vmatpush1.msra.mxu0 0.0
    %6290 = vmatprep.subr.mxu0 0.0
    %6291 = vmatpush1.msra.mxu0 0.0
    %6292 = vmatprep.subr.mxu0 0.0
    %6293 = vmatpush1.msra.mxu0 0.0
    %6294 = vmatprep.subr.mxu0 0.0
    %6295 = vmatpush1.msra.mxu0 0.0
    %6296 = vmatprep.subr.mxu0 0.0
    %6297 = vmatpush1.msra.mxu0 0.0
    %6298 = vmatprep.subr.mxu0 0.0
    %6299 = vmatpush1.msra.mxu0 0.0
    %6300 = vmatprep.subr.mxu0 0.0
    %6301 = vmatpush1.msra.mxu0 0.0
    %6302 = vmatprep.subr.mxu0 0.0
    %6303 = vmatpush1.msra.mxu0 0.0
    %6304 = vmatprep.subr.mxu0 0.0
    %6305 = vmatpush1.msra.mxu0 0.0
    %6306 = vmatprep.subr.mxu0 0.0
    %6307 = vmatpush1.msra.mxu0 0.0
    %6308 = vmatprep.subr.mxu0 0.0
    %6309 = vmatpush1.msra.mxu0 0.0
    %6310 = vmatprep.subr.mxu0 0.0
    %6311 = vmatpush1.msra.mxu0 0.0
    %6312 = vmatprep.subr.mxu0 0.0
    %6313 = vmatpush1.msra.mxu0 0.0
    %6314 = vmatprep.subr.mxu0 0.0
    %6315 = vmatpush1.msra.mxu0 0.0
    %6316 = vmatprep.subr.mxu0 0.0
    %6317 = vmatpush1.msra.mxu0 0.0
    %6318 = vmatprep.subr.mxu0 0.0
    %6319 = vmatpush1.msra.mxu0 0.0
    %6320 = vmatprep.subr.mxu0 0.0
    %6321 = vmatpush1.msra.mxu0 0.0
    %6322 = vmatprep.subr.mxu0 0.0
    %6323 = vmatpush1.msra.mxu0 0.0
    %6324 = vmatprep.subr.mxu0 0.0
    %6325 = vmatpush1.msra.mxu0 0.0
    %6326 = vmatprep.subr.mxu0 0.0
    %6327 = vmatpush1.msra.mxu0 0.0
    %6328 = vmatprep.subr.mxu0 0.0
    %6329 = vmatpush1.msra.mxu0 0.0
    %6330 = vmatprep.subr.mxu0 0.0
    %6331 = vmatpush1.msra.mxu0 0.0
    %6332 = vmatprep.subr.mxu0 0.0
    %6333 = vmatpush1.msra.mxu0 0.0
    %6334 = vmatprep.subr.mxu0 0.0
    %6335 = vmatpush1.msra.mxu0 0.0
    %6336 = vmatprep.subr.mxu0 0.0
    %6337 = vmatpush1.msra.mxu0 0.0
    %6338 = vmatprep.subr.mxu0 0.0
    %6339 = vmatpush1.msra.mxu0 0.0
    %6340 = vmatprep.subr.mxu0 0.0
    %6341 = vmatpush1.msra.mxu0 0.0
    %6342 = vmatprep.subr.mxu0 0.0
    %6343 = vmatpush1.msra.mxu0 0.0
    %6344 = vmatprep.mubr.f32.mxu0 0.0
    %6345 = vmatmul.mubr.f32.gmra.mrb[0].mxu0 %v1327
    %v6346 = vpop.f32.mrb[0].mxu0
    %v6347 = vadd.f32 0.0, %v6346
    %v6348 = vpop.f32.mrb[0].mxu0
    %v6349 = vadd.f32 0.0, %v6348
    %6350 = vdwg.mxu0
    %v6351 = vadd.f32 %v6096, %v6205
    %v6352 = vadd.f32 %v6097, %v6207
    %v6353 = vadd.f32 %v6098, %v6276
    %v6354 = vadd.f32 %v6099, %v6278
    %v6355 = vadd.f32 %v6100, %v6347
    %v6356 = vadd.f32 %v6101, %v6349
    %6357 = vrot.lane.b32.xlu0 %v4851, 111
    %v6358 = vpop.permute.xlu0 %6357
    %6359 = vrot.lane.b32.xlu0 %v4857, 111
    %v6360 = vpop.permute.xlu0 %6359
    %6361 = vrot.lane.b32.xlu0 %v4852, 111
    %v6362 = vpop.permute.xlu0 %6361
    %6363 = vrot.lane.b32.xlu0 %v4858, 111
    %v6364 = vpop.permute.xlu0 %6363
    %6365 = vrot.lane.b32.xlu0 %v4853, 111
    %v6366 = vpop.permute.xlu0 %6365
    %6367 = vrot.lane.b32.xlu0 %v4859, 111
    %v6368 = vpop.permute.xlu0 %6367
    %v6369 = vsel %vm1578, %v6366, %v6368
    %v6370 = vsel %vm1578, %v6364, %v6366
    %v6371 = vsel %vm1578, %v6362, %v6364
    %v6372 = vsel %vm1578, %v6360, %v6362
    %v6373 = vsel %vm1578, %v6358, %v6360
    %v6374 = vsel %vm1578, %v6368, %v6358
    %v6376 = vsel %vm89, %v6373, 0
    %v6379 = vsel %vm89, %v6372, 0
    %v6382 = vsel %vm89, %v6371, 0
    %v6385 = vsel %vm89, %v6370, 0
    %v6388 = vsel %vm89, %v6369, 0
    %v6391 = vsel %vm89, %v6374, 0
    %6393 = vmatprep.subr.mxu0 %v6379
    %6394 = vmatpush1.msra.mxu0 %v6376
    %6395 = vmatprep.subr.mxu0 0.0
    %6396 = vmatpush1.msra.mxu0 0.0
    %6397 = vmatprep.subr.mxu0 0.0
    %6398 = vmatpush1.msra.mxu0 0.0
    %6399 = vmatprep.subr.mxu0 0.0
    %6400 = vmatpush1.msra.mxu0 0.0
    %6401 = vmatprep.subr.mxu0 0.0
    %6402 = vmatpush1.msra.mxu0 0.0
    %6403 = vmatprep.subr.mxu0 0.0
    %6404 = vmatpush1.msra.mxu0 0.0
    %6405 = vmatprep.subr.mxu0 0.0
    %6406 = vmatpush1.msra.mxu0 0.0
    %6407 = vmatprep.subr.mxu0 0.0
    %6408 = vmatpush1.msra.mxu0 0.0
    %6409 = vmatprep.subr.mxu0 0.0
    %6410 = vmatpush1.msra.mxu0 0.0
    %6411 = vmatprep.subr.mxu0 0.0
    %6412 = vmatpush1.msra.mxu0 0.0
    %6413 = vmatprep.subr.mxu0 0.0
    %6414 = vmatpush1.msra.mxu0 0.0
    %6415 = vmatprep.subr.mxu0 0.0
    %6416 = vmatpush1.msra.mxu0 0.0
    %6417 = vmatprep.subr.mxu0 0.0
    %6418 = vmatpush1.msra.mxu0 0.0
    %6419 = vmatprep.subr.mxu0 0.0
    %6420 = vmatpush1.msra.mxu0 0.0
    %6421 = vmatprep.subr.mxu0 0.0
    %6422 = vmatpush1.msra.mxu0 0.0
    %6423 = vmatprep.subr.mxu0 0.0
    %6424 = vmatpush1.msra.mxu0 0.0
    %6425 = vmatprep.subr.mxu0 0.0
    %6426 = vmatpush1.msra.mxu0 0.0
    %6427 = vmatprep.subr.mxu0 0.0
    %6428 = vmatpush1.msra.mxu0 0.0
    %6429 = vmatprep.subr.mxu0 0.0
    %6430 = vmatpush1.msra.mxu0 0.0
    %6431 = vmatprep.subr.mxu0 0.0
    %6432 = vmatpush1.msra.mxu0 0.0
    %6433 = vmatprep.subr.mxu0 0.0
    %6434 = vmatpush1.msra.mxu0 0.0
    %6435 = vmatprep.subr.mxu0 0.0
    %6436 = vmatpush1.msra.mxu0 0.0
    %6437 = vmatprep.subr.mxu0 0.0
    %6438 = vmatpush1.msra.mxu0 0.0
    %6439 = vmatprep.subr.mxu0 0.0
    %6440 = vmatpush1.msra.mxu0 0.0
    %6441 = vmatprep.subr.mxu0 0.0
    %6442 = vmatpush1.msra.mxu0 0.0
    %6443 = vmatprep.subr.mxu0 0.0
    %6444 = vmatpush1.msra.mxu0 0.0
    %6445 = vmatprep.subr.mxu0 0.0
    %6446 = vmatpush1.msra.mxu0 0.0
    %6447 = vmatprep.subr.mxu0 0.0
    %6448 = vmatpush1.msra.mxu0 0.0
    %6449 = vmatprep.subr.mxu0 0.0
    %6450 = vmatpush1.msra.mxu0 0.0
    %6451 = vmatprep.subr.mxu0 0.0
    %6452 = vmatpush1.msra.mxu0 0.0
    %6453 = vmatprep.subr.mxu0 0.0
    %6454 = vmatpush1.msra.mxu0 0.0
    %6455 = vmatprep.subr.mxu0 0.0
    %6456 = vmatpush1.msra.mxu0 0.0
    %6457 = vmatprep.mubr.f32.mxu0 0.0
    %6458 = vmatmul.mubr.f32.gmra.mrb[0].mxu0 %v1586
    %v6459 = vpop.f32.mrb[0].mxu0
    %v6460 = vadd.f32 0.0, %v6459
    %v6461 = vpop.f32.mrb[0].mxu0
    %v6462 = vadd.f32 0.0, %v6461
    %6463 = vdwg.mxu0
    %6464 = vmatprep.subr.mxu0 %v6385
    %6465 = vmatpush1.msra.mxu0 %v6382
    %6466 = vmatprep.subr.mxu0 0.0
    %6467 = vmatpush1.msra.mxu0 0.0
    %6468 = vmatprep.subr.mxu0 0.0
    %6469 = vmatpush1.msra.mxu0 0.0
    %6470 = vmatprep.subr.mxu0 0.0
    %6471 = vmatpush1.msra.mxu0 0.0
    %6472 = vmatprep.subr.mxu0 0.0
    %6473 = vmatpush1.msra.mxu0 0.0
    %6474 = vmatprep.subr.mxu0 0.0
    %6475 = vmatpush1.msra.mxu0 0.0
    %6476 = vmatprep.subr.mxu0 0.0
    %6477 = vmatpush1.msra.mxu0 0.0
    %6478 = vmatprep.subr.mxu0 0.0
    %6479 = vmatpush1.msra.mxu0 0.0
    %6480 = vmatprep.subr.mxu0 0.0
    %6481 = vmatpush1.msra.mxu0 0.0
    %6482 = vmatprep.subr.mxu0 0.0
    %6483 = vmatpush1.msra.mxu0 0.0
    %6484 = vmatprep.subr.mxu0 0.0
    %6485 = vmatpush1.msra.mxu0 0.0
    %6486 = vmatprep.subr.mxu0 0.0
    %6487 = vmatpush1.msra.mxu0 0.0
    %6488 = vmatprep.subr.mxu0 0.0
    %6489 = vmatpush1.msra.mxu0 0.0
    %6490 = vmatprep.subr.mxu0 0.0
    %6491 = vmatpush1.msra.mxu0 0.0
    %6492 = vmatprep.subr.mxu0 0.0
    %6493 = vmatpush1.msra.mxu0 0.0
    %6494 = vmatprep.subr.mxu0 0.0
    %6495 = vmatpush1.msra.mxu0 0.0
    %6496 = vmatprep.subr.mxu0 0.0
    %6497 = vmatpush1.msra.mxu0 0.0
    %6498 = vmatprep.subr.mxu0 0.0
    %6499 = vmatpush1.msra.mxu0 0.0
    %6500 = vmatprep.subr.mxu0 0.0
    %6501 = vmatpush1.msra.mxu0 0.0
    %6502 = vmatprep.subr.mxu0 0.0
    %6503 = vmatpush1.msra.mxu0 0.0
    %6504 = vmatprep.subr.mxu0 0.0
    %6505 = vmatpush1.msra.mxu0 0.0
    %6506 = vmatprep.subr.mxu0 0.0
    %6507 = vmatpush1.msra.mxu0 0.0
    %6508 = vmatprep.subr.mxu0 0.0
    %6509 = vmatpush1.msra.mxu0 0.0
    %6510 = vmatprep.subr.mxu0 0.0
    %6511 = vmatpush1.msra.mxu0 0.0
    %6512 = vmatprep.subr.mxu0 0.0
    %6513 = vmatpush1.msra.mxu0 0.0
    %6514 = vmatprep.subr.mxu0 0.0
    %6515 = vmatpush1.msra.mxu0 0.0
    %6516 = vmatprep.subr.mxu0 0.0
    %6517 = vmatpush1.msra.mxu0 0.0
    %6518 = vmatprep.subr.mxu0 0.0
    %6519 = vmatpush1.msra.mxu0 0.0
    %6520 = vmatprep.subr.mxu0 0.0
    %6521 = vmatpush1.msra.mxu0 0.0
    %6522 = vmatprep.subr.mxu0 0.0
    %6523 = vmatpush1.msra.mxu0 0.0
    %6524 = vmatprep.subr.mxu0 0.0
    %6525 = vmatpush1.msra.mxu0 0.0
    %6526 = vmatprep.subr.mxu0 0.0
    %6527 = vmatpush1.msra.mxu0 0.0
    %6528 = vmatprep.mubr.f32.mxu0 0.0
    %6529 = vmatmul.mubr.f32.gmra.mrb[0].mxu0 %v1586
    %v6530 = vpop.f32.mrb[0].mxu0
    %v6531 = vadd.f32 0.0, %v6530
    %v6532 = vpop.f32.mrb[0].mxu0
    %v6533 = vadd.f32 0.0, %v6532
    %6534 = vdwg.mxu0
    %6535 = vmatprep.subr.mxu0 %v6391
    %6536 = vmatpush1.msra.mxu0 %v6388
    %6537 = vmatprep.subr.mxu0 0.0
    %6538 = vmatpush1.msra.mxu0 0.0
    %6539 = vmatprep.subr.mxu0 0.0
    %6540 = vmatpush1.msra.mxu0 0.0
    %6541 = vmatprep.subr.mxu0 0.0
    %6542 = vmatpush1.msra.mxu0 0.0
    %6543 = vmatprep.subr.mxu0 0.0
    %6544 = vmatpush1.msra.mxu0 0.0
    %6545 = vmatprep.subr.mxu0 0.0
    %6546 = vmatpush1.msra.mxu0 0.0
    %6547 = vmatprep.subr.mxu0 0.0
    %6548 = vmatpush1.msra.mxu0 0.0
    %6549 = vmatprep.subr.mxu0 0.0
    %6550 = vmatpush1.msra.mxu0 0.0
    %6551 = vmatprep.subr.mxu0 0.0
    %6552 = vmatpush1.msra.mxu0 0.0
    %6553 = vmatprep.subr.mxu0 0.0
    %6554 = vmatpush1.msra.mxu0 0.0
    %6555 = vmatprep.subr.mxu0 0.0
    %6556 = vmatpush1.msra.mxu0 0.0
    %6557 = vmatprep.subr.mxu0 0.0
    %6558 = vmatpush1.msra.mxu0 0.0
    %6559 = vmatprep.subr.mxu0 0.0
    %6560 = vmatpush1.msra.mxu0 0.0
    %6561 = vmatprep.subr.mxu0 0.0
    %6562 = vmatpush1.msra.mxu0 0.0
    %6563 = vmatprep.subr.mxu0 0.0
    %6564 = vmatpush1.msra.mxu0 0.0
    %6565 = vmatprep.subr.mxu0 0.0
    %6566 = vmatpush1.msra.mxu0 0.0
    %6567 = vmatprep.subr.mxu0 0.0
    %6568 = vmatpush1.msra.mxu0 0.0
    %6569 = vmatprep.subr.mxu0 0.0
    %6570 = vmatpush1.msra.mxu0 0.0
    %6571 = vmatprep.subr.mxu0 0.0
    %6572 = vmatpush1.msra.mxu0 0.0
    %6573 = vmatprep.subr.mxu0 0.0
    %6574 = vmatpush1.msra.mxu0 0.0
    %6575 = vmatprep.subr.mxu0 0.0
    %6576 = vmatpush1.msra.mxu0 0.0
    %6577 = vmatprep.subr.mxu0 0.0
    %6578 = vmatpush1.msra.mxu0 0.0
    %6579 = vmatprep.subr.mxu0 0.0
    %6580 = vmatpush1.msra.mxu0 0.0
    %6581 = vmatprep.subr.mxu0 0.0
    %6582 = vmatpush1.msra.mxu0 0.0
    %6583 = vmatprep.subr.mxu0 0.0
    %6584 = vmatpush1.msra.mxu0 0.0
    %6585 = vmatprep.subr.mxu0 0.0
    %6586 = vmatpush1.msra.mxu0 0.0
    %6587 = vmatprep.subr.mxu0 0.0
    %6588 = vmatpush1.msra.mxu0 0.0
    %6589 = vmatprep.subr.mxu0 0.0
    %6590 = vmatpush1.msra.mxu0 0.0
    %6591 = vmatprep.subr.mxu0 0.0
    %6592 = vmatpush1.msra.mxu0 0.0
    %6593 = vmatprep.subr.mxu0 0.0
    %6594 = vmatpush1.msra.mxu0 0.0
    %6595 = vmatprep.subr.mxu0 0.0
    %6596 = vmatpush1.msra.mxu0 0.0
    %6597 = vmatprep.subr.mxu0 0.0
    %6598 = vmatpush1.msra.mxu0 0.0
    %6599 = vmatprep.mubr.f32.mxu0 0.0
    %6600 = vmatmul.mubr.f32.gmra.mrb[0].mxu0 %v1586
    %v6601 = vpop.f32.mrb[0].mxu0
    %v6602 = vadd.f32 0.0, %v6601
    %v6603 = vpop.f32.mrb[0].mxu0
    %v6604 = vadd.f32 0.0, %v6603
    %6605 = vdwg.mxu0
    %v6606 = vadd.f32 %v6351, %v6460
    %v6607 = vadd.f32 %v6352, %v6462
    %v6608 = vadd.f32 %v6353, %v6531
    %v6609 = vadd.f32 %v6354, %v6533
    %v6610 = vadd.f32 %v6355, %v6602
    %v6611 = vadd.f32 %v6356, %v6604
    %6612 = vrot.lane.b32.xlu0 %v4851, 110
    %v6613 = vpop.permute.xlu0 %6612
    %6614 = vrot.lane.b32.xlu0 %v4857, 110
    %v6615 = vpop.permute.xlu0 %6614
    %6616 = vrot.lane.b32.xlu0 %v4852, 110
    %v6617 = vpop.permute.xlu0 %6616
    %6618 = vrot.lane.b32.xlu0 %v4858, 110
    %v6619 = vpop.permute.xlu0 %6618
    %6620 = vrot.lane.b32.xlu0 %v4853, 110
    %v6621 = vpop.permute.xlu0 %6620
    %6622 = vrot.lane.b32.xlu0 %v4859, 110
    %v6623 = vpop.permute.xlu0 %6622
    %v6624 = vsel %vm1837, %v6621, %v6623
    %v6625 = vsel %vm1837, %v6619, %v6621
    %v6626 = vsel %vm1837, %v6617, %v6619
    %v6627 = vsel %vm1837, %v6615, %v6617
    %v6628 = vsel %vm1837, %v6613, %v6615
    %v6629 = vsel %vm1837, %v6623, %v6613
    %v6631 = vsel %vm89, %v6628, 0
    %v6634 = vsel %vm89, %v6627, 0
    %v6637 = vsel %vm89, %v6626, 0
    %v6640 = vsel %vm89, %v6625, 0
    %v6643 = vsel %vm89, %v6624, 0
    %v6646 = vsel %vm89, %v6629, 0
    %6648 = vmatprep.subr.mxu0 %v6634
    %6649 = vmatpush1.msra.mxu0 %v6631
    %6650 = vmatprep.subr.mxu0 0.0
    %6651 = vmatpush1.msra.mxu0 0.0
    %6652 = vmatprep.subr.mxu0 0.0
    %6653 = vmatpush1.msra.mxu0 0.0
    %6654 = vmatprep.subr.mxu0 0.0
    %6655 = vmatpush1.msra.mxu0 0.0
    %6656 = vmatprep.subr.mxu0 0.0
    %6657 = vmatpush1.msra.mxu0 0.0
    %6658 = vmatprep.subr.mxu0 0.0
    %6659 = vmatpush1.msra.mxu0 0.0
    %6660 = vmatprep.subr.mxu0 0.0
    %6661 = vmatpush1.msra.mxu0 0.0
    %6662 = vmatprep.subr.mxu0 0.0
    %6663 = vmatpush1.msra.mxu0 0.0
    %6664 = vmatprep.subr.mxu0 0.0
    %6665 = vmatpush1.msra.mxu0 0.0
    %6666 = vmatprep.subr.mxu0 0.0
    %6667 = vmatpush1.msra.mxu0 0.0
    %6668 = vmatprep.subr.mxu0 0.0
    %6669 = vmatpush1.msra.mxu0 0.0
    %6670 = vmatprep.subr.mxu0 0.0
    %6671 = vmatpush1.msra.mxu0 0.0
    %6672 = vmatprep.subr.mxu0 0.0
    %6673 = vmatpush1.msra.mxu0 0.0
    %6674 = vmatprep.subr.mxu0 0.0
    %6675 = vmatpush1.msra.mxu0 0.0
    %6676 = vmatprep.subr.mxu0 0.0
    %6677 = vmatpush1.msra.mxu0 0.0
    %6678 = vmatprep.subr.mxu0 0.0
    %6679 = vmatpush1.msra.mxu0 0.0
    %6680 = vmatprep.subr.mxu0 0.0
    %6681 = vmatpush1.msra.mxu0 0.0
    %6682 = vmatprep.subr.mxu0 0.0
    %6683 = vmatpush1.msra.mxu0 0.0
    %6684 = vmatprep.subr.mxu0 0.0
    %6685 = vmatpush1.msra.mxu0 0.0
    %6686 = vmatprep.subr.mxu0 0.0
    %6687 = vmatpush1.msra.mxu0 0.0
    %6688 = vmatprep.subr.mxu0 0.0
    %6689 = vmatpush1.msra.mxu0 0.0
    %6690 = vmatprep.subr.mxu0 0.0
    %6691 = vmatpush1.msra.mxu0 0.0
    %6692 = vmatprep.subr.mxu0 0.0
    %6693 = vmatpush1.msra.mxu0 0.0
    %6694 = vmatprep.subr.mxu0 0.0
    %6695 = vmatpush1.msra.mxu0 0.0
    %6696 = vmatprep.subr.mxu0 0.0
    %6697 = vmatpush1.msra.mxu0 0.0
    %6698 = vmatprep.subr.mxu0 0.0
    %6699 = vmatpush1.msra.mxu0 0.0
    %6700 = vmatprep.subr.mxu0 0.0
    %6701 = vmatpush1.msra.mxu0 0.0
    %6702 = vmatprep.subr.mxu0 0.0
    %6703 = vmatpush1.msra.mxu0 0.0
    %6704 = vmatprep.subr.mxu0 0.0
    %6705 = vmatpush1.msra.mxu0 0.0
    %6706 = vmatprep.subr.mxu0 0.0
    %6707 = vmatpush1.msra.mxu0 0.0
    %6708 = vmatprep.subr.mxu0 0.0
    %6709 = vmatpush1.msra.mxu0 0.0
    %6710 = vmatprep.subr.mxu0 0.0
    %6711 = vmatpush1.msra.mxu0 0.0
    %6712 = vmatprep.mubr.f32.mxu0 0.0
    %6713 = vmatmul.mubr.f32.gmra.mrb[0].mxu0 %v1845
    %v6714 = vpop.f32.mrb[0].mxu0
    %v6715 = vadd.f32 0.0, %v6714
    %v6716 = vpop.f32.mrb[0].mxu0
    %v6717 = vadd.f32 0.0, %v6716
    %6718 = vdwg.mxu0
    %6719 = vmatprep.subr.mxu0 %v6640
    %6720 = vmatpush1.msra.mxu0 %v6637
    %6721 = vmatprep.subr.mxu0 0.0
    %6722 = vmatpush1.msra.mxu0 0.0
    %6723 = vmatprep.subr.mxu0 0.0
    %6724 = vmatpush1.msra.mxu0 0.0
    %6725 = vmatprep.subr.mxu0 0.0
    %6726 = vmatpush1.msra.mxu0 0.0
    %6727 = vmatprep.subr.mxu0 0.0
    %6728 = vmatpush1.msra.mxu0 0.0
    %6729 = vmatprep.subr.mxu0 0.0
    %6730 = vmatpush1.msra.mxu0 0.0
    %6731 = vmatprep.subr.mxu0 0.0
    %6732 = vmatpush1.msra.mxu0 0.0
    %6733 = vmatprep.subr.mxu0 0.0
    %6734 = vmatpush1.msra.mxu0 0.0
    %6735 = vmatprep.subr.mxu0 0.0
    %6736 = vmatpush1.msra.mxu0 0.0
    %6737 = vmatprep.subr.mxu0 0.0
    %6738 = vmatpush1.msra.mxu0 0.0
    %6739 = vmatprep.subr.mxu0 0.0
    %6740 = vmatpush1.msra.mxu0 0.0
    %6741 = vmatprep.subr.mxu0 0.0
    %6742 = vmatpush1.msra.mxu0 0.0
    %6743 = vmatprep.subr.mxu0 0.0
    %6744 = vmatpush1.msra.mxu0 0.0
    %6745 = vmatprep.subr.mxu0 0.0
    %6746 = vmatpush1.msra.mxu0 0.0
    %6747 = vmatprep.subr.mxu0 0.0
    %6748 = vmatpush1.msra.mxu0 0.0
    %6749 = vmatprep.subr.mxu0 0.0
    %6750 = vmatpush1.msra.mxu0 0.0
    %6751 = vmatprep.subr.mxu0 0.0
    %6752 = vmatpush1.msra.mxu0 0.0
    %6753 = vmatprep.subr.mxu0 0.0
    %6754 = vmatpush1.msra.mxu0 0.0
    %6755 = vmatprep.subr.mxu0 0.0
    %6756 = vmatpush1.msra.mxu0 0.0
    %6757 = vmatprep.subr.mxu0 0.0
    %6758 = vmatpush1.msra.mxu0 0.0
    %6759 = vmatprep.subr.mxu0 0.0
    %6760 = vmatpush1.msra.mxu0 0.0
    %6761 = vmatprep.subr.mxu0 0.0
    %6762 = vmatpush1.msra.mxu0 0.0
    %6763 = vmatprep.subr.mxu0 0.0
    %6764 = vmatpush1.msra.mxu0 0.0
    %6765 = vmatprep.subr.mxu0 0.0
    %6766 = vmatpush1.msra.mxu0 0.0
    %6767 = vmatprep.subr.mxu0 0.0
    %6768 = vmatpush1.msra.mxu0 0.0
    %6769 = vmatprep.subr.mxu0 0.0
    %6770 = vmatpush1.msra.mxu0 0.0
    %6771 = vmatprep.subr.mxu0 0.0
    %6772 = vmatpush1.msra.mxu0 0.0
    %6773 = vmatprep.subr.mxu0 0.0
    %6774 = vmatpush1.msra.mxu0 0.0
    %6775 = vmatprep.subr.mxu0 0.0
    %6776 = vmatpush1.msra.mxu0 0.0
    %6777 = vmatprep.subr.mxu0 0.0
    %6778 = vmatpush1.msra.mxu0 0.0
    %6779 = vmatprep.subr.mxu0 0.0
    %6780 = vmatpush1.msra.mxu0 0.0
    %6781 = vmatprep.subr.mxu0 0.0
    %6782 = vmatpush1.msra.mxu0 0.0
    %6783 = vmatprep.mubr.f32.mxu0 0.0
    %6784 = vmatmul.mubr.f32.gmra.mrb[0].mxu0 %v1845
    %v6785 = vpop.f32.mrb[0].mxu0
    %v6786 = vadd.f32 0.0, %v6785
    %v6787 = vpop.f32.mrb[0].mxu0
    %v6788 = vadd.f32 0.0, %v6787
    %6789 = vdwg.mxu0
    %6790 = vmatprep.subr.mxu0 %v6646
    %6791 = vmatpush1.msra.mxu0 %v6643
    %6792 = vmatprep.subr.mxu0 0.0
    %6793 = vmatpush1.msra.mxu0 0.0
    %6794 = vmatprep.subr.mxu0 0.0
    %6795 = vmatpush1.msra.mxu0 0.0
    %6796 = vmatprep.subr.mxu0 0.0
    %6797 = vmatpush1.msra.mxu0 0.0
    %6798 = vmatprep.subr.mxu0 0.0
    %6799 = vmatpush1.msra.mxu0 0.0
    %6800 = vmatprep.subr.mxu0 0.0
    %6801 = vmatpush1.msra.mxu0 0.0
    %6802 = vmatprep.subr.mxu0 0.0
    %6803 = vmatpush1.msra.mxu0 0.0
    %6804 = vmatprep.subr.mxu0 0.0
    %6805 = vmatpush1.msra.mxu0 0.0
    %6806 = vmatprep.subr.mxu0 0.0
    %6807 = vmatpush1.msra.mxu0 0.0
    %6808 = vmatprep.subr.mxu0 0.0
    %6809 = vmatpush1.msra.mxu0 0.0
    %6810 = vmatprep.subr.mxu0 0.0
    %6811 = vmatpush1.msra.mxu0 0.0
    %6812 = vmatprep.subr.mxu0 0.0
    %6813 = vmatpush1.msra.mxu0 0.0
    %6814 = vmatprep.subr.mxu0 0.0
    %6815 = vmatpush1.msra.mxu0 0.0
    %6816 = vmatprep.subr.mxu0 0.0
    %6817 = vmatpush1.msra.mxu0 0.0
    %6818 = vmatprep.subr.mxu0 0.0
    %6819 = vmatpush1.msra.mxu0 0.0
    %6820 = vmatprep.subr.mxu0 0.0
    %6821 = vmatpush1.msra.mxu0 0.0
    %6822 = vmatprep.subr.mxu0 0.0
    %6823 = vmatpush1.msra.mxu0 0.0
    %6824 = vmatprep.subr.mxu0 0.0
    %6825 = vmatpush1.msra.mxu0 0.0
    %6826 = vmatprep.subr.mxu0 0.0
    %6827 = vmatpush1.msra.mxu0 0.0
    %6828 = vmatprep.subr.mxu0 0.0
    %6829 = vmatpush1.msra.mxu0 0.0
    %6830 = vmatprep.subr.mxu0 0.0
    %6831 = vmatpush1.msra.mxu0 0.0
    %6832 = vmatprep.subr.mxu0 0.0
    %6833 = vmatpush1.msra.mxu0 0.0
    %6834 = vmatprep.subr.mxu0 0.0
    %6835 = vmatpush1.msra.mxu0 0.0
    %6836 = vmatprep.subr.mxu0 0.0
    %6837 = vmatpush1.msra.mxu0 0.0
    %6838 = vmatprep.subr.mxu0 0.0
    %6839 = vmatpush1.msra.mxu0 0.0
    %6840 = vmatprep.subr.mxu0 0.0
    %6841 = vmatpush1.msra.mxu0 0.0
    %6842 = vmatprep.subr.mxu0 0.0
    %6843 = vmatpush1.msra.mxu0 0.0
    %6844 = vmatprep.subr.mxu0 0.0
    %6845 = vmatpush1.msra.mxu0 0.0
    %6846 = vmatprep.subr.mxu0 0.0
    %6847 = vmatpush1.msra.mxu0 0.0
    %6848 = vmatprep.subr.mxu0 0.0
    %6849 = vmatpush1.msra.mxu0 0.0
    %6850 = vmatprep.subr.mxu0 0.0
    %6851 = vmatpush1.msra.mxu0 0.0
    %6852 = vmatprep.subr.mxu0 0.0
    %6853 = vmatpush1.msra.mxu0 0.0
    %6854 = vmatprep.mubr.f32.mxu0 0.0
    %6855 = vmatmul.mubr.f32.gmra.mrb[0].mxu0 %v1845
    %v6856 = vpop.f32.mrb[0].mxu0
    %v6857 = vadd.f32 0.0, %v6856
    %v6858 = vpop.f32.mrb[0].mxu0
    %v6859 = vadd.f32 0.0, %v6858
    %6860 = vdwg.mxu0
    %v6861 = vadd.f32 %v6606, %v6715
    %v6862 = vadd.f32 %v6607, %v6717
    %v6863 = vadd.f32 %v6608, %v6786
    %v6864 = vadd.f32 %v6609, %v6788
    %v6865 = vadd.f32 %v6610, %v6857
    %v6866 = vadd.f32 %v6611, %v6859
    %6867 = vrot.lane.b32.xlu0 %v4851, 109
    %v6868 = vpop.permute.xlu0 %6867
    %6869 = vrot.lane.b32.xlu0 %v4857, 109
    %v6870 = vpop.permute.xlu0 %6869
    %6871 = vrot.lane.b32.xlu0 %v4852, 109
    %v6872 = vpop.permute.xlu0 %6871
    %6873 = vrot.lane.b32.xlu0 %v4858, 109
    %v6874 = vpop.permute.xlu0 %6873
    %6875 = vrot.lane.b32.xlu0 %v4853, 109
    %v6876 = vpop.permute.xlu0 %6875
    %6877 = vrot.lane.b32.xlu0 %v4859, 109
    %v6878 = vpop.permute.xlu0 %6877
    %v6879 = vsel %vm2096, %v6876, %v6878
    %v6880 = vsel %vm2096, %v6874, %v6876
    %v6881 = vsel %vm2096, %v6872, %v6874
    %v6882 = vsel %vm2096, %v6870, %v6872
    %v6883 = vsel %vm2096, %v6868, %v6870
    %v6884 = vsel %vm2096, %v6878, %v6868
    %v6886 = vsel %vm89, %v6883, 0
    %v6889 = vsel %vm89, %v6882, 0
    %v6892 = vsel %vm89, %v6881, 0
    %v6895 = vsel %vm89, %v6880, 0
    %v6898 = vsel %vm89, %v6879, 0
    %v6901 = vsel %vm89, %v6884, 0
    %6903 = vmatprep.subr.mxu0 %v6889
    %6904 = vmatpush1.msra.mxu0 %v6886
    %6905 = vmatprep.subr.mxu0 0.0
    %6906 = vmatpush1.msra.mxu0 0.0
    %6907 = vmatprep.subr.mxu0 0.0
    %6908 = vmatpush1.msra.mxu0 0.0
    %6909 = vmatprep.subr.mxu0 0.0
    %6910 = vmatpush1.msra.mxu0 0.0
    %6911 = vmatprep.subr.mxu0 0.0
    %6912 = vmatpush1.msra.mxu0 0.0
    %6913 = vmatprep.subr.mxu0 0.0
    %6914 = vmatpush1.msra.mxu0 0.0
    %6915 = vmatprep.subr.mxu0 0.0
    %6916 = vmatpush1.msra.mxu0 0.0
    %6917 = vmatprep.subr.mxu0 0.0
    %6918 = vmatpush1.msra.mxu0 0.0
    %6919 = vmatprep.subr.mxu0 0.0
    %6920 = vmatpush1.msra.mxu0 0.0
    %6921 = vmatprep.subr.mxu0 0.0
    %6922 = vmatpush1.msra.mxu0 0.0
    %6923 = vmatprep.subr.mxu0 0.0
    %6924 = vmatpush1.msra.mxu0 0.0
    %6925 = vmatprep.subr.mxu0 0.0
    %6926 = vmatpush1.msra.mxu0 0.0
    %6927 = vmatprep.subr.mxu0 0.0
    %6928 = vmatpush1.msra.mxu0 0.0
    %6929 = vmatprep.subr.mxu0 0.0
    %6930 = vmatpush1.msra.mxu0 0.0
    %6931 = vmatprep.subr.mxu0 0.0
    %6932 = vmatpush1.msra.mxu0 0.0
    %6933 = vmatprep.subr.mxu0 0.0
    %6934 = vmatpush1.msra.mxu0 0.0
    %6935 = vmatprep.subr.mxu0 0.0
    %6936 = vmatpush1.msra.mxu0 0.0
    %6937 = vmatprep.subr.mxu0 0.0
    %6938 = vmatpush1.msra.mxu0 0.0
    %6939 = vmatprep.subr.mxu0 0.0
    %6940 = vmatpush1.msra.mxu0 0.0
    %6941 = vmatprep.subr.mxu0 0.0
    %6942 = vmatpush1.msra.mxu0 0.0
    %6943 = vmatprep.subr.mxu0 0.0
    %6944 = vmatpush1.msra.mxu0 0.0
    %6945 = vmatprep.subr.mxu0 0.0
    %6946 = vmatpush1.msra.mxu0 0.0
    %6947 = vmatprep.subr.mxu0 0.0
    %6948 = vmatpush1.msra.mxu0 0.0
    %6949 = vmatprep.subr.mxu0 0.0
    %6950 = vmatpush1.msra.mxu0 0.0
    %6951 = vmatprep.subr.mxu0 0.0
    %6952 = vmatpush1.msra.mxu0 0.0
    %6953 = vmatprep.subr.mxu0 0.0
    %6954 = vmatpush1.msra.mxu0 0.0
    %6955 = vmatprep.subr.mxu0 0.0
    %6956 = vmatpush1.msra.mxu0 0.0
    %6957 = vmatprep.subr.mxu0 0.0
    %6958 = vmatpush1.msra.mxu0 0.0
    %6959 = vmatprep.subr.mxu0 0.0
    %6960 = vmatpush1.msra.mxu0 0.0
    %6961 = vmatprep.subr.mxu0 0.0
    %6962 = vmatpush1.msra.mxu0 0.0
    %6963 = vmatprep.subr.mxu0 0.0
    %6964 = vmatpush1.msra.mxu0 0.0
    %6965 = vmatprep.subr.mxu0 0.0
    %6966 = vmatpush1.msra.mxu0 0.0
    %6967 = vmatprep.mubr.f32.mxu0 0.0
    %6968 = vmatmul.mubr.f32.gmra.mrb[0].mxu0 %v2104
    %v6969 = vpop.f32.mrb[0].mxu0
    %v6970 = vadd.f32 0.0, %v6969
    %v6971 = vpop.f32.mrb[0].mxu0
    %v6972 = vadd.f32 0.0, %v6971
    %6973 = vdwg.mxu0
    %6974 = vmatprep.subr.mxu0 %v6895
    %6975 = vmatpush1.msra.mxu0 %v6892
    %6976 = vmatprep.subr.mxu0 0.0
    %6977 = vmatpush1.msra.mxu0 0.0
    %6978 = vmatprep.subr.mxu0 0.0
    %6979 = vmatpush1.msra.mxu0 0.0
    %6980 = vmatprep.subr.mxu0 0.0
    %6981 = vmatpush1.msra.mxu0 0.0
    %6982 = vmatprep.subr.mxu0 0.0
    %6983 = vmatpush1.msra.mxu0 0.0
    %6984 = vmatprep.subr.mxu0 0.0
    %6985 = vmatpush1.msra.mxu0 0.0
    %6986 = vmatprep.subr.mxu0 0.0
    %6987 = vmatpush1.msra.mxu0 0.0
    %6988 = vmatprep.subr.mxu0 0.0
    %6989 = vmatpush1.msra.mxu0 0.0
    %6990 = vmatprep.subr.mxu0 0.0
    %6991 = vmatpush1.msra.mxu0 0.0
    %6992 = vmatprep.subr.mxu0 0.0
    %6993 = vmatpush1.msra.mxu0 0.0
    %6994 = vmatprep.subr.mxu0 0.0
    %6995 = vmatpush1.msra.mxu0 0.0
    %6996 = vmatprep.subr.mxu0 0.0
    %6997 = vmatpush1.msra.mxu0 0.0
    %6998 = vmatprep.subr.mxu0 0.0
    %6999 = vmatpush1.msra.mxu0 0.0
    %7000 = vmatprep.subr.mxu0 0.0
    %7001 = vmatpush1.msra.mxu0 0.0
    %7002 = vmatprep.subr.mxu0 0.0
    %7003 = vmatpush1.msra.mxu0 0.0
    %7004 = vmatprep.subr.mxu0 0.0
    %7005 = vmatpush1.msra.mxu0 0.0
    %7006 = vmatprep.subr.mxu0 0.0
    %7007 = vmatpush1.msra.mxu0 0.0
    %7008 = vmatprep.subr.mxu0 0.0
    %7009 = vmatpush1.msra.mxu0 0.0
    %7010 = vmatprep.subr.mxu0 0.0
    %7011 = vmatpush1.msra.mxu0 0.0
    %7012 = vmatprep.subr.mxu0 0.0
    %7013 = vmatpush1.msra.mxu0 0.0
    %7014 = vmatprep.subr.mxu0 0.0
    %7015 = vmatpush1.msra.mxu0 0.0
    %7016 = vmatprep.subr.mxu0 0.0
    %7017 = vmatpush1.msra.mxu0 0.0
    %7018 = vmatprep.subr.mxu0 0.0
    %7019 = vmatpush1.msra.mxu0 0.0
    %7020 = vmatprep.subr.mxu0 0.0
    %7021 = vmatpush1.msra.mxu0 0.0
    %7022 = vmatprep.subr.mxu0 0.0
    %7023 = vmatpush1.msra.mxu0 0.0
    %7024 = vmatprep.subr.mxu0 0.0
    %7025 = vmatpush1.msra.mxu0 0.0
    %7026 = vmatprep.subr.mxu0 0.0
    %7027 = vmatpush1.msra.mxu0 0.0
    %7028 = vmatprep.subr.mxu0 0.0
    %7029 = vmatpush1.msra.mxu0 0.0
    %7030 = vmatprep.subr.mxu0 0.0
    %7031 = vmatpush1.msra.mxu0 0.0
    %7032 = vmatprep.subr.mxu0 0.0
    %7033 = vmatpush1.msra.mxu0 0.0
    %7034 = vmatprep.subr.mxu0 0.0
    %7035 = vmatpush1.msra.mxu0 0.0
    %7036 = vmatprep.subr.mxu0 0.0
    %7037 = vmatpush1.msra.mxu0 0.0
    %7038 = vmatprep.mubr.f32.mxu0 0.0
    %7039 = vmatmul.mubr.f32.gmra.mrb[0].mxu0 %v2104
    %v7040 = vpop.f32.mrb[0].mxu0
    %v7041 = vadd.f32 0.0, %v7040
    %v7042 = vpop.f32.mrb[0].mxu0
    %v7043 = vadd.f32 0.0, %v7042
    %7044 = vdwg.mxu0
    %7045 = vmatprep.subr.mxu0 %v6901
    %7046 = vmatpush1.msra.mxu0 %v6898
    %7047 = vmatprep.subr.mxu0 0.0
    %7048 = vmatpush1.msra.mxu0 0.0
    %7049 = vmatprep.subr.mxu0 0.0
    %7050 = vmatpush1.msra.mxu0 0.0
    %7051 = vmatprep.subr.mxu0 0.0
    %7052 = vmatpush1.msra.mxu0 0.0
    %7053 = vmatprep.subr.mxu0 0.0
    %7054 = vmatpush1.msra.mxu0 0.0
    %7055 = vmatprep.subr.mxu0 0.0
    %7056 = vmatpush1.msra.mxu0 0.0
    %7057 = vmatprep.subr.mxu0 0.0
    %7058 = vmatpush1.msra.mxu0 0.0
    %7059 = vmatprep.subr.mxu0 0.0
    %7060 = vmatpush1.msra.mxu0 0.0
    %7061 = vmatprep.subr.mxu0 0.0
    %7062 = vmatpush1.msra.mxu0 0.0
    %7063 = vmatprep.subr.mxu0 0.0
    %7064 = vmatpush1.msra.mxu0 0.0
    %7065 = vmatprep.subr.mxu0 0.0
    %7066 = vmatpush1.msra.mxu0 0.0
    %7067 = vmatprep.subr.mxu0 0.0
    %7068 = vmatpush1.msra.mxu0 0.0
    %7069 = vmatprep.subr.mxu0 0.0
    %7070 = vmatpush1.msra.mxu0 0.0
    %7071 = vmatprep.subr.mxu0 0.0
    %7072 = vmatpush1.msra.mxu0 0.0
    %7073 = vmatprep.subr.mxu0 0.0
    %7074 = vmatpush1.msra.mxu0 0.0
    %7075 = vmatprep.subr.mxu0 0.0
    %7076 = vmatpush1.msra.mxu0 0.0
    %7077 = vmatprep.subr.mxu0 0.0
    %7078 = vmatpush1.msra.mxu0 0.0
    %7079 = vmatprep.subr.mxu0 0.0
    %7080 = vmatpush1.msra.mxu0 0.0
    %7081 = vmatprep.subr.mxu0 0.0
    %7082 = vmatpush1.msra.mxu0 0.0
    %7083 = vmatprep.subr.mxu0 0.0
    %7084 = vmatpush1.msra.mxu0 0.0
    %7085 = vmatprep.subr.mxu0 0.0
    %7086 = vmatpush1.msra.mxu0 0.0
    %7087 = vmatprep.subr.mxu0 0.0
    %7088 = vmatpush1.msra.mxu0 0.0
    %7089 = vmatprep.subr.mxu0 0.0
    %7090 = vmatpush1.msra.mxu0 0.0
    %7091 = vmatprep.subr.mxu0 0.0
    %7092 = vmatpush1.msra.mxu0 0.0
    %7093 = vmatprep.subr.mxu0 0.0
    %7094 = vmatpush1.msra.mxu0 0.0
    %7095 = vmatprep.subr.mxu0 0.0
    %7096 = vmatpush1.msra.mxu0 0.0
    %7097 = vmatprep.subr.mxu0 0.0
    %7098 = vmatpush1.msra.mxu0 0.0
    %7099 = vmatprep.subr.mxu0 0.0
    %7100 = vmatpush1.msra.mxu0 0.0
    %7101 = vmatprep.subr.mxu0 0.0
    %7102 = vmatpush1.msra.mxu0 0.0
    %7103 = vmatprep.subr.mxu0 0.0
    %7104 = vmatpush1.msra.mxu0 0.0
    %7105 = vmatprep.subr.mxu0 0.0
    %7106 = vmatpush1.msra.mxu0 0.0
    %7107 = vmatprep.subr.mxu0 0.0
    %7108 = vmatpush1.msra.mxu0 0.0
    %7109 = vmatprep.mubr.f32.mxu0 0.0
    %7110 = vmatmul.mubr.f32.gmra.mrb[0].mxu0 %v2104
    %v7111 = vpop.f32.mrb[0].mxu0
    %v7112 = vadd.f32 0.0, %v7111
    %v7113 = vpop.f32.mrb[0].mxu0
    %v7114 = vadd.f32 0.0, %v7113
    %7115 = vdwg.mxu0
    %v7116 = vadd.f32 %v6861, %v6970
    %v7117 = vadd.f32 %v6862, %v6972
    %v7118 = vadd.f32 %v6863, %v7041
    %v7119 = vadd.f32 %v6864, %v7043
    %v7120 = vadd.f32 %v6865, %v7112
    %v7121 = vadd.f32 %v6866, %v7114
    %v7122 = vmul.f32 %v7116, %v2347
    %v7123 = vmul.f32 %v7117, %v2351
    %v7124 = vmul.f32 %v7118, %v2355
    %v7125 = vmul.f32 %v7119, %v2359
    %v7126 = vmul.f32 %v7120, %v2363
    %v7127 = vmul.f32 %v7121, %v2367
    %v7128 = vsel %vm89, %v7122, 0.0
    %v7129 = vsel %vm89, %v7123, 0.0
    %v7130 = vadd.f32 %v7128, %v7129
    %v7131 = vsel %vm89, %v7124, 0.0
    %v7132 = vadd.f32 %v7130, %v7131
    %v7133 = vsel %vm89, %v7125, 0.0
    %v7134 = vadd.f32 %v7132, %v7133
    %v7135 = vsel %vm89, %v7126, 0.0
    %v7136 = vadd.f32 %v7134, %v7135
    %v7137 = vsel %vm89, %v7127, 0.0
    %v7138 = vadd.f32 %v7136, %v7137
    %7139 = vadd.xlane.f32.xlu0 %v7138
    %v7140 = vpop.xlane.xlu0 %7139
    %v7141 = vmul.f32 %v7140, 0.001953125
    %v7142 = vsub.f32 %v7116, %v7141
    %v7143 = vsub.f32 %v7117, %v7141
    %v7144 = vsub.f32 %v7118, %v7141
    %v7145 = vsub.f32 %v7119, %v7141
    %v7146 = vsub.f32 %v7120, %v7141
    %v7147 = vsub.f32 %v7121, %v7141
    %v7148 = vmul.f32 %v7142, %v2347
    %v7149 = vmul.f32 %v7143, %v2351
    %v7150 = vmul.f32 %v7144, %v2355
    %v7151 = vmul.f32 %v7145, %v2359
    %v7152 = vmul.f32 %v7146, %v2363
    %v7153 = vmul.f32 %v7147, %v2367
    %v7154 = vmul.f32 %v7148, %v7148
    %v7155 = vmul.f32 %v7149, %v7149
    %v7156 = vmul.f32 %v7150, %v7150
    %v7157 = vmul.f32 %v7151, %v7151
    %v7158 = vmul.f32 %v7152, %v7152
    %v7159 = vmul.f32 %v7153, %v7153
    %v7160 = vsel %vm89, %v7154, 0.0
    %v7161 = vsel %vm89, %v7155, 0.0
    %v7162 = vadd.f32 %v7160, %v7161
    %v7163 = vsel %vm89, %v7156, 0.0
    %v7164 = vadd.f32 %v7162, %v7163
    %v7165 = vsel %vm89, %v7157, 0.0
    %v7166 = vadd.f32 %v7164, %v7165
    %v7167 = vsel %vm89, %v7158, 0.0
    %v7168 = vadd.f32 %v7166, %v7167
    %v7169 = vsel %vm89, %v7159, 0.0
    %v7170 = vadd.f32 %v7168, %v7169
    %7171 = vadd.xlane.f32.xlu0 %v7170
    %v7172 = vpop.xlane.xlu0 %7171
    %v7173 = vmul.f32 %v7172, 0.001953125
    %v7174 = vadd.f32 %v7173, 1e-05
    %v7175 = vrsqrt.pop %v7174
    %v7176 = vmul.f32 %v34, %v7175
    %v7177 = vmul.f32 %v7141, %v7176
    %v7178 = vsub.f32 %v35, %v7177
    %7180 = vset.pattern.permute.xlu0 0
    %7181 = vperm.xlu0 %7180, %v7176
    %v7182 = vpop.permute.xlu0 %7181
    %v7184 = vmul.f32 %v7116, %v7182
    %v7185 = vmul.f32 %v7117, %v7182
    %v7186 = vmul.f32 %v7118, %v7182
    %v7187 = vmul.f32 %v7119, %v7182
    %v7188 = vmul.f32 %v7120, %v7182
    %v7189 = vmul.f32 %v7121, %v7182
    %7191 = vset.pattern.permute.xlu0 0
    %7192 = vperm.xlu0 %7191, %v7178
    %v7193 = vpop.permute.xlu0 %7192
    %v7195 = vadd.f32 %v7184, %v7193
    %v7196 = vadd.f32 %v7185, %v7193
    %v7197 = vadd.f32 %v7186, %v7193
    %v7198 = vadd.f32 %v7187, %v7193
    %v7199 = vadd.f32 %v7188, %v7193
    %v7200 = vadd.f32 %v7189, %v7193
    %v7201 = vmax.f32 %v7195, 0.0
    %v7202 = vmax.f32 %v7196, 0.0
    %v7203 = vmax.f32 %v7197, 0.0
    %v7204 = vmax.f32 %v7198, 0.0
    %v7205 = vmax.f32 %v7199, 0.0
    %v7206 = vmax.f32 %v7200, 0.0
    %v7207 = vmul.f32 %v7201, %v2347
    %v7208 = vmul.f32 %v7202, %v2351
    %v7209 = vmul.f32 %v7203, %v2355
    %v7210 = vmul.f32 %v7204, %v2359
    %v7211 = vmul.f32 %v7205, %v2363
    %v7212 = vmul.f32 %v7206, %v2367
    %v7219 = vcombine.low %v7207, %v7208
    %v7220 = vcombine.low %v7209, %v7210
    %v7221 = vcombine.low %v7211, %v7212
    %7225 = vst [vmem:[#allocation2] sm:$0xff] %v7219
    %7226 = vst [vmem:[#allocation2 + $0x8] sm:$0xff] %v7220
    %7227 = vst [vmem:[#allocation2 + $0x10] sm:$0xff] %v7221
    // Predicated region
    $region22: #{tpu_custom_call.1} parent=1 // pred_check
      _
    $region23: #{tpu_custom_call.1} parent=1 // pred_check_branch
      %7229 = sbr.rel (0) target = $region25
    $region24: #{tpu_custom_call.1} parent=1 // pred_region
      %s7231 = ssub.s32 384, 384
      %7232 = vsyncadd [#allocation3], %s7231
      %s7234 = sshll.u32 [#allocation2], 4
      %s7235 = int_to_ptr.vmem [resolvable:$true] %s7234
      %7237 = dma.vmem_to_hbm [thread:$0]  %s7235, 384, %s5, [#allocation3]
    $region25: #{tpu_custom_call.1} parent=1 // pred_fallthru
      _
    // Predicated region
    $region26: #{tpu_custom_call.1} parent=1 // pred_check
      _
    $region27: #{tpu_custom_call.1} parent=1 // pred_check_branch
      %7239 = sbr.rel (0) target = $region29
    $region28: #{tpu_custom_call.1} parent=1 // pred_region
      %7240 = dma.done [#allocation3], 384
    $region29: #{tpu_custom_call.1} parent=1 // pred_fallthru
      _
    %7241 = vsyncpa [#allocation3], 1

</llo_original>
